<compile_context>
chip_gen: v6e
topology: v6e:2x2x1
jax: 0.10.0
libtpu: 0.0.40
codegen_flags: <defaults>
</compile_context>

<pallas_src>
import functools

import numpy as np

import jax
import jax.numpy as jnp
from jax.experimental import pallas as pl
from jax.experimental.pallas import tpu as pltpu


# ----------------------------------------------------------------------------
# Host-side constant builders (trace-time numpy -> jit constants).
# ----------------------------------------------------------------------------
def _round_up(a, b):
    return ((a + b - 1) // b) * b


def _up_matrix_1d(s):
    """(s, 2s) matrix U such that (x @ U) is PyTorch's 2x bilinear upsample
    (align_corners=False) along that axis."""
    u = np.zeros((s, 2 * s), np.float32)
    for i in range(s):
        # even output 2i  : 0.75 * x[i] + 0.25 * x[max(i-1, 0)]
        # odd  output 2i+1: 0.75 * x[i] + 0.25 * x[min(i+1, s-1)]
        u[i, 2 * i] += 0.75
        u[max(i - 1, 0), 2 * i] += 0.25
        u[i, 2 * i + 1] += 0.75
        u[min(i + 1, s - 1), 2 * i + 1] += 0.25
    return u


def _up_matrix_2d(h, w):
    """(h*w, 4*h*w) flattened-spatial 2x bilinear upsample operator."""
    return jnp.asarray(np.kron(_up_matrix_1d(h), _up_matrix_1d(w)))


def _edge_masks(h, w):
    """(2, h*w) f32 masks: row 0 zeroes output column 0 (for the kx=0 taps),
    row 1 zeroes output column w-1 (for the kx=2 taps)."""
    col = np.arange(h * w) % w
    return jnp.asarray(np.stack([(col != 0), (col != w - 1)]).astype(np.float32))


# ----------------------------------------------------------------------------
# In-kernel 3x3 conv on lane-dense (C, H*W) values: 9 lane shifts + VPU FMAs.
# ----------------------------------------------------------------------------
def _conv3x3_lane(x, w, b, mask_l, mask_r, *, W, pad, relu):
    # x      : (Cin, L) f32, L = H*W (lane-dense)
    # w      : (9, Cout, Cin) f32, tap = ky*3 + kx
    # b      : (Cout, 1) f32
    # mask_l : (1, L) f32, zero where output column == 0
    # mask_r : (1, L) f32, zero where output column == W-1
    Cin, L = x.shape
    Cout = w.shape[1]

    # Zero-pad the flat spatial axis with lane-tile-aligned pads; vertical
    # (row) out-of-bounds taps then read zeros, horizontal wrap is fixed by
    # the two column masks.
    zpad = jnp.zeros((Cin, pad), jnp.float32)
    z = jnp.concatenate([zpad, x, zpad], axis=1)          # (Cin, 2*pad + L)

    acc = jnp.zeros((Cout, L), jnp.float32)
    for tap in range(9):
        ddy = tap // 3 - 1
        ddx = tap % 3 - 1
        start = pad + ddy * W + ddx
        shifted = z[:, start:start + L]                   # (Cin, L) lane shift
        if ddx == -1:
            shifted = shifted * mask_l
        elif ddx == 1:
            shifted = shifted * mask_r
        wt = w[tap]                                       # (Cout, Cin)
        # Channel contraction as broadcast FMAs on the VPU (MXU not worth it
        # for K = Cin <= 8, M = Cout <= 4).
        for ci in range(Cin):
            acc = acc + wt[:, ci:ci + 1] * shifted[ci:ci + 1, :]

    acc = acc + b
    if relu:
        acc = jnp.maximum(acc, 0.0)
    return acc


# ----------------------------------------------------------------------------
# Fused DecoderBlock kernel: one grid step per batch element.
# ----------------------------------------------------------------------------
def _decoder_block_kernel(x_ref, u1_ref, u2_ref, m1_ref, m2_ref,
                          wb_ref, bb_ref, w1_ref, b1_ref, w2_ref, b2_ref,
                          o_ref, *, W1, W2, pad1, pad2):
    # x_ref : (1, Cin, L0)      flattened NCHW input tile
    # u1_ref: (L0, L1)          bilinear 2x operator (flattened spatial)
    # u2_ref: (L1, L2)
    # m*_ref: (2, L*)           column edge masks for each resolution
    # w*_ref: (9, Cout, Cin), b*_ref: (Cout, 1)
    # o_ref : (1, Cout_final, L2)
    x0 = x_ref[0]                                          # (Cin, L0)
    m1 = m1_ref[...]
    m2 = m2_ref[...]

    # upsample1 (MXU matmul against the constant interpolation matrix)
    x1 = jnp.dot(x0, u1_ref[...], preferred_element_type=jnp.float32)   # (Cin, L1)
    h1 = _conv3x3_lane(x1, wb_ref[...], bb_ref[...], m1[0:1, :], m1[1:2, :],
                       W=W1, pad=pad1, relu=True)                       # (C1, L1)

    # upsample2
    x2 = jnp.dot(h1, u2_ref[...], preferred_element_type=jnp.float32)   # (C1, L2)
    h2 = _conv3x3_lane(x2, w1_ref[...], b1_ref[...], m2[0:1, :], m2[1:2, :],
                       W=W2, pad=pad2, relu=True)                       # (C2, L2)
    h3 = _conv3x3_lane(h2, w2_ref[...], b2_ref[...], m2[0:1, :], m2[1:2, :],
                       W=W2, pad=pad2, relu=False)                      # (C3, L2)

    o_ref[...] = h3[None, :, :]                            # lane-dense store


# ----------------------------------------------------------------------------
# Wrapper: PyTorch NCHW in/out, single fused pallas_call.
# ----------------------------------------------------------------------------
def decoder_block(x_nchw, params):
    """x_nchw: (N, Cin, H, W) f32; params hold PyTorch-layout conv weights."""
    N, Cin, H, W = x_nchw.shape
    H1, W1 = 2 * H, 2 * W
    H2, W2 = 2 * H1, 2 * W1
    L0, L1, L2 = H * W, H1 * W1, H2 * W2

    def to_taps(w_pt):  # (Cout, Cin, 3, 3) -> (9, Cout, Cin), tap = ky*3 + kx
        co, ci = w_pt.shape[0], w_pt.shape[1]
        return jnp.transpose(w_pt, (2, 3, 0, 1)).reshape(9, co, ci)

    wb = to_taps(params["w_between"]); bb = params["b_between"].reshape(-1, 1)
    w1 = to_taps(params["w1"]);        b1 = params["b1"].reshape(-1, 1)
    w2 = to_taps(params["w2"]);        b2 = params["b2"].reshape(-1, 1)
    C1, C2, C3 = wb.shape[1], w1.shape[1], w2.shape[1]

    u1 = _up_matrix_2d(H, W)      # (L0, L1)
    u2 = _up_matrix_2d(H1, W1)    # (L1, L2)
    m1 = _edge_masks(H1, W1)      # (2, L1)
    m2 = _edge_masks(H2, W2)      # (2, L2)

    pad1 = _round_up(W1 + 1, 128)
    pad2 = _round_up(W2 + 1, 128)

    x_flat = x_nchw.reshape(N, Cin, L0)   # row-major NCHW flatten (bitcast)

    kernel = functools.partial(_decoder_block_kernel,
                               W1=W1, W2=W2, pad1=pad1, pad2=pad2)

    out_flat = pl.pallas_call(
        kernel,
        out_shape=jax.ShapeDtypeStruct((N, C3, L2), jnp.float32),
        grid=(N,),
        in_specs=[
            pl.BlockSpec((1, Cin, L0), lambda n: (n, 0, 0)),
            pl.BlockSpec((L0, L1), lambda n: (0, 0)),
            pl.BlockSpec((L1, L2), lambda n: (0, 0)),
            pl.BlockSpec((2, L1), lambda n: (0, 0)),
            pl.BlockSpec((2, L2), lambda n: (0, 0)),
            pl.BlockSpec((9, C1, Cin), lambda n: (0, 0, 0)),
            pl.BlockSpec((C1, 1), lambda n: (0, 0)),
            pl.BlockSpec((9, C2, C1), lambda n: (0, 0, 0)),
            pl.BlockSpec((C2, 1), lambda n: (0, 0)),
            pl.BlockSpec((9, C3, C2), lambda n: (0, 0, 0)),
            pl.BlockSpec((C3, 1), lambda n: (0, 0)),
        ],
        out_specs=pl.BlockSpec((1, C3, L2), lambda n: (n, 0, 0)),
        compiler_params=pltpu.CompilerParams(
            dimension_semantics=("parallel",)),
    )(x_flat, u1, u2, m1, m2, wb, bb, w1, b1, w2, b2)

    return out_flat.reshape(N, C3, H2, W2)


# ----------------------------------------------------------------------------
# Pure-JAX reference (PyTorch semantics) for a structural correctness check.
# ----------------------------------------------------------------------------
def _reference_decoder_block(x, params):
    def up2(x):
        N, C, H, W = x.shape
        def coeffs(S):
            src = (jnp.arange(2 * S, dtype=jnp.float32) + 0.5) / 2.0 - 0.5
            src = jnp.maximum(src, 0.0)
            i0 = jnp.minimum(jnp.floor(src).astype(jnp.int32), S - 1)
            i1 = jnp.minimum(i0 + 1, S - 1)
            w1 = src - i0.astype(jnp.float32)
            return i0, i1, 1.0 - w1, w1
        i0, i1, w0, w1 = coeffs(H)
        xh = (x[:, :, i0, :] * w0[None, None, :, None]
              + x[:, :, i1, :] * w1[None, None, :, None])
        j0, j1, v0, v1 = coeffs(W)
        return xh[:, :, :, j0] * v0 + xh[:, :, :, j1] * v1

    def conv(x, w_pt, b, relu):
        N, C, H, W = x.shape
        Cout = w_pt.shape[0]
        xp = jnp.pad(x, ((0, 0), (0, 0), (1, 1), (1, 1)))
        out = jnp.broadcast_to(b[None, :, None, None], (N, Cout, H, W))
        out = out.astype(jnp.float32)
        for ky in range(3):
            for kx in range(3):
                patch = xp[:, :, ky:ky + H, kx:kx + W]       # (N, Cin, H, W)
                wk = w_pt[:, :, ky, kx]                      # (Cout, Cin)
                out = out + jnp.sum(wk[None, :, :, None, None] * patch[:, None],
                                    axis=2)
        return jnp.maximum(out, 0.0) if relu else out

    h = up2(x)
    h = conv(h, params["w_between"], params["b_between"], True)
    h = up2(h)
    h = conv(h, params["w1"], params["b1"], True)
    return conv(h, params["w2"], params["b2"], False)


def init_conv_params(key, cin, cout):
    """PyTorch nn.Conv2d default-style deterministic init, PyTorch layout."""
    kw, kb = jax.random.split(key)
    fan_in = cin * 3 * 3
    bound = 1.0 / jnp.sqrt(jnp.float32(fan_in))
    w_pt = jax.random.uniform(kw, (cout, cin, 3, 3), jnp.float32, -bound, bound)
    b = jax.random.uniform(kb, (cout,), jnp.float32, -bound, bound)
    return w_pt, b


if __name__ == "__main__":
    # Small shapes consistent with the module: in_channels=8, out_channels=1.
    batch, in_channels, out_channels, spatial = 2, 8, 1, 8

    key = jax.random.PRNGKey(0)
    k_x, k_b, k_1, k_2 = jax.random.split(key, 4)

    w_between, b_between = init_conv_params(k_b, in_channels, in_channels // 2)
    w1, b1 = init_conv_params(k_1, in_channels // 2, in_channels // 4)
    w2, b2 = init_conv_params(k_2, in_channels // 4, out_channels)
    params = {
        "w_between": w_between, "b_between": b_between,
        "w1": w1, "b1": b1,
        "w2": w2, "b2": b2,
    }

    # Input in PyTorch NCHW convention.
    x = jax.random.normal(k_x, (batch, in_channels, spatial, spatial),
                          dtype=jnp.float32)

    fwd = jax.jit(decoder_block)
    out = fwd(x, params)                   # (2, 1, 32, 32)
    jax.block_until_ready(out)
    assert out.shape == (batch, out_channels, 4 * spatial, 4 * spatial)

    # Structural correctness check against the pure-JAX reference.  Tolerance
    # is loose on purpose: the in-kernel upsample matmuls may run through
    # bf16-pass MXU arithmetic depending on platform precision defaults.
    ref = _reference_decoder_block(x, params)
    err = float(jnp.max(jnp.abs(out - ref)))
    assert err < 5e-2, f"max abs error vs reference: {err}"

    print("KERNEL_OK")
</pallas_src>

<mosaic_0001>
module attributes {stable_mosaic.version = 11 : i64} {
  func.func @_decoder_block_kernel(%arg0: i32, %arg1: memref<1x8x64xf32, #tpu.memory_space<vmem>>, %arg2: memref<64x256xf32, #tpu.memory_space<vmem>>, %arg3: memref<256x1024xf32, #tpu.memory_space<vmem>>, %arg4: memref<2x256xf32, #tpu.memory_space<vmem>>, %arg5: memref<2x1024xf32, #tpu.memory_space<vmem>>, %arg6: memref<9x4x8xf32, #tpu.memory_space<vmem>>, %arg7: memref<4x1xf32, #tpu.memory_space<vmem>>, %arg8: memref<9x2x4xf32, #tpu.memory_space<vmem>>, %arg9: memref<2x1xf32, #tpu.memory_space<vmem>>, %arg10: memref<9x1x2xf32, #tpu.memory_space<vmem>>, %arg11: memref<1x1xf32, #tpu.memory_space<vmem>>, %arg12: memref<1x1x1024xf32, #tpu.memory_space<vmem>>) attributes {dimension_semantics = [#tpu.dimension_semantics<parallel>], iteration_bounds = array<i64: 2>, scalar_prefetch = 0 : i64, scratch_operands = 0 : i64, tpu.core_type = #tpu.core_type<tc>, window_params = [{transform_indices = @transform_0, window_bounds = array<i64: 1, 8, 64>}, {pipeline_mode = #tpu.pipeline_mode<synchronous>, transform_indices = @transform_1, window_bounds = array<i64: 64, 256>}, {pipeline_mode = #tpu.pipeline_mode<synchronous>, transform_indices = @transform_2, window_bounds = array<i64: 256, 1024>}, {pipeline_mode = #tpu.pipeline_mode<synchronous>, transform_indices = @transform_3, window_bounds = array<i64: 2, 256>}, {pipeline_mode = #tpu.pipeline_mode<synchronous>, transform_indices = @transform_4, window_bounds = array<i64: 2, 1024>}, {pipeline_mode = #tpu.pipeline_mode<synchronous>, transform_indices = @transform_5, window_bounds = array<i64: 9, 4, 8>}, {pipeline_mode = #tpu.pipeline_mode<synchronous>, transform_indices = @transform_6, window_bounds = array<i64: 4, 1>}, {pipeline_mode = #tpu.pipeline_mode<synchronous>, transform_indices = @transform_7, window_bounds = array<i64: 9, 2, 4>}, {pipeline_mode = #tpu.pipeline_mode<synchronous>, transform_indices = @transform_8, window_bounds = array<i64: 2, 1>}, {pipeline_mode = #tpu.pipeline_mode<synchronous>, transform_indices = @transform_9, window_bounds = array<i64: 9, 1, 2>}, {pipeline_mode = #tpu.pipeline_mode<synchronous>, transform_indices = @transform_10, window_bounds = array<i64: 1, 1>}, {transform_indices = @transform_11, window_bounds = array<i64: 1, 1, 1024>}]} {
    %c0 = arith.constant 0 : index
    %c0_0 = arith.constant 0 : index
    %c0_1 = arith.constant 0 : index
    %0 = vector.load %arg1[%c0, %c0_0, %c0_1] : memref<1x8x64xf32, #tpu.memory_space<vmem>>, vector<1x8x64xf32>
    %1 = vector.shape_cast %0 : vector<1x8x64xf32> to vector<8x64xf32>
    %c0_2 = arith.constant 0 : index
    %c0_3 = arith.constant 0 : index
    %2 = vector.load %arg4[%c0_2, %c0_3] : memref<2x256xf32, #tpu.memory_space<vmem>>, vector<2x256xf32>
    %c0_4 = arith.constant 0 : index
    %c0_5 = arith.constant 0 : index
    %3 = vector.load %arg5[%c0_4, %c0_5] : memref<2x1024xf32, #tpu.memory_space<vmem>>, vector<2x1024xf32>
    %c0_6 = arith.constant 0 : index
    %c0_7 = arith.constant 0 : index
    %4 = vector.load %arg2[%c0_6, %c0_7] : memref<64x256xf32, #tpu.memory_space<vmem>>, vector<64x256xf32>
    %cst = arith.constant dense<0.000000e+00> : vector<8x256xf32>
    %5 = tpu.matmul %1, %4, %cst {dimension_numbers = #tpu.dot_dimension_numbers<[1], [0], [0], [1], [0, 0, 1, 1], [], []>} : vector<8x64xf32>, vector<64x256xf32>, vector<8x256xf32> -> vector<8x256xf32>
    %c0_8 = arith.constant 0 : index
    %c0_9 = arith.constant 0 : index
    %c0_10 = arith.constant 0 : index
    %6 = vector.load %arg6[%c0_8, %c0_9, %c0_10] : memref<9x4x8xf32, #tpu.memory_space<vmem>>, vector<9x4x8xf32>
    %c0_11 = arith.constant 0 : index
    %c0_12 = arith.constant 0 : index
    %7 = vector.load %arg7[%c0_11, %c0_12] : memref<4x1xf32, #tpu.memory_space<vmem>>, vector<4x1xf32>
    %8 = vector.extract_strided_slice %2 {offsets = [0, 0], sizes = [1, 256], strides = [1, 1]} : vector<2x256xf32> to vector<1x256xf32>
    %9 = vector.extract_strided_slice %2 {offsets = [1, 0], sizes = [1, 256], strides = [1, 1]} : vector<2x256xf32> to vector<1x256xf32>
    %cst_13 = arith.constant 0.000000e+00 : f32
    %10 = vector.broadcast %cst_13 : f32 to vector<8x128xf32>
    %11 = tpu.concatenate %10, %5, %10 in 1 : vector<8x128xf32>, vector<8x256xf32>, vector<8x128xf32> -> vector<8x512xf32>
    %cst_14 = arith.constant 0.000000e+00 : f32
    %12 = vector.broadcast %cst_14 : f32 to vector<4x256xf32>
    %13 = vector.extract_strided_slice %11 {offsets = [0, 111], sizes = [8, 256], strides = [1, 1]} : vector<8x512xf32> to vector<8x256xf32>
    %14 = vector.broadcast %8 : vector<1x256xf32> to vector<8x256xf32>
    %15 = arith.mulf %13, %14 : vector<8x256xf32>
    %16 = vector.extract_strided_slice %6 {offsets = [0, 0, 0], sizes = [1, 4, 8], strides = [1, 1, 1]} : vector<9x4x8xf32> to vector<1x4x8xf32>
    %17 = vector.shape_cast %16 : vector<1x4x8xf32> to vector<4x8xf32>
    %18 = vector.extract_strided_slice %17 {offsets = [0, 0], sizes = [4, 1], strides = [1, 1]} : vector<4x8xf32> to vector<4x1xf32>
    %19 = vector.extract_strided_slice %15 {offsets = [0, 0], sizes = [1, 256], strides = [1, 1]} : vector<8x256xf32> to vector<1x256xf32>
    %20 = vector.broadcast %18 : vector<4x1xf32> to vector<4x256xf32>
    %21 = vector.broadcast %19 : vector<1x256xf32> to vector<4x256xf32>
    %22 = arith.mulf %20, %21 : vector<4x256xf32>
    %23 = arith.addf %12, %22 : vector<4x256xf32>
    %24 = vector.extract_strided_slice %17 {offsets = [0, 1], sizes = [4, 1], strides = [1, 1]} : vector<4x8xf32> to vector<4x1xf32>
    %25 = vector.extract_strided_slice %15 {offsets = [1, 0], sizes = [1, 256], strides = [1, 1]} : vector<8x256xf32> to vector<1x256xf32>
    %26 = vector.broadcast %24 : vector<4x1xf32> to vector<4x256xf32>
    %27 = vector.broadcast %25 : vector<1x256xf32> to vector<4x256xf32>
    %28 = arith.mulf %26, %27 : vector<4x256xf32>
    %29 = arith.addf %23, %28 : vector<4x256xf32>
    %30 = vector.extract_strided_slice %17 {offsets = [0, 2], sizes = [4, 1], strides = [1, 1]} : vector<4x8xf32> to vector<4x1xf32>
    %31 = vector.extract_strided_slice %15 {offsets = [2, 0], sizes = [1, 256], strides = [1, 1]} : vector<8x256xf32> to vector<1x256xf32>
    %32 = vector.broadcast %30 : vector<4x1xf32> to vector<4x256xf32>
    %33 = vector.broadcast %31 : vector<1x256xf32> to vector<4x256xf32>
    %34 = arith.mulf %32, %33 : vector<4x256xf32>
    %35 = arith.addf %29, %34 : vector<4x256xf32>
    %36 = vector.extract_strided_slice %17 {offsets = [0, 3], sizes = [4, 1], strides = [1, 1]} : vector<4x8xf32> to vector<4x1xf32>
    %37 = vector.extract_strided_slice %15 {offsets = [3, 0], sizes = [1, 256], strides = [1, 1]} : vector<8x256xf32> to vector<1x256xf32>
    %38 = vector.broadcast %36 : vector<4x1xf32> to vector<4x256xf32>
    %39 = vector.broadcast %37 : vector<1x256xf32> to vector<4x256xf32>
    %40 = arith.mulf %38, %39 : vector<4x256xf32>
    %41 = arith.addf %35, %40 : vector<4x256xf32>
    %42 = vector.extract_strided_slice %17 {offsets = [0, 4], sizes = [4, 1], strides = [1, 1]} : vector<4x8xf32> to vector<4x1xf32>
    %43 = vector.extract_strided_slice %15 {offsets = [4, 0], sizes = [1, 256], strides = [1, 1]} : vector<8x256xf32> to vector<1x256xf32>
    %44 = vector.broadcast %42 : vector<4x1xf32> to vector<4x256xf32>
    %45 = vector.broadcast %43 : vector<1x256xf32> to vector<4x256xf32>
    %46 = arith.mulf %44, %45 : vector<4x256xf32>
    %47 = arith.addf %41, %46 : vector<4x256xf32>
    %48 = vector.extract_strided_slice %17 {offsets = [0, 5], sizes = [4, 1], strides = [1, 1]} : vector<4x8xf32> to vector<4x1xf32>
    %49 = vector.extract_strided_slice %15 {offsets = [5, 0], sizes = [1, 256], strides = [1, 1]} : vector<8x256xf32> to vector<1x256xf32>
    %50 = vector.broadcast %48 : vector<4x1xf32> to vector<4x256xf32>
    %51 = vector.broadcast %49 : vector<1x256xf32> to vector<4x256xf32>
    %52 = arith.mulf %50, %51 : vector<4x256xf32>
    %53 = arith.addf %47, %52 : vector<4x256xf32>
    %54 = vector.extract_strided_slice %17 {offsets = [0, 6], sizes = [4, 1], strides = [1, 1]} : vector<4x8xf32> to vector<4x1xf32>
    %55 = vector.extract_strided_slice %15 {offsets = [6, 0], sizes = [1, 256], strides = [1, 1]} : vector<8x256xf32> to vector<1x256xf32>
    %56 = vector.broadcast %54 : vector<4x1xf32> to vector<4x256xf32>
    %57 = vector.broadcast %55 : vector<1x256xf32> to vector<4x256xf32>
    %58 = arith.mulf %56, %57 : vector<4x256xf32>
    %59 = arith.addf %53, %58 : vector<4x256xf32>
    %60 = vector.extract_strided_slice %17 {offsets = [0, 7], sizes = [4, 1], strides = [1, 1]} : vector<4x8xf32> to vector<4x1xf32>
    %61 = vector.extract_strided_slice %15 {offsets = [7, 0], sizes = [1, 256], strides = [1, 1]} : vector<8x256xf32> to vector<1x256xf32>
    %62 = vector.broadcast %60 : vector<4x1xf32> to vector<4x256xf32>
    %63 = vector.broadcast %61 : vector<1x256xf32> to vector<4x256xf32>
    %64 = arith.mulf %62, %63 : vector<4x256xf32>
    %65 = arith.addf %59, %64 : vector<4x256xf32>
    %66 = vector.extract_strided_slice %11 {offsets = [0, 112], sizes = [8, 256], strides = [1, 1]} : vector<8x512xf32> to vector<8x256xf32>
    %67 = vector.extract_strided_slice %6 {offsets = [1, 0, 0], sizes = [1, 4, 8], strides = [1, 1, 1]} : vector<9x4x8xf32> to vector<1x4x8xf32>
    %68 = vector.shape_cast %67 : vector<1x4x8xf32> to vector<4x8xf32>
    %69 = vector.extract_strided_slice %68 {offsets = [0, 0], sizes = [4, 1], strides = [1, 1]} : vector<4x8xf32> to vector<4x1xf32>
    %70 = vector.extract_strided_slice %66 {offsets = [0, 0], sizes = [1, 256], strides = [1, 1]} : vector<8x256xf32> to vector<1x256xf32>
    %71 = vector.broadcast %69 : vector<4x1xf32> to vector<4x256xf32>
    %72 = vector.broadcast %70 : vector<1x256xf32> to vector<4x256xf32>
    %73 = arith.mulf %71, %72 : vector<4x256xf32>
    %74 = arith.addf %65, %73 : vector<4x256xf32>
    %75 = vector.extract_strided_slice %68 {offsets = [0, 1], sizes = [4, 1], strides = [1, 1]} : vector<4x8xf32> to vector<4x1xf32>
    %76 = vector.extract_strided_slice %66 {offsets = [1, 0], sizes = [1, 256], strides = [1, 1]} : vector<8x256xf32> to vector<1x256xf32>
    %77 = vector.broadcast %75 : vector<4x1xf32> to vector<4x256xf32>
    %78 = vector.broadcast %76 : vector<1x256xf32> to vector<4x256xf32>
    %79 = arith.mulf %77, %78 : vector<4x256xf32>
    %80 = arith.addf %74, %79 : vector<4x256xf32>
    %81 = vector.extract_strided_slice %68 {offsets = [0, 2], sizes = [4, 1], strides = [1, 1]} : vector<4x8xf32> to vector<4x1xf32>
    %82 = vector.extract_strided_slice %66 {offsets = [2, 0], sizes = [1, 256], strides = [1, 1]} : vector<8x256xf32> to vector<1x256xf32>
    %83 = vector.broadcast %81 : vector<4x1xf32> to vector<4x256xf32>
    %84 = vector.broadcast %82 : vector<1x256xf32> to vector<4x256xf32>
    %85 = arith.mulf %83, %84 : vector<4x256xf32>
    %86 = arith.addf %80, %85 : vector<4x256xf32>
    %87 = vector.extract_strided_slice %68 {offsets = [0, 3], sizes = [4, 1], strides = [1, 1]} : vector<4x8xf32> to vector<4x1xf32>
    %88 = vector.extract_strided_slice %66 {offsets = [3, 0], sizes = [1, 256], strides = [1, 1]} : vector<8x256xf32> to vector<1x256xf32>
    %89 = vector.broadcast %87 : vector<4x1xf32> to vector<4x256xf32>
    %90 = vector.broadcast %88 : vector<1x256xf32> to vector<4x256xf32>
    %91 = arith.mulf %89, %90 : vector<4x256xf32>
    %92 = arith.addf %86, %91 : vector<4x256xf32>
    %93 = vector.extract_strided_slice %68 {offsets = [0, 4], sizes = [4, 1], strides = [1, 1]} : vector<4x8xf32> to vector<4x1xf32>
    %94 = vector.extract_strided_slice %66 {offsets = [4, 0], sizes = [1, 256], strides = [1, 1]} : vector<8x256xf32> to vector<1x256xf32>
    %95 = vector.broadcast %93 : vector<4x1xf32> to vector<4x256xf32>
    %96 = vector.broadcast %94 : vector<1x256xf32> to vector<4x256xf32>
    %97 = arith.mulf %95, %96 : vector<4x256xf32>
    %98 = arith.addf %92, %97 : vector<4x256xf32>
    %99 = vector.extract_strided_slice %68 {offsets = [0, 5], sizes = [4, 1], strides = [1, 1]} : vector<4x8xf32> to vector<4x1xf32>
    %100 = vector.extract_strided_slice %66 {offsets = [5, 0], sizes = [1, 256], strides = [1, 1]} : vector<8x256xf32> to vector<1x256xf32>
    %101 = vector.broadcast %99 : vector<4x1xf32> to vector<4x256xf32>
    %102 = vector.broadcast %100 : vector<1x256xf32> to vector<4x256xf32>
    %103 = arith.mulf %101, %102 : vector<4x256xf32>
    %104 = arith.addf %98, %103 : vector<4x256xf32>
    %105 = vector.extract_strided_slice %68 {offsets = [0, 6], sizes = [4, 1], strides = [1, 1]} : vector<4x8xf32> to vector<4x1xf32>
    %106 = vector.extract_strided_slice %66 {offsets = [6, 0], sizes = [1, 256], strides = [1, 1]} : vector<8x256xf32> to vector<1x256xf32>
    %107 = vector.broadcast %105 : vector<4x1xf32> to vector<4x256xf32>
    %108 = vector.broadcast %106 : vector<1x256xf32> to vector<4x256xf32>
    %109 = arith.mulf %107, %108 : vector<4x256xf32>
    %110 = arith.addf %104, %109 : vector<4x256xf32>
    %111 = vector.extract_strided_slice %68 {offsets = [0, 7], sizes = [4, 1], strides = [1, 1]} : vector<4x8xf32> to vector<4x1xf32>
    %112 = vector.extract_strided_slice %66 {offsets = [7, 0], sizes = [1, 256], strides = [1, 1]} : vector<8x256xf32> to vector<1x256xf32>
    %113 = vector.broadcast %111 : vector<4x1xf32> to vector<4x256xf32>
    %114 = vector.broadcast %112 : vector<1x256xf32> to vector<4x256xf32>
    %115 = arith.mulf %113, %114 : vector<4x256xf32>
    %116 = arith.addf %110, %115 : vector<4x256xf32>
    %117 = vector.extract_strided_slice %11 {offsets = [0, 113], sizes = [8, 256], strides = [1, 1]} : vector<8x512xf32> to vector<8x256xf32>
    %118 = vector.broadcast %9 : vector<1x256xf32> to vector<8x256xf32>
    %119 = arith.mulf %117, %118 : vector<8x256xf32>
    %120 = vector.extract_strided_slice %6 {offsets = [2, 0, 0], sizes = [1, 4, 8], strides = [1, 1, 1]} : vector<9x4x8xf32> to vector<1x4x8xf32>
    %121 = vector.shape_cast %120 : vector<1x4x8xf32> to vector<4x8xf32>
    %122 = vector.extract_strided_slice %121 {offsets = [0, 0], sizes = [4, 1], strides = [1, 1]} : vector<4x8xf32> to vector<4x1xf32>
    %123 = vector.extract_strided_slice %119 {offsets = [0, 0], sizes = [1, 256], strides = [1, 1]} : vector<8x256xf32> to vector<1x256xf32>
    %124 = vector.broadcast %122 : vector<4x1xf32> to vector<4x256xf32>
    %125 = vector.broadcast %123 : vector<1x256xf32> to vector<4x256xf32>
    %126 = arith.mulf %124, %125 : vector<4x256xf32>
    %127 = arith.addf %116, %126 : vector<4x256xf32>
    %128 = vector.extract_strided_slice %121 {offsets = [0, 1], sizes = [4, 1], strides = [1, 1]} : vector<4x8xf32> to vector<4x1xf32>
    %129 = vector.extract_strided_slice %119 {offsets = [1, 0], sizes = [1, 256], strides = [1, 1]} : vector<8x256xf32> to vector<1x256xf32>
    %130 = vector.broadcast %128 : vector<4x1xf32> to vector<4x256xf32>
    %131 = vector.broadcast %129 : vector<1x256xf32> to vector<4x256xf32>
    %132 = arith.mulf %130, %131 : vector<4x256xf32>
    %133 = arith.addf %127, %132 : vector<4x256xf32>
    %134 = vector.extract_strided_slice %121 {offsets = [0, 2], sizes = [4, 1], strides = [1, 1]} : vector<4x8xf32> to vector<4x1xf32>
    %135 = vector.extract_strided_slice %119 {offsets = [2, 0], sizes = [1, 256], strides = [1, 1]} : vector<8x256xf32> to vector<1x256xf32>
    %136 = vector.broadcast %134 : vector<4x1xf32> to vector<4x256xf32>
    %137 = vector.broadcast %135 : vector<1x256xf32> to vector<4x256xf32>
    %138 = arith.mulf %136, %137 : vector<4x256xf32>
    %139 = arith.addf %133, %138 : vector<4x256xf32>
    %140 = vector.extract_strided_slice %121 {offsets = [0, 3], sizes = [4, 1], strides = [1, 1]} : vector<4x8xf32> to vector<4x1xf32>
    %141 = vector.extract_strided_slice %119 {offsets = [3, 0], sizes = [1, 256], strides = [1, 1]} : vector<8x256xf32> to vector<1x256xf32>
    %142 = vector.broadcast %140 : vector<4x1xf32> to vector<4x256xf32>
    %143 = vector.broadcast %141 : vector<1x256xf32> to vector<4x256xf32>
    %144 = arith.mulf %142, %143 : vector<4x256xf32>
    %145 = arith.addf %139, %144 : vector<4x256xf32>
    %146 = vector.extract_strided_slice %121 {offsets = [0, 4], sizes = [4, 1], strides = [1, 1]} : vector<4x8xf32> to vector<4x1xf32>
    %147 = vector.extract_strided_slice %119 {offsets = [4, 0], sizes = [1, 256], strides = [1, 1]} : vector<8x256xf32> to vector<1x256xf32>
    %148 = vector.broadcast %146 : vector<4x1xf32> to vector<4x256xf32>
    %149 = vector.broadcast %147 : vector<1x256xf32> to vector<4x256xf32>
    %150 = arith.mulf %148, %149 : vector<4x256xf32>
    %151 = arith.addf %145, %150 : vector<4x256xf32>
    %152 = vector.extract_strided_slice %121 {offsets = [0, 5], sizes = [4, 1], strides = [1, 1]} : vector<4x8xf32> to vector<4x1xf32>
    %153 = vector.extract_strided_slice %119 {offsets = [5, 0], sizes = [1, 256], strides = [1, 1]} : vector<8x256xf32> to vector<1x256xf32>
    %154 = vector.broadcast %152 : vector<4x1xf32> to vector<4x256xf32>
    %155 = vector.broadcast %153 : vector<1x256xf32> to vector<4x256xf32>
    %156 = arith.mulf %154, %155 : vector<4x256xf32>
    %157 = arith.addf %151, %156 : vector<4x256xf32>
    %158 = vector.extract_strided_slice %121 {offsets = [0, 6], sizes = [4, 1], strides = [1, 1]} : vector<4x8xf32> to vector<4x1xf32>
    %159 = vector.extract_strided_slice %119 {offsets = [6, 0], sizes = [1, 256], strides = [1, 1]} : vector<8x256xf32> to vector<1x256xf32>
    %160 = vector.broadcast %158 : vector<4x1xf32> to vector<4x256xf32>
    %161 = vector.broadcast %159 : vector<1x256xf32> to vector<4x256xf32>
    %162 = arith.mulf %160, %161 : vector<4x256xf32>
    %163 = arith.addf %157, %162 : vector<4x256xf32>
    %164 = vector.extract_strided_slice %121 {offsets = [0, 7], sizes = [4, 1], strides = [1, 1]} : vector<4x8xf32> to vector<4x1xf32>
    %165 = vector.extract_strided_slice %119 {offsets = [7, 0], sizes = [1, 256], strides = [1, 1]} : vector<8x256xf32> to vector<1x256xf32>
    %166 = vector.broadcast %164 : vector<4x1xf32> to vector<4x256xf32>
    %167 = vector.broadcast %165 : vector<1x256xf32> to vector<4x256xf32>
    %168 = arith.mulf %166, %167 : vector<4x256xf32>
    %169 = arith.addf %163, %168 : vector<4x256xf32>
    %170 = vector.extract_strided_slice %11 {offsets = [0, 127], sizes = [8, 256], strides = [1, 1]} : vector<8x512xf32> to vector<8x256xf32>
    %171 = vector.broadcast %8 : vector<1x256xf32> to vector<8x256xf32>
    %172 = arith.mulf %170, %171 : vector<8x256xf32>
    %173 = vector.extract_strided_slice %6 {offsets = [3, 0, 0], sizes = [1, 4, 8], strides = [1, 1, 1]} : vector<9x4x8xf32> to vector<1x4x8xf32>
    %174 = vector.shape_cast %173 : vector<1x4x8xf32> to vector<4x8xf32>
    %175 = vector.extract_strided_slice %174 {offsets = [0, 0], sizes = [4, 1], strides = [1, 1]} : vector<4x8xf32> to vector<4x1xf32>
    %176 = vector.extract_strided_slice %172 {offsets = [0, 0], sizes = [1, 256], strides = [1, 1]} : vector<8x256xf32> to vector<1x256xf32>
    %177 = vector.broadcast %175 : vector<4x1xf32> to vector<4x256xf32>
    %178 = vector.broadcast %176 : vector<1x256xf32> to vector<4x256xf32>
    %179 = arith.mulf %177, %178 : vector<4x256xf32>
    %180 = arith.addf %169, %179 : vector<4x256xf32>
    %181 = vector.extract_strided_slice %174 {offsets = [0, 1], sizes = [4, 1], strides = [1, 1]} : vector<4x8xf32> to vector<4x1xf32>
    %182 = vector.extract_strided_slice %172 {offsets = [1, 0], sizes = [1, 256], strides = [1, 1]} : vector<8x256xf32> to vector<1x256xf32>
    %183 = vector.broadcast %181 : vector<4x1xf32> to vector<4x256xf32>
    %184 = vector.broadcast %182 : vector<1x256xf32> to vector<4x256xf32>
    %185 = arith.mulf %183, %184 : vector<4x256xf32>
    %186 = arith.addf %180, %185 : vector<4x256xf32>
    %187 = vector.extract_strided_slice %174 {offsets = [0, 2], sizes = [4, 1], strides = [1, 1]} : vector<4x8xf32> to vector<4x1xf32>
    %188 = vector.extract_strided_slice %172 {offsets = [2, 0], sizes = [1, 256], strides = [1, 1]} : vector<8x256xf32> to vector<1x256xf32>
    %189 = vector.broadcast %187 : vector<4x1xf32> to vector<4x256xf32>
    %190 = vector.broadcast %188 : vector<1x256xf32> to vector<4x256xf32>
    %191 = arith.mulf %189, %190 : vector<4x256xf32>
    %192 = arith.addf %186, %191 : vector<4x256xf32>
    %193 = vector.extract_strided_slice %174 {offsets = [0, 3], sizes = [4, 1], strides = [1, 1]} : vector<4x8xf32> to vector<4x1xf32>
    %194 = vector.extract_strided_slice %172 {offsets = [3, 0], sizes = [1, 256], strides = [1, 1]} : vector<8x256xf32> to vector<1x256xf32>
    %195 = vector.broadcast %193 : vector<4x1xf32> to vector<4x256xf32>
    %196 = vector.broadcast %194 : vector<1x256xf32> to vector<4x256xf32>
    %197 = arith.mulf %195, %196 : vector<4x256xf32>
    %198 = arith.addf %192, %197 : vector<4x256xf32>
    %199 = vector.extract_strided_slice %174 {offsets = [0, 4], sizes = [4, 1], strides = [1, 1]} : vector<4x8xf32> to vector<4x1xf32>
    %200 = vector.extract_strided_slice %172 {offsets = [4, 0], sizes = [1, 256], strides = [1, 1]} : vector<8x256xf32> to vector<1x256xf32>
    %201 = vector.broadcast %199 : vector<4x1xf32> to vector<4x256xf32>
    %202 = vector.broadcast %200 : vector<1x256xf32> to vector<4x256xf32>
    %203 = arith.mulf %201, %202 : vector<4x256xf32>
    %204 = arith.addf %198, %203 : vector<4x256xf32>
    %205 = vector.extract_strided_slice %174 {offsets = [0, 5], sizes = [4, 1], strides = [1, 1]} : vector<4x8xf32> to vector<4x1xf32>
    %206 = vector.extract_strided_slice %172 {offsets = [5, 0], sizes = [1, 256], strides = [1, 1]} : vector<8x256xf32> to vector<1x256xf32>
    %207 = vector.broadcast %205 : vector<4x1xf32> to vector<4x256xf32>
    %208 = vector.broadcast %206 : vector<1x256xf32> to vector<4x256xf32>
    %209 = arith.mulf %207, %208 : vector<4x256xf32>
    %210 = arith.addf %204, %209 : vector<4x256xf32>
    %211 = vector.extract_strided_slice %174 {offsets = [0, 6], sizes = [4, 1], strides = [1, 1]} : vector<4x8xf32> to vector<4x1xf32>
    %212 = vector.extract_strided_slice %172 {offsets = [6, 0], sizes = [1, 256], strides = [1, 1]} : vector<8x256xf32> to vector<1x256xf32>
    %213 = vector.broadcast %211 : vector<4x1xf32> to vector<4x256xf32>
    %214 = vector.broadcast %212 : vector<1x256xf32> to vector<4x256xf32>
    %215 = arith.mulf %213, %214 : vector<4x256xf32>
    %216 = arith.addf %210, %215 : vector<4x256xf32>
    %217 = vector.extract_strided_slice %174 {offsets = [0, 7], sizes = [4, 1], strides = [1, 1]} : vector<4x8xf32> to vector<4x1xf32>
    %218 = vector.extract_strided_slice %172 {offsets = [7, 0], sizes = [1, 256], strides = [1, 1]} : vector<8x256xf32> to vector<1x256xf32>
    %219 = vector.broadcast %217 : vector<4x1xf32> to vector<4x256xf32>
    %220 = vector.broadcast %218 : vector<1x256xf32> to vector<4x256xf32>
    %221 = arith.mulf %219, %220 : vector<4x256xf32>
    %222 = arith.addf %216, %221 : vector<4x256xf32>
    %223 = vector.extract_strided_slice %11 {offsets = [0, 128], sizes = [8, 256], strides = [1, 1]} : vector<8x512xf32> to vector<8x256xf32>
    %224 = vector.extract_strided_slice %6 {offsets = [4, 0, 0], sizes = [1, 4, 8], strides = [1, 1, 1]} : vector<9x4x8xf32> to vector<1x4x8xf32>
    %225 = vector.shape_cast %224 : vector<1x4x8xf32> to vector<4x8xf32>
    %226 = vector.extract_strided_slice %225 {offsets = [0, 0], sizes = [4, 1], strides = [1, 1]} : vector<4x8xf32> to vector<4x1xf32>
    %227 = vector.extract_strided_slice %223 {offsets = [0, 0], sizes = [1, 256], strides = [1, 1]} : vector<8x256xf32> to vector<1x256xf32>
    %228 = vector.broadcast %226 : vector<4x1xf32> to vector<4x256xf32>
    %229 = vector.broadcast %227 : vector<1x256xf32> to vector<4x256xf32>
    %230 = arith.mulf %228, %229 : vector<4x256xf32>
    %231 = arith.addf %222, %230 : vector<4x256xf32>
    %232 = vector.extract_strided_slice %225 {offsets = [0, 1], sizes = [4, 1], strides = [1, 1]} : vector<4x8xf32> to vector<4x1xf32>
    %233 = vector.extract_strided_slice %223 {offsets = [1, 0], sizes = [1, 256], strides = [1, 1]} : vector<8x256xf32> to vector<1x256xf32>
    %234 = vector.broadcast %232 : vector<4x1xf32> to vector<4x256xf32>
    %235 = vector.broadcast %233 : vector<1x256xf32> to vector<4x256xf32>
    %236 = arith.mulf %234, %235 : vector<4x256xf32>
    %237 = arith.addf %231, %236 : vector<4x256xf32>
    %238 = vector.extract_strided_slice %225 {offsets = [0, 2], sizes = [4, 1], strides = [1, 1]} : vector<4x8xf32> to vector<4x1xf32>
    %239 = vector.extract_strided_slice %223 {offsets = [2, 0], sizes = [1, 256], strides = [1, 1]} : vector<8x256xf32> to vector<1x256xf32>
    %240 = vector.broadcast %238 : vector<4x1xf32> to vector<4x256xf32>
    %241 = vector.broadcast %239 : vector<1x256xf32> to vector<4x256xf32>
    %242 = arith.mulf %240, %241 : vector<4x256xf32>
    %243 = arith.addf %237, %242 : vector<4x256xf32>
    %244 = vector.extract_strided_slice %225 {offsets = [0, 3], sizes = [4, 1], strides = [1, 1]} : vector<4x8xf32> to vector<4x1xf32>
    %245 = vector.extract_strided_slice %223 {offsets = [3, 0], sizes = [1, 256], strides = [1, 1]} : vector<8x256xf32> to vector<1x256xf32>
    %246 = vector.broadcast %244 : vector<4x1xf32> to vector<4x256xf32>
    %247 = vector.broadcast %245 : vector<1x256xf32> to vector<4x256xf32>
    %248 = arith.mulf %246, %247 : vector<4x256xf32>
    %249 = arith.addf %243, %248 : vector<4x256xf32>
    %250 = vector.extract_strided_slice %225 {offsets = [0, 4], sizes = [4, 1], strides = [1, 1]} : vector<4x8xf32> to vector<4x1xf32>
    %251 = vector.extract_strided_slice %223 {offsets = [4, 0], sizes = [1, 256], strides = [1, 1]} : vector<8x256xf32> to vector<1x256xf32>
    %252 = vector.broadcast %250 : vector<4x1xf32> to vector<4x256xf32>
    %253 = vector.broadcast %251 : vector<1x256xf32> to vector<4x256xf32>
    %254 = arith.mulf %252, %253 : vector<4x256xf32>
    %255 = arith.addf %249, %254 : vector<4x256xf32>
    %256 = vector.extract_strided_slice %225 {offsets = [0, 5], sizes = [4, 1], strides = [1, 1]} : vector<4x8xf32> to vector<4x1xf32>
    %257 = vector.extract_strided_slice %223 {offsets = [5, 0], sizes = [1, 256], strides = [1, 1]} : vector<8x256xf32> to vector<1x256xf32>
    %258 = vector.broadcast %256 : vector<4x1xf32> to vector<4x256xf32>
    %259 = vector.broadcast %257 : vector<1x256xf32> to vector<4x256xf32>
    %260 = arith.mulf %258, %259 : vector<4x256xf32>
    %261 = arith.addf %255, %260 : vector<4x256xf32>
    %262 = vector.extract_strided_slice %225 {offsets = [0, 6], sizes = [4, 1], strides = [1, 1]} : vector<4x8xf32> to vector<4x1xf32>
    %263 = vector.extract_strided_slice %223 {offsets = [6, 0], sizes = [1, 256], strides = [1, 1]} : vector<8x256xf32> to vector<1x256xf32>
    %264 = vector.broadcast %262 : vector<4x1xf32> to vector<4x256xf32>
    %265 = vector.broadcast %263 : vector<1x256xf32> to vector<4x256xf32>
    %266 = arith.mulf %264, %265 : vector<4x256xf32>
    %267 = arith.addf %261, %266 : vector<4x256xf32>
    %268 = vector.extract_strided_slice %225 {offsets = [0, 7], sizes = [4, 1], strides = [1, 1]} : vector<4x8xf32> to vector<4x1xf32>
    %269 = vector.extract_strided_slice %223 {offsets = [7, 0], sizes = [1, 256], strides = [1, 1]} : vector<8x256xf32> to vector<1x256xf32>
    %270 = vector.broadcast %268 : vector<4x1xf32> to vector<4x256xf32>
    %271 = vector.broadcast %269 : vector<1x256xf32> to vector<4x256xf32>
    %272 = arith.mulf %270, %271 : vector<4x256xf32>
    %273 = arith.addf %267, %272 : vector<4x256xf32>
    %274 = vector.extract_strided_slice %11 {offsets = [0, 129], sizes = [8, 256], strides = [1, 1]} : vector<8x512xf32> to vector<8x256xf32>
    %275 = vector.broadcast %9 : vector<1x256xf32> to vector<8x256xf32>
    %276 = arith.mulf %274, %275 : vector<8x256xf32>
    %277 = vector.extract_strided_slice %6 {offsets = [5, 0, 0], sizes = [1, 4, 8], strides = [1, 1, 1]} : vector<9x4x8xf32> to vector<1x4x8xf32>
    %278 = vector.shape_cast %277 : vector<1x4x8xf32> to vector<4x8xf32>
    %279 = vector.extract_strided_slice %278 {offsets = [0, 0], sizes = [4, 1], strides = [1, 1]} : vector<4x8xf32> to vector<4x1xf32>
    %280 = vector.extract_strided_slice %276 {offsets = [0, 0], sizes = [1, 256], strides = [1, 1]} : vector<8x256xf32> to vector<1x256xf32>
    %281 = vector.broadcast %279 : vector<4x1xf32> to vector<4x256xf32>
    %282 = vector.broadcast %280 : vector<1x256xf32> to vector<4x256xf32>
    %283 = arith.mulf %281, %282 : vector<4x256xf32>
    %284 = arith.addf %273, %283 : vector<4x256xf32>
    %285 = vector.extract_strided_slice %278 {offsets = [0, 1], sizes = [4, 1], strides = [1, 1]} : vector<4x8xf32> to vector<4x1xf32>
    %286 = vector.extract_strided_slice %276 {offsets = [1, 0], sizes = [1, 256], strides = [1, 1]} : vector<8x256xf32> to vector<1x256xf32>
    %287 = vector.broadcast %285 : vector<4x1xf32> to vector<4x256xf32>
    %288 = vector.broadcast %286 : vector<1x256xf32> to vector<4x256xf32>
    %289 = arith.mulf %287, %288 : vector<4x256xf32>
    %290 = arith.addf %284, %289 : vector<4x256xf32>
    %291 = vector.extract_strided_slice %278 {offsets = [0, 2], sizes = [4, 1], strides = [1, 1]} : vector<4x8xf32> to vector<4x1xf32>
    %292 = vector.extract_strided_slice %276 {offsets = [2, 0], sizes = [1, 256], strides = [1, 1]} : vector<8x256xf32> to vector<1x256xf32>
    %293 = vector.broadcast %291 : vector<4x1xf32> to vector<4x256xf32>
    %294 = vector.broadcast %292 : vector<1x256xf32> to vector<4x256xf32>
    %295 = arith.mulf %293, %294 : vector<4x256xf32>
    %296 = arith.addf %290, %295 : vector<4x256xf32>
    %297 = vector.extract_strided_slice %278 {offsets = [0, 3], sizes = [4, 1], strides = [1, 1]} : vector<4x8xf32> to vector<4x1xf32>
    %298 = vector.extract_strided_slice %276 {offsets = [3, 0], sizes = [1, 256], strides = [1, 1]} : vector<8x256xf32> to vector<1x256xf32>
    %299 = vector.broadcast %297 : vector<4x1xf32> to vector<4x256xf32>
    %300 = vector.broadcast %298 : vector<1x256xf32> to vector<4x256xf32>
    %301 = arith.mulf %299, %300 : vector<4x256xf32>
    %302 = arith.addf %296, %301 : vector<4x256xf32>
    %303 = vector.extract_strided_slice %278 {offsets = [0, 4], sizes = [4, 1], strides = [1, 1]} : vector<4x8xf32> to vector<4x1xf32>
    %304 = vector.extract_strided_slice %276 {offsets = [4, 0], sizes = [1, 256], strides = [1, 1]} : vector<8x256xf32> to vector<1x256xf32>
    %305 = vector.broadcast %303 : vector<4x1xf32> to vector<4x256xf32>
    %306 = vector.broadcast %304 : vector<1x256xf32> to vector<4x256xf32>
    %307 = arith.mulf %305, %306 : vector<4x256xf32>
    %308 = arith.addf %302, %307 : vector<4x256xf32>
    %309 = vector.extract_strided_slice %278 {offsets = [0, 5], sizes = [4, 1], strides = [1, 1]} : vector<4x8xf32> to vector<4x1xf32>
    %310 = vector.extract_strided_slice %276 {offsets = [5, 0], sizes = [1, 256], strides = [1, 1]} : vector<8x256xf32> to vector<1x256xf32>
    %311 = vector.broadcast %309 : vector<4x1xf32> to vector<4x256xf32>
    %312 = vector.broadcast %310 : vector<1x256xf32> to vector<4x256xf32>
    %313 = arith.mulf %311, %312 : vector<4x256xf32>
    %314 = arith.addf %308, %313 : vector<4x256xf32>
    %315 = vector.extract_strided_slice %278 {offsets = [0, 6], sizes = [4, 1], strides = [1, 1]} : vector<4x8xf32> to vector<4x1xf32>
    %316 = vector.extract_strided_slice %276 {offsets = [6, 0], sizes = [1, 256], strides = [1, 1]} : vector<8x256xf32> to vector<1x256xf32>
    %317 = vector.broadcast %315 : vector<4x1xf32> to vector<4x256xf32>
    %318 = vector.broadcast %316 : vector<1x256xf32> to vector<4x256xf32>
    %319 = arith.mulf %317, %318 : vector<4x256xf32>
    %320 = arith.addf %314, %319 : vector<4x256xf32>
    %321 = vector.extract_strided_slice %278 {offsets = [0, 7], sizes = [4, 1], strides = [1, 1]} : vector<4x8xf32> to vector<4x1xf32>
    %322 = vector.extract_strided_slice %276 {offsets = [7, 0], sizes = [1, 256], strides = [1, 1]} : vector<8x256xf32> to vector<1x256xf32>
    %323 = vector.broadcast %321 : vector<4x1xf32> to vector<4x256xf32>
    %324 = vector.broadcast %322 : vector<1x256xf32> to vector<4x256xf32>
    %325 = arith.mulf %323, %324 : vector<4x256xf32>
    %326 = arith.addf %320, %325 : vector<4x256xf32>
    %327 = vector.extract_strided_slice %11 {offsets = [0, 143], sizes = [8, 256], strides = [1, 1]} : vector<8x512xf32> to vector<8x256xf32>
    %328 = vector.broadcast %8 : vector<1x256xf32> to vector<8x256xf32>
    %329 = arith.mulf %327, %328 : vector<8x256xf32>
    %330 = vector.extract_strided_slice %6 {offsets = [6, 0, 0], sizes = [1, 4, 8], strides = [1, 1, 1]} : vector<9x4x8xf32> to vector<1x4x8xf32>
    %331 = vector.shape_cast %330 : vector<1x4x8xf32> to vector<4x8xf32>
    %332 = vector.extract_strided_slice %331 {offsets = [0, 0], sizes = [4, 1], strides = [1, 1]} : vector<4x8xf32> to vector<4x1xf32>
    %333 = vector.extract_strided_slice %329 {offsets = [0, 0], sizes = [1, 256], strides = [1, 1]} : vector<8x256xf32> to vector<1x256xf32>
    %334 = vector.broadcast %332 : vector<4x1xf32> to vector<4x256xf32>
    %335 = vector.broadcast %333 : vector<1x256xf32> to vector<4x256xf32>
    %336 = arith.mulf %334, %335 : vector<4x256xf32>
    %337 = arith.addf %326, %336 : vector<4x256xf32>
    %338 = vector.extract_strided_slice %331 {offsets = [0, 1], sizes = [4, 1], strides = [1, 1]} : vector<4x8xf32> to vector<4x1xf32>
    %339 = vector.extract_strided_slice %329 {offsets = [1, 0], sizes = [1, 256], strides = [1, 1]} : vector<8x256xf32> to vector<1x256xf32>
    %340 = vector.broadcast %338 : vector<4x1xf32> to vector<4x256xf32>
    %341 = vector.broadcast %339 : vector<1x256xf32> to vector<4x256xf32>
    %342 = arith.mulf %340, %341 : vector<4x256xf32>
    %343 = arith.addf %337, %342 : vector<4x256xf32>
    %344 = vector.extract_strided_slice %331 {offsets = [0, 2], sizes = [4, 1], strides = [1, 1]} : vector<4x8xf32> to vector<4x1xf32>
    %345 = vector.extract_strided_slice %329 {offsets = [2, 0], sizes = [1, 256], strides = [1, 1]} : vector<8x256xf32> to vector<1x256xf32>
    %346 = vector.broadcast %344 : vector<4x1xf32> to vector<4x256xf32>
    %347 = vector.broadcast %345 : vector<1x256xf32> to vector<4x256xf32>
    %348 = arith.mulf %346, %347 : vector<4x256xf32>
    %349 = arith.addf %343, %348 : vector<4x256xf32>
    %350 = vector.extract_strided_slice %331 {offsets = [0, 3], sizes = [4, 1], strides = [1, 1]} : vector<4x8xf32> to vector<4x1xf32>
    %351 = vector.extract_strided_slice %329 {offsets = [3, 0], sizes = [1, 256], strides = [1, 1]} : vector<8x256xf32> to vector<1x256xf32>
    %352 = vector.broadcast %350 : vector<4x1xf32> to vector<4x256xf32>
    %353 = vector.broadcast %351 : vector<1x256xf32> to vector<4x256xf32>
    %354 = arith.mulf %352, %353 : vector<4x256xf32>
    %355 = arith.addf %349, %354 : vector<4x256xf32>
    %356 = vector.extract_strided_slice %331 {offsets = [0, 4], sizes = [4, 1], strides = [1, 1]} : vector<4x8xf32> to vector<4x1xf32>
    %357 = vector.extract_strided_slice %329 {offsets = [4, 0], sizes = [1, 256], strides = [1, 1]} : vector<8x256xf32> to vector<1x256xf32>
    %358 = vector.broadcast %356 : vector<4x1xf32> to vector<4x256xf32>
    %359 = vector.broadcast %357 : vector<1x256xf32> to vector<4x256xf32>
    %360 = arith.mulf %358, %359 : vector<4x256xf32>
    %361 = arith.addf %355, %360 : vector<4x256xf32>
    %362 = vector.extract_strided_slice %331 {offsets = [0, 5], sizes = [4, 1], strides = [1, 1]} : vector<4x8xf32> to vector<4x1xf32>
    %363 = vector.extract_strided_slice %329 {offsets = [5, 0], sizes = [1, 256], strides = [1, 1]} : vector<8x256xf32> to vector<1x256xf32>
    %364 = vector.broadcast %362 : vector<4x1xf32> to vector<4x256xf32>
    %365 = vector.broadcast %363 : vector<1x256xf32> to vector<4x256xf32>
    %366 = arith.mulf %364, %365 : vector<4x256xf32>
    %367 = arith.addf %361, %366 : vector<4x256xf32>
    %368 = vector.extract_strided_slice %331 {offsets = [0, 6], sizes = [4, 1], strides = [1, 1]} : vector<4x8xf32> to vector<4x1xf32>
    %369 = vector.extract_strided_slice %329 {offsets = [6, 0], sizes = [1, 256], strides = [1, 1]} : vector<8x256xf32> to vector<1x256xf32>
    %370 = vector.broadcast %368 : vector<4x1xf32> to vector<4x256xf32>
    %371 = vector.broadcast %369 : vector<1x256xf32> to vector<4x256xf32>
    %372 = arith.mulf %370, %371 : vector<4x256xf32>
    %373 = arith.addf %367, %372 : vector<4x256xf32>
    %374 = vector.extract_strided_slice %331 {offsets = [0, 7], sizes = [4, 1], strides = [1, 1]} : vector<4x8xf32> to vector<4x1xf32>
    %375 = vector.extract_strided_slice %329 {offsets = [7, 0], sizes = [1, 256], strides = [1, 1]} : vector<8x256xf32> to vector<1x256xf32>
    %376 = vector.broadcast %374 : vector<4x1xf32> to vector<4x256xf32>
    %377 = vector.broadcast %375 : vector<1x256xf32> to vector<4x256xf32>
    %378 = arith.mulf %376, %377 : vector<4x256xf32>
    %379 = arith.addf %373, %378 : vector<4x256xf32>
    %380 = vector.extract_strided_slice %11 {offsets = [0, 144], sizes = [8, 256], strides = [1, 1]} : vector<8x512xf32> to vector<8x256xf32>
    %381 = vector.extract_strided_slice %6 {offsets = [7, 0, 0], sizes = [1, 4, 8], strides = [1, 1, 1]} : vector<9x4x8xf32> to vector<1x4x8xf32>
    %382 = vector.shape_cast %381 : vector<1x4x8xf32> to vector<4x8xf32>
    %383 = vector.extract_strided_slice %382 {offsets = [0, 0], sizes = [4, 1], strides = [1, 1]} : vector<4x8xf32> to vector<4x1xf32>
    %384 = vector.extract_strided_slice %380 {offsets = [0, 0], sizes = [1, 256], strides = [1, 1]} : vector<8x256xf32> to vector<1x256xf32>
    %385 = vector.broadcast %383 : vector<4x1xf32> to vector<4x256xf32>
    %386 = vector.broadcast %384 : vector<1x256xf32> to vector<4x256xf32>
    %387 = arith.mulf %385, %386 : vector<4x256xf32>
    %388 = arith.addf %379, %387 : vector<4x256xf32>
    %389 = vector.extract_strided_slice %382 {offsets = [0, 1], sizes = [4, 1], strides = [1, 1]} : vector<4x8xf32> to vector<4x1xf32>
    %390 = vector.extract_strided_slice %380 {offsets = [1, 0], sizes = [1, 256], strides = [1, 1]} : vector<8x256xf32> to vector<1x256xf32>
    %391 = vector.broadcast %389 : vector<4x1xf32> to vector<4x256xf32>
    %392 = vector.broadcast %390 : vector<1x256xf32> to vector<4x256xf32>
    %393 = arith.mulf %391, %392 : vector<4x256xf32>
    %394 = arith.addf %388, %393 : vector<4x256xf32>
    %395 = vector.extract_strided_slice %382 {offsets = [0, 2], sizes = [4, 1], strides = [1, 1]} : vector<4x8xf32> to vector<4x1xf32>
    %396 = vector.extract_strided_slice %380 {offsets = [2, 0], sizes = [1, 256], strides = [1, 1]} : vector<8x256xf32> to vector<1x256xf32>
    %397 = vector.broadcast %395 : vector<4x1xf32> to vector<4x256xf32>
    %398 = vector.broadcast %396 : vector<1x256xf32> to vector<4x256xf32>
    %399 = arith.mulf %397, %398 : vector<4x256xf32>
    %400 = arith.addf %394, %399 : vector<4x256xf32>
    %401 = vector.extract_strided_slice %382 {offsets = [0, 3], sizes = [4, 1], strides = [1, 1]} : vector<4x8xf32> to vector<4x1xf32>
    %402 = vector.extract_strided_slice %380 {offsets = [3, 0], sizes = [1, 256], strides = [1, 1]} : vector<8x256xf32> to vector<1x256xf32>
    %403 = vector.broadcast %401 : vector<4x1xf32> to vector<4x256xf32>
    %404 = vector.broadcast %402 : vector<1x256xf32> to vector<4x256xf32>
    %405 = arith.mulf %403, %404 : vector<4x256xf32>
    %406 = arith.addf %400, %405 : vector<4x256xf32>
    %407 = vector.extract_strided_slice %382 {offsets = [0, 4], sizes = [4, 1], strides = [1, 1]} : vector<4x8xf32> to vector<4x1xf32>
    %408 = vector.extract_strided_slice %380 {offsets = [4, 0], sizes = [1, 256], strides = [1, 1]} : vector<8x256xf32> to vector<1x256xf32>
    %409 = vector.broadcast %407 : vector<4x1xf32> to vector<4x256xf32>
    %410 = vector.broadcast %408 : vector<1x256xf32> to vector<4x256xf32>
    %411 = arith.mulf %409, %410 : vector<4x256xf32>
    %412 = arith.addf %406, %411 : vector<4x256xf32>
    %413 = vector.extract_strided_slice %382 {offsets = [0, 5], sizes = [4, 1], strides = [1, 1]} : vector<4x8xf32> to vector<4x1xf32>
    %414 = vector.extract_strided_slice %380 {offsets = [5, 0], sizes = [1, 256], strides = [1, 1]} : vector<8x256xf32> to vector<1x256xf32>
    %415 = vector.broadcast %413 : vector<4x1xf32> to vector<4x256xf32>
    %416 = vector.broadcast %414 : vector<1x256xf32> to vector<4x256xf32>
    %417 = arith.mulf %415, %416 : vector<4x256xf32>
    %418 = arith.addf %412, %417 : vector<4x256xf32>
    %419 = vector.extract_strided_slice %382 {offsets = [0, 6], sizes = [4, 1], strides = [1, 1]} : vector<4x8xf32> to vector<4x1xf32>
    %420 = vector.extract_strided_slice %380 {offsets = [6, 0], sizes = [1, 256], strides = [1, 1]} : vector<8x256xf32> to vector<1x256xf32>
    %421 = vector.broadcast %419 : vector<4x1xf32> to vector<4x256xf32>
    %422 = vector.broadcast %420 : vector<1x256xf32> to vector<4x256xf32>
    %423 = arith.mulf %421, %422 : vector<4x256xf32>
    %424 = arith.addf %418, %423 : vector<4x256xf32>
    %425 = vector.extract_strided_slice %382 {offsets = [0, 7], sizes = [4, 1], strides = [1, 1]} : vector<4x8xf32> to vector<4x1xf32>
    %426 = vector.extract_strided_slice %380 {offsets = [7, 0], sizes = [1, 256], strides = [1, 1]} : vector<8x256xf32> to vector<1x256xf32>
    %427 = vector.broadcast %425 : vector<4x1xf32> to vector<4x256xf32>
    %428 = vector.broadcast %426 : vector<1x256xf32> to vector<4x256xf32>
    %429 = arith.mulf %427, %428 : vector<4x256xf32>
    %430 = arith.addf %424, %429 : vector<4x256xf32>
    %431 = vector.extract_strided_slice %11 {offsets = [0, 145], sizes = [8, 256], strides = [1, 1]} : vector<8x512xf32> to vector<8x256xf32>
    %432 = vector.broadcast %9 : vector<1x256xf32> to vector<8x256xf32>
    %433 = arith.mulf %431, %432 : vector<8x256xf32>
    %434 = vector.extract_strided_slice %6 {offsets = [8, 0, 0], sizes = [1, 4, 8], strides = [1, 1, 1]} : vector<9x4x8xf32> to vector<1x4x8xf32>
    %435 = vector.shape_cast %434 : vector<1x4x8xf32> to vector<4x8xf32>
    %436 = vector.extract_strided_slice %435 {offsets = [0, 0], sizes = [4, 1], strides = [1, 1]} : vector<4x8xf32> to vector<4x1xf32>
    %437 = vector.extract_strided_slice %433 {offsets = [0, 0], sizes = [1, 256], strides = [1, 1]} : vector<8x256xf32> to vector<1x256xf32>
    %438 = vector.broadcast %436 : vector<4x1xf32> to vector<4x256xf32>
    %439 = vector.broadcast %437 : vector<1x256xf32> to vector<4x256xf32>
    %440 = arith.mulf %438, %439 : vector<4x256xf32>
    %441 = arith.addf %430, %440 : vector<4x256xf32>
    %442 = vector.extract_strided_slice %435 {offsets = [0, 1], sizes = [4, 1], strides = [1, 1]} : vector<4x8xf32> to vector<4x1xf32>
    %443 = vector.extract_strided_slice %433 {offsets = [1, 0], sizes = [1, 256], strides = [1, 1]} : vector<8x256xf32> to vector<1x256xf32>
    %444 = vector.broadcast %442 : vector<4x1xf32> to vector<4x256xf32>
    %445 = vector.broadcast %443 : vector<1x256xf32> to vector<4x256xf32>
    %446 = arith.mulf %444, %445 : vector<4x256xf32>
    %447 = arith.addf %441, %446 : vector<4x256xf32>
    %448 = vector.extract_strided_slice %435 {offsets = [0, 2], sizes = [4, 1], strides = [1, 1]} : vector<4x8xf32> to vector<4x1xf32>
    %449 = vector.extract_strided_slice %433 {offsets = [2, 0], sizes = [1, 256], strides = [1, 1]} : vector<8x256xf32> to vector<1x256xf32>
    %450 = vector.broadcast %448 : vector<4x1xf32> to vector<4x256xf32>
    %451 = vector.broadcast %449 : vector<1x256xf32> to vector<4x256xf32>
    %452 = arith.mulf %450, %451 : vector<4x256xf32>
    %453 = arith.addf %447, %452 : vector<4x256xf32>
    %454 = vector.extract_strided_slice %435 {offsets = [0, 3], sizes = [4, 1], strides = [1, 1]} : vector<4x8xf32> to vector<4x1xf32>
    %455 = vector.extract_strided_slice %433 {offsets = [3, 0], sizes = [1, 256], strides = [1, 1]} : vector<8x256xf32> to vector<1x256xf32>
    %456 = vector.broadcast %454 : vector<4x1xf32> to vector<4x256xf32>
    %457 = vector.broadcast %455 : vector<1x256xf32> to vector<4x256xf32>
    %458 = arith.mulf %456, %457 : vector<4x256xf32>
    %459 = arith.addf %453, %458 : vector<4x256xf32>
    %460 = vector.extract_strided_slice %435 {offsets = [0, 4], sizes = [4, 1], strides = [1, 1]} : vector<4x8xf32> to vector<4x1xf32>
    %461 = vector.extract_strided_slice %433 {offsets = [4, 0], sizes = [1, 256], strides = [1, 1]} : vector<8x256xf32> to vector<1x256xf32>
    %462 = vector.broadcast %460 : vector<4x1xf32> to vector<4x256xf32>
    %463 = vector.broadcast %461 : vector<1x256xf32> to vector<4x256xf32>
    %464 = arith.mulf %462, %463 : vector<4x256xf32>
    %465 = arith.addf %459, %464 : vector<4x256xf32>
    %466 = vector.extract_strided_slice %435 {offsets = [0, 5], sizes = [4, 1], strides = [1, 1]} : vector<4x8xf32> to vector<4x1xf32>
    %467 = vector.extract_strided_slice %433 {offsets = [5, 0], sizes = [1, 256], strides = [1, 1]} : vector<8x256xf32> to vector<1x256xf32>
    %468 = vector.broadcast %466 : vector<4x1xf32> to vector<4x256xf32>
    %469 = vector.broadcast %467 : vector<1x256xf32> to vector<4x256xf32>
    %470 = arith.mulf %468, %469 : vector<4x256xf32>
    %471 = arith.addf %465, %470 : vector<4x256xf32>
    %472 = vector.extract_strided_slice %435 {offsets = [0, 6], sizes = [4, 1], strides = [1, 1]} : vector<4x8xf32> to vector<4x1xf32>
    %473 = vector.extract_strided_slice %433 {offsets = [6, 0], sizes = [1, 256], strides = [1, 1]} : vector<8x256xf32> to vector<1x256xf32>
    %474 = vector.broadcast %472 : vector<4x1xf32> to vector<4x256xf32>
    %475 = vector.broadcast %473 : vector<1x256xf32> to vector<4x256xf32>
    %476 = arith.mulf %474, %475 : vector<4x256xf32>
    %477 = arith.addf %471, %476 : vector<4x256xf32>
    %478 = vector.extract_strided_slice %435 {offsets = [0, 7], sizes = [4, 1], strides = [1, 1]} : vector<4x8xf32> to vector<4x1xf32>
    %479 = vector.extract_strided_slice %433 {offsets = [7, 0], sizes = [1, 256], strides = [1, 1]} : vector<8x256xf32> to vector<1x256xf32>
    %480 = vector.broadcast %478 : vector<4x1xf32> to vector<4x256xf32>
    %481 = vector.broadcast %479 : vector<1x256xf32> to vector<4x256xf32>
    %482 = arith.mulf %480, %481 : vector<4x256xf32>
    %483 = arith.addf %477, %482 : vector<4x256xf32>
    %484 = vector.broadcast %7 : vector<4x1xf32> to vector<4x256xf32>
    %485 = arith.addf %483, %484 : vector<4x256xf32>
    %cst_15 = arith.constant 0.000000e+00 : f32
    %486 = vector.broadcast %cst_15 : f32 to vector<4x256xf32>
    %487 = arith.maximumf %485, %486 : vector<4x256xf32>
    %c0_16 = arith.constant 0 : index
    %c0_17 = arith.constant 0 : index
    %488 = vector.load %arg3[%c0_16, %c0_17] : memref<256x1024xf32, #tpu.memory_space<vmem>>, vector<256x1024xf32>
    %cst_18 = arith.constant dense<0.000000e+00> : vector<4x1024xf32>
    %489 = tpu.matmul %487, %488, %cst_18 {dimension_numbers = #tpu.dot_dimension_numbers<[1], [0], [0], [1], [0, 0, 1, 1], [], []>} : vector<4x256xf32>, vector<256x1024xf32>, vector<4x1024xf32> -> vector<4x1024xf32>
    %c0_19 = arith.constant 0 : index
    %c0_20 = arith.constant 0 : index
    %c0_21 = arith.constant 0 : index
    %490 = vector.load %arg8[%c0_19, %c0_20, %c0_21] : memref<9x2x4xf32, #tpu.memory_space<vmem>>, vector<9x2x4xf32>
    %c0_22 = arith.constant 0 : index
    %c0_23 = arith.constant 0 : index
    %491 = vector.load %arg9[%c0_22, %c0_23] : memref<2x1xf32, #tpu.memory_space<vmem>>, vector<2x1xf32>
    %492 = vector.extract_strided_slice %3 {offsets = [0, 0], sizes = [1, 1024], strides = [1, 1]} : vector<2x1024xf32> to vector<1x1024xf32>
    %493 = vector.extract_strided_slice %3 {offsets = [1, 0], sizes = [1, 1024], strides = [1, 1]} : vector<2x1024xf32> to vector<1x1024xf32>
    %cst_24 = arith.constant 0.000000e+00 : f32
    %494 = vector.broadcast %cst_24 : f32 to vector<4x128xf32>
    %495 = tpu.concatenate %494, %489, %494 in 1 : vector<4x128xf32>, vector<4x1024xf32>, vector<4x128xf32> -> vector<4x1280xf32>
    %cst_25 = arith.constant 0.000000e+00 : f32
    %496 = vector.broadcast %cst_25 : f32 to vector<2x1024xf32>
    %497 = vector.extract_strided_slice %495 {offsets = [0, 95], sizes = [4, 1024], strides = [1, 1]} : vector<4x1280xf32> to vector<4x1024xf32>
    %498 = vector.broadcast %492 : vector<1x1024xf32> to vector<4x1024xf32>
    %499 = arith.mulf %497, %498 : vector<4x1024xf32>
    %500 = vector.extract_strided_slice %490 {offsets = [0, 0, 0], sizes = [1, 2, 4], strides = [1, 1, 1]} : vector<9x2x4xf32> to vector<1x2x4xf32>
    %501 = vector.shape_cast %500 : vector<1x2x4xf32> to vector<2x4xf32>
    %502 = vector.extract_strided_slice %501 {offsets = [0, 0], sizes = [2, 1], strides = [1, 1]} : vector<2x4xf32> to vector<2x1xf32>
    %503 = vector.extract_strided_slice %499 {offsets = [0, 0], sizes = [1, 1024], strides = [1, 1]} : vector<4x1024xf32> to vector<1x1024xf32>
    %504 = vector.broadcast %502 : vector<2x1xf32> to vector<2x1024xf32>
    %505 = vector.broadcast %503 : vector<1x1024xf32> to vector<2x1024xf32>
    %506 = arith.mulf %504, %505 : vector<2x1024xf32>
    %507 = arith.addf %496, %506 : vector<2x1024xf32>
    %508 = vector.extract_strided_slice %501 {offsets = [0, 1], sizes = [2, 1], strides = [1, 1]} : vector<2x4xf32> to vector<2x1xf32>
    %509 = vector.extract_strided_slice %499 {offsets = [1, 0], sizes = [1, 1024], strides = [1, 1]} : vector<4x1024xf32> to vector<1x1024xf32>
    %510 = vector.broadcast %508 : vector<2x1xf32> to vector<2x1024xf32>
    %511 = vector.broadcast %509 : vector<1x1024xf32> to vector<2x1024xf32>
    %512 = arith.mulf %510, %511 : vector<2x1024xf32>
    %513 = arith.addf %507, %512 : vector<2x1024xf32>
    %514 = vector.extract_strided_slice %501 {offsets = [0, 2], sizes = [2, 1], strides = [1, 1]} : vector<2x4xf32> to vector<2x1xf32>
    %515 = vector.extract_strided_slice %499 {offsets = [2, 0], sizes = [1, 1024], strides = [1, 1]} : vector<4x1024xf32> to vector<1x1024xf32>
    %516 = vector.broadcast %514 : vector<2x1xf32> to vector<2x1024xf32>
    %517 = vector.broadcast %515 : vector<1x1024xf32> to vector<2x1024xf32>
    %518 = arith.mulf %516, %517 : vector<2x1024xf32>
    %519 = arith.addf %513, %518 : vector<2x1024xf32>
    %520 = vector.extract_strided_slice %501 {offsets = [0, 3], sizes = [2, 1], strides = [1, 1]} : vector<2x4xf32> to vector<2x1xf32>
    %521 = vector.extract_strided_slice %499 {offsets = [3, 0], sizes = [1, 1024], strides = [1, 1]} : vector<4x1024xf32> to vector<1x1024xf32>
    %522 = vector.broadcast %520 : vector<2x1xf32> to vector<2x1024xf32>
    %523 = vector.broadcast %521 : vector<1x1024xf32> to vector<2x1024xf32>
    %524 = arith.mulf %522, %523 : vector<2x1024xf32>
    %525 = arith.addf %519, %524 : vector<2x1024xf32>
    %526 = vector.extract_strided_slice %495 {offsets = [0, 96], sizes = [4, 1024], strides = [1, 1]} : vector<4x1280xf32> to vector<4x1024xf32>
    %527 = vector.extract_strided_slice %490 {offsets = [1, 0, 0], sizes = [1, 2, 4], strides = [1, 1, 1]} : vector<9x2x4xf32> to vector<1x2x4xf32>
    %528 = vector.shape_cast %527 : vector<1x2x4xf32> to vector<2x4xf32>
    %529 = vector.extract_strided_slice %528 {offsets = [0, 0], sizes = [2, 1], strides = [1, 1]} : vector<2x4xf32> to vector<2x1xf32>
    %530 = vector.extract_strided_slice %526 {offsets = [0, 0], sizes = [1, 1024], strides = [1, 1]} : vector<4x1024xf32> to vector<1x1024xf32>
    %531 = vector.broadcast %529 : vector<2x1xf32> to vector<2x1024xf32>
    %532 = vector.broadcast %530 : vector<1x1024xf32> to vector<2x1024xf32>
    %533 = arith.mulf %531, %532 : vector<2x1024xf32>
    %534 = arith.addf %525, %533 : vector<2x1024xf32>
    %535 = vector.extract_strided_slice %528 {offsets = [0, 1], sizes = [2, 1], strides = [1, 1]} : vector<2x4xf32> to vector<2x1xf32>
    %536 = vector.extract_strided_slice %526 {offsets = [1, 0], sizes = [1, 1024], strides = [1, 1]} : vector<4x1024xf32> to vector<1x1024xf32>
    %537 = vector.broadcast %535 : vector<2x1xf32> to vector<2x1024xf32>
    %538 = vector.broadcast %536 : vector<1x1024xf32> to vector<2x1024xf32>
    %539 = arith.mulf %537, %538 : vector<2x1024xf32>
    %540 = arith.addf %534, %539 : vector<2x1024xf32>
    %541 = vector.extract_strided_slice %528 {offsets = [0, 2], sizes = [2, 1], strides = [1, 1]} : vector<2x4xf32> to vector<2x1xf32>
    %542 = vector.extract_strided_slice %526 {offsets = [2, 0], sizes = [1, 1024], strides = [1, 1]} : vector<4x1024xf32> to vector<1x1024xf32>
    %543 = vector.broadcast %541 : vector<2x1xf32> to vector<2x1024xf32>
    %544 = vector.broadcast %542 : vector<1x1024xf32> to vector<2x1024xf32>
    %545 = arith.mulf %543, %544 : vector<2x1024xf32>
    %546 = arith.addf %540, %545 : vector<2x1024xf32>
    %547 = vector.extract_strided_slice %528 {offsets = [0, 3], sizes = [2, 1], strides = [1, 1]} : vector<2x4xf32> to vector<2x1xf32>
    %548 = vector.extract_strided_slice %526 {offsets = [3, 0], sizes = [1, 1024], strides = [1, 1]} : vector<4x1024xf32> to vector<1x1024xf32>
    %549 = vector.broadcast %547 : vector<2x1xf32> to vector<2x1024xf32>
    %550 = vector.broadcast %548 : vector<1x1024xf32> to vector<2x1024xf32>
    %551 = arith.mulf %549, %550 : vector<2x1024xf32>
    %552 = arith.addf %546, %551 : vector<2x1024xf32>
    %553 = vector.extract_strided_slice %495 {offsets = [0, 97], sizes = [4, 1024], strides = [1, 1]} : vector<4x1280xf32> to vector<4x1024xf32>
    %554 = vector.broadcast %493 : vector<1x1024xf32> to vector<4x1024xf32>
    %555 = arith.mulf %553, %554 : vector<4x1024xf32>
    %556 = vector.extract_strided_slice %490 {offsets = [2, 0, 0], sizes = [1, 2, 4], strides = [1, 1, 1]} : vector<9x2x4xf32> to vector<1x2x4xf32>
    %557 = vector.shape_cast %556 : vector<1x2x4xf32> to vector<2x4xf32>
    %558 = vector.extract_strided_slice %557 {offsets = [0, 0], sizes = [2, 1], strides = [1, 1]} : vector<2x4xf32> to vector<2x1xf32>
    %559 = vector.extract_strided_slice %555 {offsets = [0, 0], sizes = [1, 1024], strides = [1, 1]} : vector<4x1024xf32> to vector<1x1024xf32>
    %560 = vector.broadcast %558 : vector<2x1xf32> to vector<2x1024xf32>
    %561 = vector.broadcast %559 : vector<1x1024xf32> to vector<2x1024xf32>
    %562 = arith.mulf %560, %561 : vector<2x1024xf32>
    %563 = arith.addf %552, %562 : vector<2x1024xf32>
    %564 = vector.extract_strided_slice %557 {offsets = [0, 1], sizes = [2, 1], strides = [1, 1]} : vector<2x4xf32> to vector<2x1xf32>
    %565 = vector.extract_strided_slice %555 {offsets = [1, 0], sizes = [1, 1024], strides = [1, 1]} : vector<4x1024xf32> to vector<1x1024xf32>
    %566 = vector.broadcast %564 : vector<2x1xf32> to vector<2x1024xf32>
    %567 = vector.broadcast %565 : vector<1x1024xf32> to vector<2x1024xf32>
    %568 = arith.mulf %566, %567 : vector<2x1024xf32>
    %569 = arith.addf %563, %568 : vector<2x1024xf32>
    %570 = vector.extract_strided_slice %557 {offsets = [0, 2], sizes = [2, 1], strides = [1, 1]} : vector<2x4xf32> to vector<2x1xf32>
    %571 = vector.extract_strided_slice %555 {offsets = [2, 0], sizes = [1, 1024], strides = [1, 1]} : vector<4x1024xf32> to vector<1x1024xf32>
    %572 = vector.broadcast %570 : vector<2x1xf32> to vector<2x1024xf32>
    %573 = vector.broadcast %571 : vector<1x1024xf32> to vector<2x1024xf32>
    %574 = arith.mulf %572, %573 : vector<2x1024xf32>
    %575 = arith.addf %569, %574 : vector<2x1024xf32>
    %576 = vector.extract_strided_slice %557 {offsets = [0, 3], sizes = [2, 1], strides = [1, 1]} : vector<2x4xf32> to vector<2x1xf32>
    %577 = vector.extract_strided_slice %555 {offsets = [3, 0], sizes = [1, 1024], strides = [1, 1]} : vector<4x1024xf32> to vector<1x1024xf32>
    %578 = vector.broadcast %576 : vector<2x1xf32> to vector<2x1024xf32>
    %579 = vector.broadcast %577 : vector<1x1024xf32> to vector<2x1024xf32>
    %580 = arith.mulf %578, %579 : vector<2x1024xf32>
    %581 = arith.addf %575, %580 : vector<2x1024xf32>
    %582 = vector.extract_strided_slice %495 {offsets = [0, 127], sizes = [4, 1024], strides = [1, 1]} : vector<4x1280xf32> to vector<4x1024xf32>
    %583 = vector.broadcast %492 : vector<1x1024xf32> to vector<4x1024xf32>
    %584 = arith.mulf %582, %583 : vector<4x1024xf32>
    %585 = vector.extract_strided_slice %490 {offsets = [3, 0, 0], sizes = [1, 2, 4], strides = [1, 1, 1]} : vector<9x2x4xf32> to vector<1x2x4xf32>
    %586 = vector.shape_cast %585 : vector<1x2x4xf32> to vector<2x4xf32>
    %587 = vector.extract_strided_slice %586 {offsets = [0, 0], sizes = [2, 1], strides = [1, 1]} : vector<2x4xf32> to vector<2x1xf32>
    %588 = vector.extract_strided_slice %584 {offsets = [0, 0], sizes = [1, 1024], strides = [1, 1]} : vector<4x1024xf32> to vector<1x1024xf32>
    %589 = vector.broadcast %587 : vector<2x1xf32> to vector<2x1024xf32>
    %590 = vector.broadcast %588 : vector<1x1024xf32> to vector<2x1024xf32>
    %591 = arith.mulf %589, %590 : vector<2x1024xf32>
    %592 = arith.addf %581, %591 : vector<2x1024xf32>
    %593 = vector.extract_strided_slice %586 {offsets = [0, 1], sizes = [2, 1], strides = [1, 1]} : vector<2x4xf32> to vector<2x1xf32>
    %594 = vector.extract_strided_slice %584 {offsets = [1, 0], sizes = [1, 1024], strides = [1, 1]} : vector<4x1024xf32> to vector<1x1024xf32>
    %595 = vector.broadcast %593 : vector<2x1xf32> to vector<2x1024xf32>
    %596 = vector.broadcast %594 : vector<1x1024xf32> to vector<2x1024xf32>
    %597 = arith.mulf %595, %596 : vector<2x1024xf32>
    %598 = arith.addf %592, %597 : vector<2x1024xf32>
    %599 = vector.extract_strided_slice %586 {offsets = [0, 2], sizes = [2, 1], strides = [1, 1]} : vector<2x4xf32> to vector<2x1xf32>
    %600 = vector.extract_strided_slice %584 {offsets = [2, 0], sizes = [1, 1024], strides = [1, 1]} : vector<4x1024xf32> to vector<1x1024xf32>
    %601 = vector.broadcast %599 : vector<2x1xf32> to vector<2x1024xf32>
    %602 = vector.broadcast %600 : vector<1x1024xf32> to vector<2x1024xf32>
    %603 = arith.mulf %601, %602 : vector<2x1024xf32>
    %604 = arith.addf %598, %603 : vector<2x1024xf32>
    %605 = vector.extract_strided_slice %586 {offsets = [0, 3], sizes = [2, 1], strides = [1, 1]} : vector<2x4xf32> to vector<2x1xf32>
    %606 = vector.extract_strided_slice %584 {offsets = [3, 0], sizes = [1, 1024], strides = [1, 1]} : vector<4x1024xf32> to vector<1x1024xf32>
    %607 = vector.broadcast %605 : vector<2x1xf32> to vector<2x1024xf32>
    %608 = vector.broadcast %606 : vector<1x1024xf32> to vector<2x1024xf32>
    %609 = arith.mulf %607, %608 : vector<2x1024xf32>
    %610 = arith.addf %604, %609 : vector<2x1024xf32>
    %611 = vector.extract_strided_slice %495 {offsets = [0, 128], sizes = [4, 1024], strides = [1, 1]} : vector<4x1280xf32> to vector<4x1024xf32>
    %612 = vector.extract_strided_slice %490 {offsets = [4, 0, 0], sizes = [1, 2, 4], strides = [1, 1, 1]} : vector<9x2x4xf32> to vector<1x2x4xf32>
    %613 = vector.shape_cast %612 : vector<1x2x4xf32> to vector<2x4xf32>
    %614 = vector.extract_strided_slice %613 {offsets = [0, 0], sizes = [2, 1], strides = [1, 1]} : vector<2x4xf32> to vector<2x1xf32>
    %615 = vector.extract_strided_slice %611 {offsets = [0, 0], sizes = [1, 1024], strides = [1, 1]} : vector<4x1024xf32> to vector<1x1024xf32>
    %616 = vector.broadcast %614 : vector<2x1xf32> to vector<2x1024xf32>
    %617 = vector.broadcast %615 : vector<1x1024xf32> to vector<2x1024xf32>
    %618 = arith.mulf %616, %617 : vector<2x1024xf32>
    %619 = arith.addf %610, %618 : vector<2x1024xf32>
    %620 = vector.extract_strided_slice %613 {offsets = [0, 1], sizes = [2, 1], strides = [1, 1]} : vector<2x4xf32> to vector<2x1xf32>
    %621 = vector.extract_strided_slice %611 {offsets = [1, 0], sizes = [1, 1024], strides = [1, 1]} : vector<4x1024xf32> to vector<1x1024xf32>
    %622 = vector.broadcast %620 : vector<2x1xf32> to vector<2x1024xf32>
    %623 = vector.broadcast %621 : vector<1x1024xf32> to vector<2x1024xf32>
    %624 = arith.mulf %622, %623 : vector<2x1024xf32>
    %625 = arith.addf %619, %624 : vector<2x1024xf32>
    %626 = vector.extract_strided_slice %613 {offsets = [0, 2], sizes = [2, 1], strides = [1, 1]} : vector<2x4xf32> to vector<2x1xf32>
    %627 = vector.extract_strided_slice %611 {offsets = [2, 0], sizes = [1, 1024], strides = [1, 1]} : vector<4x1024xf32> to vector<1x1024xf32>
    %628 = vector.broadcast %626 : vector<2x1xf32> to vector<2x1024xf32>
    %629 = vector.broadcast %627 : vector<1x1024xf32> to vector<2x1024xf32>
    %630 = arith.mulf %628, %629 : vector<2x1024xf32>
    %631 = arith.addf %625, %630 : vector<2x1024xf32>
    %632 = vector.extract_strided_slice %613 {offsets = [0, 3], sizes = [2, 1], strides = [1, 1]} : vector<2x4xf32> to vector<2x1xf32>
    %633 = vector.extract_strided_slice %611 {offsets = [3, 0], sizes = [1, 1024], strides = [1, 1]} : vector<4x1024xf32> to vector<1x1024xf32>
    %634 = vector.broadcast %632 : vector<2x1xf32> to vector<2x1024xf32>
    %635 = vector.broadcast %633 : vector<1x1024xf32> to vector<2x1024xf32>
    %636 = arith.mulf %634, %635 : vector<2x1024xf32>
    %637 = arith.addf %631, %636 : vector<2x1024xf32>
    %638 = vector.extract_strided_slice %495 {offsets = [0, 129], sizes = [4, 1024], strides = [1, 1]} : vector<4x1280xf32> to vector<4x1024xf32>
    %639 = vector.broadcast %493 : vector<1x1024xf32> to vector<4x1024xf32>
    %640 = arith.mulf %638, %639 : vector<4x1024xf32>
    %641 = vector.extract_strided_slice %490 {offsets = [5, 0, 0], sizes = [1, 2, 4], strides = [1, 1, 1]} : vector<9x2x4xf32> to vector<1x2x4xf32>
    %642 = vector.shape_cast %641 : vector<1x2x4xf32> to vector<2x4xf32>
    %643 = vector.extract_strided_slice %642 {offsets = [0, 0], sizes = [2, 1], strides = [1, 1]} : vector<2x4xf32> to vector<2x1xf32>
    %644 = vector.extract_strided_slice %640 {offsets = [0, 0], sizes = [1, 1024], strides = [1, 1]} : vector<4x1024xf32> to vector<1x1024xf32>
    %645 = vector.broadcast %643 : vector<2x1xf32> to vector<2x1024xf32>
    %646 = vector.broadcast %644 : vector<1x1024xf32> to vector<2x1024xf32>
    %647 = arith.mulf %645, %646 : vector<2x1024xf32>
    %648 = arith.addf %637, %647 : vector<2x1024xf32>
    %649 = vector.extract_strided_slice %642 {offsets = [0, 1], sizes = [2, 1], strides = [1, 1]} : vector<2x4xf32> to vector<2x1xf32>
    %650 = vector.extract_strided_slice %640 {offsets = [1, 0], sizes = [1, 1024], strides = [1, 1]} : vector<4x1024xf32> to vector<1x1024xf32>
    %651 = vector.broadcast %649 : vector<2x1xf32> to vector<2x1024xf32>
    %652 = vector.broadcast %650 : vector<1x1024xf32> to vector<2x1024xf32>
    %653 = arith.mulf %651, %652 : vector<2x1024xf32>
    %654 = arith.addf %648, %653 : vector<2x1024xf32>
    %655 = vector.extract_strided_slice %642 {offsets = [0, 2], sizes = [2, 1], strides = [1, 1]} : vector<2x4xf32> to vector<2x1xf32>
    %656 = vector.extract_strided_slice %640 {offsets = [2, 0], sizes = [1, 1024], strides = [1, 1]} : vector<4x1024xf32> to vector<1x1024xf32>
    %657 = vector.broadcast %655 : vector<2x1xf32> to vector<2x1024xf32>
    %658 = vector.broadcast %656 : vector<1x1024xf32> to vector<2x1024xf32>
    %659 = arith.mulf %657, %658 : vector<2x1024xf32>
    %660 = arith.addf %654, %659 : vector<2x1024xf32>
    %661 = vector.extract_strided_slice %642 {offsets = [0, 3], sizes = [2, 1], strides = [1, 1]} : vector<2x4xf32> to vector<2x1xf32>
    %662 = vector.extract_strided_slice %640 {offsets = [3, 0], sizes = [1, 1024], strides = [1, 1]} : vector<4x1024xf32> to vector<1x1024xf32>
    %663 = vector.broadcast %661 : vector<2x1xf32> to vector<2x1024xf32>
    %664 = vector.broadcast %662 : vector<1x1024xf32> to vector<2x1024xf32>
    %665 = arith.mulf %663, %664 : vector<2x1024xf32>
    %666 = arith.addf %660, %665 : vector<2x1024xf32>
    %667 = vector.extract_strided_slice %495 {offsets = [0, 159], sizes = [4, 1024], strides = [1, 1]} : vector<4x1280xf32> to vector<4x1024xf32>
    %668 = vector.broadcast %492 : vector<1x1024xf32> to vector<4x1024xf32>
    %669 = arith.mulf %667, %668 : vector<4x1024xf32>
    %670 = vector.extract_strided_slice %490 {offsets = [6, 0, 0], sizes = [1, 2, 4], strides = [1, 1, 1]} : vector<9x2x4xf32> to vector<1x2x4xf32>
    %671 = vector.shape_cast %670 : vector<1x2x4xf32> to vector<2x4xf32>
    %672 = vector.extract_strided_slice %671 {offsets = [0, 0], sizes = [2, 1], strides = [1, 1]} : vector<2x4xf32> to vector<2x1xf32>
    %673 = vector.extract_strided_slice %669 {offsets = [0, 0], sizes = [1, 1024], strides = [1, 1]} : vector<4x1024xf32> to vector<1x1024xf32>
    %674 = vector.broadcast %672 : vector<2x1xf32> to vector<2x1024xf32>
    %675 = vector.broadcast %673 : vector<1x1024xf32> to vector<2x1024xf32>
    %676 = arith.mulf %674, %675 : vector<2x1024xf32>
    %677 = arith.addf %666, %676 : vector<2x1024xf32>
    %678 = vector.extract_strided_slice %671 {offsets = [0, 1], sizes = [2, 1], strides = [1, 1]} : vector<2x4xf32> to vector<2x1xf32>
    %679 = vector.extract_strided_slice %669 {offsets = [1, 0], sizes = [1, 1024], strides = [1, 1]} : vector<4x1024xf32> to vector<1x1024xf32>
    %680 = vector.broadcast %678 : vector<2x1xf32> to vector<2x1024xf32>
    %681 = vector.broadcast %679 : vector<1x1024xf32> to vector<2x1024xf32>
    %682 = arith.mulf %680, %681 : vector<2x1024xf32>
    %683 = arith.addf %677, %682 : vector<2x1024xf32>
    %684 = vector.extract_strided_slice %671 {offsets = [0, 2], sizes = [2, 1], strides = [1, 1]} : vector<2x4xf32> to vector<2x1xf32>
    %685 = vector.extract_strided_slice %669 {offsets = [2, 0], sizes = [1, 1024], strides = [1, 1]} : vector<4x1024xf32> to vector<1x1024xf32>
    %686 = vector.broadcast %684 : vector<2x1xf32> to vector<2x1024xf32>
    %687 = vector.broadcast %685 : vector<1x1024xf32> to vector<2x1024xf32>
    %688 = arith.mulf %686, %687 : vector<2x1024xf32>
    %689 = arith.addf %683, %688 : vector<2x1024xf32>
    %690 = vector.extract_strided_slice %671 {offsets = [0, 3], sizes = [2, 1], strides = [1, 1]} : vector<2x4xf32> to vector<2x1xf32>
    %691 = vector.extract_strided_slice %669 {offsets = [3, 0], sizes = [1, 1024], strides = [1, 1]} : vector<4x1024xf32> to vector<1x1024xf32>
    %692 = vector.broadcast %690 : vector<2x1xf32> to vector<2x1024xf32>
    %693 = vector.broadcast %691 : vector<1x1024xf32> to vector<2x1024xf32>
    %694 = arith.mulf %692, %693 : vector<2x1024xf32>
    %695 = arith.addf %689, %694 : vector<2x1024xf32>
    %696 = vector.extract_strided_slice %495 {offsets = [0, 160], sizes = [4, 1024], strides = [1, 1]} : vector<4x1280xf32> to vector<4x1024xf32>
    %697 = vector.extract_strided_slice %490 {offsets = [7, 0, 0], sizes = [1, 2, 4], strides = [1, 1, 1]} : vector<9x2x4xf32> to vector<1x2x4xf32>
    %698 = vector.shape_cast %697 : vector<1x2x4xf32> to vector<2x4xf32>
    %699 = vector.extract_strided_slice %698 {offsets = [0, 0], sizes = [2, 1], strides = [1, 1]} : vector<2x4xf32> to vector<2x1xf32>
    %700 = vector.extract_strided_slice %696 {offsets = [0, 0], sizes = [1, 1024], strides = [1, 1]} : vector<4x1024xf32> to vector<1x1024xf32>
    %701 = vector.broadcast %699 : vector<2x1xf32> to vector<2x1024xf32>
    %702 = vector.broadcast %700 : vector<1x1024xf32> to vector<2x1024xf32>
    %703 = arith.mulf %701, %702 : vector<2x1024xf32>
    %704 = arith.addf %695, %703 : vector<2x1024xf32>
    %705 = vector.extract_strided_slice %698 {offsets = [0, 1], sizes = [2, 1], strides = [1, 1]} : vector<2x4xf32> to vector<2x1xf32>
    %706 = vector.extract_strided_slice %696 {offsets = [1, 0], sizes = [1, 1024], strides = [1, 1]} : vector<4x1024xf32> to vector<1x1024xf32>
    %707 = vector.broadcast %705 : vector<2x1xf32> to vector<2x1024xf32>
    %708 = vector.broadcast %706 : vector<1x1024xf32> to vector<2x1024xf32>
    %709 = arith.mulf %707, %708 : vector<2x1024xf32>
    %710 = arith.addf %704, %709 : vector<2x1024xf32>
    %711 = vector.extract_strided_slice %698 {offsets = [0, 2], sizes = [2, 1], strides = [1, 1]} : vector<2x4xf32> to vector<2x1xf32>
    %712 = vector.extract_strided_slice %696 {offsets = [2, 0], sizes = [1, 1024], strides = [1, 1]} : vector<4x1024xf32> to vector<1x1024xf32>
    %713 = vector.broadcast %711 : vector<2x1xf32> to vector<2x1024xf32>
    %714 = vector.broadcast %712 : vector<1x1024xf32> to vector<2x1024xf32>
    %715 = arith.mulf %713, %714 : vector<2x1024xf32>
    %716 = arith.addf %710, %715 : vector<2x1024xf32>
    %717 = vector.extract_strided_slice %698 {offsets = [0, 3], sizes = [2, 1], strides = [1, 1]} : vector<2x4xf32> to vector<2x1xf32>
    %718 = vector.extract_strided_slice %696 {offsets = [3, 0], sizes = [1, 1024], strides = [1, 1]} : vector<4x1024xf32> to vector<1x1024xf32>
    %719 = vector.broadcast %717 : vector<2x1xf32> to vector<2x1024xf32>
    %720 = vector.broadcast %718 : vector<1x1024xf32> to vector<2x1024xf32>
    %721 = arith.mulf %719, %720 : vector<2x1024xf32>
    %722 = arith.addf %716, %721 : vector<2x1024xf32>
    %723 = vector.extract_strided_slice %495 {offsets = [0, 161], sizes = [4, 1024], strides = [1, 1]} : vector<4x1280xf32> to vector<4x1024xf32>
    %724 = vector.broadcast %493 : vector<1x1024xf32> to vector<4x1024xf32>
    %725 = arith.mulf %723, %724 : vector<4x1024xf32>
    %726 = vector.extract_strided_slice %490 {offsets = [8, 0, 0], sizes = [1, 2, 4], strides = [1, 1, 1]} : vector<9x2x4xf32> to vector<1x2x4xf32>
    %727 = vector.shape_cast %726 : vector<1x2x4xf32> to vector<2x4xf32>
    %728 = vector.extract_strided_slice %727 {offsets = [0, 0], sizes = [2, 1], strides = [1, 1]} : vector<2x4xf32> to vector<2x1xf32>
    %729 = vector.extract_strided_slice %725 {offsets = [0, 0], sizes = [1, 1024], strides = [1, 1]} : vector<4x1024xf32> to vector<1x1024xf32>
    %730 = vector.broadcast %728 : vector<2x1xf32> to vector<2x1024xf32>
    %731 = vector.broadcast %729 : vector<1x1024xf32> to vector<2x1024xf32>
    %732 = arith.mulf %730, %731 : vector<2x1024xf32>
    %733 = arith.addf %722, %732 : vector<2x1024xf32>
    %734 = vector.extract_strided_slice %727 {offsets = [0, 1], sizes = [2, 1], strides = [1, 1]} : vector<2x4xf32> to vector<2x1xf32>
    %735 = vector.extract_strided_slice %725 {offsets = [1, 0], sizes = [1, 1024], strides = [1, 1]} : vector<4x1024xf32> to vector<1x1024xf32>
    %736 = vector.broadcast %734 : vector<2x1xf32> to vector<2x1024xf32>
    %737 = vector.broadcast %735 : vector<1x1024xf32> to vector<2x1024xf32>
    %738 = arith.mulf %736, %737 : vector<2x1024xf32>
    %739 = arith.addf %733, %738 : vector<2x1024xf32>
    %740 = vector.extract_strided_slice %727 {offsets = [0, 2], sizes = [2, 1], strides = [1, 1]} : vector<2x4xf32> to vector<2x1xf32>
    %741 = vector.extract_strided_slice %725 {offsets = [2, 0], sizes = [1, 1024], strides = [1, 1]} : vector<4x1024xf32> to vector<1x1024xf32>
    %742 = vector.broadcast %740 : vector<2x1xf32> to vector<2x1024xf32>
    %743 = vector.broadcast %741 : vector<1x1024xf32> to vector<2x1024xf32>
    %744 = arith.mulf %742, %743 : vector<2x1024xf32>
    %745 = arith.addf %739, %744 : vector<2x1024xf32>
    %746 = vector.extract_strided_slice %727 {offsets = [0, 3], sizes = [2, 1], strides = [1, 1]} : vector<2x4xf32> to vector<2x1xf32>
    %747 = vector.extract_strided_slice %725 {offsets = [3, 0], sizes = [1, 1024], strides = [1, 1]} : vector<4x1024xf32> to vector<1x1024xf32>
    %748 = vector.broadcast %746 : vector<2x1xf32> to vector<2x1024xf32>
    %749 = vector.broadcast %747 : vector<1x1024xf32> to vector<2x1024xf32>
    %750 = arith.mulf %748, %749 : vector<2x1024xf32>
    %751 = arith.addf %745, %750 : vector<2x1024xf32>
    %752 = vector.broadcast %491 : vector<2x1xf32> to vector<2x1024xf32>
    %753 = arith.addf %751, %752 : vector<2x1024xf32>
    %cst_26 = arith.constant 0.000000e+00 : f32
    %754 = vector.broadcast %cst_26 : f32 to vector<2x1024xf32>
    %755 = arith.maximumf %753, %754 : vector<2x1024xf32>
    %c0_27 = arith.constant 0 : index
    %c0_28 = arith.constant 0 : index
    %c0_29 = arith.constant 0 : index
    %756 = vector.load %arg10[%c0_27, %c0_28, %c0_29] : memref<9x1x2xf32, #tpu.memory_space<vmem>>, vector<9x1x2xf32>
    %c0_30 = arith.constant 0 : index
    %c0_31 = arith.constant 0 : index
    %757 = vector.load %arg11[%c0_30, %c0_31] : memref<1x1xf32, #tpu.memory_space<vmem>>, vector<1x1xf32>
    %758 = vector.extract_strided_slice %3 {offsets = [0, 0], sizes = [1, 1024], strides = [1, 1]} : vector<2x1024xf32> to vector<1x1024xf32>
    %759 = vector.extract_strided_slice %3 {offsets = [1, 0], sizes = [1, 1024], strides = [1, 1]} : vector<2x1024xf32> to vector<1x1024xf32>
    %cst_32 = arith.constant 0.000000e+00 : f32
    %760 = vector.broadcast %cst_32 : f32 to vector<2x128xf32>
    %761 = tpu.concatenate %760, %755, %760 in 1 : vector<2x128xf32>, vector<2x1024xf32>, vector<2x128xf32> -> vector<2x1280xf32>
    %cst_33 = arith.constant 0.000000e+00 : f32
    %762 = vector.broadcast %cst_33 : f32 to vector<1x1024xf32>
    %763 = vector.extract_strided_slice %761 {offsets = [0, 95], sizes = [2, 1024], strides = [1, 1]} : vector<2x1280xf32> to vector<2x1024xf32>
    %764 = vector.broadcast %758 : vector<1x1024xf32> to vector<2x1024xf32>
    %765 = arith.mulf %763, %764 : vector<2x1024xf32>
    %766 = vector.extract_strided_slice %756 {offsets = [0, 0, 0], sizes = [1, 1, 2], strides = [1, 1, 1]} : vector<9x1x2xf32> to vector<1x1x2xf32>
    %767 = vector.shape_cast %766 : vector<1x1x2xf32> to vector<1x2xf32>
    %768 = vector.extract_strided_slice %767 {offsets = [0, 0], sizes = [1, 1], strides = [1, 1]} : vector<1x2xf32> to vector<1x1xf32>
    %769 = vector.extract_strided_slice %765 {offsets = [0, 0], sizes = [1, 1024], strides = [1, 1]} : vector<2x1024xf32> to vector<1x1024xf32>
    %770 = vector.broadcast %768 : vector<1x1xf32> to vector<1x1024xf32>
    %771 = arith.mulf %770, %769 : vector<1x1024xf32>
    %772 = arith.addf %762, %771 : vector<1x1024xf32>
    %773 = vector.extract_strided_slice %767 {offsets = [0, 1], sizes = [1, 1], strides = [1, 1]} : vector<1x2xf32> to vector<1x1xf32>
    %774 = vector.extract_strided_slice %765 {offsets = [1, 0], sizes = [1, 1024], strides = [1, 1]} : vector<2x1024xf32> to vector<1x1024xf32>
    %775 = vector.broadcast %773 : vector<1x1xf32> to vector<1x1024xf32>
    %776 = arith.mulf %775, %774 : vector<1x1024xf32>
    %777 = arith.addf %772, %776 : vector<1x1024xf32>
    %778 = vector.extract_strided_slice %761 {offsets = [0, 96], sizes = [2, 1024], strides = [1, 1]} : vector<2x1280xf32> to vector<2x1024xf32>
    %779 = vector.extract_strided_slice %756 {offsets = [1, 0, 0], sizes = [1, 1, 2], strides = [1, 1, 1]} : vector<9x1x2xf32> to vector<1x1x2xf32>
    %780 = vector.shape_cast %779 : vector<1x1x2xf32> to vector<1x2xf32>
    %781 = vector.extract_strided_slice %780 {offsets = [0, 0], sizes = [1, 1], strides = [1, 1]} : vector<1x2xf32> to vector<1x1xf32>
    %782 = vector.extract_strided_slice %778 {offsets = [0, 0], sizes = [1, 1024], strides = [1, 1]} : vector<2x1024xf32> to vector<1x1024xf32>
    %783 = vector.broadcast %781 : vector<1x1xf32> to vector<1x1024xf32>
    %784 = arith.mulf %783, %782 : vector<1x1024xf32>
    %785 = arith.addf %777, %784 : vector<1x1024xf32>
    %786 = vector.extract_strided_slice %780 {offsets = [0, 1], sizes = [1, 1], strides = [1, 1]} : vector<1x2xf32> to vector<1x1xf32>
    %787 = vector.extract_strided_slice %778 {offsets = [1, 0], sizes = [1, 1024], strides = [1, 1]} : vector<2x1024xf32> to vector<1x1024xf32>
    %788 = vector.broadcast %786 : vector<1x1xf32> to vector<1x1024xf32>
    %789 = arith.mulf %788, %787 : vector<1x1024xf32>
    %790 = arith.addf %785, %789 : vector<1x1024xf32>
    %791 = vector.extract_strided_slice %761 {offsets = [0, 97], sizes = [2, 1024], strides = [1, 1]} : vector<2x1280xf32> to vector<2x1024xf32>
    %792 = vector.broadcast %759 : vector<1x1024xf32> to vector<2x1024xf32>
    %793 = arith.mulf %791, %792 : vector<2x1024xf32>
    %794 = vector.extract_strided_slice %756 {offsets = [2, 0, 0], sizes = [1, 1, 2], strides = [1, 1, 1]} : vector<9x1x2xf32> to vector<1x1x2xf32>
    %795 = vector.shape_cast %794 : vector<1x1x2xf32> to vector<1x2xf32>
    %796 = vector.extract_strided_slice %795 {offsets = [0, 0], sizes = [1, 1], strides = [1, 1]} : vector<1x2xf32> to vector<1x1xf32>
    %797 = vector.extract_strided_slice %793 {offsets = [0, 0], sizes = [1, 1024], strides = [1, 1]} : vector<2x1024xf32> to vector<1x1024xf32>
    %798 = vector.broadcast %796 : vector<1x1xf32> to vector<1x1024xf32>
    %799 = arith.mulf %798, %797 : vector<1x1024xf32>
    %800 = arith.addf %790, %799 : vector<1x1024xf32>
    %801 = vector.extract_strided_slice %795 {offsets = [0, 1], sizes = [1, 1], strides = [1, 1]} : vector<1x2xf32> to vector<1x1xf32>
    %802 = vector.extract_strided_slice %793 {offsets = [1, 0], sizes = [1, 1024], strides = [1, 1]} : vector<2x1024xf32> to vector<1x1024xf32>
    %803 = vector.broadcast %801 : vector<1x1xf32> to vector<1x1024xf32>
    %804 = arith.mulf %803, %802 : vector<1x1024xf32>
    %805 = arith.addf %800, %804 : vector<1x1024xf32>
    %806 = vector.extract_strided_slice %761 {offsets = [0, 127], sizes = [2, 1024], strides = [1, 1]} : vector<2x1280xf32> to vector<2x1024xf32>
    %807 = vector.broadcast %758 : vector<1x1024xf32> to vector<2x1024xf32>
    %808 = arith.mulf %806, %807 : vector<2x1024xf32>
    %809 = vector.extract_strided_slice %756 {offsets = [3, 0, 0], sizes = [1, 1, 2], strides = [1, 1, 1]} : vector<9x1x2xf32> to vector<1x1x2xf32>
    %810 = vector.shape_cast %809 : vector<1x1x2xf32> to vector<1x2xf32>
    %811 = vector.extract_strided_slice %810 {offsets = [0, 0], sizes = [1, 1], strides = [1, 1]} : vector<1x2xf32> to vector<1x1xf32>
    %812 = vector.extract_strided_slice %808 {offsets = [0, 0], sizes = [1, 1024], strides = [1, 1]} : vector<2x1024xf32> to vector<1x1024xf32>
    %813 = vector.broadcast %811 : vector<1x1xf32> to vector<1x1024xf32>
    %814 = arith.mulf %813, %812 : vector<1x1024xf32>
    %815 = arith.addf %805, %814 : vector<1x1024xf32>
    %816 = vector.extract_strided_slice %810 {offsets = [0, 1], sizes = [1, 1], strides = [1, 1]} : vector<1x2xf32> to vector<1x1xf32>
    %817 = vector.extract_strided_slice %808 {offsets = [1, 0], sizes = [1, 1024], strides = [1, 1]} : vector<2x1024xf32> to vector<1x1024xf32>
    %818 = vector.broadcast %816 : vector<1x1xf32> to vector<1x1024xf32>
    %819 = arith.mulf %818, %817 : vector<1x1024xf32>
    %820 = arith.addf %815, %819 : vector<1x1024xf32>
    %821 = vector.extract_strided_slice %761 {offsets = [0, 128], sizes = [2, 1024], strides = [1, 1]} : vector<2x1280xf32> to vector<2x1024xf32>
    %822 = vector.extract_strided_slice %756 {offsets = [4, 0, 0], sizes = [1, 1, 2], strides = [1, 1, 1]} : vector<9x1x2xf32> to vector<1x1x2xf32>
    %823 = vector.shape_cast %822 : vector<1x1x2xf32> to vector<1x2xf32>
    %824 = vector.extract_strided_slice %823 {offsets = [0, 0], sizes = [1, 1], strides = [1, 1]} : vector<1x2xf32> to vector<1x1xf32>
    %825 = vector.extract_strided_slice %821 {offsets = [0, 0], sizes = [1, 1024], strides = [1, 1]} : vector<2x1024xf32> to vector<1x1024xf32>
    %826 = vector.broadcast %824 : vector<1x1xf32> to vector<1x1024xf32>
    %827 = arith.mulf %826, %825 : vector<1x1024xf32>
    %828 = arith.addf %820, %827 : vector<1x1024xf32>
    %829 = vector.extract_strided_slice %823 {offsets = [0, 1], sizes = [1, 1], strides = [1, 1]} : vector<1x2xf32> to vector<1x1xf32>
    %830 = vector.extract_strided_slice %821 {offsets = [1, 0], sizes = [1, 1024], strides = [1, 1]} : vector<2x1024xf32> to vector<1x1024xf32>
    %831 = vector.broadcast %829 : vector<1x1xf32> to vector<1x1024xf32>
    %832 = arith.mulf %831, %830 : vector<1x1024xf32>
    %833 = arith.addf %828, %832 : vector<1x1024xf32>
    %834 = vector.extract_strided_slice %761 {offsets = [0, 129], sizes = [2, 1024], strides = [1, 1]} : vector<2x1280xf32> to vector<2x1024xf32>
    %835 = vector.broadcast %759 : vector<1x1024xf32> to vector<2x1024xf32>
    %836 = arith.mulf %834, %835 : vector<2x1024xf32>
    %837 = vector.extract_strided_slice %756 {offsets = [5, 0, 0], sizes = [1, 1, 2], strides = [1, 1, 1]} : vector<9x1x2xf32> to vector<1x1x2xf32>
    %838 = vector.shape_cast %837 : vector<1x1x2xf32> to vector<1x2xf32>
    %839 = vector.extract_strided_slice %838 {offsets = [0, 0], sizes = [1, 1], strides = [1, 1]} : vector<1x2xf32> to vector<1x1xf32>
    %840 = vector.extract_strided_slice %836 {offsets = [0, 0], sizes = [1, 1024], strides = [1, 1]} : vector<2x1024xf32> to vector<1x1024xf32>
    %841 = vector.broadcast %839 : vector<1x1xf32> to vector<1x1024xf32>
    %842 = arith.mulf %841, %840 : vector<1x1024xf32>
    %843 = arith.addf %833, %842 : vector<1x1024xf32>
    %844 = vector.extract_strided_slice %838 {offsets = [0, 1], sizes = [1, 1], strides = [1, 1]} : vector<1x2xf32> to vector<1x1xf32>
    %845 = vector.extract_strided_slice %836 {offsets = [1, 0], sizes = [1, 1024], strides = [1, 1]} : vector<2x1024xf32> to vector<1x1024xf32>
    %846 = vector.broadcast %844 : vector<1x1xf32> to vector<1x1024xf32>
    %847 = arith.mulf %846, %845 : vector<1x1024xf32>
    %848 = arith.addf %843, %847 : vector<1x1024xf32>
    %849 = vector.extract_strided_slice %761 {offsets = [0, 159], sizes = [2, 1024], strides = [1, 1]} : vector<2x1280xf32> to vector<2x1024xf32>
    %850 = vector.broadcast %758 : vector<1x1024xf32> to vector<2x1024xf32>
    %851 = arith.mulf %849, %850 : vector<2x1024xf32>
    %852 = vector.extract_strided_slice %756 {offsets = [6, 0, 0], sizes = [1, 1, 2], strides = [1, 1, 1]} : vector<9x1x2xf32> to vector<1x1x2xf32>
    %853 = vector.shape_cast %852 : vector<1x1x2xf32> to vector<1x2xf32>
    %854 = vector.extract_strided_slice %853 {offsets = [0, 0], sizes = [1, 1], strides = [1, 1]} : vector<1x2xf32> to vector<1x1xf32>
    %855 = vector.extract_strided_slice %851 {offsets = [0, 0], sizes = [1, 1024], strides = [1, 1]} : vector<2x1024xf32> to vector<1x1024xf32>
    %856 = vector.broadcast %854 : vector<1x1xf32> to vector<1x1024xf32>
    %857 = arith.mulf %856, %855 : vector<1x1024xf32>
    %858 = arith.addf %848, %857 : vector<1x1024xf32>
    %859 = vector.extract_strided_slice %853 {offsets = [0, 1], sizes = [1, 1], strides = [1, 1]} : vector<1x2xf32> to vector<1x1xf32>
    %860 = vector.extract_strided_slice %851 {offsets = [1, 0], sizes = [1, 1024], strides = [1, 1]} : vector<2x1024xf32> to vector<1x1024xf32>
    %861 = vector.broadcast %859 : vector<1x1xf32> to vector<1x1024xf32>
    %862 = arith.mulf %861, %860 : vector<1x1024xf32>
    %863 = arith.addf %858, %862 : vector<1x1024xf32>
    %864 = vector.extract_strided_slice %761 {offsets = [0, 160], sizes = [2, 1024], strides = [1, 1]} : vector<2x1280xf32> to vector<2x1024xf32>
    %865 = vector.extract_strided_slice %756 {offsets = [7, 0, 0], sizes = [1, 1, 2], strides = [1, 1, 1]} : vector<9x1x2xf32> to vector<1x1x2xf32>
    %866 = vector.shape_cast %865 : vector<1x1x2xf32> to vector<1x2xf32>
    %867 = vector.extract_strided_slice %866 {offsets = [0, 0], sizes = [1, 1], strides = [1, 1]} : vector<1x2xf32> to vector<1x1xf32>
    %868 = vector.extract_strided_slice %864 {offsets = [0, 0], sizes = [1, 1024], strides = [1, 1]} : vector<2x1024xf32> to vector<1x1024xf32>
    %869 = vector.broadcast %867 : vector<1x1xf32> to vector<1x1024xf32>
    %870 = arith.mulf %869, %868 : vector<1x1024xf32>
    %871 = arith.addf %863, %870 : vector<1x1024xf32>
    %872 = vector.extract_strided_slice %866 {offsets = [0, 1], sizes = [1, 1], strides = [1, 1]} : vector<1x2xf32> to vector<1x1xf32>
    %873 = vector.extract_strided_slice %864 {offsets = [1, 0], sizes = [1, 1024], strides = [1, 1]} : vector<2x1024xf32> to vector<1x1024xf32>
    %874 = vector.broadcast %872 : vector<1x1xf32> to vector<1x1024xf32>
    %875 = arith.mulf %874, %873 : vector<1x1024xf32>
    %876 = arith.addf %871, %875 : vector<1x1024xf32>
    %877 = vector.extract_strided_slice %761 {offsets = [0, 161], sizes = [2, 1024], strides = [1, 1]} : vector<2x1280xf32> to vector<2x1024xf32>
    %878 = vector.broadcast %759 : vector<1x1024xf32> to vector<2x1024xf32>
    %879 = arith.mulf %877, %878 : vector<2x1024xf32>
    %880 = vector.extract_strided_slice %756 {offsets = [8, 0, 0], sizes = [1, 1, 2], strides = [1, 1, 1]} : vector<9x1x2xf32> to vector<1x1x2xf32>
    %881 = vector.shape_cast %880 : vector<1x1x2xf32> to vector<1x2xf32>
    %882 = vector.extract_strided_slice %881 {offsets = [0, 0], sizes = [1, 1], strides = [1, 1]} : vector<1x2xf32> to vector<1x1xf32>
    %883 = vector.extract_strided_slice %879 {offsets = [0, 0], sizes = [1, 1024], strides = [1, 1]} : vector<2x1024xf32> to vector<1x1024xf32>
    %884 = vector.broadcast %882 : vector<1x1xf32> to vector<1x1024xf32>
    %885 = arith.mulf %884, %883 : vector<1x1024xf32>
    %886 = arith.addf %876, %885 : vector<1x1024xf32>
    %887 = vector.extract_strided_slice %881 {offsets = [0, 1], sizes = [1, 1], strides = [1, 1]} : vector<1x2xf32> to vector<1x1xf32>
    %888 = vector.extract_strided_slice %879 {offsets = [1, 0], sizes = [1, 1024], strides = [1, 1]} : vector<2x1024xf32> to vector<1x1024xf32>
    %889 = vector.broadcast %887 : vector<1x1xf32> to vector<1x1024xf32>
    %890 = arith.mulf %889, %888 : vector<1x1024xf32>
    %891 = arith.addf %886, %890 : vector<1x1024xf32>
    %892 = vector.broadcast %757 : vector<1x1xf32> to vector<1x1024xf32>
    %893 = arith.addf %891, %892 : vector<1x1024xf32>
    %894 = vector.shape_cast %893 : vector<1x1024xf32> to vector<1x1x1024xf32>
    %c0_34 = arith.constant 0 : index
    %c0_35 = arith.constant 0 : index
    %c0_36 = arith.constant 0 : index
    %895 = vector.load %arg12[%c0_34, %c0_35, %c0_36] : memref<1x1x1024xf32, #tpu.memory_space<vmem>>, vector<1x1x1024xf32>
    tpu.vector_store %arg12[%c0_34, %c0_35, %c0_36], %894 {strides = array<i32>} : memref<1x1x1024xf32, #tpu.memory_space<vmem>>, vector<1x1x1024xf32>,
    return
  }
  func.func @transform_0(%arg0: i32) -> (i32, i32, i32) {
    %c0_i32 = arith.constant 0 : i32
    %c0_i32_0 = arith.constant 0 : i32
    %c0_i32_1 = arith.constant 0 : i32
    return %arg0, %c0_i32, %c0_i32_0 : i32, i32, i32
  }
  func.func @transform_1(%arg0: i32) -> (i32, i32) {
    %c0_i32 = arith.constant 0 : i32
    %c0_i32_0 = arith.constant 0 : i32
    %c0_i32_1 = arith.constant 0 : i32
    return %c0_i32, %c0_i32_0 : i32, i32
  }
  func.func @transform_2(%arg0: i32) -> (i32, i32) {
    %c0_i32 = arith.constant 0 : i32
    %c0_i32_0 = arith.constant 0 : i32
    %c0_i32_1 = arith.constant 0 : i32
    return %c0_i32, %c0_i32_0 : i32, i32
  }
  func.func @transform_3(%arg0: i32) -> (i32, i32) {
    %c0_i32 = arith.constant 0 : i32
    %c0_i32_0 = arith.constant 0 : i32
    %c0_i32_1 = arith.constant 0 : i32
    return %c0_i32, %c0_i32_0 : i32, i32
  }
  func.func @transform_4(%arg0: i32) -> (i32, i32) {
    %c0_i32 = arith.constant 0 : i32
    %c0_i32_0 = arith.constant 0 : i32
    %c0_i32_1 = arith.constant 0 : i32
    return %c0_i32, %c0_i32_0 : i32, i32
  }
  func.func @transform_5(%arg0: i32) -> (i32, i32, i32) {
    %c0_i32 = arith.constant 0 : i32
    %c0_i32_0 = arith.constant 0 : i32
    %c0_i32_1 = arith.constant 0 : i32
    %c0_i32_2 = arith.constant 0 : i32
    return %c0_i32, %c0_i32_0, %c0_i32_1 : i32, i32, i32
  }
  func.func @transform_6(%arg0: i32) -> (i32, i32) {
    %c0_i32 = arith.constant 0 : i32
    %c0_i32_0 = arith.constant 0 : i32
    %c0_i32_1 = arith.constant 0 : i32
    return %c0_i32, %c0_i32_0 : i32, i32
  }
  func.func @transform_7(%arg0: i32) -> (i32, i32, i32) {
    %c0_i32 = arith.constant 0 : i32
    %c0_i32_0 = arith.constant 0 : i32
    %c0_i32_1 = arith.constant 0 : i32
    %c0_i32_2 = arith.constant 0 : i32
    return %c0_i32, %c0_i32_0, %c0_i32_1 : i32, i32, i32
  }
  func.func @transform_8(%arg0: i32) -> (i32, i32) {
    %c0_i32 = arith.constant 0 : i32
    %c0_i32_0 = arith.constant 0 : i32
    %c0_i32_1 = arith.constant 0 : i32
    return %c0_i32, %c0_i32_0 : i32, i32
  }
  func.func @transform_9(%arg0: i32) -> (i32, i32, i32) {
    %c0_i32 = arith.constant 0 : i32
    %c0_i32_0 = arith.constant 0 : i32
    %c0_i32_1 = arith.constant 0 : i32
    %c0_i32_2 = arith.constant 0 : i32
    return %c0_i32, %c0_i32_0, %c0_i32_1 : i32, i32, i32
  }
  func.func @transform_10(%arg0: i32) -> (i32, i32) {
    %c0_i32 = arith.constant 0 : i32
    %c0_i32_0 = arith.constant 0 : i32
    %c0_i32_1 = arith.constant 0 : i32
    return %c0_i32, %c0_i32_0 : i32, i32
  }
  func.func @transform_11(%arg0: i32) -> (i32, i32, i32) {
    %c0_i32 = arith.constant 0 : i32
    %c0_i32_0 = arith.constant 0 : i32
    %c0_i32_1 = arith.constant 0 : i32
    return %arg0, %c0_i32, %c0_i32_0 : i32, i32, i32
  }
}

</mosaic_0001>

<llo_original>
// kernel: decoder_block.1
$region0: #{decoder_block.1}
  #allocation0 [shape = 'u32[]', space=smem, size = 0x4, offset = 0x4, fixed_abs, tag = 'smem constant byte address 0x4 - core index']
  #allocation1 [shape = 'u32[144,128]{1,0:T(1,128)}', space=vmem, size = 0x12000, scoped, tag = 'internal scratch']
  #allocation2 [shape = 'f32[1,1]{1,0:T(1,128)S(1)}', space=vmem, size = 0x200, scoped, tag = 'scoped memory for decoder_block.1']
  %s0 = inlined_call_operand.vmem [shape: f32[2,8,64], index: 0, kind: input, shape index: {}]
  %s1 = inlined_call_operand.vmem [shape: f32[64,256], index: 1, kind: input, shape index: {}]
  %s2 = inlined_call_operand.hbm [shape: f32[256,1024], index: 2, kind: input, shape index: {}]
  %s3 = inlined_call_operand.vmem [shape: f32[2,256], index: 3, kind: input, shape index: {}]
  %s4 = inlined_call_operand.vmem [shape: f32[2,1024], index: 4, kind: input, shape index: {}]
  %s5 = inlined_call_operand.vmem [shape: f32[9,4,8], index: 5, kind: input, shape index: {}]
  %s6 = inlined_call_operand.vmem [shape: f32[4,1], index: 6, kind: input, shape index: {}]
  %s7 = inlined_call_operand.vmem [shape: f32[9,2,4], index: 7, kind: input, shape index: {}]
  %s8 = inlined_call_operand.vmem [shape: f32[2,1], index: 8, kind: input, shape index: {}]
  %s9 = inlined_call_operand.vmem [shape: f32[9,1,2], index: 9, kind: input, shape index: {}]
  %s10 = inlined_call_operand.<no memory space> [shape: f32[1,1], index: 10, kind: input, shape index: {}]
  %s11 = inlined_call_operand.vmem [shape: f32[2,1,1024], index: 11, kind: output, shape index: {}]
  %s12 = sld [smem:[#allocation0]]
  $region81: #{decoder_block.1} parent=0
    _
  %s14 = ssub.s32 1, %s12
  %s15 = scalar_select 0, %s14, %s12
  %v16 = vstv %s10
  %17 = vst [vmem:[#allocation2] sm:$0x1] %v16
  $region1: #{decoder_block.1} parent=0
    #allocation3 [shape = 'u8[1048576]{0}', space=vmem, size = 0x100000, scoped, tag = 'input window, operand 2, single buffered']
    #allocation4 [shape = 's32[2]{0}', space=sflag, size = 0x8, scoped, tag = 'scoped memory for decoder_block.1']
    %18 = vsyncpa [#allocation4], 0
    loop: start=0, step=1, limit=4
    $region2: #{decoder_block.1} parent=1 // loop_pre_header
      _
    $region3: #{decoder_block.1} parent=1 // loop_header
      %s20 = sphi 0, %s24
      %p21 = scmp.ge.s32.totalorder %s20, 4
      %s30 = sphi 0, %s32
      %s33 = sphi 0, %s30
      %s34 = sphi 0, %s33
      %s50 = sphi 0, %s34
      %s54 = sphi 0, %s54
      %s56 = sphi 0, %s54
      %s57 = sphi 0, %s56
      %s71 = sphi 0, %s57
      %s75 = sphi 0, %s75
      %s77 = sphi 0, %s75
      %s78 = sphi 0, %s77
      %s92 = sphi 0, %s78
      %s96 = sphi 0, %s96
      %s98 = sphi 0, %s96
      %s99 = sphi 0, %s98
      %s113 = sphi 0, %s99
      %s117 = sphi 0, %s117
      %s119 = sphi 0, %s117
      %s120 = sphi 0, %s119
      %s134 = sphi 0, %s120
      %s138 = sphi 0, %s138
      %s140 = sphi 0, %s138
      %s141 = sphi 0, %s140
      %s155 = sphi 0, %s141
      %s159 = sphi 0, %s159
      %s161 = sphi 0, %s159
      %s162 = sphi 0, %s161
      %s176 = sphi 0, %s162
      %s180 = sphi 0, %s180
      %s182 = sphi 0, %s180
      %s183 = sphi 0, %s182
      %s197 = sphi 0, %s183
      %s201 = sphi 0, %s201
      %s203 = sphi 0, %s201
      %s204 = sphi 0, %s203
      %s218 = sphi 0, %s204
      %s222 = sphi 0, %s222
      %s224 = sphi 0, %s222
      %s225 = sphi 0, %s224
      %s239 = sphi 0, %s225
      %s243 = sphi 0, %s243
      %s245 = sphi 0, %s243
      %s246 = sphi 0, %s245
      %s260 = sphi 0, %s246
      %s266 = sphi 0, %s268
      %s269 = sphi 0, %s266
      %s270 = sphi 0, %s269
      %s286 = sphi 0, %s270
    $region4: #{decoder_block.1} parent=1 // loop_header_branch
      %23 = sbr.rel (%p21) target = $region8
    $region5: #{decoder_block.1} parent=1 // loop_body
      %s25 = ssub.s32 %s20, 1
      %s26 = ssub.s32 %s20, 2
      %s27 = sadd.s32 %s20, 1
      %s28 = ssub.s32 %s20, %s27
      %p29 = scmp.eq.s32.totalorder %s28, 0
      %s31 = sadd.s32 %s30, 1
      %s32 = scalar_select %p29, %s30, %s31
      %p35 = pneg %p29
      %p36 = scmp.eq.s32.totalorder %s20, 1
      %p37 = por %p35, %p36
      %p38 = scmp.ne.s32.totalorder %s30, %s33
      %p39 = scmp.eq.s32.totalorder %s20, 0
      %p40 = por %p38, %p39
      %p41 = scmp.ne.s32.totalorder %s30, %s33
      %p42 = scmp.eq.s32.totalorder %s25, 1
      %p43 = por %p41, %p42
      %p44 = scmp.ne.s32.totalorder %s33, %s34
      %p45 = scmp.eq.s32.totalorder %s25, 0
      %p46 = por %p44, %p45
      %p47 = scmp.ne.s32.totalorder %s33, %s34
      %p48 = scmp.eq.s32.totalorder %s26, 1
      %p49 = por %p47, %p48
      %p51 = scmp.ne.s32.totalorder %s34, %s50
      %p52 = scmp.eq.s32.totalorder %s26, 0
      %p53 = por %p51, %p52
      %s55 = sadd.s32 %s54, 1
      %p58 = scmp.eq.s32.totalorder %s20, 1
      %p59 = scmp.ne.s32.totalorder %s54, %s56
      %p60 = scmp.eq.s32.totalorder %s20, 0
      %p61 = por %p59, %p60
      %p62 = scmp.ne.s32.totalorder %s54, %s56
      %p63 = scmp.eq.s32.totalorder %s25, 1
      %p64 = por %p62, %p63
      %p65 = scmp.ne.s32.totalorder %s56, %s57
      %p66 = scmp.eq.s32.totalorder %s25, 0
      %p67 = por %p65, %p66
      %p68 = scmp.ne.s32.totalorder %s56, %s57
      %p69 = scmp.eq.s32.totalorder %s26, 1
      %p70 = por %p68, %p69
      %p72 = scmp.ne.s32.totalorder %s57, %s71
      %p73 = scmp.eq.s32.totalorder %s26, 0
      %p74 = por %p72, %p73
      %s76 = sadd.s32 %s75, 1
      %p79 = scmp.eq.s32.totalorder %s20, 1
      %p80 = scmp.ne.s32.totalorder %s75, %s77
      %p81 = scmp.eq.s32.totalorder %s20, 0
      %p82 = por %p80, %p81
      %p83 = scmp.ne.s32.totalorder %s75, %s77
      %p84 = scmp.eq.s32.totalorder %s25, 1
      %p85 = por %p83, %p84
      %p86 = scmp.ne.s32.totalorder %s77, %s78
      %p87 = scmp.eq.s32.totalorder %s25, 0
      %p88 = por %p86, %p87
      %p89 = scmp.ne.s32.totalorder %s77, %s78
      %p90 = scmp.eq.s32.totalorder %s26, 1
      %p91 = por %p89, %p90
      %p93 = scmp.ne.s32.totalorder %s78, %s92
      %p94 = scmp.eq.s32.totalorder %s26, 0
      %p95 = por %p93, %p94
      %s97 = sadd.s32 %s96, 1
      %p100 = scmp.eq.s32.totalorder %s20, 1
      %p101 = scmp.ne.s32.totalorder %s96, %s98
      %p102 = scmp.eq.s32.totalorder %s20, 0
      %p103 = por %p101, %p102
      %p104 = scmp.ne.s32.totalorder %s96, %s98
      %p105 = scmp.eq.s32.totalorder %s25, 1
      %p106 = por %p104, %p105
      %p107 = scmp.ne.s32.totalorder %s98, %s99
      %p108 = scmp.eq.s32.totalorder %s25, 0
      %p109 = por %p107, %p108
      %p110 = scmp.ne.s32.totalorder %s98, %s99
      %p111 = scmp.eq.s32.totalorder %s26, 1
      %p112 = por %p110, %p111
      %p114 = scmp.ne.s32.totalorder %s99, %s113
      %p115 = scmp.eq.s32.totalorder %s26, 0
      %p116 = por %p114, %p115
      %s118 = sadd.s32 %s117, 1
      %p121 = scmp.eq.s32.totalorder %s20, 1
      %p122 = scmp.ne.s32.totalorder %s117, %s119
      %p123 = scmp.eq.s32.totalorder %s20, 0
      %p124 = por %p122, %p123
      %p125 = scmp.ne.s32.totalorder %s117, %s119
      %p126 = scmp.eq.s32.totalorder %s25, 1
      %p127 = por %p125, %p126
      %p128 = scmp.ne.s32.totalorder %s119, %s120
      %p129 = scmp.eq.s32.totalorder %s25, 0
      %p130 = por %p128, %p129
      %p131 = scmp.ne.s32.totalorder %s119, %s120
      %p132 = scmp.eq.s32.totalorder %s26, 1
      %p133 = por %p131, %p132
      %p135 = scmp.ne.s32.totalorder %s120, %s134
      %p136 = scmp.eq.s32.totalorder %s26, 0
      %p137 = por %p135, %p136
      %s139 = sadd.s32 %s138, 1
      %p142 = scmp.eq.s32.totalorder %s20, 1
      %p143 = scmp.ne.s32.totalorder %s138, %s140
      %p144 = scmp.eq.s32.totalorder %s20, 0
      %p145 = por %p143, %p144
      %p146 = scmp.ne.s32.totalorder %s138, %s140
      %p147 = scmp.eq.s32.totalorder %s25, 1
      %p148 = por %p146, %p147
      %p149 = scmp.ne.s32.totalorder %s140, %s141
      %p150 = scmp.eq.s32.totalorder %s25, 0
      %p151 = por %p149, %p150
      %p152 = scmp.ne.s32.totalorder %s140, %s141
      %p153 = scmp.eq.s32.totalorder %s26, 1
      %p154 = por %p152, %p153
      %p156 = scmp.ne.s32.totalorder %s141, %s155
      %p157 = scmp.eq.s32.totalorder %s26, 0
      %p158 = por %p156, %p157
      %s160 = sadd.s32 %s159, 1
      %p163 = scmp.eq.s32.totalorder %s20, 1
      %p164 = scmp.ne.s32.totalorder %s159, %s161
      %p165 = scmp.eq.s32.totalorder %s20, 0
      %p166 = por %p164, %p165
      %p167 = scmp.ne.s32.totalorder %s159, %s161
      %p168 = scmp.eq.s32.totalorder %s25, 1
      %p169 = por %p167, %p168
      %p170 = scmp.ne.s32.totalorder %s161, %s162
      %p171 = scmp.eq.s32.totalorder %s25, 0
      %p172 = por %p170, %p171
      %p173 = scmp.ne.s32.totalorder %s161, %s162
      %p174 = scmp.eq.s32.totalorder %s26, 1
      %p175 = por %p173, %p174
      %p177 = scmp.ne.s32.totalorder %s162, %s176
      %p178 = scmp.eq.s32.totalorder %s26, 0
      %p179 = por %p177, %p178
      %s181 = sadd.s32 %s180, 1
      %p184 = scmp.eq.s32.totalorder %s20, 1
      %p185 = scmp.ne.s32.totalorder %s180, %s182
      %p186 = scmp.eq.s32.totalorder %s20, 0
      %p187 = por %p185, %p186
      %p188 = scmp.ne.s32.totalorder %s180, %s182
      %p189 = scmp.eq.s32.totalorder %s25, 1
      %p190 = por %p188, %p189
      %p191 = scmp.ne.s32.totalorder %s182, %s183
      %p192 = scmp.eq.s32.totalorder %s25, 0
      %p193 = por %p191, %p192
      %p194 = scmp.ne.s32.totalorder %s182, %s183
      %p195 = scmp.eq.s32.totalorder %s26, 1
      %p196 = por %p194, %p195
      %p198 = scmp.ne.s32.totalorder %s183, %s197
      %p199 = scmp.eq.s32.totalorder %s26, 0
      %p200 = por %p198, %p199
      %s202 = sadd.s32 %s201, 1
      %p205 = scmp.eq.s32.totalorder %s20, 1
      %p206 = scmp.ne.s32.totalorder %s201, %s203
      %p207 = scmp.eq.s32.totalorder %s20, 0
      %p208 = por %p206, %p207
      %p209 = scmp.ne.s32.totalorder %s201, %s203
      %p210 = scmp.eq.s32.totalorder %s25, 1
      %p211 = por %p209, %p210
      %p212 = scmp.ne.s32.totalorder %s203, %s204
      %p213 = scmp.eq.s32.totalorder %s25, 0
      %p214 = por %p212, %p213
      %p215 = scmp.ne.s32.totalorder %s203, %s204
      %p216 = scmp.eq.s32.totalorder %s26, 1
      %p217 = por %p215, %p216
      %p219 = scmp.ne.s32.totalorder %s204, %s218
      %p220 = scmp.eq.s32.totalorder %s26, 0
      %p221 = por %p219, %p220
      %s223 = sadd.s32 %s222, 1
      %p226 = scmp.eq.s32.totalorder %s20, 1
      %p227 = scmp.ne.s32.totalorder %s222, %s224
      %p228 = scmp.eq.s32.totalorder %s20, 0
      %p229 = por %p227, %p228
      %p230 = scmp.ne.s32.totalorder %s222, %s224
      %p231 = scmp.eq.s32.totalorder %s25, 1
      %p232 = por %p230, %p231
      %p233 = scmp.ne.s32.totalorder %s224, %s225
      %p234 = scmp.eq.s32.totalorder %s25, 0
      %p235 = por %p233, %p234
      %p236 = scmp.ne.s32.totalorder %s224, %s225
      %p237 = scmp.eq.s32.totalorder %s26, 1
      %p238 = por %p236, %p237
      %p240 = scmp.ne.s32.totalorder %s225, %s239
      %p241 = scmp.eq.s32.totalorder %s26, 0
      %p242 = por %p240, %p241
      %s244 = sadd.s32 %s243, 1
      %p247 = scmp.eq.s32.totalorder %s20, 1
      %p248 = scmp.ne.s32.totalorder %s243, %s245
      %p249 = scmp.eq.s32.totalorder %s20, 0
      %p250 = por %p248, %p249
      %p251 = scmp.ne.s32.totalorder %s243, %s245
      %p252 = scmp.eq.s32.totalorder %s25, 1
      %p253 = por %p251, %p252
      %p254 = scmp.ne.s32.totalorder %s245, %s246
      %p255 = scmp.eq.s32.totalorder %s25, 0
      %p256 = por %p254, %p255
      %p257 = scmp.ne.s32.totalorder %s245, %s246
      %p258 = scmp.eq.s32.totalorder %s26, 1
      %p259 = por %p257, %p258
      %p261 = scmp.ne.s32.totalorder %s246, %s260
      %p262 = scmp.eq.s32.totalorder %s26, 0
      %p263 = por %p261, %p262
      %s264 = ssub.s32 %s20, %s27
      %p265 = scmp.eq.s32.totalorder %s264, 0
      %s267 = sadd.s32 %s266, 1
      %s268 = scalar_select %p265, %s266, %s267
      %p271 = pneg %p265
      %p272 = scmp.eq.s32.totalorder %s20, 1
      %p273 = por %p271, %p272
      %p274 = scmp.ne.s32.totalorder %s266, %s269
      %p275 = scmp.eq.s32.totalorder %s20, 0
      %p276 = por %p274, %p275
      %p277 = scmp.ne.s32.totalorder %s266, %s269
      %p278 = scmp.eq.s32.totalorder %s25, 1
      %p279 = por %p277, %p278
      %p280 = scmp.ne.s32.totalorder %s269, %s270
      %p281 = scmp.eq.s32.totalorder %s25, 0
      %p282 = por %p280, %p281
      %p283 = scmp.ne.s32.totalorder %s269, %s270
      %p284 = scmp.eq.s32.totalorder %s26, 1
      %p285 = por %p283, %p284
      %p287 = scmp.ne.s32.totalorder %s270, %s286
      %p288 = scmp.eq.s32.totalorder %s26, 0
      %p289 = por %p287, %p288
      %p290 = scmp.le.s32.totalorder 1, %s20
      %p291 = scmp.lt.s32.totalorder %s20, 3
      %p292 = pnand %p290, %p291
      %p293 = pneg %p292
      // Predicated region
      $region9: #{decoder_block.1} parent=5 // pred_check
        _
      $region10: #{decoder_block.1} parent=5 // pred_check_branch
        %295 = sbr.rel (%p292) target = $region12
      $region11: #{decoder_block.1} parent=5 // pred_region
        %s296 = ssub.s32 %s20, 1
        // Predicated region
        $region13: #{decoder_block.1} parent=11 // pred_check
          %p297 = pneg %p67
        $region14: #{decoder_block.1} parent=11 // pred_check_branch
          %299 = sbr.rel (%p297) target = $region16
        $region15: #{decoder_block.1} parent=11 // pred_region
          _
        $region16: #{decoder_block.1} parent=11 // pred_fallthru
          _
        // Predicated region
        $region17: #{decoder_block.1} parent=11 // pred_check
          %p300 = pneg %p88
        $region18: #{decoder_block.1} parent=11 // pred_check_branch
          %302 = sbr.rel (%p300) target = $region20
        $region19: #{decoder_block.1} parent=11 // pred_region
          %s304 = ssub.s32 32768, 32768
          %305 = vsyncadd [#allocation4], %s304
          %s306 = sshll.u32 [#allocation3], 4
          %s307 = int_to_ptr.vmem [resolvable:$true] %s306
          %312 = dma.hbm_to_vmem [thread:$0]  %s2, 32768, %s307, [#allocation4], 1024, 1024, 64
        $region20: #{decoder_block.1} parent=11 // pred_fallthru
          _
        // Predicated region
        $region21: #{decoder_block.1} parent=11 // pred_check
          %p313 = pneg %p109
        $region22: #{decoder_block.1} parent=11 // pred_check_branch
          %315 = sbr.rel (%p313) target = $region24
        $region23: #{decoder_block.1} parent=11 // pred_region
          _
        $region24: #{decoder_block.1} parent=11 // pred_fallthru
          _
        // Predicated region
        $region25: #{decoder_block.1} parent=11 // pred_check
          %p316 = pneg %p130
        $region26: #{decoder_block.1} parent=11 // pred_check_branch
          %318 = sbr.rel (%p316) target = $region28
        $region27: #{decoder_block.1} parent=11 // pred_region
          _
        $region28: #{decoder_block.1} parent=11 // pred_fallthru
          _
        // Predicated region
        $region29: #{decoder_block.1} parent=11 // pred_check
          %p319 = pneg %p151
        $region30: #{decoder_block.1} parent=11 // pred_check_branch
          %321 = sbr.rel (%p319) target = $region32
        $region31: #{decoder_block.1} parent=11 // pred_region
          _
        $region32: #{decoder_block.1} parent=11 // pred_fallthru
          _
        // Predicated region
        $region33: #{decoder_block.1} parent=11 // pred_check
          %p322 = pneg %p172
        $region34: #{decoder_block.1} parent=11 // pred_check_branch
          %324 = sbr.rel (%p322) target = $region36
        $region35: #{decoder_block.1} parent=11 // pred_region
          _
        $region36: #{decoder_block.1} parent=11 // pred_fallthru
          _
        // Predicated region
        $region37: #{decoder_block.1} parent=11 // pred_check
          %p325 = pneg %p193
        $region38: #{decoder_block.1} parent=11 // pred_check_branch
          %327 = sbr.rel (%p325) target = $region40
        $region39: #{decoder_block.1} parent=11 // pred_region
          _
        $region40: #{decoder_block.1} parent=11 // pred_fallthru
          _
        // Predicated region
        $region41: #{decoder_block.1} parent=11 // pred_check
          %p328 = pneg %p214
        $region42: #{decoder_block.1} parent=11 // pred_check_branch
          %330 = sbr.rel (%p328) target = $region44
        $region43: #{decoder_block.1} parent=11 // pred_region
          _
        $region44: #{decoder_block.1} parent=11 // pred_fallthru
          _
        // Predicated region
        $region45: #{decoder_block.1} parent=11 // pred_check
          %p331 = pneg %p235
        $region46: #{decoder_block.1} parent=11 // pred_check_branch
          %333 = sbr.rel (%p331) target = $region48
        $region47: #{decoder_block.1} parent=11 // pred_region
          _
        $region48: #{decoder_block.1} parent=11 // pred_fallthru
          _
        // Predicated region
        $region49: #{decoder_block.1} parent=11 // pred_check
          %p334 = pneg %p256
        $region50: #{decoder_block.1} parent=11 // pred_check_branch
          %336 = sbr.rel (%p334) target = $region52
        $region51: #{decoder_block.1} parent=11 // pred_region
          _
        $region52: #{decoder_block.1} parent=11 // pred_fallthru
          _
      $region12: #{decoder_block.1} parent=5 // pred_fallthru
        _
      %p337 = scmp.lt.s32.totalorder %s20, 2
      // Predicated region
      $region53: #{decoder_block.1} parent=5 // pred_check
        %p338 = pneg %p337
      $region54: #{decoder_block.1} parent=5 // pred_check_branch
        %340 = sbr.rel (%p338) target = $region56
      $region55: #{decoder_block.1} parent=5 // pred_region
        // Predicated region
        $region57: #{decoder_block.1} parent=55 // pred_check
          %p341 = pneg %p40
        $region58: #{decoder_block.1} parent=55 // pred_check_branch
          %343 = sbr.rel (%p341) target = $region60
        $region59: #{decoder_block.1} parent=55 // pred_region
          %p344 = scmp.lt.s32.totalorder %s20, 1
          %s345 = scalar_select %p344, %s20, 1
          %s346 = smul.addr %s345, 8
          %s347 = scalar_lea.vmem %s0, %s346
        $region60: #{decoder_block.1} parent=55 // pred_fallthru
          _
      $region56: #{decoder_block.1} parent=5 // pred_fallthru
        _
      %p348 = scmp.le.s32.totalorder 1, %s20
      %p349 = scmp.lt.s32.totalorder %s20, 3
      %p350 = pnand %p348, %p349
      %p351 = pneg %p350
      // Predicated region
      $region61: #{decoder_block.1} parent=5 // pred_check
        _
      $region62: #{decoder_block.1} parent=5 // pred_check_branch
        %353 = sbr.rel (%p350) target = $region64
      $region63: #{decoder_block.1} parent=5 // pred_region
        %s354 = ssub.s32 %s20, 1
        // Predicated region
        $region65: #{decoder_block.1} parent=63 // pred_check
          %p355 = pneg %p88
        $region66: #{decoder_block.1} parent=63 // pred_check_branch
          %357 = sbr.rel (%p355) target = $region68
        $region67: #{decoder_block.1} parent=63 // pred_region
          %358 = dma.done [#allocation4], 32768
        $region68: #{decoder_block.1} parent=63 // pred_fallthru
          _
        %p359 = scmp.lt.s32.totalorder %s25, 1
        %s360 = scalar_select %p359, %s25, 1
        %s361 = smul.addr %s360, 8
        %s362 = scalar_lea.vmem %s0, %s361
        %p363 = pneg %p46
        %p364 = pneg %p43
        %p365 = pneg %p67
        %p366 = pneg %p64
        %p367 = pneg %p88
        %p368 = pneg %p85
        %p369 = pneg %p109
        %p370 = pneg %p106
        %p371 = pneg %p130
        %p372 = pneg %p127
        %p373 = pneg %p151
        %p374 = pneg %p148
        %p375 = pneg %p172
        %p376 = pneg %p169
        %p377 = pneg %p193
        %p378 = pneg %p190
        %p379 = pneg %p214
        %p380 = pneg %p211
        %p381 = pneg %p235
        %p382 = pneg %p232
        %p383 = pneg %p256
        %p384 = pneg %p253
        %p385 = pneg %p282
        %p386 = pneg %p279
        %p387 = scmp.lt.s32.totalorder %s25, 1
        %s388 = scalar_select %p387, %s25, 1
        %s389 = smul.addr %s388, 8
        %s390 = scalar_lea.vmem %s11, %s389
        %p391 = scmp.lt.s32.totalorder %s25, 1
        %s392 = scalar_select %p391, %s25, 1
        %s393 = smul.addr %s392, 8
        %s394 = scalar_lea.vmem %s0, %s393
        %p395 = scmp.lt.s32.totalorder %s25, 1
        %s396 = scalar_select %p395, %s25, 1
        %s397 = smul.addr %s396, 8
        %s398 = scalar_lea.vmem %s11, %s397
        %v399 = vld [vmem:[%s394] sm:$0xff]
        %v400 = vld [vmem:[%s3] sm:$0xf]
        %v401 = vld [vmem:[%s4] sm:$0xff]
        %v402 = vld [vmem:[%s4 + $0x8] sm:$0xff]
        %v403 = vld [vmem:[%s1] sm:$0xff]
        %v404 = vld [vmem:[%s1 + $0x8] sm:$0xff]
        %v405 = vld [vmem:[%s1 + $0x10] sm:$0xff]
        %v406 = vld [vmem:[%s1 + $0x18] sm:$0xff]
        %v407 = vld [vmem:[%s1 + $0x20] sm:$0xff]
        %v408 = vld [vmem:[%s1 + $0x28] sm:$0xff]
        %v409 = vld [vmem:[%s1 + $0x30] sm:$0xff]
        %v410 = vld [vmem:[%s1 + $0x38] sm:$0xff]
        %v411 = vld [vmem:[%s1 + $0x40] sm:$0xff]
        %v412 = vld [vmem:[%s1 + $0x48] sm:$0xff]
        %v413 = vld [vmem:[%s1 + $0x50] sm:$0xff]
        %v414 = vld [vmem:[%s1 + $0x58] sm:$0xff]
        %v415 = vld [vmem:[%s1 + $0x60] sm:$0xff]
        %v416 = vld [vmem:[%s1 + $0x68] sm:$0xff]
        %v417 = vld [vmem:[%s1 + $0x70] sm:$0xff]
        %v418 = vld [vmem:[%s1 + $0x78] sm:$0xff]
        %vm419 = vcmask 523264
        %v421 = vsel %vm419, %v399, 0
        %423 = vmatprep.subr.mxu0 0.0
        %424 = vmatpush1.msra.mxu0 0.0
        %425 = vmatprep.subr.mxu0 0.0
        %426 = vmatpush1.msra.mxu0 0.0
        %427 = vmatprep.subr.mxu0 0.0
        %428 = vmatpush1.msra.mxu0 0.0
        %429 = vmatprep.subr.mxu0 0.0
        %430 = vmatpush1.msra.mxu0 0.0
        %431 = vmatprep.subr.mxu0 0.0
        %432 = vmatpush1.msra.mxu0 0.0
        %433 = vmatprep.subr.mxu0 0.0
        %434 = vmatpush1.msra.mxu0 0.0
        %435 = vmatprep.subr.mxu0 0.0
        %436 = vmatpush1.msra.mxu0 0.0
        %437 = vmatprep.subr.mxu0 0.0
        %438 = vmatpush1.msra.mxu0 0.0
        %439 = vmatprep.subr.mxu0 %v418
        %440 = vmatpush1.msra.mxu0 %v417
        %441 = vmatprep.subr.mxu0 %v416
        %442 = vmatpush1.msra.mxu0 %v415
        %443 = vmatprep.subr.mxu0 %v414
        %444 = vmatpush1.msra.mxu0 %v413
        %445 = vmatprep.subr.mxu0 %v412
        %446 = vmatpush1.msra.mxu0 %v411
        %447 = vmatprep.subr.mxu0 %v410
        %448 = vmatpush1.msra.mxu0 %v409
        %449 = vmatprep.subr.mxu0 %v408
        %450 = vmatpush1.msra.mxu0 %v407
        %451 = vmatprep.subr.mxu0 %v406
        %452 = vmatpush1.msra.mxu0 %v405
        %453 = vmatprep.subr.mxu0 %v404
        %454 = vmatpush1.msra.mxu0 %v403
        %455 = vmatprep.subr.mxu0 0.0
        %456 = vmatpush2.msra.mxu0 0.0
        %457 = vmatprep.subr.mxu0 0.0
        %458 = vmatpush2.msra.mxu0 0.0
        %459 = vmatprep.subr.mxu0 0.0
        %460 = vmatpush2.msra.mxu0 0.0
        %461 = vmatprep.subr.mxu0 0.0
        %462 = vmatpush2.msra.mxu0 0.0
        %463 = vmatprep.subr.mxu0 0.0
        %464 = vmatpush2.msra.mxu0 0.0
        %465 = vmatprep.subr.mxu0 0.0
        %466 = vmatpush2.msra.mxu0 0.0
        %467 = vmatprep.subr.mxu0 0.0
        %468 = vmatpush2.msra.mxu0 0.0
        %469 = vmatprep.subr.mxu0 0.0
        %470 = vmatpush2.msra.mxu0 0.0
        %471 = vmatprep.subr.mxu0 0.0
        %472 = vmatpush2.msra.mxu0 0.0
        %473 = vmatprep.subr.mxu0 0.0
        %474 = vmatpush2.msra.mxu0 0.0
        %475 = vmatprep.subr.mxu0 0.0
        %476 = vmatpush2.msra.mxu0 0.0
        %477 = vmatprep.subr.mxu0 0.0
        %478 = vmatpush2.msra.mxu0 0.0
        %479 = vmatprep.subr.mxu0 0.0
        %480 = vmatpush2.msra.mxu0 0.0
        %481 = vmatprep.subr.mxu0 0.0
        %482 = vmatpush2.msra.mxu0 0.0
        %483 = vmatprep.subr.mxu0 0.0
        %484 = vmatpush2.msra.mxu0 0.0
        %485 = vmatprep.subr.mxu0 0.0
        %486 = vmatpush2.msra.mxu0 0.0
        %487 = vmatprep.mubr.f32.mxu0 0.0
        %488 = vmatmul.mubr.f32.gmra.mxu0 %v421
        %v489 = vpop.f32.mrf.mxu0
        %v490 = vadd.f32 0.0, %v489
        %v491 = vpop.f32.mrf.mxu0
        %v492 = vadd.f32 0.0, %v491
        %493 = vdwg.mxu0
        %v494 = vld [vmem:[%s5] sm:$0xf]
        %v495 = vld [vmem:[%s5 + $0x4] sm:$0xf]
        %v496 = vld [vmem:[%s5 + $0x8] sm:$0xf]
        %v497 = vld [vmem:[%s5 + $0xc] sm:$0xf]
        %v498 = vld [vmem:[%s5 + $0x10] sm:$0xf]
        %v499 = vld [vmem:[%s5 + $0x14] sm:$0xf]
        %v500 = vld [vmem:[%s5 + $0x18] sm:$0xf]
        %v501 = vld [vmem:[%s5 + $0x1c] sm:$0xf]
        %v502 = vld [vmem:[%s5 + $0x20] sm:$0xf]
        %v503 = vld [vmem:[%s6] sm:$0xf]
        %v505 = vlaneseq
        %v506 = vshrl.u32 %v505, 7
        %v507 = vsub.s32 0, %v506
        %v508 = vrot.slane %v400, %v507
        %v509 = vlaneseq
        %v510 = vshrl.u32 %v509, 7
        %v511 = vsub.s32 2, %v510
        %v512 = vrot.slane %v400, %v511
        %v515 = vlaneseq
        %v516 = vshrl.u32 %v515, 7
        %v517 = vsub.s32 0, %v516
        %v518 = vrot.slane %v508, %v517
        %v519 = vlaneseq
        %v520 = vshrl.u32 %v519, 7
        %v521 = vsub.s32 0, %v520
        %v522 = vrot.slane %v512, %v521
        %525 = vrot.lane.b32.xlu0 %v518, 111
        %v526 = vpop.permute.xlu0 %525
        %527 = vrot.lane.b32.xlu0 %v522, 111
        %v528 = vpop.permute.xlu0 %527
        %vm529 = vcmask 908288
        %v530 = vsel %vm529, %v526, %v528
        %v534 = vmul.f32 %v526, 0.0
        %v535 = vmul.f32 %v490, %v530
        %v536 = vmul.f32 %v492, %v528
        %538 = vset.pattern.permute.xlu0 0
        %539 = vperm.xlu0 %538, %v494
        %v540 = vpop.permute.xlu0 %539
        %v542 = vlaneseq
        %v543 = vshrl.u32 %v542, 7
        %v544 = vsub.s32 0, %v543
        %v545 = vrot.slane %v534, %v544
        %v546 = vlaneseq
        %v547 = vshrl.u32 %v546, 7
        %v548 = vsub.s32 0, %v547
        %v549 = vrot.slane %v535, %v548
        %v550 = vlaneseq
        %v551 = vshrl.u32 %v550, 7
        %v552 = vsub.s32 0, %v551
        %v553 = vrot.slane %v536, %v552
        %v554 = vmul.f32 %v540, %v545
        %v555 = vmul.f32 %v540, %v549
        %v556 = vmul.f32 %v540, %v553
        %v557 = vadd.f32 %v554, 0.0
        %v558 = vadd.f32 %v555, 0.0
        %v559 = vadd.f32 %v556, 0.0
        %560 = vset.pattern.permute.xlu0 1
        %561 = vperm.xlu0 %560, %v494
        %v562 = vpop.permute.xlu0 %561
        %v564 = vlaneseq
        %v565 = vshrl.u32 %v564, 7
        %v566 = vsub.s32 1, %v565
        %v567 = vrot.slane %v534, %v566
        %v568 = vlaneseq
        %v569 = vshrl.u32 %v568, 7
        %v570 = vsub.s32 1, %v569
        %v571 = vrot.slane %v535, %v570
        %v572 = vlaneseq
        %v573 = vshrl.u32 %v572, 7
        %v574 = vsub.s32 1, %v573
        %v575 = vrot.slane %v536, %v574
        %v576 = vmul.f32 %v562, %v567
        %v577 = vmul.f32 %v562, %v571
        %v578 = vmul.f32 %v562, %v575
        %v579 = vadd.f32 %v557, %v576
        %v580 = vadd.f32 %v558, %v577
        %v581 = vadd.f32 %v559, %v578
        %582 = vset.pattern.permute.xlu0 2
        %583 = vperm.xlu0 %582, %v494
        %v584 = vpop.permute.xlu0 %583
        %v586 = vlaneseq
        %v587 = vshrl.u32 %v586, 7
        %v588 = vsub.s32 2, %v587
        %v589 = vrot.slane %v534, %v588
        %v590 = vlaneseq
        %v591 = vshrl.u32 %v590, 7
        %v592 = vsub.s32 2, %v591
        %v593 = vrot.slane %v535, %v592
        %v594 = vlaneseq
        %v595 = vshrl.u32 %v594, 7
        %v596 = vsub.s32 2, %v595
        %v597 = vrot.slane %v536, %v596
        %v598 = vmul.f32 %v584, %v589
        %v599 = vmul.f32 %v584, %v593
        %v600 = vmul.f32 %v584, %v597
        %v601 = vadd.f32 %v579, %v598
        %v602 = vadd.f32 %v580, %v599
        %v603 = vadd.f32 %v581, %v600
        %604 = vset.pattern.permute.xlu0 3
        %605 = vperm.xlu0 %604, %v494
        %v606 = vpop.permute.xlu0 %605
        %v608 = vlaneseq
        %v609 = vshrl.u32 %v608, 7
        %v610 = vsub.s32 3, %v609
        %v611 = vrot.slane %v534, %v610
        %v612 = vlaneseq
        %v613 = vshrl.u32 %v612, 7
        %v614 = vsub.s32 3, %v613
        %v615 = vrot.slane %v535, %v614
        %v616 = vlaneseq
        %v617 = vshrl.u32 %v616, 7
        %v618 = vsub.s32 3, %v617
        %v619 = vrot.slane %v536, %v618
        %v620 = vmul.f32 %v606, %v611
        %v621 = vmul.f32 %v606, %v615
        %v622 = vmul.f32 %v606, %v619
        %v623 = vadd.f32 %v601, %v620
        %v624 = vadd.f32 %v602, %v621
        %v625 = vadd.f32 %v603, %v622
        %626 = vset.pattern.permute.xlu0 4
        %627 = vperm.xlu0 %626, %v494
        %v628 = vpop.permute.xlu0 %627
        %v630 = vlaneseq
        %v631 = vshrl.u32 %v630, 7
        %v632 = vsub.s32 4, %v631
        %v633 = vrot.slane %v534, %v632
        %v634 = vlaneseq
        %v635 = vshrl.u32 %v634, 7
        %v636 = vsub.s32 4, %v635
        %v637 = vrot.slane %v535, %v636
        %v638 = vlaneseq
        %v639 = vshrl.u32 %v638, 7
        %v640 = vsub.s32 4, %v639
        %v641 = vrot.slane %v536, %v640
        %v642 = vmul.f32 %v628, %v633
        %v643 = vmul.f32 %v628, %v637
        %v644 = vmul.f32 %v628, %v641
        %v645 = vadd.f32 %v623, %v642
        %v646 = vadd.f32 %v624, %v643
        %v647 = vadd.f32 %v625, %v644
        %648 = vset.pattern.permute.xlu0 5
        %649 = vperm.xlu0 %648, %v494
        %v650 = vpop.permute.xlu0 %649
        %v652 = vlaneseq
        %v653 = vshrl.u32 %v652, 7
        %v654 = vsub.s32 5, %v653
        %v655 = vrot.slane %v534, %v654
        %v656 = vlaneseq
        %v657 = vshrl.u32 %v656, 7
        %v658 = vsub.s32 5, %v657
        %v659 = vrot.slane %v535, %v658
        %v660 = vlaneseq
        %v661 = vshrl.u32 %v660, 7
        %v662 = vsub.s32 5, %v661
        %v663 = vrot.slane %v536, %v662
        %v664 = vmul.f32 %v650, %v655
        %v665 = vmul.f32 %v650, %v659
        %v666 = vmul.f32 %v650, %v663
        %v667 = vadd.f32 %v645, %v664
        %v668 = vadd.f32 %v646, %v665
        %v669 = vadd.f32 %v647, %v666
        %670 = vset.pattern.permute.xlu0 6
        %671 = vperm.xlu0 %670, %v494
        %v672 = vpop.permute.xlu0 %671
        %v674 = vlaneseq
        %v675 = vshrl.u32 %v674, 7
        %v676 = vsub.s32 6, %v675
        %v677 = vrot.slane %v534, %v676
        %v678 = vlaneseq
        %v679 = vshrl.u32 %v678, 7
        %v680 = vsub.s32 6, %v679
        %v681 = vrot.slane %v535, %v680
        %v682 = vlaneseq
        %v683 = vshrl.u32 %v682, 7
        %v684 = vsub.s32 6, %v683
        %v685 = vrot.slane %v536, %v684
        %v686 = vmul.f32 %v672, %v677
        %v687 = vmul.f32 %v672, %v681
        %v688 = vmul.f32 %v672, %v685
        %v689 = vadd.f32 %v667, %v686
        %v690 = vadd.f32 %v668, %v687
        %v691 = vadd.f32 %v669, %v688
        %692 = vset.pattern.permute.xlu0 7
        %693 = vperm.xlu0 %692, %v494
        %v694 = vpop.permute.xlu0 %693
        %v696 = vlaneseq
        %v697 = vshrl.u32 %v696, 7
        %v698 = vsub.s32 7, %v697
        %v699 = vrot.slane %v534, %v698
        %v700 = vlaneseq
        %v701 = vshrl.u32 %v700, 7
        %v702 = vsub.s32 7, %v701
        %v703 = vrot.slane %v535, %v702
        %v704 = vlaneseq
        %v705 = vshrl.u32 %v704, 7
        %v706 = vsub.s32 7, %v705
        %v707 = vrot.slane %v536, %v706
        %v708 = vmul.f32 %v694, %v699
        %v709 = vmul.f32 %v694, %v703
        %v710 = vmul.f32 %v694, %v707
        %v711 = vadd.f32 %v689, %v708
        %v712 = vadd.f32 %v690, %v709
        %v713 = vadd.f32 %v691, %v710
        %715 = vset.pattern.permute.xlu0 0
        %716 = vperm.xlu0 %715, %v495
        %v717 = vpop.permute.xlu0 %716
        %v719 = vlaneseq
        %v720 = vshrl.u32 %v719, 7
        %v721 = vsub.s32 0, %v720
        %v722 = vlaneseq
        %v723 = vshrl.u32 %v722, 7
        %v724 = vsub.s32 0, %v723
        %v725 = vrot.slane %v490, %v724
        %v726 = vlaneseq
        %v727 = vshrl.u32 %v726, 7
        %v728 = vsub.s32 0, %v727
        %v729 = vrot.slane %v492, %v728
        %v730 = vmul.f32 %v717, 0.0
        %v731 = vmul.f32 %v717, %v725
        %v732 = vmul.f32 %v717, %v729
        %736 = vrot.lane.b32.xlu0 %v730, 127
        %v737 = vpop.permute.xlu0 %736
        %738 = vrot.lane.b32.xlu0 %v731, 127
        %v739 = vpop.permute.xlu0 %738
        %740 = vrot.lane.b32.xlu0 %v732, 127
        %v741 = vpop.permute.xlu0 %740
        %vm742 = vcmask 1039360
        %v743 = vsel %vm742, %v737, %v739
        %v744 = vsel %vm742, %v739, %v741
        %v748 = vadd.f32 %v711, %v743
        %v749 = vadd.f32 %v712, %v744
        %v750 = vadd.f32 %v713, %v741
        %751 = vset.pattern.permute.xlu0 1
        %752 = vperm.xlu0 %751, %v495
        %v753 = vpop.permute.xlu0 %752
        %v755 = vlaneseq
        %v756 = vshrl.u32 %v755, 7
        %v757 = vsub.s32 1, %v756
        %v758 = vlaneseq
        %v759 = vshrl.u32 %v758, 7
        %v760 = vsub.s32 1, %v759
        %v761 = vrot.slane %v490, %v760
        %v762 = vlaneseq
        %v763 = vshrl.u32 %v762, 7
        %v764 = vsub.s32 1, %v763
        %v765 = vrot.slane %v492, %v764
        %v766 = vmul.f32 %v753, 0.0
        %v767 = vmul.f32 %v753, %v761
        %v768 = vmul.f32 %v753, %v765
        %772 = vrot.lane.b32.xlu0 %v766, 127
        %v773 = vpop.permute.xlu0 %772
        %774 = vrot.lane.b32.xlu0 %v767, 127
        %v775 = vpop.permute.xlu0 %774
        %776 = vrot.lane.b32.xlu0 %v768, 127
        %v777 = vpop.permute.xlu0 %776
        %v778 = vsel %vm742, %v773, %v775
        %v779 = vsel %vm742, %v775, %v777
        %v783 = vadd.f32 %v748, %v778
        %v784 = vadd.f32 %v749, %v779
        %v785 = vadd.f32 %v750, %v777
        %786 = vset.pattern.permute.xlu0 2
        %787 = vperm.xlu0 %786, %v495
        %v788 = vpop.permute.xlu0 %787
        %v790 = vlaneseq
        %v791 = vshrl.u32 %v790, 7
        %v792 = vsub.s32 2, %v791
        %v793 = vlaneseq
        %v794 = vshrl.u32 %v793, 7
        %v795 = vsub.s32 2, %v794
        %v796 = vrot.slane %v490, %v795
        %v797 = vlaneseq
        %v798 = vshrl.u32 %v797, 7
        %v799 = vsub.s32 2, %v798
        %v800 = vrot.slane %v492, %v799
        %v801 = vmul.f32 %v788, 0.0
        %v802 = vmul.f32 %v788, %v796
        %v803 = vmul.f32 %v788, %v800
        %807 = vrot.lane.b32.xlu0 %v801, 127
        %v808 = vpop.permute.xlu0 %807
        %809 = vrot.lane.b32.xlu0 %v802, 127
        %v810 = vpop.permute.xlu0 %809
        %811 = vrot.lane.b32.xlu0 %v803, 127
        %v812 = vpop.permute.xlu0 %811
        %v813 = vsel %vm742, %v808, %v810
        %v814 = vsel %vm742, %v810, %v812
        %v818 = vadd.f32 %v783, %v813
        %v819 = vadd.f32 %v784, %v814
        %v820 = vadd.f32 %v785, %v812
        %821 = vset.pattern.permute.xlu0 3
        %822 = vperm.xlu0 %821, %v495
        %v823 = vpop.permute.xlu0 %822
        %v825 = vlaneseq
        %v826 = vshrl.u32 %v825, 7
        %v827 = vsub.s32 3, %v826
        %v828 = vlaneseq
        %v829 = vshrl.u32 %v828, 7
        %v830 = vsub.s32 3, %v829
        %v831 = vrot.slane %v490, %v830
        %v832 = vlaneseq
        %v833 = vshrl.u32 %v832, 7
        %v834 = vsub.s32 3, %v833
        %v835 = vrot.slane %v492, %v834
        %v836 = vmul.f32 %v823, 0.0
        %v837 = vmul.f32 %v823, %v831
        %v838 = vmul.f32 %v823, %v835
        %842 = vrot.lane.b32.xlu0 %v836, 127
        %v843 = vpop.permute.xlu0 %842
        %844 = vrot.lane.b32.xlu0 %v837, 127
        %v845 = vpop.permute.xlu0 %844
        %846 = vrot.lane.b32.xlu0 %v838, 127
        %v847 = vpop.permute.xlu0 %846
        %v848 = vsel %vm742, %v843, %v845
        %v849 = vsel %vm742, %v845, %v847
        %v853 = vadd.f32 %v818, %v848
        %v854 = vadd.f32 %v819, %v849
        %v855 = vadd.f32 %v820, %v847
        %856 = vset.pattern.permute.xlu0 4
        %857 = vperm.xlu0 %856, %v495
        %v858 = vpop.permute.xlu0 %857
        %v860 = vlaneseq
        %v861 = vshrl.u32 %v860, 7
        %v862 = vsub.s32 4, %v861
        %v863 = vlaneseq
        %v864 = vshrl.u32 %v863, 7
        %v865 = vsub.s32 4, %v864
        %v866 = vrot.slane %v490, %v865
        %v867 = vlaneseq
        %v868 = vshrl.u32 %v867, 7
        %v869 = vsub.s32 4, %v868
        %v870 = vrot.slane %v492, %v869
        %v871 = vmul.f32 %v858, 0.0
        %v872 = vmul.f32 %v858, %v866
        %v873 = vmul.f32 %v858, %v870
        %877 = vrot.lane.b32.xlu0 %v871, 127
        %v878 = vpop.permute.xlu0 %877
        %879 = vrot.lane.b32.xlu0 %v872, 127
        %v880 = vpop.permute.xlu0 %879
        %881 = vrot.lane.b32.xlu0 %v873, 127
        %v882 = vpop.permute.xlu0 %881
        %v883 = vsel %vm742, %v878, %v880
        %v884 = vsel %vm742, %v880, %v882
        %v888 = vadd.f32 %v853, %v883
        %v889 = vadd.f32 %v854, %v884
        %v890 = vadd.f32 %v855, %v882
        %891 = vset.pattern.permute.xlu0 5
        %892 = vperm.xlu0 %891, %v495
        %v893 = vpop.permute.xlu0 %892
        %v895 = vlaneseq
        %v896 = vshrl.u32 %v895, 7
        %v897 = vsub.s32 5, %v896
        %v898 = vlaneseq
        %v899 = vshrl.u32 %v898, 7
        %v900 = vsub.s32 5, %v899
        %v901 = vrot.slane %v490, %v900
        %v902 = vlaneseq
        %v903 = vshrl.u32 %v902, 7
        %v904 = vsub.s32 5, %v903
        %v905 = vrot.slane %v492, %v904
        %v906 = vmul.f32 %v893, 0.0
        %v907 = vmul.f32 %v893, %v901
        %v908 = vmul.f32 %v893, %v905
        %912 = vrot.lane.b32.xlu0 %v906, 127
        %v913 = vpop.permute.xlu0 %912
        %914 = vrot.lane.b32.xlu0 %v907, 127
        %v915 = vpop.permute.xlu0 %914
        %916 = vrot.lane.b32.xlu0 %v908, 127
        %v917 = vpop.permute.xlu0 %916
        %v918 = vsel %vm742, %v913, %v915
        %v919 = vsel %vm742, %v915, %v917
        %v923 = vadd.f32 %v888, %v918
        %v924 = vadd.f32 %v889, %v919
        %v925 = vadd.f32 %v890, %v917
        %926 = vset.pattern.permute.xlu0 6
        %927 = vperm.xlu0 %926, %v495
        %v928 = vpop.permute.xlu0 %927
        %v930 = vlaneseq
        %v931 = vshrl.u32 %v930, 7
        %v932 = vsub.s32 6, %v931
        %v933 = vlaneseq
        %v934 = vshrl.u32 %v933, 7
        %v935 = vsub.s32 6, %v934
        %v936 = vrot.slane %v490, %v935
        %v937 = vlaneseq
        %v938 = vshrl.u32 %v937, 7
        %v939 = vsub.s32 6, %v938
        %v940 = vrot.slane %v492, %v939
        %v941 = vmul.f32 %v928, 0.0
        %v942 = vmul.f32 %v928, %v936
        %v943 = vmul.f32 %v928, %v940
        %947 = vrot.lane.b32.xlu0 %v941, 127
        %v948 = vpop.permute.xlu0 %947
        %949 = vrot.lane.b32.xlu0 %v942, 127
        %v950 = vpop.permute.xlu0 %949
        %951 = vrot.lane.b32.xlu0 %v943, 127
        %v952 = vpop.permute.xlu0 %951
        %v953 = vsel %vm742, %v948, %v950
        %v954 = vsel %vm742, %v950, %v952
        %v958 = vadd.f32 %v923, %v953
        %v959 = vadd.f32 %v924, %v954
        %v960 = vadd.f32 %v925, %v952
        %961 = vset.pattern.permute.xlu0 7
        %962 = vperm.xlu0 %961, %v495
        %v963 = vpop.permute.xlu0 %962
        %v965 = vlaneseq
        %v966 = vshrl.u32 %v965, 7
        %v967 = vsub.s32 7, %v966
        %v968 = vlaneseq
        %v969 = vshrl.u32 %v968, 7
        %v970 = vsub.s32 7, %v969
        %v971 = vrot.slane %v490, %v970
        %v972 = vlaneseq
        %v973 = vshrl.u32 %v972, 7
        %v974 = vsub.s32 7, %v973
        %v975 = vrot.slane %v492, %v974
        %v976 = vmul.f32 %v963, 0.0
        %v977 = vmul.f32 %v963, %v971
        %v978 = vmul.f32 %v963, %v975
        %982 = vrot.lane.b32.xlu0 %v976, 127
        %v983 = vpop.permute.xlu0 %982
        %984 = vrot.lane.b32.xlu0 %v977, 127
        %v985 = vpop.permute.xlu0 %984
        %986 = vrot.lane.b32.xlu0 %v978, 127
        %v987 = vpop.permute.xlu0 %986
        %v988 = vsel %vm742, %v983, %v985
        %v989 = vsel %vm742, %v985, %v987
        %v993 = vadd.f32 %v958, %v988
        %v994 = vadd.f32 %v959, %v989
        %v995 = vadd.f32 %v960, %v987
        %v996 = vlaneseq
        %v997 = vshrl.u32 %v996, 7
        %v998 = vsub.s32 1, %v997
        %v999 = vrot.slane %v400, %v998
        %v1000 = vlaneseq
        %v1001 = vshrl.u32 %v1000, 7
        %v1002 = vsub.s32 3, %v1001
        %v1003 = vrot.slane %v400, %v1002
        %v1006 = vlaneseq
        %v1007 = vshrl.u32 %v1006, 7
        %v1008 = vsub.s32 1, %v1007
        %v1009 = vrot.slane %v999, %v1008
        %v1010 = vlaneseq
        %v1011 = vshrl.u32 %v1010, 7
        %v1012 = vsub.s32 1, %v1011
        %v1013 = vrot.slane %v1003, %v1012
        %1016 = vrot.lane.b32.xlu0 %v1009, 113
        %v1017 = vpop.permute.xlu0 %1016
        %1018 = vrot.lane.b32.xlu0 %v1013, 113
        %v1019 = vpop.permute.xlu0 %1018
        %vm1020 = vcmask 924672
        %v1021 = vsel %vm1020, %v1017, %v1019
        %v1025 = vmul.f32 %v1017, 0.0
        %v1026 = vmul.f32 %v490, %v1021
        %v1027 = vmul.f32 %v492, %v1019
        %1029 = vset.pattern.permute.xlu0 0
        %1030 = vperm.xlu0 %1029, %v496
        %v1031 = vpop.permute.xlu0 %1030
        %v1033 = vlaneseq
        %v1034 = vshrl.u32 %v1033, 7
        %v1035 = vsub.s32 0, %v1034
        %v1036 = vrot.slane %v1025, %v1035
        %v1037 = vlaneseq
        %v1038 = vshrl.u32 %v1037, 7
        %v1039 = vsub.s32 0, %v1038
        %v1040 = vrot.slane %v1026, %v1039
        %v1041 = vlaneseq
        %v1042 = vshrl.u32 %v1041, 7
        %v1043 = vsub.s32 0, %v1042
        %v1044 = vrot.slane %v1027, %v1043
        %v1045 = vmul.f32 %v1031, %v1036
        %v1046 = vmul.f32 %v1031, %v1040
        %v1047 = vmul.f32 %v1031, %v1044
        %1051 = vrot.lane.b32.xlu0 %v1045, 126
        %v1052 = vpop.permute.xlu0 %1051
        %1053 = vrot.lane.b32.xlu0 %v1046, 126
        %v1054 = vpop.permute.xlu0 %1053
        %1055 = vrot.lane.b32.xlu0 %v1047, 126
        %v1056 = vpop.permute.xlu0 %1055
        %vm1057 = vcmask 1031168
        %v1058 = vsel %vm1057, %v1052, %v1054
        %v1059 = vsel %vm1057, %v1054, %v1056
        %v1063 = vadd.f32 %v993, %v1058
        %v1064 = vadd.f32 %v994, %v1059
        %v1065 = vadd.f32 %v995, %v1056
        %1066 = vset.pattern.permute.xlu0 1
        %1067 = vperm.xlu0 %1066, %v496
        %v1068 = vpop.permute.xlu0 %1067
        %v1070 = vlaneseq
        %v1071 = vshrl.u32 %v1070, 7
        %v1072 = vsub.s32 1, %v1071
        %v1073 = vrot.slane %v1025, %v1072
        %v1074 = vlaneseq
        %v1075 = vshrl.u32 %v1074, 7
        %v1076 = vsub.s32 1, %v1075
        %v1077 = vrot.slane %v1026, %v1076
        %v1078 = vlaneseq
        %v1079 = vshrl.u32 %v1078, 7
        %v1080 = vsub.s32 1, %v1079
        %v1081 = vrot.slane %v1027, %v1080
        %v1082 = vmul.f32 %v1068, %v1073
        %v1083 = vmul.f32 %v1068, %v1077
        %v1084 = vmul.f32 %v1068, %v1081
        %1088 = vrot.lane.b32.xlu0 %v1082, 126
        %v1089 = vpop.permute.xlu0 %1088
        %1090 = vrot.lane.b32.xlu0 %v1083, 126
        %v1091 = vpop.permute.xlu0 %1090
        %1092 = vrot.lane.b32.xlu0 %v1084, 126
        %v1093 = vpop.permute.xlu0 %1092
        %v1094 = vsel %vm1057, %v1089, %v1091
        %v1095 = vsel %vm1057, %v1091, %v1093
        %v1099 = vadd.f32 %v1063, %v1094
        %v1100 = vadd.f32 %v1064, %v1095
        %v1101 = vadd.f32 %v1065, %v1093
        %1102 = vset.pattern.permute.xlu0 2
        %1103 = vperm.xlu0 %1102, %v496
        %v1104 = vpop.permute.xlu0 %1103
        %v1106 = vlaneseq
        %v1107 = vshrl.u32 %v1106, 7
        %v1108 = vsub.s32 2, %v1107
        %v1109 = vrot.slane %v1025, %v1108
        %v1110 = vlaneseq
        %v1111 = vshrl.u32 %v1110, 7
        %v1112 = vsub.s32 2, %v1111
        %v1113 = vrot.slane %v1026, %v1112
        %v1114 = vlaneseq
        %v1115 = vshrl.u32 %v1114, 7
        %v1116 = vsub.s32 2, %v1115
        %v1117 = vrot.slane %v1027, %v1116
        %v1118 = vmul.f32 %v1104, %v1109
        %v1119 = vmul.f32 %v1104, %v1113
        %v1120 = vmul.f32 %v1104, %v1117
        %1124 = vrot.lane.b32.xlu0 %v1118, 126
        %v1125 = vpop.permute.xlu0 %1124
        %1126 = vrot.lane.b32.xlu0 %v1119, 126
        %v1127 = vpop.permute.xlu0 %1126
        %1128 = vrot.lane.b32.xlu0 %v1120, 126
        %v1129 = vpop.permute.xlu0 %1128
        %v1130 = vsel %vm1057, %v1125, %v1127
        %v1131 = vsel %vm1057, %v1127, %v1129
        %v1135 = vadd.f32 %v1099, %v1130
        %v1136 = vadd.f32 %v1100, %v1131
        %v1137 = vadd.f32 %v1101, %v1129
        %1138 = vset.pattern.permute.xlu0 3
        %1139 = vperm.xlu0 %1138, %v496
        %v1140 = vpop.permute.xlu0 %1139
        %v1142 = vlaneseq
        %v1143 = vshrl.u32 %v1142, 7
        %v1144 = vsub.s32 3, %v1143
        %v1145 = vrot.slane %v1025, %v1144
        %v1146 = vlaneseq
        %v1147 = vshrl.u32 %v1146, 7
        %v1148 = vsub.s32 3, %v1147
        %v1149 = vrot.slane %v1026, %v1148
        %v1150 = vlaneseq
        %v1151 = vshrl.u32 %v1150, 7
        %v1152 = vsub.s32 3, %v1151
        %v1153 = vrot.slane %v1027, %v1152
        %v1154 = vmul.f32 %v1140, %v1145
        %v1155 = vmul.f32 %v1140, %v1149
        %v1156 = vmul.f32 %v1140, %v1153
        %1160 = vrot.lane.b32.xlu0 %v1154, 126
        %v1161 = vpop.permute.xlu0 %1160
        %1162 = vrot.lane.b32.xlu0 %v1155, 126
        %v1163 = vpop.permute.xlu0 %1162
        %1164 = vrot.lane.b32.xlu0 %v1156, 126
        %v1165 = vpop.permute.xlu0 %1164
        %v1166 = vsel %vm1057, %v1161, %v1163
        %v1167 = vsel %vm1057, %v1163, %v1165
        %v1171 = vadd.f32 %v1135, %v1166
        %v1172 = vadd.f32 %v1136, %v1167
        %v1173 = vadd.f32 %v1137, %v1165
        %1174 = vset.pattern.permute.xlu0 4
        %1175 = vperm.xlu0 %1174, %v496
        %v1176 = vpop.permute.xlu0 %1175
        %v1178 = vlaneseq
        %v1179 = vshrl.u32 %v1178, 7
        %v1180 = vsub.s32 4, %v1179
        %v1181 = vrot.slane %v1025, %v1180
        %v1182 = vlaneseq
        %v1183 = vshrl.u32 %v1182, 7
        %v1184 = vsub.s32 4, %v1183
        %v1185 = vrot.slane %v1026, %v1184
        %v1186 = vlaneseq
        %v1187 = vshrl.u32 %v1186, 7
        %v1188 = vsub.s32 4, %v1187
        %v1189 = vrot.slane %v1027, %v1188
        %v1190 = vmul.f32 %v1176, %v1181
        %v1191 = vmul.f32 %v1176, %v1185
        %v1192 = vmul.f32 %v1176, %v1189
        %1196 = vrot.lane.b32.xlu0 %v1190, 126
        %v1197 = vpop.permute.xlu0 %1196
        %1198 = vrot.lane.b32.xlu0 %v1191, 126
        %v1199 = vpop.permute.xlu0 %1198
        %1200 = vrot.lane.b32.xlu0 %v1192, 126
        %v1201 = vpop.permute.xlu0 %1200
        %v1202 = vsel %vm1057, %v1197, %v1199
        %v1203 = vsel %vm1057, %v1199, %v1201
        %v1207 = vadd.f32 %v1171, %v1202
        %v1208 = vadd.f32 %v1172, %v1203
        %v1209 = vadd.f32 %v1173, %v1201
        %1210 = vset.pattern.permute.xlu0 5
        %1211 = vperm.xlu0 %1210, %v496
        %v1212 = vpop.permute.xlu0 %1211
        %v1214 = vlaneseq
        %v1215 = vshrl.u32 %v1214, 7
        %v1216 = vsub.s32 5, %v1215
        %v1217 = vrot.slane %v1025, %v1216
        %v1218 = vlaneseq
        %v1219 = vshrl.u32 %v1218, 7
        %v1220 = vsub.s32 5, %v1219
        %v1221 = vrot.slane %v1026, %v1220
        %v1222 = vlaneseq
        %v1223 = vshrl.u32 %v1222, 7
        %v1224 = vsub.s32 5, %v1223
        %v1225 = vrot.slane %v1027, %v1224
        %v1226 = vmul.f32 %v1212, %v1217
        %v1227 = vmul.f32 %v1212, %v1221
        %v1228 = vmul.f32 %v1212, %v1225
        %1232 = vrot.lane.b32.xlu0 %v1226, 126
        %v1233 = vpop.permute.xlu0 %1232
        %1234 = vrot.lane.b32.xlu0 %v1227, 126
        %v1235 = vpop.permute.xlu0 %1234
        %1236 = vrot.lane.b32.xlu0 %v1228, 126
        %v1237 = vpop.permute.xlu0 %1236
        %v1238 = vsel %vm1057, %v1233, %v1235
        %v1239 = vsel %vm1057, %v1235, %v1237
        %v1243 = vadd.f32 %v1207, %v1238
        %v1244 = vadd.f32 %v1208, %v1239
        %v1245 = vadd.f32 %v1209, %v1237
        %1246 = vset.pattern.permute.xlu0 6
        %1247 = vperm.xlu0 %1246, %v496
        %v1248 = vpop.permute.xlu0 %1247
        %v1250 = vlaneseq
        %v1251 = vshrl.u32 %v1250, 7
        %v1252 = vsub.s32 6, %v1251
        %v1253 = vrot.slane %v1025, %v1252
        %v1254 = vlaneseq
        %v1255 = vshrl.u32 %v1254, 7
        %v1256 = vsub.s32 6, %v1255
        %v1257 = vrot.slane %v1026, %v1256
        %v1258 = vlaneseq
        %v1259 = vshrl.u32 %v1258, 7
        %v1260 = vsub.s32 6, %v1259
        %v1261 = vrot.slane %v1027, %v1260
        %v1262 = vmul.f32 %v1248, %v1253
        %v1263 = vmul.f32 %v1248, %v1257
        %v1264 = vmul.f32 %v1248, %v1261
        %1268 = vrot.lane.b32.xlu0 %v1262, 126
        %v1269 = vpop.permute.xlu0 %1268
        %1270 = vrot.lane.b32.xlu0 %v1263, 126
        %v1271 = vpop.permute.xlu0 %1270
        %1272 = vrot.lane.b32.xlu0 %v1264, 126
        %v1273 = vpop.permute.xlu0 %1272
        %v1274 = vsel %vm1057, %v1269, %v1271
        %v1275 = vsel %vm1057, %v1271, %v1273
        %v1279 = vadd.f32 %v1243, %v1274
        %v1280 = vadd.f32 %v1244, %v1275
        %v1281 = vadd.f32 %v1245, %v1273
        %1282 = vset.pattern.permute.xlu0 7
        %1283 = vperm.xlu0 %1282, %v496
        %v1284 = vpop.permute.xlu0 %1283
        %v1286 = vlaneseq
        %v1287 = vshrl.u32 %v1286, 7
        %v1288 = vsub.s32 7, %v1287
        %v1289 = vrot.slane %v1025, %v1288
        %v1290 = vlaneseq
        %v1291 = vshrl.u32 %v1290, 7
        %v1292 = vsub.s32 7, %v1291
        %v1293 = vrot.slane %v1026, %v1292
        %v1294 = vlaneseq
        %v1295 = vshrl.u32 %v1294, 7
        %v1296 = vsub.s32 7, %v1295
        %v1297 = vrot.slane %v1027, %v1296
        %v1298 = vmul.f32 %v1284, %v1289
        %v1299 = vmul.f32 %v1284, %v1293
        %v1300 = vmul.f32 %v1284, %v1297
        %1304 = vrot.lane.b32.xlu0 %v1298, 126
        %v1305 = vpop.permute.xlu0 %1304
        %1306 = vrot.lane.b32.xlu0 %v1299, 126
        %v1307 = vpop.permute.xlu0 %1306
        %1308 = vrot.lane.b32.xlu0 %v1300, 126
        %v1309 = vpop.permute.xlu0 %1308
        %v1310 = vsel %vm1057, %v1305, %v1307
        %v1311 = vsel %vm1057, %v1307, %v1309
        %v1315 = vadd.f32 %v1279, %v1310
        %v1316 = vadd.f32 %v1280, %v1311
        %v1317 = vadd.f32 %v1281, %v1309
        %1318 = vrot.lane.b32.xlu0 %v518, 127
        %v1319 = vpop.permute.xlu0 %1318
        %1320 = vrot.lane.b32.xlu0 %v522, 127
        %v1321 = vpop.permute.xlu0 %1320
        %v1322 = vsel %vm742, %v1319, %v1321
        %v1326 = vmul.f32 %v1319, 0.0
        %v1327 = vmul.f32 %v490, %v1322
        %v1328 = vmul.f32 %v492, %v1321
        %1330 = vset.pattern.permute.xlu0 0
        %1331 = vperm.xlu0 %1330, %v497
        %v1332 = vpop.permute.xlu0 %1331
        %v1334 = vlaneseq
        %v1335 = vshrl.u32 %v1334, 7
        %v1336 = vsub.s32 0, %v1335
        %v1337 = vrot.slane %v1326, %v1336
        %v1338 = vlaneseq
        %v1339 = vshrl.u32 %v1338, 7
        %v1340 = vsub.s32 0, %v1339
        %v1341 = vrot.slane %v1327, %v1340
        %v1342 = vlaneseq
        %v1343 = vshrl.u32 %v1342, 7
        %v1344 = vsub.s32 0, %v1343
        %v1345 = vrot.slane %v1328, %v1344
        %v1346 = vmul.f32 %v1332, %v1337
        %v1347 = vmul.f32 %v1332, %v1341
        %v1348 = vmul.f32 %v1332, %v1345
        %1352 = vrot.lane.b32.xlu0 %v1346, 112
        %v1353 = vpop.permute.xlu0 %1352
        %1354 = vrot.lane.b32.xlu0 %v1347, 112
        %v1355 = vpop.permute.xlu0 %1354
        %1356 = vrot.lane.b32.xlu0 %v1348, 112
        %v1357 = vpop.permute.xlu0 %1356
        %vm1358 = vcmask 916480
        %v1359 = vsel %vm1358, %v1353, %v1355
        %v1360 = vsel %vm1358, %v1355, %v1357
        %v1364 = vadd.f32 %v1315, %v1359
        %v1365 = vadd.f32 %v1316, %v1360
        %v1366 = vadd.f32 %v1317, %v1357
        %1367 = vset.pattern.permute.xlu0 1
        %1368 = vperm.xlu0 %1367, %v497
        %v1369 = vpop.permute.xlu0 %1368
        %v1371 = vlaneseq
        %v1372 = vshrl.u32 %v1371, 7
        %v1373 = vsub.s32 1, %v1372
        %v1374 = vrot.slane %v1326, %v1373
        %v1375 = vlaneseq
        %v1376 = vshrl.u32 %v1375, 7
        %v1377 = vsub.s32 1, %v1376
        %v1378 = vrot.slane %v1327, %v1377
        %v1379 = vlaneseq
        %v1380 = vshrl.u32 %v1379, 7
        %v1381 = vsub.s32 1, %v1380
        %v1382 = vrot.slane %v1328, %v1381
        %v1383 = vmul.f32 %v1369, %v1374
        %v1384 = vmul.f32 %v1369, %v1378
        %v1385 = vmul.f32 %v1369, %v1382
        %1389 = vrot.lane.b32.xlu0 %v1383, 112
        %v1390 = vpop.permute.xlu0 %1389
        %1391 = vrot.lane.b32.xlu0 %v1384, 112
        %v1392 = vpop.permute.xlu0 %1391
        %1393 = vrot.lane.b32.xlu0 %v1385, 112
        %v1394 = vpop.permute.xlu0 %1393
        %v1395 = vsel %vm1358, %v1390, %v1392
        %v1396 = vsel %vm1358, %v1392, %v1394
        %v1400 = vadd.f32 %v1364, %v1395
        %v1401 = vadd.f32 %v1365, %v1396
        %v1402 = vadd.f32 %v1366, %v1394
        %1403 = vset.pattern.permute.xlu0 2
        %1404 = vperm.xlu0 %1403, %v497
        %v1405 = vpop.permute.xlu0 %1404
        %v1407 = vlaneseq
        %v1408 = vshrl.u32 %v1407, 7
        %v1409 = vsub.s32 2, %v1408
        %v1410 = vrot.slane %v1326, %v1409
        %v1411 = vlaneseq
        %v1412 = vshrl.u32 %v1411, 7
        %v1413 = vsub.s32 2, %v1412
        %v1414 = vrot.slane %v1327, %v1413
        %v1415 = vlaneseq
        %v1416 = vshrl.u32 %v1415, 7
        %v1417 = vsub.s32 2, %v1416
        %v1418 = vrot.slane %v1328, %v1417
        %v1419 = vmul.f32 %v1405, %v1410
        %v1420 = vmul.f32 %v1405, %v1414
        %v1421 = vmul.f32 %v1405, %v1418
        %1425 = vrot.lane.b32.xlu0 %v1419, 112
        %v1426 = vpop.permute.xlu0 %1425
        %1427 = vrot.lane.b32.xlu0 %v1420, 112
        %v1428 = vpop.permute.xlu0 %1427
        %1429 = vrot.lane.b32.xlu0 %v1421, 112
        %v1430 = vpop.permute.xlu0 %1429
        %v1431 = vsel %vm1358, %v1426, %v1428
        %v1432 = vsel %vm1358, %v1428, %v1430
        %v1436 = vadd.f32 %v1400, %v1431
        %v1437 = vadd.f32 %v1401, %v1432
        %v1438 = vadd.f32 %v1402, %v1430
        %1439 = vset.pattern.permute.xlu0 3
        %1440 = vperm.xlu0 %1439, %v497
        %v1441 = vpop.permute.xlu0 %1440
        %v1443 = vlaneseq
        %v1444 = vshrl.u32 %v1443, 7
        %v1445 = vsub.s32 3, %v1444
        %v1446 = vrot.slane %v1326, %v1445
        %v1447 = vlaneseq
        %v1448 = vshrl.u32 %v1447, 7
        %v1449 = vsub.s32 3, %v1448
        %v1450 = vrot.slane %v1327, %v1449
        %v1451 = vlaneseq
        %v1452 = vshrl.u32 %v1451, 7
        %v1453 = vsub.s32 3, %v1452
        %v1454 = vrot.slane %v1328, %v1453
        %v1455 = vmul.f32 %v1441, %v1446
        %v1456 = vmul.f32 %v1441, %v1450
        %v1457 = vmul.f32 %v1441, %v1454
        %1461 = vrot.lane.b32.xlu0 %v1455, 112
        %v1462 = vpop.permute.xlu0 %1461
        %1463 = vrot.lane.b32.xlu0 %v1456, 112
        %v1464 = vpop.permute.xlu0 %1463
        %1465 = vrot.lane.b32.xlu0 %v1457, 112
        %v1466 = vpop.permute.xlu0 %1465
        %v1467 = vsel %vm1358, %v1462, %v1464
        %v1468 = vsel %vm1358, %v1464, %v1466
        %v1472 = vadd.f32 %v1436, %v1467
        %v1473 = vadd.f32 %v1437, %v1468
        %v1474 = vadd.f32 %v1438, %v1466
        %1475 = vset.pattern.permute.xlu0 4
        %1476 = vperm.xlu0 %1475, %v497
        %v1477 = vpop.permute.xlu0 %1476
        %v1479 = vlaneseq
        %v1480 = vshrl.u32 %v1479, 7
        %v1481 = vsub.s32 4, %v1480
        %v1482 = vrot.slane %v1326, %v1481
        %v1483 = vlaneseq
        %v1484 = vshrl.u32 %v1483, 7
        %v1485 = vsub.s32 4, %v1484
        %v1486 = vrot.slane %v1327, %v1485
        %v1487 = vlaneseq
        %v1488 = vshrl.u32 %v1487, 7
        %v1489 = vsub.s32 4, %v1488
        %v1490 = vrot.slane %v1328, %v1489
        %v1491 = vmul.f32 %v1477, %v1482
        %v1492 = vmul.f32 %v1477, %v1486
        %v1493 = vmul.f32 %v1477, %v1490
        %1497 = vrot.lane.b32.xlu0 %v1491, 112
        %v1498 = vpop.permute.xlu0 %1497
        %1499 = vrot.lane.b32.xlu0 %v1492, 112
        %v1500 = vpop.permute.xlu0 %1499
        %1501 = vrot.lane.b32.xlu0 %v1493, 112
        %v1502 = vpop.permute.xlu0 %1501
        %v1503 = vsel %vm1358, %v1498, %v1500
        %v1504 = vsel %vm1358, %v1500, %v1502
        %v1508 = vadd.f32 %v1472, %v1503
        %v1509 = vadd.f32 %v1473, %v1504
        %v1510 = vadd.f32 %v1474, %v1502
        %1511 = vset.pattern.permute.xlu0 5
        %1512 = vperm.xlu0 %1511, %v497
        %v1513 = vpop.permute.xlu0 %1512
        %v1515 = vlaneseq
        %v1516 = vshrl.u32 %v1515, 7
        %v1517 = vsub.s32 5, %v1516
        %v1518 = vrot.slane %v1326, %v1517
        %v1519 = vlaneseq
        %v1520 = vshrl.u32 %v1519, 7
        %v1521 = vsub.s32 5, %v1520
        %v1522 = vrot.slane %v1327, %v1521
        %v1523 = vlaneseq
        %v1524 = vshrl.u32 %v1523, 7
        %v1525 = vsub.s32 5, %v1524
        %v1526 = vrot.slane %v1328, %v1525
        %v1527 = vmul.f32 %v1513, %v1518
        %v1528 = vmul.f32 %v1513, %v1522
        %v1529 = vmul.f32 %v1513, %v1526
        %1533 = vrot.lane.b32.xlu0 %v1527, 112
        %v1534 = vpop.permute.xlu0 %1533
        %1535 = vrot.lane.b32.xlu0 %v1528, 112
        %v1536 = vpop.permute.xlu0 %1535
        %1537 = vrot.lane.b32.xlu0 %v1529, 112
        %v1538 = vpop.permute.xlu0 %1537
        %v1539 = vsel %vm1358, %v1534, %v1536
        %v1540 = vsel %vm1358, %v1536, %v1538
        %v1544 = vadd.f32 %v1508, %v1539
        %v1545 = vadd.f32 %v1509, %v1540
        %v1546 = vadd.f32 %v1510, %v1538
        %1547 = vset.pattern.permute.xlu0 6
        %1548 = vperm.xlu0 %1547, %v497
        %v1549 = vpop.permute.xlu0 %1548
        %v1551 = vlaneseq
        %v1552 = vshrl.u32 %v1551, 7
        %v1553 = vsub.s32 6, %v1552
        %v1554 = vrot.slane %v1326, %v1553
        %v1555 = vlaneseq
        %v1556 = vshrl.u32 %v1555, 7
        %v1557 = vsub.s32 6, %v1556
        %v1558 = vrot.slane %v1327, %v1557
        %v1559 = vlaneseq
        %v1560 = vshrl.u32 %v1559, 7
        %v1561 = vsub.s32 6, %v1560
        %v1562 = vrot.slane %v1328, %v1561
        %v1563 = vmul.f32 %v1549, %v1554
        %v1564 = vmul.f32 %v1549, %v1558
        %v1565 = vmul.f32 %v1549, %v1562
        %1569 = vrot.lane.b32.xlu0 %v1563, 112
        %v1570 = vpop.permute.xlu0 %1569
        %1571 = vrot.lane.b32.xlu0 %v1564, 112
        %v1572 = vpop.permute.xlu0 %1571
        %1573 = vrot.lane.b32.xlu0 %v1565, 112
        %v1574 = vpop.permute.xlu0 %1573
        %v1575 = vsel %vm1358, %v1570, %v1572
        %v1576 = vsel %vm1358, %v1572, %v1574
        %v1580 = vadd.f32 %v1544, %v1575
        %v1581 = vadd.f32 %v1545, %v1576
        %v1582 = vadd.f32 %v1546, %v1574
        %1583 = vset.pattern.permute.xlu0 7
        %1584 = vperm.xlu0 %1583, %v497
        %v1585 = vpop.permute.xlu0 %1584
        %v1587 = vlaneseq
        %v1588 = vshrl.u32 %v1587, 7
        %v1589 = vsub.s32 7, %v1588
        %v1590 = vrot.slane %v1326, %v1589
        %v1591 = vlaneseq
        %v1592 = vshrl.u32 %v1591, 7
        %v1593 = vsub.s32 7, %v1592
        %v1594 = vrot.slane %v1327, %v1593
        %v1595 = vlaneseq
        %v1596 = vshrl.u32 %v1595, 7
        %v1597 = vsub.s32 7, %v1596
        %v1598 = vrot.slane %v1328, %v1597
        %v1599 = vmul.f32 %v1585, %v1590
        %v1600 = vmul.f32 %v1585, %v1594
        %v1601 = vmul.f32 %v1585, %v1598
        %1605 = vrot.lane.b32.xlu0 %v1599, 112
        %v1606 = vpop.permute.xlu0 %1605
        %1607 = vrot.lane.b32.xlu0 %v1600, 112
        %v1608 = vpop.permute.xlu0 %1607
        %1609 = vrot.lane.b32.xlu0 %v1601, 112
        %v1610 = vpop.permute.xlu0 %1609
        %v1611 = vsel %vm1358, %v1606, %v1608
        %v1612 = vsel %vm1358, %v1608, %v1610
        %v1616 = vadd.f32 %v1580, %v1611
        %v1617 = vadd.f32 %v1581, %v1612
        %v1618 = vadd.f32 %v1582, %v1610
        %1620 = vset.pattern.permute.xlu0 0
        %1621 = vperm.xlu0 %1620, %v498
        %v1622 = vpop.permute.xlu0 %1621
        %v1624 = vmul.f32 %v1622, %v725
        %v1625 = vmul.f32 %v1622, %v729
        %1628 = vrot.lane.b32.xlu0 %v1624, 111
        %v1629 = vpop.permute.xlu0 %1628
        %1630 = vrot.lane.b32.xlu0 %v1625, 111
        %v1631 = vpop.permute.xlu0 %1630
        %v1632 = vsel %vm529, %v1629, %v1631
        %v1636 = vadd.f32 %v1616, %v1629
        %v1637 = vadd.f32 %v1617, %v1632
        %v1638 = vadd.f32 %v1618, %v1631
        %1639 = vset.pattern.permute.xlu0 1
        %1640 = vperm.xlu0 %1639, %v498
        %v1641 = vpop.permute.xlu0 %1640
        %v1643 = vmul.f32 %v1641, %v761
        %v1644 = vmul.f32 %v1641, %v765
        %1647 = vrot.lane.b32.xlu0 %v1643, 111
        %v1648 = vpop.permute.xlu0 %1647
        %1649 = vrot.lane.b32.xlu0 %v1644, 111
        %v1650 = vpop.permute.xlu0 %1649
        %v1651 = vsel %vm529, %v1648, %v1650
        %v1655 = vadd.f32 %v1636, %v1648
        %v1656 = vadd.f32 %v1637, %v1651
        %v1657 = vadd.f32 %v1638, %v1650
        %1658 = vset.pattern.permute.xlu0 2
        %1659 = vperm.xlu0 %1658, %v498
        %v1660 = vpop.permute.xlu0 %1659
        %v1662 = vmul.f32 %v1660, %v796
        %v1663 = vmul.f32 %v1660, %v800
        %1666 = vrot.lane.b32.xlu0 %v1662, 111
        %v1667 = vpop.permute.xlu0 %1666
        %1668 = vrot.lane.b32.xlu0 %v1663, 111
        %v1669 = vpop.permute.xlu0 %1668
        %v1670 = vsel %vm529, %v1667, %v1669
        %v1674 = vadd.f32 %v1655, %v1667
        %v1675 = vadd.f32 %v1656, %v1670
        %v1676 = vadd.f32 %v1657, %v1669
        %1677 = vset.pattern.permute.xlu0 3
        %1678 = vperm.xlu0 %1677, %v498
        %v1679 = vpop.permute.xlu0 %1678
        %v1681 = vmul.f32 %v1679, %v831
        %v1682 = vmul.f32 %v1679, %v835
        %1685 = vrot.lane.b32.xlu0 %v1681, 111
        %v1686 = vpop.permute.xlu0 %1685
        %1687 = vrot.lane.b32.xlu0 %v1682, 111
        %v1688 = vpop.permute.xlu0 %1687
        %v1689 = vsel %vm529, %v1686, %v1688
        %v1693 = vadd.f32 %v1674, %v1686
        %v1694 = vadd.f32 %v1675, %v1689
        %v1695 = vadd.f32 %v1676, %v1688
        %1696 = vset.pattern.permute.xlu0 4
        %1697 = vperm.xlu0 %1696, %v498
        %v1698 = vpop.permute.xlu0 %1697
        %v1700 = vmul.f32 %v1698, %v866
        %v1701 = vmul.f32 %v1698, %v870
        %1704 = vrot.lane.b32.xlu0 %v1700, 111
        %v1705 = vpop.permute.xlu0 %1704
        %1706 = vrot.lane.b32.xlu0 %v1701, 111
        %v1707 = vpop.permute.xlu0 %1706
        %v1708 = vsel %vm529, %v1705, %v1707
        %v1712 = vadd.f32 %v1693, %v1705
        %v1713 = vadd.f32 %v1694, %v1708
        %v1714 = vadd.f32 %v1695, %v1707
        %1715 = vset.pattern.permute.xlu0 5
        %1716 = vperm.xlu0 %1715, %v498
        %v1717 = vpop.permute.xlu0 %1716
        %v1719 = vmul.f32 %v1717, %v901
        %v1720 = vmul.f32 %v1717, %v905
        %1723 = vrot.lane.b32.xlu0 %v1719, 111
        %v1724 = vpop.permute.xlu0 %1723
        %1725 = vrot.lane.b32.xlu0 %v1720, 111
        %v1726 = vpop.permute.xlu0 %1725
        %v1727 = vsel %vm529, %v1724, %v1726
        %v1731 = vadd.f32 %v1712, %v1724
        %v1732 = vadd.f32 %v1713, %v1727
        %v1733 = vadd.f32 %v1714, %v1726
        %1734 = vset.pattern.permute.xlu0 6
        %1735 = vperm.xlu0 %1734, %v498
        %v1736 = vpop.permute.xlu0 %1735
        %v1738 = vmul.f32 %v1736, %v936
        %v1739 = vmul.f32 %v1736, %v940
        %1742 = vrot.lane.b32.xlu0 %v1738, 111
        %v1743 = vpop.permute.xlu0 %1742
        %1744 = vrot.lane.b32.xlu0 %v1739, 111
        %v1745 = vpop.permute.xlu0 %1744
        %v1746 = vsel %vm529, %v1743, %v1745
        %v1750 = vadd.f32 %v1731, %v1743
        %v1751 = vadd.f32 %v1732, %v1746
        %v1752 = vadd.f32 %v1733, %v1745
        %1753 = vset.pattern.permute.xlu0 7
        %1754 = vperm.xlu0 %1753, %v498
        %v1755 = vpop.permute.xlu0 %1754
        %v1757 = vmul.f32 %v1755, %v971
        %v1758 = vmul.f32 %v1755, %v975
        %1761 = vrot.lane.b32.xlu0 %v1757, 111
        %v1762 = vpop.permute.xlu0 %1761
        %1763 = vrot.lane.b32.xlu0 %v1758, 111
        %v1764 = vpop.permute.xlu0 %1763
        %v1765 = vsel %vm529, %v1762, %v1764
        %v1769 = vadd.f32 %v1750, %v1762
        %v1770 = vadd.f32 %v1751, %v1765
        %v1771 = vadd.f32 %v1752, %v1764
        %1772 = vrot.lane.b32.xlu0 %v1009, 1
        %v1773 = vpop.permute.xlu0 %1772
        %1774 = vrot.lane.b32.xlu0 %v1013, 1
        %v1775 = vpop.permute.xlu0 %1774
        %vm1776 = vcmask 7168
        %v1777 = vsel %vm1776, %v1773, %v1775
        %v1781 = vmul.f32 %v490, %v1773
        %v1782 = vmul.f32 %v492, %v1777
        %v1783 = vmul.f32 %v1775, 0.0
        %1785 = vset.pattern.permute.xlu0 0
        %1786 = vperm.xlu0 %1785, %v499
        %v1787 = vpop.permute.xlu0 %1786
        %v1789 = vlaneseq
        %v1790 = vshrl.u32 %v1789, 7
        %v1791 = vsub.s32 0, %v1790
        %v1792 = vrot.slane %v1781, %v1791
        %v1793 = vlaneseq
        %v1794 = vshrl.u32 %v1793, 7
        %v1795 = vsub.s32 0, %v1794
        %v1796 = vrot.slane %v1782, %v1795
        %v1797 = vlaneseq
        %v1798 = vshrl.u32 %v1797, 7
        %v1799 = vsub.s32 0, %v1798
        %v1800 = vrot.slane %v1783, %v1799
        %v1801 = vmul.f32 %v1787, %v1792
        %v1802 = vmul.f32 %v1787, %v1796
        %v1803 = vmul.f32 %v1787, %v1800
        %1807 = vrot.lane.b32.xlu0 %v1801, 110
        %v1808 = vpop.permute.xlu0 %1807
        %1809 = vrot.lane.b32.xlu0 %v1802, 110
        %v1810 = vpop.permute.xlu0 %1809
        %1811 = vrot.lane.b32.xlu0 %v1803, 110
        %v1812 = vpop.permute.xlu0 %1811
        %vm1813 = vcmask 900096
        %v1814 = vsel %vm1813, %v1808, %v1810
        %v1815 = vsel %vm1813, %v1810, %v1812
        %v1819 = vadd.f32 %v1769, %v1808
        %v1820 = vadd.f32 %v1770, %v1814
        %v1821 = vadd.f32 %v1771, %v1815
        %1822 = vset.pattern.permute.xlu0 1
        %1823 = vperm.xlu0 %1822, %v499
        %v1824 = vpop.permute.xlu0 %1823
        %v1826 = vlaneseq
        %v1827 = vshrl.u32 %v1826, 7
        %v1828 = vsub.s32 1, %v1827
        %v1829 = vrot.slane %v1781, %v1828
        %v1830 = vlaneseq
        %v1831 = vshrl.u32 %v1830, 7
        %v1832 = vsub.s32 1, %v1831
        %v1833 = vrot.slane %v1782, %v1832
        %v1834 = vlaneseq
        %v1835 = vshrl.u32 %v1834, 7
        %v1836 = vsub.s32 1, %v1835
        %v1837 = vrot.slane %v1783, %v1836
        %v1838 = vmul.f32 %v1824, %v1829
        %v1839 = vmul.f32 %v1824, %v1833
        %v1840 = vmul.f32 %v1824, %v1837
        %1844 = vrot.lane.b32.xlu0 %v1838, 110
        %v1845 = vpop.permute.xlu0 %1844
        %1846 = vrot.lane.b32.xlu0 %v1839, 110
        %v1847 = vpop.permute.xlu0 %1846
        %1848 = vrot.lane.b32.xlu0 %v1840, 110
        %v1849 = vpop.permute.xlu0 %1848
        %v1850 = vsel %vm1813, %v1845, %v1847
        %v1851 = vsel %vm1813, %v1847, %v1849
        %v1855 = vadd.f32 %v1819, %v1845
        %v1856 = vadd.f32 %v1820, %v1850
        %v1857 = vadd.f32 %v1821, %v1851
        %1858 = vset.pattern.permute.xlu0 2
        %1859 = vperm.xlu0 %1858, %v499
        %v1860 = vpop.permute.xlu0 %1859
        %v1862 = vlaneseq
        %v1863 = vshrl.u32 %v1862, 7
        %v1864 = vsub.s32 2, %v1863
        %v1865 = vrot.slane %v1781, %v1864
        %v1866 = vlaneseq
        %v1867 = vshrl.u32 %v1866, 7
        %v1868 = vsub.s32 2, %v1867
        %v1869 = vrot.slane %v1782, %v1868
        %v1870 = vlaneseq
        %v1871 = vshrl.u32 %v1870, 7
        %v1872 = vsub.s32 2, %v1871
        %v1873 = vrot.slane %v1783, %v1872
        %v1874 = vmul.f32 %v1860, %v1865
        %v1875 = vmul.f32 %v1860, %v1869
        %v1876 = vmul.f32 %v1860, %v1873
        %1880 = vrot.lane.b32.xlu0 %v1874, 110
        %v1881 = vpop.permute.xlu0 %1880
        %1882 = vrot.lane.b32.xlu0 %v1875, 110
        %v1883 = vpop.permute.xlu0 %1882
        %1884 = vrot.lane.b32.xlu0 %v1876, 110
        %v1885 = vpop.permute.xlu0 %1884
        %v1886 = vsel %vm1813, %v1881, %v1883
        %v1887 = vsel %vm1813, %v1883, %v1885
        %v1891 = vadd.f32 %v1855, %v1881
        %v1892 = vadd.f32 %v1856, %v1886
        %v1893 = vadd.f32 %v1857, %v1887
        %1894 = vset.pattern.permute.xlu0 3
        %1895 = vperm.xlu0 %1894, %v499
        %v1896 = vpop.permute.xlu0 %1895
        %v1898 = vlaneseq
        %v1899 = vshrl.u32 %v1898, 7
        %v1900 = vsub.s32 3, %v1899
        %v1901 = vrot.slane %v1781, %v1900
        %v1902 = vlaneseq
        %v1903 = vshrl.u32 %v1902, 7
        %v1904 = vsub.s32 3, %v1903
        %v1905 = vrot.slane %v1782, %v1904
        %v1906 = vlaneseq
        %v1907 = vshrl.u32 %v1906, 7
        %v1908 = vsub.s32 3, %v1907
        %v1909 = vrot.slane %v1783, %v1908
        %v1910 = vmul.f32 %v1896, %v1901
        %v1911 = vmul.f32 %v1896, %v1905
        %v1912 = vmul.f32 %v1896, %v1909
        %1916 = vrot.lane.b32.xlu0 %v1910, 110
        %v1917 = vpop.permute.xlu0 %1916
        %1918 = vrot.lane.b32.xlu0 %v1911, 110
        %v1919 = vpop.permute.xlu0 %1918
        %1920 = vrot.lane.b32.xlu0 %v1912, 110
        %v1921 = vpop.permute.xlu0 %1920
        %v1922 = vsel %vm1813, %v1917, %v1919
        %v1923 = vsel %vm1813, %v1919, %v1921
        %v1927 = vadd.f32 %v1891, %v1917
        %v1928 = vadd.f32 %v1892, %v1922
        %v1929 = vadd.f32 %v1893, %v1923
        %1930 = vset.pattern.permute.xlu0 4
        %1931 = vperm.xlu0 %1930, %v499
        %v1932 = vpop.permute.xlu0 %1931
        %v1934 = vlaneseq
        %v1935 = vshrl.u32 %v1934, 7
        %v1936 = vsub.s32 4, %v1935
        %v1937 = vrot.slane %v1781, %v1936
        %v1938 = vlaneseq
        %v1939 = vshrl.u32 %v1938, 7
        %v1940 = vsub.s32 4, %v1939
        %v1941 = vrot.slane %v1782, %v1940
        %v1942 = vlaneseq
        %v1943 = vshrl.u32 %v1942, 7
        %v1944 = vsub.s32 4, %v1943
        %v1945 = vrot.slane %v1783, %v1944
        %v1946 = vmul.f32 %v1932, %v1937
        %v1947 = vmul.f32 %v1932, %v1941
        %v1948 = vmul.f32 %v1932, %v1945
        %1952 = vrot.lane.b32.xlu0 %v1946, 110
        %v1953 = vpop.permute.xlu0 %1952
        %1954 = vrot.lane.b32.xlu0 %v1947, 110
        %v1955 = vpop.permute.xlu0 %1954
        %1956 = vrot.lane.b32.xlu0 %v1948, 110
        %v1957 = vpop.permute.xlu0 %1956
        %v1958 = vsel %vm1813, %v1953, %v1955
        %v1959 = vsel %vm1813, %v1955, %v1957
        %v1963 = vadd.f32 %v1927, %v1953
        %v1964 = vadd.f32 %v1928, %v1958
        %v1965 = vadd.f32 %v1929, %v1959
        %1966 = vset.pattern.permute.xlu0 5
        %1967 = vperm.xlu0 %1966, %v499
        %v1968 = vpop.permute.xlu0 %1967
        %v1970 = vlaneseq
        %v1971 = vshrl.u32 %v1970, 7
        %v1972 = vsub.s32 5, %v1971
        %v1973 = vrot.slane %v1781, %v1972
        %v1974 = vlaneseq
        %v1975 = vshrl.u32 %v1974, 7
        %v1976 = vsub.s32 5, %v1975
        %v1977 = vrot.slane %v1782, %v1976
        %v1978 = vlaneseq
        %v1979 = vshrl.u32 %v1978, 7
        %v1980 = vsub.s32 5, %v1979
        %v1981 = vrot.slane %v1783, %v1980
        %v1982 = vmul.f32 %v1968, %v1973
        %v1983 = vmul.f32 %v1968, %v1977
        %v1984 = vmul.f32 %v1968, %v1981
        %1988 = vrot.lane.b32.xlu0 %v1982, 110
        %v1989 = vpop.permute.xlu0 %1988
        %1990 = vrot.lane.b32.xlu0 %v1983, 110
        %v1991 = vpop.permute.xlu0 %1990
        %1992 = vrot.lane.b32.xlu0 %v1984, 110
        %v1993 = vpop.permute.xlu0 %1992
        %v1994 = vsel %vm1813, %v1989, %v1991
        %v1995 = vsel %vm1813, %v1991, %v1993
        %v1999 = vadd.f32 %v1963, %v1989
        %v2000 = vadd.f32 %v1964, %v1994
        %v2001 = vadd.f32 %v1965, %v1995
        %2002 = vset.pattern.permute.xlu0 6
        %2003 = vperm.xlu0 %2002, %v499
        %v2004 = vpop.permute.xlu0 %2003
        %v2006 = vlaneseq
        %v2007 = vshrl.u32 %v2006, 7
        %v2008 = vsub.s32 6, %v2007
        %v2009 = vrot.slane %v1781, %v2008
        %v2010 = vlaneseq
        %v2011 = vshrl.u32 %v2010, 7
        %v2012 = vsub.s32 6, %v2011
        %v2013 = vrot.slane %v1782, %v2012
        %v2014 = vlaneseq
        %v2015 = vshrl.u32 %v2014, 7
        %v2016 = vsub.s32 6, %v2015
        %v2017 = vrot.slane %v1783, %v2016
        %v2018 = vmul.f32 %v2004, %v2009
        %v2019 = vmul.f32 %v2004, %v2013
        %v2020 = vmul.f32 %v2004, %v2017
        %2024 = vrot.lane.b32.xlu0 %v2018, 110
        %v2025 = vpop.permute.xlu0 %2024
        %2026 = vrot.lane.b32.xlu0 %v2019, 110
        %v2027 = vpop.permute.xlu0 %2026
        %2028 = vrot.lane.b32.xlu0 %v2020, 110
        %v2029 = vpop.permute.xlu0 %2028
        %v2030 = vsel %vm1813, %v2025, %v2027
        %v2031 = vsel %vm1813, %v2027, %v2029
        %v2035 = vadd.f32 %v1999, %v2025
        %v2036 = vadd.f32 %v2000, %v2030
        %v2037 = vadd.f32 %v2001, %v2031
        %2038 = vset.pattern.permute.xlu0 7
        %2039 = vperm.xlu0 %2038, %v499
        %v2040 = vpop.permute.xlu0 %2039
        %v2042 = vlaneseq
        %v2043 = vshrl.u32 %v2042, 7
        %v2044 = vsub.s32 7, %v2043
        %v2045 = vrot.slane %v1781, %v2044
        %v2046 = vlaneseq
        %v2047 = vshrl.u32 %v2046, 7
        %v2048 = vsub.s32 7, %v2047
        %v2049 = vrot.slane %v1782, %v2048
        %v2050 = vlaneseq
        %v2051 = vshrl.u32 %v2050, 7
        %v2052 = vsub.s32 7, %v2051
        %v2053 = vrot.slane %v1783, %v2052
        %v2054 = vmul.f32 %v2040, %v2045
        %v2055 = vmul.f32 %v2040, %v2049
        %v2056 = vmul.f32 %v2040, %v2053
        %2060 = vrot.lane.b32.xlu0 %v2054, 110
        %v2061 = vpop.permute.xlu0 %2060
        %2062 = vrot.lane.b32.xlu0 %v2055, 110
        %v2063 = vpop.permute.xlu0 %2062
        %2064 = vrot.lane.b32.xlu0 %v2056, 110
        %v2065 = vpop.permute.xlu0 %2064
        %v2066 = vsel %vm1813, %v2061, %v2063
        %v2067 = vsel %vm1813, %v2063, %v2065
        %v2071 = vadd.f32 %v2035, %v2061
        %v2072 = vadd.f32 %v2036, %v2066
        %v2073 = vadd.f32 %v2037, %v2067
        %2074 = vrot.lane.b32.xlu0 %v518, 15
        %v2075 = vpop.permute.xlu0 %2074
        %2076 = vrot.lane.b32.xlu0 %v522, 15
        %v2077 = vpop.permute.xlu0 %2076
        %vm2078 = vcmask 121856
        %v2079 = vsel %vm2078, %v2075, %v2077
        %v2083 = vmul.f32 %v490, %v2075
        %v2084 = vmul.f32 %v492, %v2079
        %v2085 = vmul.f32 %v2077, 0.0
        %2087 = vset.pattern.permute.xlu0 0
        %2088 = vperm.xlu0 %2087, %v500
        %v2089 = vpop.permute.xlu0 %2088
        %v2091 = vlaneseq
        %v2092 = vshrl.u32 %v2091, 7
        %v2093 = vsub.s32 0, %v2092
        %v2094 = vrot.slane %v2083, %v2093
        %v2095 = vlaneseq
        %v2096 = vshrl.u32 %v2095, 7
        %v2097 = vsub.s32 0, %v2096
        %v2098 = vrot.slane %v2084, %v2097
        %v2099 = vlaneseq
        %v2100 = vshrl.u32 %v2099, 7
        %v2101 = vsub.s32 0, %v2100
        %v2102 = vrot.slane %v2085, %v2101
        %v2103 = vmul.f32 %v2089, %v2094
        %v2104 = vmul.f32 %v2089, %v2098
        %v2105 = vmul.f32 %v2089, %v2102
        %2109 = vrot.lane.b32.xlu0 %v2103, 96
        %v2110 = vpop.permute.xlu0 %2109
        %2111 = vrot.lane.b32.xlu0 %v2104, 96
        %v2112 = vpop.permute.xlu0 %2111
        %2113 = vrot.lane.b32.xlu0 %v2105, 96
        %v2114 = vpop.permute.xlu0 %2113
        %vm2115 = vcmask 785408
        %v2116 = vsel %vm2115, %v2110, %v2112
        %v2117 = vsel %vm2115, %v2112, %v2114
        %v2121 = vadd.f32 %v2071, %v2110
        %v2122 = vadd.f32 %v2072, %v2116
        %v2123 = vadd.f32 %v2073, %v2117
        %2124 = vset.pattern.permute.xlu0 1
        %2125 = vperm.xlu0 %2124, %v500
        %v2126 = vpop.permute.xlu0 %2125
        %v2128 = vlaneseq
        %v2129 = vshrl.u32 %v2128, 7
        %v2130 = vsub.s32 1, %v2129
        %v2131 = vrot.slane %v2083, %v2130
        %v2132 = vlaneseq
        %v2133 = vshrl.u32 %v2132, 7
        %v2134 = vsub.s32 1, %v2133
        %v2135 = vrot.slane %v2084, %v2134
        %v2136 = vlaneseq
        %v2137 = vshrl.u32 %v2136, 7
        %v2138 = vsub.s32 1, %v2137
        %v2139 = vrot.slane %v2085, %v2138
        %v2140 = vmul.f32 %v2126, %v2131
        %v2141 = vmul.f32 %v2126, %v2135
        %v2142 = vmul.f32 %v2126, %v2139
        %2146 = vrot.lane.b32.xlu0 %v2140, 96
        %v2147 = vpop.permute.xlu0 %2146
        %2148 = vrot.lane.b32.xlu0 %v2141, 96
        %v2149 = vpop.permute.xlu0 %2148
        %2150 = vrot.lane.b32.xlu0 %v2142, 96
        %v2151 = vpop.permute.xlu0 %2150
        %v2152 = vsel %vm2115, %v2147, %v2149
        %v2153 = vsel %vm2115, %v2149, %v2151
        %v2157 = vadd.f32 %v2121, %v2147
        %v2158 = vadd.f32 %v2122, %v2152
        %v2159 = vadd.f32 %v2123, %v2153
        %2160 = vset.pattern.permute.xlu0 2
        %2161 = vperm.xlu0 %2160, %v500
        %v2162 = vpop.permute.xlu0 %2161
        %v2164 = vlaneseq
        %v2165 = vshrl.u32 %v2164, 7
        %v2166 = vsub.s32 2, %v2165
        %v2167 = vrot.slane %v2083, %v2166
        %v2168 = vlaneseq
        %v2169 = vshrl.u32 %v2168, 7
        %v2170 = vsub.s32 2, %v2169
        %v2171 = vrot.slane %v2084, %v2170
        %v2172 = vlaneseq
        %v2173 = vshrl.u32 %v2172, 7
        %v2174 = vsub.s32 2, %v2173
        %v2175 = vrot.slane %v2085, %v2174
        %v2176 = vmul.f32 %v2162, %v2167
        %v2177 = vmul.f32 %v2162, %v2171
        %v2178 = vmul.f32 %v2162, %v2175
        %2182 = vrot.lane.b32.xlu0 %v2176, 96
        %v2183 = vpop.permute.xlu0 %2182
        %2184 = vrot.lane.b32.xlu0 %v2177, 96
        %v2185 = vpop.permute.xlu0 %2184
        %2186 = vrot.lane.b32.xlu0 %v2178, 96
        %v2187 = vpop.permute.xlu0 %2186
        %v2188 = vsel %vm2115, %v2183, %v2185
        %v2189 = vsel %vm2115, %v2185, %v2187
        %v2193 = vadd.f32 %v2157, %v2183
        %v2194 = vadd.f32 %v2158, %v2188
        %v2195 = vadd.f32 %v2159, %v2189
        %2196 = vset.pattern.permute.xlu0 3
        %2197 = vperm.xlu0 %2196, %v500
        %v2198 = vpop.permute.xlu0 %2197
        %v2200 = vlaneseq
        %v2201 = vshrl.u32 %v2200, 7
        %v2202 = vsub.s32 3, %v2201
        %v2203 = vrot.slane %v2083, %v2202
        %v2204 = vlaneseq
        %v2205 = vshrl.u32 %v2204, 7
        %v2206 = vsub.s32 3, %v2205
        %v2207 = vrot.slane %v2084, %v2206
        %v2208 = vlaneseq
        %v2209 = vshrl.u32 %v2208, 7
        %v2210 = vsub.s32 3, %v2209
        %v2211 = vrot.slane %v2085, %v2210
        %v2212 = vmul.f32 %v2198, %v2203
        %v2213 = vmul.f32 %v2198, %v2207
        %v2214 = vmul.f32 %v2198, %v2211
        %2218 = vrot.lane.b32.xlu0 %v2212, 96
        %v2219 = vpop.permute.xlu0 %2218
        %2220 = vrot.lane.b32.xlu0 %v2213, 96
        %v2221 = vpop.permute.xlu0 %2220
        %2222 = vrot.lane.b32.xlu0 %v2214, 96
        %v2223 = vpop.permute.xlu0 %2222
        %v2224 = vsel %vm2115, %v2219, %v2221
        %v2225 = vsel %vm2115, %v2221, %v2223
        %v2229 = vadd.f32 %v2193, %v2219
        %v2230 = vadd.f32 %v2194, %v2224
        %v2231 = vadd.f32 %v2195, %v2225
        %2232 = vset.pattern.permute.xlu0 4
        %2233 = vperm.xlu0 %2232, %v500
        %v2234 = vpop.permute.xlu0 %2233
        %v2236 = vlaneseq
        %v2237 = vshrl.u32 %v2236, 7
        %v2238 = vsub.s32 4, %v2237
        %v2239 = vrot.slane %v2083, %v2238
        %v2240 = vlaneseq
        %v2241 = vshrl.u32 %v2240, 7
        %v2242 = vsub.s32 4, %v2241
        %v2243 = vrot.slane %v2084, %v2242
        %v2244 = vlaneseq
        %v2245 = vshrl.u32 %v2244, 7
        %v2246 = vsub.s32 4, %v2245
        %v2247 = vrot.slane %v2085, %v2246
        %v2248 = vmul.f32 %v2234, %v2239
        %v2249 = vmul.f32 %v2234, %v2243
        %v2250 = vmul.f32 %v2234, %v2247
        %2254 = vrot.lane.b32.xlu0 %v2248, 96
        %v2255 = vpop.permute.xlu0 %2254
        %2256 = vrot.lane.b32.xlu0 %v2249, 96
        %v2257 = vpop.permute.xlu0 %2256
        %2258 = vrot.lane.b32.xlu0 %v2250, 96
        %v2259 = vpop.permute.xlu0 %2258
        %v2260 = vsel %vm2115, %v2255, %v2257
        %v2261 = vsel %vm2115, %v2257, %v2259
        %v2265 = vadd.f32 %v2229, %v2255
        %v2266 = vadd.f32 %v2230, %v2260
        %v2267 = vadd.f32 %v2231, %v2261
        %2268 = vset.pattern.permute.xlu0 5
        %2269 = vperm.xlu0 %2268, %v500
        %v2270 = vpop.permute.xlu0 %2269
        %v2272 = vlaneseq
        %v2273 = vshrl.u32 %v2272, 7
        %v2274 = vsub.s32 5, %v2273
        %v2275 = vrot.slane %v2083, %v2274
        %v2276 = vlaneseq
        %v2277 = vshrl.u32 %v2276, 7
        %v2278 = vsub.s32 5, %v2277
        %v2279 = vrot.slane %v2084, %v2278
        %v2280 = vlaneseq
        %v2281 = vshrl.u32 %v2280, 7
        %v2282 = vsub.s32 5, %v2281
        %v2283 = vrot.slane %v2085, %v2282
        %v2284 = vmul.f32 %v2270, %v2275
        %v2285 = vmul.f32 %v2270, %v2279
        %v2286 = vmul.f32 %v2270, %v2283
        %2290 = vrot.lane.b32.xlu0 %v2284, 96
        %v2291 = vpop.permute.xlu0 %2290
        %2292 = vrot.lane.b32.xlu0 %v2285, 96
        %v2293 = vpop.permute.xlu0 %2292
        %2294 = vrot.lane.b32.xlu0 %v2286, 96
        %v2295 = vpop.permute.xlu0 %2294
        %v2296 = vsel %vm2115, %v2291, %v2293
        %v2297 = vsel %vm2115, %v2293, %v2295
        %v2301 = vadd.f32 %v2265, %v2291
        %v2302 = vadd.f32 %v2266, %v2296
        %v2303 = vadd.f32 %v2267, %v2297
        %2304 = vset.pattern.permute.xlu0 6
        %2305 = vperm.xlu0 %2304, %v500
        %v2306 = vpop.permute.xlu0 %2305
        %v2308 = vlaneseq
        %v2309 = vshrl.u32 %v2308, 7
        %v2310 = vsub.s32 6, %v2309
        %v2311 = vrot.slane %v2083, %v2310
        %v2312 = vlaneseq
        %v2313 = vshrl.u32 %v2312, 7
        %v2314 = vsub.s32 6, %v2313
        %v2315 = vrot.slane %v2084, %v2314
        %v2316 = vlaneseq
        %v2317 = vshrl.u32 %v2316, 7
        %v2318 = vsub.s32 6, %v2317
        %v2319 = vrot.slane %v2085, %v2318
        %v2320 = vmul.f32 %v2306, %v2311
        %v2321 = vmul.f32 %v2306, %v2315
        %v2322 = vmul.f32 %v2306, %v2319
        %2326 = vrot.lane.b32.xlu0 %v2320, 96
        %v2327 = vpop.permute.xlu0 %2326
        %2328 = vrot.lane.b32.xlu0 %v2321, 96
        %v2329 = vpop.permute.xlu0 %2328
        %2330 = vrot.lane.b32.xlu0 %v2322, 96
        %v2331 = vpop.permute.xlu0 %2330
        %v2332 = vsel %vm2115, %v2327, %v2329
        %v2333 = vsel %vm2115, %v2329, %v2331
        %v2337 = vadd.f32 %v2301, %v2327
        %v2338 = vadd.f32 %v2302, %v2332
        %v2339 = vadd.f32 %v2303, %v2333
        %2340 = vset.pattern.permute.xlu0 7
        %2341 = vperm.xlu0 %2340, %v500
        %v2342 = vpop.permute.xlu0 %2341
        %v2344 = vlaneseq
        %v2345 = vshrl.u32 %v2344, 7
        %v2346 = vsub.s32 7, %v2345
        %v2347 = vrot.slane %v2083, %v2346
        %v2348 = vlaneseq
        %v2349 = vshrl.u32 %v2348, 7
        %v2350 = vsub.s32 7, %v2349
        %v2351 = vrot.slane %v2084, %v2350
        %v2352 = vlaneseq
        %v2353 = vshrl.u32 %v2352, 7
        %v2354 = vsub.s32 7, %v2353
        %v2355 = vrot.slane %v2085, %v2354
        %v2356 = vmul.f32 %v2342, %v2347
        %v2357 = vmul.f32 %v2342, %v2351
        %v2358 = vmul.f32 %v2342, %v2355
        %2362 = vrot.lane.b32.xlu0 %v2356, 96
        %v2363 = vpop.permute.xlu0 %2362
        %2364 = vrot.lane.b32.xlu0 %v2357, 96
        %v2365 = vpop.permute.xlu0 %2364
        %2366 = vrot.lane.b32.xlu0 %v2358, 96
        %v2367 = vpop.permute.xlu0 %2366
        %v2368 = vsel %vm2115, %v2363, %v2365
        %v2369 = vsel %vm2115, %v2365, %v2367
        %v2373 = vadd.f32 %v2337, %v2363
        %v2374 = vadd.f32 %v2338, %v2368
        %v2375 = vadd.f32 %v2339, %v2369
        %2377 = vset.pattern.permute.xlu0 0
        %2378 = vperm.xlu0 %2377, %v501
        %v2379 = vpop.permute.xlu0 %2378
        %v2381 = vmul.f32 %v2379, %v725
        %v2382 = vmul.f32 %v2379, %v729
        %v2383 = vmul.f32 %v2379, 0.0
        %2387 = vrot.lane.b32.xlu0 %v2381, 95
        %v2388 = vpop.permute.xlu0 %2387
        %2389 = vrot.lane.b32.xlu0 %v2382, 95
        %v2390 = vpop.permute.xlu0 %2389
        %2391 = vrot.lane.b32.xlu0 %v2383, 95
        %v2392 = vpop.permute.xlu0 %2391
        %vm2393 = vcmask 777216
        %v2394 = vsel %vm2393, %v2388, %v2390
        %v2395 = vsel %vm2393, %v2390, %v2392
        %v2399 = vadd.f32 %v2373, %v2388
        %v2400 = vadd.f32 %v2374, %v2394
        %v2401 = vadd.f32 %v2375, %v2395
        %2402 = vset.pattern.permute.xlu0 1
        %2403 = vperm.xlu0 %2402, %v501
        %v2404 = vpop.permute.xlu0 %2403
        %v2406 = vmul.f32 %v2404, %v761
        %v2407 = vmul.f32 %v2404, %v765
        %v2408 = vmul.f32 %v2404, 0.0
        %2412 = vrot.lane.b32.xlu0 %v2406, 95
        %v2413 = vpop.permute.xlu0 %2412
        %2414 = vrot.lane.b32.xlu0 %v2407, 95
        %v2415 = vpop.permute.xlu0 %2414
        %2416 = vrot.lane.b32.xlu0 %v2408, 95
        %v2417 = vpop.permute.xlu0 %2416
        %v2418 = vsel %vm2393, %v2413, %v2415
        %v2419 = vsel %vm2393, %v2415, %v2417
        %v2423 = vadd.f32 %v2399, %v2413
        %v2424 = vadd.f32 %v2400, %v2418
        %v2425 = vadd.f32 %v2401, %v2419
        %2426 = vset.pattern.permute.xlu0 2
        %2427 = vperm.xlu0 %2426, %v501
        %v2428 = vpop.permute.xlu0 %2427
        %v2430 = vmul.f32 %v2428, %v796
        %v2431 = vmul.f32 %v2428, %v800
        %v2432 = vmul.f32 %v2428, 0.0
        %2436 = vrot.lane.b32.xlu0 %v2430, 95
        %v2437 = vpop.permute.xlu0 %2436
        %2438 = vrot.lane.b32.xlu0 %v2431, 95
        %v2439 = vpop.permute.xlu0 %2438
        %2440 = vrot.lane.b32.xlu0 %v2432, 95
        %v2441 = vpop.permute.xlu0 %2440
        %v2442 = vsel %vm2393, %v2437, %v2439
        %v2443 = vsel %vm2393, %v2439, %v2441
        %v2447 = vadd.f32 %v2423, %v2437
        %v2448 = vadd.f32 %v2424, %v2442
        %v2449 = vadd.f32 %v2425, %v2443
        %2450 = vset.pattern.permute.xlu0 3
        %2451 = vperm.xlu0 %2450, %v501
        %v2452 = vpop.permute.xlu0 %2451
        %v2454 = vmul.f32 %v2452, %v831
        %v2455 = vmul.f32 %v2452, %v835
        %v2456 = vmul.f32 %v2452, 0.0
        %2460 = vrot.lane.b32.xlu0 %v2454, 95
        %v2461 = vpop.permute.xlu0 %2460
        %2462 = vrot.lane.b32.xlu0 %v2455, 95
        %v2463 = vpop.permute.xlu0 %2462
        %2464 = vrot.lane.b32.xlu0 %v2456, 95
        %v2465 = vpop.permute.xlu0 %2464
        %v2466 = vsel %vm2393, %v2461, %v2463
        %v2467 = vsel %vm2393, %v2463, %v2465
        %v2471 = vadd.f32 %v2447, %v2461
        %v2472 = vadd.f32 %v2448, %v2466
        %v2473 = vadd.f32 %v2449, %v2467
        %2474 = vset.pattern.permute.xlu0 4
        %2475 = vperm.xlu0 %2474, %v501
        %v2476 = vpop.permute.xlu0 %2475
        %v2478 = vmul.f32 %v2476, %v866
        %v2479 = vmul.f32 %v2476, %v870
        %v2480 = vmul.f32 %v2476, 0.0
        %2484 = vrot.lane.b32.xlu0 %v2478, 95
        %v2485 = vpop.permute.xlu0 %2484
        %2486 = vrot.lane.b32.xlu0 %v2479, 95
        %v2487 = vpop.permute.xlu0 %2486
        %2488 = vrot.lane.b32.xlu0 %v2480, 95
        %v2489 = vpop.permute.xlu0 %2488
        %v2490 = vsel %vm2393, %v2485, %v2487
        %v2491 = vsel %vm2393, %v2487, %v2489
        %v2495 = vadd.f32 %v2471, %v2485
        %v2496 = vadd.f32 %v2472, %v2490
        %v2497 = vadd.f32 %v2473, %v2491
        %2498 = vset.pattern.permute.xlu0 5
        %2499 = vperm.xlu0 %2498, %v501
        %v2500 = vpop.permute.xlu0 %2499
        %v2502 = vmul.f32 %v2500, %v901
        %v2503 = vmul.f32 %v2500, %v905
        %v2504 = vmul.f32 %v2500, 0.0
        %2508 = vrot.lane.b32.xlu0 %v2502, 95
        %v2509 = vpop.permute.xlu0 %2508
        %2510 = vrot.lane.b32.xlu0 %v2503, 95
        %v2511 = vpop.permute.xlu0 %2510
        %2512 = vrot.lane.b32.xlu0 %v2504, 95
        %v2513 = vpop.permute.xlu0 %2512
        %v2514 = vsel %vm2393, %v2509, %v2511
        %v2515 = vsel %vm2393, %v2511, %v2513
        %v2519 = vadd.f32 %v2495, %v2509
        %v2520 = vadd.f32 %v2496, %v2514
        %v2521 = vadd.f32 %v2497, %v2515
        %2522 = vset.pattern.permute.xlu0 6
        %2523 = vperm.xlu0 %2522, %v501
        %v2524 = vpop.permute.xlu0 %2523
        %v2526 = vmul.f32 %v2524, %v936
        %v2527 = vmul.f32 %v2524, %v940
        %v2528 = vmul.f32 %v2524, 0.0
        %2532 = vrot.lane.b32.xlu0 %v2526, 95
        %v2533 = vpop.permute.xlu0 %2532
        %2534 = vrot.lane.b32.xlu0 %v2527, 95
        %v2535 = vpop.permute.xlu0 %2534
        %2536 = vrot.lane.b32.xlu0 %v2528, 95
        %v2537 = vpop.permute.xlu0 %2536
        %v2538 = vsel %vm2393, %v2533, %v2535
        %v2539 = vsel %vm2393, %v2535, %v2537
        %v2543 = vadd.f32 %v2519, %v2533
        %v2544 = vadd.f32 %v2520, %v2538
        %v2545 = vadd.f32 %v2521, %v2539
        %2546 = vset.pattern.permute.xlu0 7
        %2547 = vperm.xlu0 %2546, %v501
        %v2548 = vpop.permute.xlu0 %2547
        %v2550 = vmul.f32 %v2548, %v971
        %v2551 = vmul.f32 %v2548, %v975
        %v2552 = vmul.f32 %v2548, 0.0
        %2556 = vrot.lane.b32.xlu0 %v2550, 95
        %v2557 = vpop.permute.xlu0 %2556
        %2558 = vrot.lane.b32.xlu0 %v2551, 95
        %v2559 = vpop.permute.xlu0 %2558
        %2560 = vrot.lane.b32.xlu0 %v2552, 95
        %v2561 = vpop.permute.xlu0 %2560
        %v2562 = vsel %vm2393, %v2557, %v2559
        %v2563 = vsel %vm2393, %v2559, %v2561
        %v2567 = vadd.f32 %v2543, %v2557
        %v2568 = vadd.f32 %v2544, %v2562
        %v2569 = vadd.f32 %v2545, %v2563
        %2570 = vrot.lane.b32.xlu0 %v1009, 17
        %v2571 = vpop.permute.xlu0 %2570
        %2572 = vrot.lane.b32.xlu0 %v1013, 17
        %v2573 = vpop.permute.xlu0 %2572
        %vm2574 = vcmask 138240
        %v2575 = vsel %vm2574, %v2571, %v2573
        %v2579 = vmul.f32 %v490, %v2571
        %v2580 = vmul.f32 %v492, %v2575
        %v2581 = vmul.f32 %v2573, 0.0
        %2583 = vset.pattern.permute.xlu0 0
        %2584 = vperm.xlu0 %2583, %v502
        %v2585 = vpop.permute.xlu0 %2584
        %v2587 = vlaneseq
        %v2588 = vshrl.u32 %v2587, 7
        %v2589 = vsub.s32 0, %v2588
        %v2590 = vrot.slane %v2579, %v2589
        %v2591 = vlaneseq
        %v2592 = vshrl.u32 %v2591, 7
        %v2593 = vsub.s32 0, %v2592
        %v2594 = vrot.slane %v2580, %v2593
        %v2595 = vlaneseq
        %v2596 = vshrl.u32 %v2595, 7
        %v2597 = vsub.s32 0, %v2596
        %v2598 = vrot.slane %v2581, %v2597
        %v2599 = vmul.f32 %v2585, %v2590
        %v2600 = vmul.f32 %v2585, %v2594
        %v2601 = vmul.f32 %v2585, %v2598
        %2605 = vrot.lane.b32.xlu0 %v2599, 94
        %v2606 = vpop.permute.xlu0 %2605
        %2607 = vrot.lane.b32.xlu0 %v2600, 94
        %v2608 = vpop.permute.xlu0 %2607
        %2609 = vrot.lane.b32.xlu0 %v2601, 94
        %v2610 = vpop.permute.xlu0 %2609
        %vm2611 = vcmask 769024
        %v2612 = vsel %vm2611, %v2606, %v2608
        %v2613 = vsel %vm2611, %v2608, %v2610
        %v2617 = vadd.f32 %v2567, %v2606
        %v2618 = vadd.f32 %v2568, %v2612
        %v2619 = vadd.f32 %v2569, %v2613
        %2620 = vset.pattern.permute.xlu0 1
        %2621 = vperm.xlu0 %2620, %v502
        %v2622 = vpop.permute.xlu0 %2621
        %v2624 = vlaneseq
        %v2625 = vshrl.u32 %v2624, 7
        %v2626 = vsub.s32 1, %v2625
        %v2627 = vrot.slane %v2579, %v2626
        %v2628 = vlaneseq
        %v2629 = vshrl.u32 %v2628, 7
        %v2630 = vsub.s32 1, %v2629
        %v2631 = vrot.slane %v2580, %v2630
        %v2632 = vlaneseq
        %v2633 = vshrl.u32 %v2632, 7
        %v2634 = vsub.s32 1, %v2633
        %v2635 = vrot.slane %v2581, %v2634
        %v2636 = vmul.f32 %v2622, %v2627
        %v2637 = vmul.f32 %v2622, %v2631
        %v2638 = vmul.f32 %v2622, %v2635
        %2642 = vrot.lane.b32.xlu0 %v2636, 94
        %v2643 = vpop.permute.xlu0 %2642
        %2644 = vrot.lane.b32.xlu0 %v2637, 94
        %v2645 = vpop.permute.xlu0 %2644
        %2646 = vrot.lane.b32.xlu0 %v2638, 94
        %v2647 = vpop.permute.xlu0 %2646
        %v2648 = vsel %vm2611, %v2643, %v2645
        %v2649 = vsel %vm2611, %v2645, %v2647
        %v2653 = vadd.f32 %v2617, %v2643
        %v2654 = vadd.f32 %v2618, %v2648
        %v2655 = vadd.f32 %v2619, %v2649
        %2656 = vset.pattern.permute.xlu0 2
        %2657 = vperm.xlu0 %2656, %v502
        %v2658 = vpop.permute.xlu0 %2657
        %v2660 = vlaneseq
        %v2661 = vshrl.u32 %v2660, 7
        %v2662 = vsub.s32 2, %v2661
        %v2663 = vrot.slane %v2579, %v2662
        %v2664 = vlaneseq
        %v2665 = vshrl.u32 %v2664, 7
        %v2666 = vsub.s32 2, %v2665
        %v2667 = vrot.slane %v2580, %v2666
        %v2668 = vlaneseq
        %v2669 = vshrl.u32 %v2668, 7
        %v2670 = vsub.s32 2, %v2669
        %v2671 = vrot.slane %v2581, %v2670
        %v2672 = vmul.f32 %v2658, %v2663
        %v2673 = vmul.f32 %v2658, %v2667
        %v2674 = vmul.f32 %v2658, %v2671
        %2678 = vrot.lane.b32.xlu0 %v2672, 94
        %v2679 = vpop.permute.xlu0 %2678
        %2680 = vrot.lane.b32.xlu0 %v2673, 94
        %v2681 = vpop.permute.xlu0 %2680
        %2682 = vrot.lane.b32.xlu0 %v2674, 94
        %v2683 = vpop.permute.xlu0 %2682
        %v2684 = vsel %vm2611, %v2679, %v2681
        %v2685 = vsel %vm2611, %v2681, %v2683
        %v2689 = vadd.f32 %v2653, %v2679
        %v2690 = vadd.f32 %v2654, %v2684
        %v2691 = vadd.f32 %v2655, %v2685
        %2692 = vset.pattern.permute.xlu0 3
        %2693 = vperm.xlu0 %2692, %v502
        %v2694 = vpop.permute.xlu0 %2693
        %v2696 = vlaneseq
        %v2697 = vshrl.u32 %v2696, 7
        %v2698 = vsub.s32 3, %v2697
        %v2699 = vrot.slane %v2579, %v2698
        %v2700 = vlaneseq
        %v2701 = vshrl.u32 %v2700, 7
        %v2702 = vsub.s32 3, %v2701
        %v2703 = vrot.slane %v2580, %v2702
        %v2704 = vlaneseq
        %v2705 = vshrl.u32 %v2704, 7
        %v2706 = vsub.s32 3, %v2705
        %v2707 = vrot.slane %v2581, %v2706
        %v2708 = vmul.f32 %v2694, %v2699
        %v2709 = vmul.f32 %v2694, %v2703
        %v2710 = vmul.f32 %v2694, %v2707
        %2714 = vrot.lane.b32.xlu0 %v2708, 94
        %v2715 = vpop.permute.xlu0 %2714
        %2716 = vrot.lane.b32.xlu0 %v2709, 94
        %v2717 = vpop.permute.xlu0 %2716
        %2718 = vrot.lane.b32.xlu0 %v2710, 94
        %v2719 = vpop.permute.xlu0 %2718
        %v2720 = vsel %vm2611, %v2715, %v2717
        %v2721 = vsel %vm2611, %v2717, %v2719
        %v2725 = vadd.f32 %v2689, %v2715
        %v2726 = vadd.f32 %v2690, %v2720
        %v2727 = vadd.f32 %v2691, %v2721
        %2728 = vset.pattern.permute.xlu0 4
        %2729 = vperm.xlu0 %2728, %v502
        %v2730 = vpop.permute.xlu0 %2729
        %v2732 = vlaneseq
        %v2733 = vshrl.u32 %v2732, 7
        %v2734 = vsub.s32 4, %v2733
        %v2735 = vrot.slane %v2579, %v2734
        %v2736 = vlaneseq
        %v2737 = vshrl.u32 %v2736, 7
        %v2738 = vsub.s32 4, %v2737
        %v2739 = vrot.slane %v2580, %v2738
        %v2740 = vlaneseq
        %v2741 = vshrl.u32 %v2740, 7
        %v2742 = vsub.s32 4, %v2741
        %v2743 = vrot.slane %v2581, %v2742
        %v2744 = vmul.f32 %v2730, %v2735
        %v2745 = vmul.f32 %v2730, %v2739
        %v2746 = vmul.f32 %v2730, %v2743
        %2750 = vrot.lane.b32.xlu0 %v2744, 94
        %v2751 = vpop.permute.xlu0 %2750
        %2752 = vrot.lane.b32.xlu0 %v2745, 94
        %v2753 = vpop.permute.xlu0 %2752
        %2754 = vrot.lane.b32.xlu0 %v2746, 94
        %v2755 = vpop.permute.xlu0 %2754
        %v2756 = vsel %vm2611, %v2751, %v2753
        %v2757 = vsel %vm2611, %v2753, %v2755
        %v2761 = vadd.f32 %v2725, %v2751
        %v2762 = vadd.f32 %v2726, %v2756
        %v2763 = vadd.f32 %v2727, %v2757
        %2764 = vset.pattern.permute.xlu0 5
        %2765 = vperm.xlu0 %2764, %v502
        %v2766 = vpop.permute.xlu0 %2765
        %v2768 = vlaneseq
        %v2769 = vshrl.u32 %v2768, 7
        %v2770 = vsub.s32 5, %v2769
        %v2771 = vrot.slane %v2579, %v2770
        %v2772 = vlaneseq
        %v2773 = vshrl.u32 %v2772, 7
        %v2774 = vsub.s32 5, %v2773
        %v2775 = vrot.slane %v2580, %v2774
        %v2776 = vlaneseq
        %v2777 = vshrl.u32 %v2776, 7
        %v2778 = vsub.s32 5, %v2777
        %v2779 = vrot.slane %v2581, %v2778
        %v2780 = vmul.f32 %v2766, %v2771
        %v2781 = vmul.f32 %v2766, %v2775
        %v2782 = vmul.f32 %v2766, %v2779
        %2786 = vrot.lane.b32.xlu0 %v2780, 94
        %v2787 = vpop.permute.xlu0 %2786
        %2788 = vrot.lane.b32.xlu0 %v2781, 94
        %v2789 = vpop.permute.xlu0 %2788
        %2790 = vrot.lane.b32.xlu0 %v2782, 94
        %v2791 = vpop.permute.xlu0 %2790
        %v2792 = vsel %vm2611, %v2787, %v2789
        %v2793 = vsel %vm2611, %v2789, %v2791
        %v2797 = vadd.f32 %v2761, %v2787
        %v2798 = vadd.f32 %v2762, %v2792
        %v2799 = vadd.f32 %v2763, %v2793
        %2800 = vset.pattern.permute.xlu0 6
        %2801 = vperm.xlu0 %2800, %v502
        %v2802 = vpop.permute.xlu0 %2801
        %v2804 = vlaneseq
        %v2805 = vshrl.u32 %v2804, 7
        %v2806 = vsub.s32 6, %v2805
        %v2807 = vrot.slane %v2579, %v2806
        %v2808 = vlaneseq
        %v2809 = vshrl.u32 %v2808, 7
        %v2810 = vsub.s32 6, %v2809
        %v2811 = vrot.slane %v2580, %v2810
        %v2812 = vlaneseq
        %v2813 = vshrl.u32 %v2812, 7
        %v2814 = vsub.s32 6, %v2813
        %v2815 = vrot.slane %v2581, %v2814
        %v2816 = vmul.f32 %v2802, %v2807
        %v2817 = vmul.f32 %v2802, %v2811
        %v2818 = vmul.f32 %v2802, %v2815
        %2822 = vrot.lane.b32.xlu0 %v2816, 94
        %v2823 = vpop.permute.xlu0 %2822
        %2824 = vrot.lane.b32.xlu0 %v2817, 94
        %v2825 = vpop.permute.xlu0 %2824
        %2826 = vrot.lane.b32.xlu0 %v2818, 94
        %v2827 = vpop.permute.xlu0 %2826
        %v2828 = vsel %vm2611, %v2823, %v2825
        %v2829 = vsel %vm2611, %v2825, %v2827
        %v2833 = vadd.f32 %v2797, %v2823
        %v2834 = vadd.f32 %v2798, %v2828
        %v2835 = vadd.f32 %v2799, %v2829
        %2836 = vset.pattern.permute.xlu0 7
        %2837 = vperm.xlu0 %2836, %v502
        %v2838 = vpop.permute.xlu0 %2837
        %v2840 = vlaneseq
        %v2841 = vshrl.u32 %v2840, 7
        %v2842 = vsub.s32 7, %v2841
        %v2843 = vrot.slane %v2579, %v2842
        %v2844 = vlaneseq
        %v2845 = vshrl.u32 %v2844, 7
        %v2846 = vsub.s32 7, %v2845
        %v2847 = vrot.slane %v2580, %v2846
        %v2848 = vlaneseq
        %v2849 = vshrl.u32 %v2848, 7
        %v2850 = vsub.s32 7, %v2849
        %v2851 = vrot.slane %v2581, %v2850
        %v2852 = vmul.f32 %v2838, %v2843
        %v2853 = vmul.f32 %v2838, %v2847
        %v2854 = vmul.f32 %v2838, %v2851
        %2858 = vrot.lane.b32.xlu0 %v2852, 94
        %v2859 = vpop.permute.xlu0 %2858
        %2860 = vrot.lane.b32.xlu0 %v2853, 94
        %v2861 = vpop.permute.xlu0 %2860
        %2862 = vrot.lane.b32.xlu0 %v2854, 94
        %v2863 = vpop.permute.xlu0 %2862
        %v2864 = vsel %vm2611, %v2859, %v2861
        %v2865 = vsel %vm2611, %v2861, %v2863
        %v2869 = vadd.f32 %v2833, %v2859
        %v2870 = vadd.f32 %v2834, %v2864
        %v2871 = vadd.f32 %v2835, %v2865
        %2873 = vset.pattern.permute.xlu0 0
        %2874 = vperm.xlu0 %2873, %v503
        %v2875 = vpop.permute.xlu0 %2874
        %v2877 = vadd.f32 %v2869, %v2875
        %v2878 = vadd.f32 %v2870, %v2875
        %v2879 = vadd.f32 %v2871, %v2875
        %v2880 = vmax.f32 %v2877, 0.0
        %v2881 = vmax.f32 %v2878, 0.0
        %v2882 = vmax.f32 %v2879, 0.0
        %v2883 = vld [vmem:[#allocation3] sm:$0xff]
        %v2884 = vld [vmem:[#allocation3 + $0x8] sm:$0xff]
        %v2885 = vld [vmem:[#allocation3 + $0x10] sm:$0xff]
        %v2886 = vld [vmem:[#allocation3 + $0x18] sm:$0xff]
        %v2887 = vld [vmem:[#allocation3 + $0x20] sm:$0xff]
        %v2888 = vld [vmem:[#allocation3 + $0x28] sm:$0xff]
        %v2889 = vld [vmem:[#allocation3 + $0x30] sm:$0xff]
        %v2890 = vld [vmem:[#allocation3 + $0x38] sm:$0xff]
        %v2891 = vld [vmem:[#allocation3 + $0x40] sm:$0xff]
        %v2892 = vld [vmem:[#allocation3 + $0x48] sm:$0xff]
        %v2893 = vld [vmem:[#allocation3 + $0x50] sm:$0xff]
        %v2894 = vld [vmem:[#allocation3 + $0x58] sm:$0xff]
        %v2895 = vld [vmem:[#allocation3 + $0x60] sm:$0xff]
        %v2896 = vld [vmem:[#allocation3 + $0x68] sm:$0xff]
        %v2897 = vld [vmem:[#allocation3 + $0x70] sm:$0xff]
        %v2898 = vld [vmem:[#allocation3 + $0x78] sm:$0xff]
        %v2899 = vld [vmem:[#allocation3 + $0x80] sm:$0xff]
        %v2900 = vld [vmem:[#allocation3 + $0x88] sm:$0xff]
        %v2901 = vld [vmem:[#allocation3 + $0x90] sm:$0xff]
        %v2902 = vld [vmem:[#allocation3 + $0x98] sm:$0xff]
        %v2903 = vld [vmem:[#allocation3 + $0xa0] sm:$0xff]
        %v2904 = vld [vmem:[#allocation3 + $0xa8] sm:$0xff]
        %v2905 = vld [vmem:[#allocation3 + $0xb0] sm:$0xff]
        %v2906 = vld [vmem:[#allocation3 + $0xb8] sm:$0xff]
        %v2907 = vld [vmem:[#allocation3 + $0xc0] sm:$0xff]
        %v2908 = vld [vmem:[#allocation3 + $0xc8] sm:$0xff]
        %v2909 = vld [vmem:[#allocation3 + $0xd0] sm:$0xff]
        %v2910 = vld [vmem:[#allocation3 + $0xd8] sm:$0xff]
        %v2911 = vld [vmem:[#allocation3 + $0xe0] sm:$0xff]
        %v2912 = vld [vmem:[#allocation3 + $0xe8] sm:$0xff]
        %v2913 = vld [vmem:[#allocation3 + $0xf0] sm:$0xff]
        %v2914 = vld [vmem:[#allocation3 + $0xf8] sm:$0xff]
        %v2915 = vld [vmem:[#allocation3 + $0x100] sm:$0xff]
        %v2916 = vld [vmem:[#allocation3 + $0x108] sm:$0xff]
        %v2917 = vld [vmem:[#allocation3 + $0x110] sm:$0xff]
        %v2918 = vld [vmem:[#allocation3 + $0x118] sm:$0xff]
        %v2919 = vld [vmem:[#allocation3 + $0x120] sm:$0xff]
        %v2920 = vld [vmem:[#allocation3 + $0x128] sm:$0xff]
        %v2921 = vld [vmem:[#allocation3 + $0x130] sm:$0xff]
        %v2922 = vld [vmem:[#allocation3 + $0x138] sm:$0xff]
        %v2923 = vld [vmem:[#allocation3 + $0x140] sm:$0xff]
        %v2924 = vld [vmem:[#allocation3 + $0x148] sm:$0xff]
        %v2925 = vld [vmem:[#allocation3 + $0x150] sm:$0xff]
        %v2926 = vld [vmem:[#allocation3 + $0x158] sm:$0xff]
        %v2927 = vld [vmem:[#allocation3 + $0x160] sm:$0xff]
        %v2928 = vld [vmem:[#allocation3 + $0x168] sm:$0xff]
        %v2929 = vld [vmem:[#allocation3 + $0x170] sm:$0xff]
        %v2930 = vld [vmem:[#allocation3 + $0x178] sm:$0xff]
        %v2931 = vld [vmem:[#allocation3 + $0x180] sm:$0xff]
        %v2932 = vld [vmem:[#allocation3 + $0x188] sm:$0xff]
        %v2933 = vld [vmem:[#allocation3 + $0x190] sm:$0xff]
        %v2934 = vld [vmem:[#allocation3 + $0x198] sm:$0xff]
        %v2935 = vld [vmem:[#allocation3 + $0x1a0] sm:$0xff]
        %v2936 = vld [vmem:[#allocation3 + $0x1a8] sm:$0xff]
        %v2937 = vld [vmem:[#allocation3 + $0x1b0] sm:$0xff]
        %v2938 = vld [vmem:[#allocation3 + $0x1b8] sm:$0xff]
        %v2939 = vld [vmem:[#allocation3 + $0x1c0] sm:$0xff]
        %v2940 = vld [vmem:[#allocation3 + $0x1c8] sm:$0xff]
        %v2941 = vld [vmem:[#allocation3 + $0x1d0] sm:$0xff]
        %v2942 = vld [vmem:[#allocation3 + $0x1d8] sm:$0xff]
        %v2943 = vld [vmem:[#allocation3 + $0x1e0] sm:$0xff]
        %v2944 = vld [vmem:[#allocation3 + $0x1e8] sm:$0xff]
        %v2945 = vld [vmem:[#allocation3 + $0x1f0] sm:$0xff]
        %v2946 = vld [vmem:[#allocation3 + $0x1f8] sm:$0xff]
        %v2947 = vld [vmem:[#allocation3 + $0x200] sm:$0xff]
        %v2948 = vld [vmem:[#allocation3 + $0x208] sm:$0xff]
        %v2949 = vld [vmem:[#allocation3 + $0x210] sm:$0xff]
        %v2950 = vld [vmem:[#allocation3 + $0x218] sm:$0xff]
        %v2951 = vld [vmem:[#allocation3 + $0x220] sm:$0xff]
        %v2952 = vld [vmem:[#allocation3 + $0x228] sm:$0xff]
        %v2953 = vld [vmem:[#allocation3 + $0x230] sm:$0xff]
        %v2954 = vld [vmem:[#allocation3 + $0x238] sm:$0xff]
        %v2955 = vld [vmem:[#allocation3 + $0x240] sm:$0xff]
        %v2956 = vld [vmem:[#allocation3 + $0x248] sm:$0xff]
        %v2957 = vld [vmem:[#allocation3 + $0x250] sm:$0xff]
        %v2958 = vld [vmem:[#allocation3 + $0x258] sm:$0xff]
        %v2959 = vld [vmem:[#allocation3 + $0x260] sm:$0xff]
        %v2960 = vld [vmem:[#allocation3 + $0x268] sm:$0xff]
        %v2961 = vld [vmem:[#allocation3 + $0x270] sm:$0xff]
        %v2962 = vld [vmem:[#allocation3 + $0x278] sm:$0xff]
        %v2963 = vld [vmem:[#allocation3 + $0x280] sm:$0xff]
        %v2964 = vld [vmem:[#allocation3 + $0x288] sm:$0xff]
        %v2965 = vld [vmem:[#allocation3 + $0x290] sm:$0xff]
        %v2966 = vld [vmem:[#allocation3 + $0x298] sm:$0xff]
        %v2967 = vld [vmem:[#allocation3 + $0x2a0] sm:$0xff]
        %v2968 = vld [vmem:[#allocation3 + $0x2a8] sm:$0xff]
        %v2969 = vld [vmem:[#allocation3 + $0x2b0] sm:$0xff]
        %v2970 = vld [vmem:[#allocation3 + $0x2b8] sm:$0xff]
        %v2971 = vld [vmem:[#allocation3 + $0x2c0] sm:$0xff]
        %v2972 = vld [vmem:[#allocation3 + $0x2c8] sm:$0xff]
        %v2973 = vld [vmem:[#allocation3 + $0x2d0] sm:$0xff]
        %v2974 = vld [vmem:[#allocation3 + $0x2d8] sm:$0xff]
        %v2975 = vld [vmem:[#allocation3 + $0x2e0] sm:$0xff]
        %v2976 = vld [vmem:[#allocation3 + $0x2e8] sm:$0xff]
        %v2977 = vld [vmem:[#allocation3 + $0x2f0] sm:$0xff]
        %v2978 = vld [vmem:[#allocation3 + $0x2f8] sm:$0xff]
        %v2979 = vld [vmem:[#allocation3 + $0x300] sm:$0xff]
        %v2980 = vld [vmem:[#allocation3 + $0x308] sm:$0xff]
        %v2981 = vld [vmem:[#allocation3 + $0x310] sm:$0xff]
        %v2982 = vld [vmem:[#allocation3 + $0x318] sm:$0xff]
        %v2983 = vld [vmem:[#allocation3 + $0x320] sm:$0xff]
        %v2984 = vld [vmem:[#allocation3 + $0x328] sm:$0xff]
        %v2985 = vld [vmem:[#allocation3 + $0x330] sm:$0xff]
        %v2986 = vld [vmem:[#allocation3 + $0x338] sm:$0xff]
        %v2987 = vld [vmem:[#allocation3 + $0x340] sm:$0xff]
        %v2988 = vld [vmem:[#allocation3 + $0x348] sm:$0xff]
        %v2989 = vld [vmem:[#allocation3 + $0x350] sm:$0xff]
        %v2990 = vld [vmem:[#allocation3 + $0x358] sm:$0xff]
        %v2991 = vld [vmem:[#allocation3 + $0x360] sm:$0xff]
        %v2992 = vld [vmem:[#allocation3 + $0x368] sm:$0xff]
        %v2993 = vld [vmem:[#allocation3 + $0x370] sm:$0xff]
        %v2994 = vld [vmem:[#allocation3 + $0x378] sm:$0xff]
        %v2995 = vld [vmem:[#allocation3 + $0x380] sm:$0xff]
        %v2996 = vld [vmem:[#allocation3 + $0x388] sm:$0xff]
        %v2997 = vld [vmem:[#allocation3 + $0x390] sm:$0xff]
        %v2998 = vld [vmem:[#allocation3 + $0x398] sm:$0xff]
        %v2999 = vld [vmem:[#allocation3 + $0x3a0] sm:$0xff]
        %v3000 = vld [vmem:[#allocation3 + $0x3a8] sm:$0xff]
        %v3001 = vld [vmem:[#allocation3 + $0x3b0] sm:$0xff]
        %v3002 = vld [vmem:[#allocation3 + $0x3b8] sm:$0xff]
        %v3003 = vld [vmem:[#allocation3 + $0x3c0] sm:$0xff]
        %v3004 = vld [vmem:[#allocation3 + $0x3c8] sm:$0xff]
        %v3005 = vld [vmem:[#allocation3 + $0x3d0] sm:$0xff]
        %v3006 = vld [vmem:[#allocation3 + $0x3d8] sm:$0xff]
        %v3007 = vld [vmem:[#allocation3 + $0x3e0] sm:$0xff]
        %v3008 = vld [vmem:[#allocation3 + $0x3e8] sm:$0xff]
        %v3009 = vld [vmem:[#allocation3 + $0x3f0] sm:$0xff]
        %v3010 = vld [vmem:[#allocation3 + $0x3f8] sm:$0xff]
        %v3011 = vld [vmem:[#allocation3 + $0x400] sm:$0xff]
        %v3012 = vld [vmem:[#allocation3 + $0x408] sm:$0xff]
        %v3013 = vld [vmem:[#allocation3 + $0x410] sm:$0xff]
        %v3014 = vld [vmem:[#allocation3 + $0x418] sm:$0xff]
        %v3015 = vld [vmem:[#allocation3 + $0x420] sm:$0xff]
        %v3016 = vld [vmem:[#allocation3 + $0x428] sm:$0xff]
        %v3017 = vld [vmem:[#allocation3 + $0x430] sm:$0xff]
        %v3018 = vld [vmem:[#allocation3 + $0x438] sm:$0xff]
        %v3019 = vld [vmem:[#allocation3 + $0x440] sm:$0xff]
        %v3020 = vld [vmem:[#allocation3 + $0x448] sm:$0xff]
        %v3021 = vld [vmem:[#allocation3 + $0x450] sm:$0xff]
        %v3022 = vld [vmem:[#allocation3 + $0x458] sm:$0xff]
        %v3023 = vld [vmem:[#allocation3 + $0x460] sm:$0xff]
        %v3024 = vld [vmem:[#allocation3 + $0x468] sm:$0xff]
        %v3025 = vld [vmem:[#allocation3 + $0x470] sm:$0xff]
        %v3026 = vld [vmem:[#allocation3 + $0x478] sm:$0xff]
        %v3027 = vld [vmem:[#allocation3 + $0x480] sm:$0xff]
        %v3028 = vld [vmem:[#allocation3 + $0x488] sm:$0xff]
        %v3029 = vld [vmem:[#allocation3 + $0x490] sm:$0xff]
        %v3030 = vld [vmem:[#allocation3 + $0x498] sm:$0xff]
        %v3031 = vld [vmem:[#allocation3 + $0x4a0] sm:$0xff]
        %v3032 = vld [vmem:[#allocation3 + $0x4a8] sm:$0xff]
        %v3033 = vld [vmem:[#allocation3 + $0x4b0] sm:$0xff]
        %v3034 = vld [vmem:[#allocation3 + $0x4b8] sm:$0xff]
        %v3035 = vld [vmem:[#allocation3 + $0x4c0] sm:$0xff]
        %v3036 = vld [vmem:[#allocation3 + $0x4c8] sm:$0xff]
        %v3037 = vld [vmem:[#allocation3 + $0x4d0] sm:$0xff]
        %v3038 = vld [vmem:[#allocation3 + $0x4d8] sm:$0xff]
        %v3039 = vld [vmem:[#allocation3 + $0x4e0] sm:$0xff]
        %v3040 = vld [vmem:[#allocation3 + $0x4e8] sm:$0xff]
        %v3041 = vld [vmem:[#allocation3 + $0x4f0] sm:$0xff]
        %v3042 = vld [vmem:[#allocation3 + $0x4f8] sm:$0xff]
        %v3043 = vld [vmem:[#allocation3 + $0x500] sm:$0xff]
        %v3044 = vld [vmem:[#allocation3 + $0x508] sm:$0xff]
        %v3045 = vld [vmem:[#allocation3 + $0x510] sm:$0xff]
        %v3046 = vld [vmem:[#allocation3 + $0x518] sm:$0xff]
        %v3047 = vld [vmem:[#allocation3 + $0x520] sm:$0xff]
        %v3048 = vld [vmem:[#allocation3 + $0x528] sm:$0xff]
        %v3049 = vld [vmem:[#allocation3 + $0x530] sm:$0xff]
        %v3050 = vld [vmem:[#allocation3 + $0x538] sm:$0xff]
        %v3051 = vld [vmem:[#allocation3 + $0x540] sm:$0xff]
        %v3052 = vld [vmem:[#allocation3 + $0x548] sm:$0xff]
        %v3053 = vld [vmem:[#allocation3 + $0x550] sm:$0xff]
        %v3054 = vld [vmem:[#allocation3 + $0x558] sm:$0xff]
        %v3055 = vld [vmem:[#allocation3 + $0x560] sm:$0xff]
        %v3056 = vld [vmem:[#allocation3 + $0x568] sm:$0xff]
        %v3057 = vld [vmem:[#allocation3 + $0x570] sm:$0xff]
        %v3058 = vld [vmem:[#allocation3 + $0x578] sm:$0xff]
        %v3059 = vld [vmem:[#allocation3 + $0x580] sm:$0xff]
        %v3060 = vld [vmem:[#allocation3 + $0x588] sm:$0xff]
        %v3061 = vld [vmem:[#allocation3 + $0x590] sm:$0xff]
        %v3062 = vld [vmem:[#allocation3 + $0x598] sm:$0xff]
        %v3063 = vld [vmem:[#allocation3 + $0x5a0] sm:$0xff]
        %v3064 = vld [vmem:[#allocation3 + $0x5a8] sm:$0xff]
        %v3065 = vld [vmem:[#allocation3 + $0x5b0] sm:$0xff]
        %v3066 = vld [vmem:[#allocation3 + $0x5b8] sm:$0xff]
        %v3067 = vld [vmem:[#allocation3 + $0x5c0] sm:$0xff]
        %v3068 = vld [vmem:[#allocation3 + $0x5c8] sm:$0xff]
        %v3069 = vld [vmem:[#allocation3 + $0x5d0] sm:$0xff]
        %v3070 = vld [vmem:[#allocation3 + $0x5d8] sm:$0xff]
        %v3071 = vld [vmem:[#allocation3 + $0x5e0] sm:$0xff]
        %v3072 = vld [vmem:[#allocation3 + $0x5e8] sm:$0xff]
        %v3073 = vld [vmem:[#allocation3 + $0x5f0] sm:$0xff]
        %v3074 = vld [vmem:[#allocation3 + $0x5f8] sm:$0xff]
        %v3075 = vld [vmem:[#allocation3 + $0x600] sm:$0xff]
        %v3076 = vld [vmem:[#allocation3 + $0x608] sm:$0xff]
        %v3077 = vld [vmem:[#allocation3 + $0x610] sm:$0xff]
        %v3078 = vld [vmem:[#allocation3 + $0x618] sm:$0xff]
        %v3079 = vld [vmem:[#allocation3 + $0x620] sm:$0xff]
        %v3080 = vld [vmem:[#allocation3 + $0x628] sm:$0xff]
        %v3081 = vld [vmem:[#allocation3 + $0x630] sm:$0xff]
        %v3082 = vld [vmem:[#allocation3 + $0x638] sm:$0xff]
        %v3083 = vld [vmem:[#allocation3 + $0x640] sm:$0xff]
        %v3084 = vld [vmem:[#allocation3 + $0x648] sm:$0xff]
        %v3085 = vld [vmem:[#allocation3 + $0x650] sm:$0xff]
        %v3086 = vld [vmem:[#allocation3 + $0x658] sm:$0xff]
        %v3087 = vld [vmem:[#allocation3 + $0x660] sm:$0xff]
        %v3088 = vld [vmem:[#allocation3 + $0x668] sm:$0xff]
        %v3089 = vld [vmem:[#allocation3 + $0x670] sm:$0xff]
        %v3090 = vld [vmem:[#allocation3 + $0x678] sm:$0xff]
        %v3091 = vld [vmem:[#allocation3 + $0x680] sm:$0xff]
        %v3092 = vld [vmem:[#allocation3 + $0x688] sm:$0xff]
        %v3093 = vld [vmem:[#allocation3 + $0x690] sm:$0xff]
        %v3094 = vld [vmem:[#allocation3 + $0x698] sm:$0xff]
        %v3095 = vld [vmem:[#allocation3 + $0x6a0] sm:$0xff]
        %v3096 = vld [vmem:[#allocation3 + $0x6a8] sm:$0xff]
        %v3097 = vld [vmem:[#allocation3 + $0x6b0] sm:$0xff]
        %v3098 = vld [vmem:[#allocation3 + $0x6b8] sm:$0xff]
        %v3099 = vld [vmem:[#allocation3 + $0x6c0] sm:$0xff]
        %v3100 = vld [vmem:[#allocation3 + $0x6c8] sm:$0xff]
        %v3101 = vld [vmem:[#allocation3 + $0x6d0] sm:$0xff]
        %v3102 = vld [vmem:[#allocation3 + $0x6d8] sm:$0xff]
        %v3103 = vld [vmem:[#allocation3 + $0x6e0] sm:$0xff]
        %v3104 = vld [vmem:[#allocation3 + $0x6e8] sm:$0xff]
        %v3105 = vld [vmem:[#allocation3 + $0x6f0] sm:$0xff]
        %v3106 = vld [vmem:[#allocation3 + $0x6f8] sm:$0xff]
        %v3107 = vld [vmem:[#allocation3 + $0x700] sm:$0xff]
        %v3108 = vld [vmem:[#allocation3 + $0x708] sm:$0xff]
        %v3109 = vld [vmem:[#allocation3 + $0x710] sm:$0xff]
        %v3110 = vld [vmem:[#allocation3 + $0x718] sm:$0xff]
        %v3111 = vld [vmem:[#allocation3 + $0x720] sm:$0xff]
        %v3112 = vld [vmem:[#allocation3 + $0x728] sm:$0xff]
        %v3113 = vld [vmem:[#allocation3 + $0x730] sm:$0xff]
        %v3114 = vld [vmem:[#allocation3 + $0x738] sm:$0xff]
        %v3115 = vld [vmem:[#allocation3 + $0x740] sm:$0xff]
        %v3116 = vld [vmem:[#allocation3 + $0x748] sm:$0xff]
        %v3117 = vld [vmem:[#allocation3 + $0x750] sm:$0xff]
        %v3118 = vld [vmem:[#allocation3 + $0x758] sm:$0xff]
        %v3119 = vld [vmem:[#allocation3 + $0x760] sm:$0xff]
        %v3120 = vld [vmem:[#allocation3 + $0x768] sm:$0xff]
        %v3121 = vld [vmem:[#allocation3 + $0x770] sm:$0xff]
        %v3122 = vld [vmem:[#allocation3 + $0x778] sm:$0xff]
        %v3123 = vld [vmem:[#allocation3 + $0x780] sm:$0xff]
        %v3124 = vld [vmem:[#allocation3 + $0x788] sm:$0xff]
        %v3125 = vld [vmem:[#allocation3 + $0x790] sm:$0xff]
        %v3126 = vld [vmem:[#allocation3 + $0x798] sm:$0xff]
        %v3127 = vld [vmem:[#allocation3 + $0x7a0] sm:$0xff]
        %v3128 = vld [vmem:[#allocation3 + $0x7a8] sm:$0xff]
        %v3129 = vld [vmem:[#allocation3 + $0x7b0] sm:$0xff]
        %v3130 = vld [vmem:[#allocation3 + $0x7b8] sm:$0xff]
        %v3131 = vld [vmem:[#allocation3 + $0x7c0] sm:$0xff]
        %v3132 = vld [vmem:[#allocation3 + $0x7c8] sm:$0xff]
        %v3133 = vld [vmem:[#allocation3 + $0x7d0] sm:$0xff]
        %v3134 = vld [vmem:[#allocation3 + $0x7d8] sm:$0xff]
        %v3135 = vld [vmem:[#allocation3 + $0x7e0] sm:$0xff]
        %v3136 = vld [vmem:[#allocation3 + $0x7e8] sm:$0xff]
        %v3137 = vld [vmem:[#allocation3 + $0x7f0] sm:$0xff]
        %v3138 = vld [vmem:[#allocation3 + $0x7f8] sm:$0xff]
        %3142 = vrot.lane.b32.xlu0 %v2880, 17
        %v3143 = vpop.permute.xlu0 %3142
        %3144 = vrot.lane.b32.xlu0 %v2881, 17
        %v3145 = vpop.permute.xlu0 %3144
        %3146 = vrot.lane.b32.xlu0 %v2882, 17
        %v3147 = vpop.permute.xlu0 %3146
        %v3148 = vsel %vm2574, %v3143, %v3145
        %v3149 = vsel %vm2574, %v3145, %v3147
        %3152 = vmatprep.subr.mxu0 %v3004
        %3153 = vmatpush1.msra.mxu0 %v3003
        %3154 = vmatprep.subr.mxu0 %v2996
        %3155 = vmatpush1.msra.mxu0 %v2995
        %3156 = vmatprep.subr.mxu0 %v2988
        %3157 = vmatpush1.msra.mxu0 %v2987
        %3158 = vmatprep.subr.mxu0 %v2980
        %3159 = vmatpush1.msra.mxu0 %v2979
        %3160 = vmatprep.subr.mxu0 %v2972
        %3161 = vmatpush1.msra.mxu0 %v2971
        %3162 = vmatprep.subr.mxu0 %v2964
        %3163 = vmatpush1.msra.mxu0 %v2963
        %3164 = vmatprep.subr.mxu0 %v2956
        %3165 = vmatpush1.msra.mxu0 %v2955
        %3166 = vmatprep.subr.mxu0 %v2948
        %3167 = vmatpush1.msra.mxu0 %v2947
        %3168 = vmatprep.subr.mxu0 %v2940
        %3169 = vmatpush1.msra.mxu0 %v2939
        %3170 = vmatprep.subr.mxu0 %v2932
        %3171 = vmatpush1.msra.mxu0 %v2931
        %3172 = vmatprep.subr.mxu0 %v2924
        %3173 = vmatpush1.msra.mxu0 %v2923
        %3174 = vmatprep.subr.mxu0 %v2916
        %3175 = vmatpush1.msra.mxu0 %v2915
        %3176 = vmatprep.subr.mxu0 %v2908
        %3177 = vmatpush1.msra.mxu0 %v2907
        %3178 = vmatprep.subr.mxu0 %v2900
        %3179 = vmatpush1.msra.mxu0 %v2899
        %3180 = vmatprep.subr.mxu0 %v2892
        %3181 = vmatpush1.msra.mxu0 %v2891
        %3182 = vmatprep.subr.mxu0 %v2884
        %3183 = vmatpush1.msra.mxu0 %v2883
        %3184 = vmatprep.subr.mxu0 %v3132
        %3185 = vmatpush2.msra.mxu0 %v3131
        %3186 = vmatprep.subr.mxu0 %v3124
        %3187 = vmatpush2.msra.mxu0 %v3123
        %3188 = vmatprep.subr.mxu0 %v3116
        %3189 = vmatpush2.msra.mxu0 %v3115
        %3190 = vmatprep.subr.mxu0 %v3108
        %3191 = vmatpush2.msra.mxu0 %v3107
        %3192 = vmatprep.subr.mxu0 %v3100
        %3193 = vmatpush2.msra.mxu0 %v3099
        %3194 = vmatprep.subr.mxu0 %v3092
        %3195 = vmatpush2.msra.mxu0 %v3091
        %3196 = vmatprep.subr.mxu0 %v3084
        %3197 = vmatpush2.msra.mxu0 %v3083
        %3198 = vmatprep.subr.mxu0 %v3076
        %3199 = vmatpush2.msra.mxu0 %v3075
        %3200 = vmatprep.subr.mxu0 %v3068
        %3201 = vmatpush2.msra.mxu0 %v3067
        %3202 = vmatprep.subr.mxu0 %v3060
        %3203 = vmatpush2.msra.mxu0 %v3059
        %3204 = vmatprep.subr.mxu0 %v3052
        %3205 = vmatpush2.msra.mxu0 %v3051
        %3206 = vmatprep.subr.mxu0 %v3044
        %3207 = vmatpush2.msra.mxu0 %v3043
        %3208 = vmatprep.subr.mxu0 %v3036
        %3209 = vmatpush2.msra.mxu0 %v3035
        %3210 = vmatprep.subr.mxu0 %v3028
        %3211 = vmatpush2.msra.mxu0 %v3027
        %3212 = vmatprep.subr.mxu0 %v3020
        %3213 = vmatpush2.msra.mxu0 %v3019
        %3214 = vmatprep.subr.mxu0 %v3012
        %3215 = vmatpush2.msra.mxu0 %v3011
        %3216 = vmatprep.mubr.f32.mxu0 %v3149
        %3217 = vmatmul.mubr.f32.gmra.mxu0 %v3148
        %v3218 = vpop.f32.mrf.mxu0
        %v3219 = vadd.f32 0.0, %v3218
        %v3220 = vpop.f32.mrf.mxu0
        %v3221 = vadd.f32 0.0, %v3220
        %3222 = vdwg.mxu0
        %3223 = vmatprep.subr.mxu0 %v3006
        %3224 = vmatpush1.msra.mxu0 %v3005
        %3225 = vmatprep.subr.mxu0 %v2998
        %3226 = vmatpush1.msra.mxu0 %v2997
        %3227 = vmatprep.subr.mxu0 %v2990
        %3228 = vmatpush1.msra.mxu0 %v2989
        %3229 = vmatprep.subr.mxu0 %v2982
        %3230 = vmatpush1.msra.mxu0 %v2981
        %3231 = vmatprep.subr.mxu0 %v2974
        %3232 = vmatpush1.msra.mxu0 %v2973
        %3233 = vmatprep.subr.mxu0 %v2966
        %3234 = vmatpush1.msra.mxu0 %v2965
        %3235 = vmatprep.subr.mxu0 %v2958
        %3236 = vmatpush1.msra.mxu0 %v2957
        %3237 = vmatprep.subr.mxu0 %v2950
        %3238 = vmatpush1.msra.mxu0 %v2949
        %3239 = vmatprep.subr.mxu0 %v2942
        %3240 = vmatpush1.msra.mxu0 %v2941
        %3241 = vmatprep.subr.mxu0 %v2934
        %3242 = vmatpush1.msra.mxu0 %v2933
        %3243 = vmatprep.subr.mxu0 %v2926
        %3244 = vmatpush1.msra.mxu0 %v2925
        %3245 = vmatprep.subr.mxu0 %v2918
        %3246 = vmatpush1.msra.mxu0 %v2917
        %3247 = vmatprep.subr.mxu0 %v2910
        %3248 = vmatpush1.msra.mxu0 %v2909
        %3249 = vmatprep.subr.mxu0 %v2902
        %3250 = vmatpush1.msra.mxu0 %v2901
        %3251 = vmatprep.subr.mxu0 %v2894
        %3252 = vmatpush1.msra.mxu0 %v2893
        %3253 = vmatprep.subr.mxu0 %v2886
        %3254 = vmatpush1.msra.mxu0 %v2885
        %3255 = vmatprep.subr.mxu0 %v3134
        %3256 = vmatpush2.msra.mxu0 %v3133
        %3257 = vmatprep.subr.mxu0 %v3126
        %3258 = vmatpush2.msra.mxu0 %v3125
        %3259 = vmatprep.subr.mxu0 %v3118
        %3260 = vmatpush2.msra.mxu0 %v3117
        %3261 = vmatprep.subr.mxu0 %v3110
        %3262 = vmatpush2.msra.mxu0 %v3109
        %3263 = vmatprep.subr.mxu0 %v3102
        %3264 = vmatpush2.msra.mxu0 %v3101
        %3265 = vmatprep.subr.mxu0 %v3094
        %3266 = vmatpush2.msra.mxu0 %v3093
        %3267 = vmatprep.subr.mxu0 %v3086
        %3268 = vmatpush2.msra.mxu0 %v3085
        %3269 = vmatprep.subr.mxu0 %v3078
        %3270 = vmatpush2.msra.mxu0 %v3077
        %3271 = vmatprep.subr.mxu0 %v3070
        %3272 = vmatpush2.msra.mxu0 %v3069
        %3273 = vmatprep.subr.mxu0 %v3062
        %3274 = vmatpush2.msra.mxu0 %v3061
        %3275 = vmatprep.subr.mxu0 %v3054
        %3276 = vmatpush2.msra.mxu0 %v3053
        %3277 = vmatprep.subr.mxu0 %v3046
        %3278 = vmatpush2.msra.mxu0 %v3045
        %3279 = vmatprep.subr.mxu0 %v3038
        %3280 = vmatpush2.msra.mxu0 %v3037
        %3281 = vmatprep.subr.mxu0 %v3030
        %3282 = vmatpush2.msra.mxu0 %v3029
        %3283 = vmatprep.subr.mxu0 %v3022
        %3284 = vmatpush2.msra.mxu0 %v3021
        %3285 = vmatprep.subr.mxu0 %v3014
        %3286 = vmatpush2.msra.mxu0 %v3013
        %3287 = vmatprep.mubr.f32.mxu0 %v3149
        %3288 = vmatmul.mubr.f32.gmra.mxu0 %v3148
        %v3289 = vpop.f32.mrf.mxu0
        %v3290 = vadd.f32 0.0, %v3289
        %v3291 = vpop.f32.mrf.mxu0
        %v3292 = vadd.f32 0.0, %v3291
        %3293 = vdwg.mxu0
        %3294 = vmatprep.subr.mxu0 %v3008
        %3295 = vmatpush1.msra.mxu0 %v3007
        %3296 = vmatprep.subr.mxu0 %v3000
        %3297 = vmatpush1.msra.mxu0 %v2999
        %3298 = vmatprep.subr.mxu0 %v2992
        %3299 = vmatpush1.msra.mxu0 %v2991
        %3300 = vmatprep.subr.mxu0 %v2984
        %3301 = vmatpush1.msra.mxu0 %v2983
        %3302 = vmatprep.subr.mxu0 %v2976
        %3303 = vmatpush1.msra.mxu0 %v2975
        %3304 = vmatprep.subr.mxu0 %v2968
        %3305 = vmatpush1.msra.mxu0 %v2967
        %3306 = vmatprep.subr.mxu0 %v2960
        %3307 = vmatpush1.msra.mxu0 %v2959
        %3308 = vmatprep.subr.mxu0 %v2952
        %3309 = vmatpush1.msra.mxu0 %v2951
        %3310 = vmatprep.subr.mxu0 %v2944
        %3311 = vmatpush1.msra.mxu0 %v2943
        %3312 = vmatprep.subr.mxu0 %v2936
        %3313 = vmatpush1.msra.mxu0 %v2935
        %3314 = vmatprep.subr.mxu0 %v2928
        %3315 = vmatpush1.msra.mxu0 %v2927
        %3316 = vmatprep.subr.mxu0 %v2920
        %3317 = vmatpush1.msra.mxu0 %v2919
        %3318 = vmatprep.subr.mxu0 %v2912
        %3319 = vmatpush1.msra.mxu0 %v2911
        %3320 = vmatprep.subr.mxu0 %v2904
        %3321 = vmatpush1.msra.mxu0 %v2903
        %3322 = vmatprep.subr.mxu0 %v2896
        %3323 = vmatpush1.msra.mxu0 %v2895
        %3324 = vmatprep.subr.mxu0 %v2888
        %3325 = vmatpush1.msra.mxu0 %v2887
        %3326 = vmatprep.subr.mxu0 %v3136
        %3327 = vmatpush2.msra.mxu0 %v3135
        %3328 = vmatprep.subr.mxu0 %v3128
        %3329 = vmatpush2.msra.mxu0 %v3127
        %3330 = vmatprep.subr.mxu0 %v3120
        %3331 = vmatpush2.msra.mxu0 %v3119
        %3332 = vmatprep.subr.mxu0 %v3112
        %3333 = vmatpush2.msra.mxu0 %v3111
        %3334 = vmatprep.subr.mxu0 %v3104
        %3335 = vmatpush2.msra.mxu0 %v3103
        %3336 = vmatprep.subr.mxu0 %v3096
        %3337 = vmatpush2.msra.mxu0 %v3095
        %3338 = vmatprep.subr.mxu0 %v3088
        %3339 = vmatpush2.msra.mxu0 %v3087
        %3340 = vmatprep.subr.mxu0 %v3080
        %3341 = vmatpush2.msra.mxu0 %v3079
        %3342 = vmatprep.subr.mxu0 %v3072
        %3343 = vmatpush2.msra.mxu0 %v3071
        %3344 = vmatprep.subr.mxu0 %v3064
        %3345 = vmatpush2.msra.mxu0 %v3063
        %3346 = vmatprep.subr.mxu0 %v3056
        %3347 = vmatpush2.msra.mxu0 %v3055
        %3348 = vmatprep.subr.mxu0 %v3048
        %3349 = vmatpush2.msra.mxu0 %v3047
        %3350 = vmatprep.subr.mxu0 %v3040
        %3351 = vmatpush2.msra.mxu0 %v3039
        %3352 = vmatprep.subr.mxu0 %v3032
        %3353 = vmatpush2.msra.mxu0 %v3031
        %3354 = vmatprep.subr.mxu0 %v3024
        %3355 = vmatpush2.msra.mxu0 %v3023
        %3356 = vmatprep.subr.mxu0 %v3016
        %3357 = vmatpush2.msra.mxu0 %v3015
        %3358 = vmatprep.mubr.f32.mxu0 %v3149
        %3359 = vmatmul.mubr.f32.gmra.mxu0 %v3148
        %v3360 = vpop.f32.mrf.mxu0
        %v3361 = vadd.f32 0.0, %v3360
        %v3362 = vpop.f32.mrf.mxu0
        %v3363 = vadd.f32 0.0, %v3362
        %3364 = vdwg.mxu0
        %3365 = vmatprep.subr.mxu0 %v3010
        %3366 = vmatpush1.msra.mxu0 %v3009
        %3367 = vmatprep.subr.mxu0 %v3002
        %3368 = vmatpush1.msra.mxu0 %v3001
        %3369 = vmatprep.subr.mxu0 %v2994
        %3370 = vmatpush1.msra.mxu0 %v2993
        %3371 = vmatprep.subr.mxu0 %v2986
        %3372 = vmatpush1.msra.mxu0 %v2985
        %3373 = vmatprep.subr.mxu0 %v2978
        %3374 = vmatpush1.msra.mxu0 %v2977
        %3375 = vmatprep.subr.mxu0 %v2970
        %3376 = vmatpush1.msra.mxu0 %v2969
        %3377 = vmatprep.subr.mxu0 %v2962
        %3378 = vmatpush1.msra.mxu0 %v2961
        %3379 = vmatprep.subr.mxu0 %v2954
        %3380 = vmatpush1.msra.mxu0 %v2953
        %3381 = vmatprep.subr.mxu0 %v2946
        %3382 = vmatpush1.msra.mxu0 %v2945
        %3383 = vmatprep.subr.mxu0 %v2938
        %3384 = vmatpush1.msra.mxu0 %v2937
        %3385 = vmatprep.subr.mxu0 %v2930
        %3386 = vmatpush1.msra.mxu0 %v2929
        %3387 = vmatprep.subr.mxu0 %v2922
        %3388 = vmatpush1.msra.mxu0 %v2921
        %3389 = vmatprep.subr.mxu0 %v2914
        %3390 = vmatpush1.msra.mxu0 %v2913
        %3391 = vmatprep.subr.mxu0 %v2906
        %3392 = vmatpush1.msra.mxu0 %v2905
        %3393 = vmatprep.subr.mxu0 %v2898
        %3394 = vmatpush1.msra.mxu0 %v2897
        %3395 = vmatprep.subr.mxu0 %v2890
        %3396 = vmatpush1.msra.mxu0 %v2889
        %3397 = vmatprep.subr.mxu0 %v3138
        %3398 = vmatpush2.msra.mxu0 %v3137
        %3399 = vmatprep.subr.mxu0 %v3130
        %3400 = vmatpush2.msra.mxu0 %v3129
        %3401 = vmatprep.subr.mxu0 %v3122
        %3402 = vmatpush2.msra.mxu0 %v3121
        %3403 = vmatprep.subr.mxu0 %v3114
        %3404 = vmatpush2.msra.mxu0 %v3113
        %3405 = vmatprep.subr.mxu0 %v3106
        %3406 = vmatpush2.msra.mxu0 %v3105
        %3407 = vmatprep.subr.mxu0 %v3098
        %3408 = vmatpush2.msra.mxu0 %v3097
        %3409 = vmatprep.subr.mxu0 %v3090
        %3410 = vmatpush2.msra.mxu0 %v3089
        %3411 = vmatprep.subr.mxu0 %v3082
        %3412 = vmatpush2.msra.mxu0 %v3081
        %3413 = vmatprep.subr.mxu0 %v3074
        %3414 = vmatpush2.msra.mxu0 %v3073
        %3415 = vmatprep.subr.mxu0 %v3066
        %3416 = vmatpush2.msra.mxu0 %v3065
        %3417 = vmatprep.subr.mxu0 %v3058
        %3418 = vmatpush2.msra.mxu0 %v3057
        %3419 = vmatprep.subr.mxu0 %v3050
        %3420 = vmatpush2.msra.mxu0 %v3049
        %3421 = vmatprep.subr.mxu0 %v3042
        %3422 = vmatpush2.msra.mxu0 %v3041
        %3423 = vmatprep.subr.mxu0 %v3034
        %3424 = vmatpush2.msra.mxu0 %v3033
        %3425 = vmatprep.subr.mxu0 %v3026
        %3426 = vmatpush2.msra.mxu0 %v3025
        %3427 = vmatprep.subr.mxu0 %v3018
        %3428 = vmatpush2.msra.mxu0 %v3017
        %3429 = vmatprep.mubr.f32.mxu0 %v3149
        %3430 = vmatmul.mubr.f32.gmra.mxu0 %v3148
        %v3431 = vpop.f32.mrf.mxu0
        %v3432 = vadd.f32 0.0, %v3431
        %v3433 = vpop.f32.mrf.mxu0
        %v3434 = vadd.f32 0.0, %v3433
        %3435 = vdwg.mxu0
        %v3436 = vld [vmem:[%s7] sm:$0x3]
        %v3437 = vld [vmem:[%s7 + $0x2] sm:$0x3]
        %v3438 = vld [vmem:[%s7 + $0x4] sm:$0x3]
        %v3439 = vld [vmem:[%s7 + $0x6] sm:$0x3]
        %v3440 = vld [vmem:[%s7 + $0x8] sm:$0x3]
        %v3441 = vld [vmem:[%s7 + $0xa] sm:$0x3]
        %v3442 = vld [vmem:[%s7 + $0xc] sm:$0x3]
        %v3443 = vld [vmem:[%s7 + $0xe] sm:$0x3]
        %v3444 = vld [vmem:[%s7 + $0x10] sm:$0x3]
        %v3445 = vld [vmem:[%s8] sm:$0x3]
        %v3448 = vlaneseq
        %v3449 = vshrl.u32 %v3448, 7
        %v3450 = vsub.s32 0, %v3449
        %v3451 = vrot.slane %v401, %v3450
        %v3452 = vlaneseq
        %v3453 = vshrl.u32 %v3452, 7
        %v3454 = vsub.s32 2, %v3453
        %v3455 = vrot.slane %v401, %v3454
        %v3456 = vlaneseq
        %v3457 = vshrl.u32 %v3456, 7
        %v3458 = vsub.s32 4, %v3457
        %v3459 = vrot.slane %v401, %v3458
        %v3460 = vlaneseq
        %v3461 = vshrl.u32 %v3460, 7
        %v3462 = vsub.s32 6, %v3461
        %v3463 = vrot.slane %v401, %v3462
        %v3464 = vlaneseq
        %v3465 = vshrl.u32 %v3464, 7
        %v3466 = vsub.s32 0, %v3465
        %v3467 = vrot.slane %v402, %v3466
        %v3468 = vlaneseq
        %v3469 = vshrl.u32 %v3468, 7
        %v3470 = vsub.s32 2, %v3469
        %v3471 = vrot.slane %v402, %v3470
        %v3472 = vlaneseq
        %v3473 = vshrl.u32 %v3472, 7
        %v3474 = vsub.s32 4, %v3473
        %v3475 = vrot.slane %v402, %v3474
        %v3476 = vlaneseq
        %v3477 = vshrl.u32 %v3476, 7
        %v3478 = vsub.s32 6, %v3477
        %v3479 = vrot.slane %v402, %v3478
        %v3488 = vlaneseq
        %v3489 = vshrl.u32 %v3488, 7
        %v3490 = vsub.s32 0, %v3489
        %v3491 = vrot.slane %v3451, %v3490
        %v3492 = vlaneseq
        %v3493 = vshrl.u32 %v3492, 7
        %v3494 = vsub.s32 0, %v3493
        %v3495 = vrot.slane %v3455, %v3494
        %v3496 = vlaneseq
        %v3497 = vshrl.u32 %v3496, 7
        %v3498 = vsub.s32 0, %v3497
        %v3499 = vrot.slane %v3459, %v3498
        %v3500 = vlaneseq
        %v3501 = vshrl.u32 %v3500, 7
        %v3502 = vsub.s32 0, %v3501
        %v3503 = vrot.slane %v3463, %v3502
        %v3504 = vlaneseq
        %v3505 = vshrl.u32 %v3504, 7
        %v3506 = vsub.s32 0, %v3505
        %v3507 = vrot.slane %v3467, %v3506
        %v3508 = vlaneseq
        %v3509 = vshrl.u32 %v3508, 7
        %v3510 = vsub.s32 0, %v3509
        %v3511 = vrot.slane %v3471, %v3510
        %v3512 = vlaneseq
        %v3513 = vshrl.u32 %v3512, 7
        %v3514 = vsub.s32 0, %v3513
        %v3515 = vrot.slane %v3475, %v3514
        %v3516 = vlaneseq
        %v3517 = vshrl.u32 %v3516, 7
        %v3518 = vsub.s32 0, %v3517
        %v3519 = vrot.slane %v3479, %v3518
        %3528 = vrot.lane.b32.xlu0 %v3491, 95
        %v3529 = vpop.permute.xlu0 %3528
        %3530 = vrot.lane.b32.xlu0 %v3495, 95
        %v3531 = vpop.permute.xlu0 %3530
        %3532 = vrot.lane.b32.xlu0 %v3499, 95
        %v3533 = vpop.permute.xlu0 %3532
        %3534 = vrot.lane.b32.xlu0 %v3503, 95
        %v3535 = vpop.permute.xlu0 %3534
        %3536 = vrot.lane.b32.xlu0 %v3507, 95
        %v3537 = vpop.permute.xlu0 %3536
        %3538 = vrot.lane.b32.xlu0 %v3511, 95
        %v3539 = vpop.permute.xlu0 %3538
        %3540 = vrot.lane.b32.xlu0 %v3515, 95
        %v3541 = vpop.permute.xlu0 %3540
        %3542 = vrot.lane.b32.xlu0 %v3519, 95
        %v3543 = vpop.permute.xlu0 %3542
        %v3544 = vsel %vm2393, %v3529, %v3531
        %v3545 = vsel %vm2393, %v3531, %v3533
        %v3546 = vsel %vm2393, %v3533, %v3535
        %v3547 = vsel %vm2393, %v3535, %v3537
        %v3548 = vsel %vm2393, %v3537, %v3539
        %v3549 = vsel %vm2393, %v3539, %v3541
        %v3550 = vsel %vm2393, %v3541, %v3543
        %v3560 = vmul.f32 %v3529, 0.0
        %v3561 = vmul.f32 %v3219, %v3544
        %v3562 = vmul.f32 %v3221, %v3545
        %v3563 = vmul.f32 %v3290, %v3546
        %v3564 = vmul.f32 %v3292, %v3547
        %v3565 = vmul.f32 %v3361, %v3548
        %v3566 = vmul.f32 %v3363, %v3549
        %v3567 = vmul.f32 %v3432, %v3550
        %v3568 = vmul.f32 %v3434, %v3543
        %3570 = vset.pattern.permute.xlu0 0
        %3571 = vperm.xlu0 %3570, %v3436
        %v3572 = vpop.permute.xlu0 %3571
        %v3574 = vlaneseq
        %v3575 = vshrl.u32 %v3574, 7
        %v3576 = vsub.s32 0, %v3575
        %v3577 = vrot.slane %v3560, %v3576
        %v3578 = vlaneseq
        %v3579 = vshrl.u32 %v3578, 7
        %v3580 = vsub.s32 0, %v3579
        %v3581 = vrot.slane %v3561, %v3580
        %v3582 = vlaneseq
        %v3583 = vshrl.u32 %v3582, 7
        %v3584 = vsub.s32 0, %v3583
        %v3585 = vrot.slane %v3562, %v3584
        %v3586 = vlaneseq
        %v3587 = vshrl.u32 %v3586, 7
        %v3588 = vsub.s32 0, %v3587
        %v3589 = vrot.slane %v3563, %v3588
        %v3590 = vlaneseq
        %v3591 = vshrl.u32 %v3590, 7
        %v3592 = vsub.s32 0, %v3591
        %v3593 = vrot.slane %v3564, %v3592
        %v3594 = vlaneseq
        %v3595 = vshrl.u32 %v3594, 7
        %v3596 = vsub.s32 0, %v3595
        %v3597 = vrot.slane %v3565, %v3596
        %v3598 = vlaneseq
        %v3599 = vshrl.u32 %v3598, 7
        %v3600 = vsub.s32 0, %v3599
        %v3601 = vrot.slane %v3566, %v3600
        %v3602 = vlaneseq
        %v3603 = vshrl.u32 %v3602, 7
        %v3604 = vsub.s32 0, %v3603
        %v3605 = vrot.slane %v3567, %v3604
        %v3606 = vlaneseq
        %v3607 = vshrl.u32 %v3606, 7
        %v3608 = vsub.s32 0, %v3607
        %v3609 = vrot.slane %v3568, %v3608
        %v3610 = vmul.f32 %v3572, %v3577
        %v3611 = vmul.f32 %v3572, %v3581
        %v3612 = vmul.f32 %v3572, %v3585
        %v3613 = vmul.f32 %v3572, %v3589
        %v3614 = vmul.f32 %v3572, %v3593
        %v3615 = vmul.f32 %v3572, %v3597
        %v3616 = vmul.f32 %v3572, %v3601
        %v3617 = vmul.f32 %v3572, %v3605
        %v3618 = vmul.f32 %v3572, %v3609
        %v3619 = vadd.f32 %v3610, 0.0
        %v3620 = vadd.f32 %v3611, 0.0
        %v3621 = vadd.f32 %v3612, 0.0
        %v3622 = vadd.f32 %v3613, 0.0
        %v3623 = vadd.f32 %v3614, 0.0
        %v3624 = vadd.f32 %v3615, 0.0
        %v3625 = vadd.f32 %v3616, 0.0
        %v3626 = vadd.f32 %v3617, 0.0
        %v3627 = vadd.f32 %v3618, 0.0
        %3628 = vset.pattern.permute.xlu0 1
        %3629 = vperm.xlu0 %3628, %v3436
        %v3630 = vpop.permute.xlu0 %3629
        %v3632 = vlaneseq
        %v3633 = vshrl.u32 %v3632, 7
        %v3634 = vsub.s32 1, %v3633
        %v3635 = vrot.slane %v3560, %v3634
        %v3636 = vlaneseq
        %v3637 = vshrl.u32 %v3636, 7
        %v3638 = vsub.s32 1, %v3637
        %v3639 = vrot.slane %v3561, %v3638
        %v3640 = vlaneseq
        %v3641 = vshrl.u32 %v3640, 7
        %v3642 = vsub.s32 1, %v3641
        %v3643 = vrot.slane %v3562, %v3642
        %v3644 = vlaneseq
        %v3645 = vshrl.u32 %v3644, 7
        %v3646 = vsub.s32 1, %v3645
        %v3647 = vrot.slane %v3563, %v3646
        %v3648 = vlaneseq
        %v3649 = vshrl.u32 %v3648, 7
        %v3650 = vsub.s32 1, %v3649
        %v3651 = vrot.slane %v3564, %v3650
        %v3652 = vlaneseq
        %v3653 = vshrl.u32 %v3652, 7
        %v3654 = vsub.s32 1, %v3653
        %v3655 = vrot.slane %v3565, %v3654
        %v3656 = vlaneseq
        %v3657 = vshrl.u32 %v3656, 7
        %v3658 = vsub.s32 1, %v3657
        %v3659 = vrot.slane %v3566, %v3658
        %v3660 = vlaneseq
        %v3661 = vshrl.u32 %v3660, 7
        %v3662 = vsub.s32 1, %v3661
        %v3663 = vrot.slane %v3567, %v3662
        %v3664 = vlaneseq
        %v3665 = vshrl.u32 %v3664, 7
        %v3666 = vsub.s32 1, %v3665
        %v3667 = vrot.slane %v3568, %v3666
        %v3668 = vmul.f32 %v3630, %v3635
        %v3669 = vmul.f32 %v3630, %v3639
        %v3670 = vmul.f32 %v3630, %v3643
        %v3671 = vmul.f32 %v3630, %v3647
        %v3672 = vmul.f32 %v3630, %v3651
        %v3673 = vmul.f32 %v3630, %v3655
        %v3674 = vmul.f32 %v3630, %v3659
        %v3675 = vmul.f32 %v3630, %v3663
        %v3676 = vmul.f32 %v3630, %v3667
        %v3677 = vadd.f32 %v3619, %v3668
        %v3678 = vadd.f32 %v3620, %v3669
        %v3679 = vadd.f32 %v3621, %v3670
        %v3680 = vadd.f32 %v3622, %v3671
        %v3681 = vadd.f32 %v3623, %v3672
        %v3682 = vadd.f32 %v3624, %v3673
        %v3683 = vadd.f32 %v3625, %v3674
        %v3684 = vadd.f32 %v3626, %v3675
        %v3685 = vadd.f32 %v3627, %v3676
        %3686 = vset.pattern.permute.xlu0 2
        %3687 = vperm.xlu0 %3686, %v3436
        %v3688 = vpop.permute.xlu0 %3687
        %v3690 = vlaneseq
        %v3691 = vshrl.u32 %v3690, 7
        %v3692 = vsub.s32 2, %v3691
        %v3693 = vrot.slane %v3560, %v3692
        %v3694 = vlaneseq
        %v3695 = vshrl.u32 %v3694, 7
        %v3696 = vsub.s32 2, %v3695
        %v3697 = vrot.slane %v3561, %v3696
        %v3698 = vlaneseq
        %v3699 = vshrl.u32 %v3698, 7
        %v3700 = vsub.s32 2, %v3699
        %v3701 = vrot.slane %v3562, %v3700
        %v3702 = vlaneseq
        %v3703 = vshrl.u32 %v3702, 7
        %v3704 = vsub.s32 2, %v3703
        %v3705 = vrot.slane %v3563, %v3704
        %v3706 = vlaneseq
        %v3707 = vshrl.u32 %v3706, 7
        %v3708 = vsub.s32 2, %v3707
        %v3709 = vrot.slane %v3564, %v3708
        %v3710 = vlaneseq
        %v3711 = vshrl.u32 %v3710, 7
        %v3712 = vsub.s32 2, %v3711
        %v3713 = vrot.slane %v3565, %v3712
        %v3714 = vlaneseq
        %v3715 = vshrl.u32 %v3714, 7
        %v3716 = vsub.s32 2, %v3715
        %v3717 = vrot.slane %v3566, %v3716
        %v3718 = vlaneseq
        %v3719 = vshrl.u32 %v3718, 7
        %v3720 = vsub.s32 2, %v3719
        %v3721 = vrot.slane %v3567, %v3720
        %v3722 = vlaneseq
        %v3723 = vshrl.u32 %v3722, 7
        %v3724 = vsub.s32 2, %v3723
        %v3725 = vrot.slane %v3568, %v3724
        %v3726 = vmul.f32 %v3688, %v3693
        %v3727 = vmul.f32 %v3688, %v3697
        %v3728 = vmul.f32 %v3688, %v3701
        %v3729 = vmul.f32 %v3688, %v3705
        %v3730 = vmul.f32 %v3688, %v3709
        %v3731 = vmul.f32 %v3688, %v3713
        %v3732 = vmul.f32 %v3688, %v3717
        %v3733 = vmul.f32 %v3688, %v3721
        %v3734 = vmul.f32 %v3688, %v3725
        %v3735 = vadd.f32 %v3677, %v3726
        %v3736 = vadd.f32 %v3678, %v3727
        %v3737 = vadd.f32 %v3679, %v3728
        %v3738 = vadd.f32 %v3680, %v3729
        %v3739 = vadd.f32 %v3681, %v3730
        %v3740 = vadd.f32 %v3682, %v3731
        %v3741 = vadd.f32 %v3683, %v3732
        %v3742 = vadd.f32 %v3684, %v3733
        %v3743 = vadd.f32 %v3685, %v3734
        %3744 = vset.pattern.permute.xlu0 3
        %3745 = vperm.xlu0 %3744, %v3436
        %v3746 = vpop.permute.xlu0 %3745
        %v3748 = vlaneseq
        %v3749 = vshrl.u32 %v3748, 7
        %v3750 = vsub.s32 3, %v3749
        %v3751 = vrot.slane %v3560, %v3750
        %v3752 = vlaneseq
        %v3753 = vshrl.u32 %v3752, 7
        %v3754 = vsub.s32 3, %v3753
        %v3755 = vrot.slane %v3561, %v3754
        %v3756 = vlaneseq
        %v3757 = vshrl.u32 %v3756, 7
        %v3758 = vsub.s32 3, %v3757
        %v3759 = vrot.slane %v3562, %v3758
        %v3760 = vlaneseq
        %v3761 = vshrl.u32 %v3760, 7
        %v3762 = vsub.s32 3, %v3761
        %v3763 = vrot.slane %v3563, %v3762
        %v3764 = vlaneseq
        %v3765 = vshrl.u32 %v3764, 7
        %v3766 = vsub.s32 3, %v3765
        %v3767 = vrot.slane %v3564, %v3766
        %v3768 = vlaneseq
        %v3769 = vshrl.u32 %v3768, 7
        %v3770 = vsub.s32 3, %v3769
        %v3771 = vrot.slane %v3565, %v3770
        %v3772 = vlaneseq
        %v3773 = vshrl.u32 %v3772, 7
        %v3774 = vsub.s32 3, %v3773
        %v3775 = vrot.slane %v3566, %v3774
        %v3776 = vlaneseq
        %v3777 = vshrl.u32 %v3776, 7
        %v3778 = vsub.s32 3, %v3777
        %v3779 = vrot.slane %v3567, %v3778
        %v3780 = vlaneseq
        %v3781 = vshrl.u32 %v3780, 7
        %v3782 = vsub.s32 3, %v3781
        %v3783 = vrot.slane %v3568, %v3782
        %v3784 = vmul.f32 %v3746, %v3751
        %v3785 = vmul.f32 %v3746, %v3755
        %v3786 = vmul.f32 %v3746, %v3759
        %v3787 = vmul.f32 %v3746, %v3763
        %v3788 = vmul.f32 %v3746, %v3767
        %v3789 = vmul.f32 %v3746, %v3771
        %v3790 = vmul.f32 %v3746, %v3775
        %v3791 = vmul.f32 %v3746, %v3779
        %v3792 = vmul.f32 %v3746, %v3783
        %v3793 = vadd.f32 %v3735, %v3784
        %v3794 = vadd.f32 %v3736, %v3785
        %v3795 = vadd.f32 %v3737, %v3786
        %v3796 = vadd.f32 %v3738, %v3787
        %v3797 = vadd.f32 %v3739, %v3788
        %v3798 = vadd.f32 %v3740, %v3789
        %v3799 = vadd.f32 %v3741, %v3790
        %v3800 = vadd.f32 %v3742, %v3791
        %v3801 = vadd.f32 %v3743, %v3792
        %3803 = vset.pattern.permute.xlu0 0
        %3804 = vperm.xlu0 %3803, %v3437
        %v3805 = vpop.permute.xlu0 %3804
        %v3807 = vlaneseq
        %v3808 = vshrl.u32 %v3807, 7
        %v3809 = vsub.s32 0, %v3808
        %v3810 = vrot.slane %v3219, %v3809
        %v3811 = vlaneseq
        %v3812 = vshrl.u32 %v3811, 7
        %v3813 = vsub.s32 0, %v3812
        %v3814 = vrot.slane %v3221, %v3813
        %v3815 = vlaneseq
        %v3816 = vshrl.u32 %v3815, 7
        %v3817 = vsub.s32 0, %v3816
        %v3818 = vrot.slane %v3290, %v3817
        %v3819 = vlaneseq
        %v3820 = vshrl.u32 %v3819, 7
        %v3821 = vsub.s32 0, %v3820
        %v3822 = vrot.slane %v3292, %v3821
        %v3823 = vlaneseq
        %v3824 = vshrl.u32 %v3823, 7
        %v3825 = vsub.s32 0, %v3824
        %v3826 = vrot.slane %v3361, %v3825
        %v3827 = vlaneseq
        %v3828 = vshrl.u32 %v3827, 7
        %v3829 = vsub.s32 0, %v3828
        %v3830 = vrot.slane %v3363, %v3829
        %v3831 = vlaneseq
        %v3832 = vshrl.u32 %v3831, 7
        %v3833 = vsub.s32 0, %v3832
        %v3834 = vrot.slane %v3432, %v3833
        %v3835 = vlaneseq
        %v3836 = vshrl.u32 %v3835, 7
        %v3837 = vsub.s32 0, %v3836
        %v3838 = vrot.slane %v3434, %v3837
        %v3839 = vmul.f32 %v3805, 0.0
        %v3840 = vmul.f32 %v3805, %v3810
        %v3841 = vmul.f32 %v3805, %v3814
        %v3842 = vmul.f32 %v3805, %v3818
        %v3843 = vmul.f32 %v3805, %v3822
        %v3844 = vmul.f32 %v3805, %v3826
        %v3845 = vmul.f32 %v3805, %v3830
        %v3846 = vmul.f32 %v3805, %v3834
        %v3847 = vmul.f32 %v3805, %v3838
        %3857 = vrot.lane.b32.xlu0 %v3839, 127
        %v3858 = vpop.permute.xlu0 %3857
        %3859 = vrot.lane.b32.xlu0 %v3840, 127
        %v3860 = vpop.permute.xlu0 %3859
        %3861 = vrot.lane.b32.xlu0 %v3841, 127
        %v3862 = vpop.permute.xlu0 %3861
        %3863 = vrot.lane.b32.xlu0 %v3842, 127
        %v3864 = vpop.permute.xlu0 %3863
        %3865 = vrot.lane.b32.xlu0 %v3843, 127
        %v3866 = vpop.permute.xlu0 %3865
        %3867 = vrot.lane.b32.xlu0 %v3844, 127
        %v3868 = vpop.permute.xlu0 %3867
        %3869 = vrot.lane.b32.xlu0 %v3845, 127
        %v3870 = vpop.permute.xlu0 %3869
        %3871 = vrot.lane.b32.xlu0 %v3846, 127
        %v3872 = vpop.permute.xlu0 %3871
        %3873 = vrot.lane.b32.xlu0 %v3847, 127
        %v3874 = vpop.permute.xlu0 %3873
        %v3875 = vsel %vm742, %v3858, %v3860
        %v3876 = vsel %vm742, %v3860, %v3862
        %v3877 = vsel %vm742, %v3862, %v3864
        %v3878 = vsel %vm742, %v3864, %v3866
        %v3879 = vsel %vm742, %v3866, %v3868
        %v3880 = vsel %vm742, %v3868, %v3870
        %v3881 = vsel %vm742, %v3870, %v3872
        %v3882 = vsel %vm742, %v3872, %v3874
        %v3892 = vadd.f32 %v3793, %v3875
        %v3893 = vadd.f32 %v3794, %v3876
        %v3894 = vadd.f32 %v3795, %v3877
        %v3895 = vadd.f32 %v3796, %v3878
        %v3896 = vadd.f32 %v3797, %v3879
        %v3897 = vadd.f32 %v3798, %v3880
        %v3898 = vadd.f32 %v3799, %v3881
        %v3899 = vadd.f32 %v3800, %v3882
        %v3900 = vadd.f32 %v3801, %v3874
        %3901 = vset.pattern.permute.xlu0 1
        %3902 = vperm.xlu0 %3901, %v3437
        %v3903 = vpop.permute.xlu0 %3902
        %v3905 = vlaneseq
        %v3906 = vshrl.u32 %v3905, 7
        %v3907 = vsub.s32 1, %v3906
        %v3908 = vrot.slane %v3219, %v3907
        %v3909 = vlaneseq
        %v3910 = vshrl.u32 %v3909, 7
        %v3911 = vsub.s32 1, %v3910
        %v3912 = vrot.slane %v3221, %v3911
        %v3913 = vlaneseq
        %v3914 = vshrl.u32 %v3913, 7
        %v3915 = vsub.s32 1, %v3914
        %v3916 = vrot.slane %v3290, %v3915
        %v3917 = vlaneseq
        %v3918 = vshrl.u32 %v3917, 7
        %v3919 = vsub.s32 1, %v3918
        %v3920 = vrot.slane %v3292, %v3919
        %v3921 = vlaneseq
        %v3922 = vshrl.u32 %v3921, 7
        %v3923 = vsub.s32 1, %v3922
        %v3924 = vrot.slane %v3361, %v3923
        %v3925 = vlaneseq
        %v3926 = vshrl.u32 %v3925, 7
        %v3927 = vsub.s32 1, %v3926
        %v3928 = vrot.slane %v3363, %v3927
        %v3929 = vlaneseq
        %v3930 = vshrl.u32 %v3929, 7
        %v3931 = vsub.s32 1, %v3930
        %v3932 = vrot.slane %v3432, %v3931
        %v3933 = vlaneseq
        %v3934 = vshrl.u32 %v3933, 7
        %v3935 = vsub.s32 1, %v3934
        %v3936 = vrot.slane %v3434, %v3935
        %v3937 = vmul.f32 %v3903, 0.0
        %v3938 = vmul.f32 %v3903, %v3908
        %v3939 = vmul.f32 %v3903, %v3912
        %v3940 = vmul.f32 %v3903, %v3916
        %v3941 = vmul.f32 %v3903, %v3920
        %v3942 = vmul.f32 %v3903, %v3924
        %v3943 = vmul.f32 %v3903, %v3928
        %v3944 = vmul.f32 %v3903, %v3932
        %v3945 = vmul.f32 %v3903, %v3936
        %3955 = vrot.lane.b32.xlu0 %v3937, 127
        %v3956 = vpop.permute.xlu0 %3955
        %3957 = vrot.lane.b32.xlu0 %v3938, 127
        %v3958 = vpop.permute.xlu0 %3957
        %3959 = vrot.lane.b32.xlu0 %v3939, 127
        %v3960 = vpop.permute.xlu0 %3959
        %3961 = vrot.lane.b32.xlu0 %v3940, 127
        %v3962 = vpop.permute.xlu0 %3961
        %3963 = vrot.lane.b32.xlu0 %v3941, 127
        %v3964 = vpop.permute.xlu0 %3963
        %3965 = vrot.lane.b32.xlu0 %v3942, 127
        %v3966 = vpop.permute.xlu0 %3965
        %3967 = vrot.lane.b32.xlu0 %v3943, 127
        %v3968 = vpop.permute.xlu0 %3967
        %3969 = vrot.lane.b32.xlu0 %v3944, 127
        %v3970 = vpop.permute.xlu0 %3969
        %3971 = vrot.lane.b32.xlu0 %v3945, 127
        %v3972 = vpop.permute.xlu0 %3971
        %v3973 = vsel %vm742, %v3956, %v3958
        %v3974 = vsel %vm742, %v3958, %v3960
        %v3975 = vsel %vm742, %v3960, %v3962
        %v3976 = vsel %vm742, %v3962, %v3964
        %v3977 = vsel %vm742, %v3964, %v3966
        %v3978 = vsel %vm742, %v3966, %v3968
        %v3979 = vsel %vm742, %v3968, %v3970
        %v3980 = vsel %vm742, %v3970, %v3972
        %v3990 = vadd.f32 %v3892, %v3973
        %v3991 = vadd.f32 %v3893, %v3974
        %v3992 = vadd.f32 %v3894, %v3975
        %v3993 = vadd.f32 %v3895, %v3976
        %v3994 = vadd.f32 %v3896, %v3977
        %v3995 = vadd.f32 %v3897, %v3978
        %v3996 = vadd.f32 %v3898, %v3979
        %v3997 = vadd.f32 %v3899, %v3980
        %v3998 = vadd.f32 %v3900, %v3972
        %3999 = vset.pattern.permute.xlu0 2
        %4000 = vperm.xlu0 %3999, %v3437
        %v4001 = vpop.permute.xlu0 %4000
        %v4003 = vlaneseq
        %v4004 = vshrl.u32 %v4003, 7
        %v4005 = vsub.s32 2, %v4004
        %v4006 = vrot.slane %v3219, %v4005
        %v4007 = vlaneseq
        %v4008 = vshrl.u32 %v4007, 7
        %v4009 = vsub.s32 2, %v4008
        %v4010 = vrot.slane %v3221, %v4009
        %v4011 = vlaneseq
        %v4012 = vshrl.u32 %v4011, 7
        %v4013 = vsub.s32 2, %v4012
        %v4014 = vrot.slane %v3290, %v4013
        %v4015 = vlaneseq
        %v4016 = vshrl.u32 %v4015, 7
        %v4017 = vsub.s32 2, %v4016
        %v4018 = vrot.slane %v3292, %v4017
        %v4019 = vlaneseq
        %v4020 = vshrl.u32 %v4019, 7
        %v4021 = vsub.s32 2, %v4020
        %v4022 = vrot.slane %v3361, %v4021
        %v4023 = vlaneseq
        %v4024 = vshrl.u32 %v4023, 7
        %v4025 = vsub.s32 2, %v4024
        %v4026 = vrot.slane %v3363, %v4025
        %v4027 = vlaneseq
        %v4028 = vshrl.u32 %v4027, 7
        %v4029 = vsub.s32 2, %v4028
        %v4030 = vrot.slane %v3432, %v4029
        %v4031 = vlaneseq
        %v4032 = vshrl.u32 %v4031, 7
        %v4033 = vsub.s32 2, %v4032
        %v4034 = vrot.slane %v3434, %v4033
        %v4035 = vmul.f32 %v4001, 0.0
        %v4036 = vmul.f32 %v4001, %v4006
        %v4037 = vmul.f32 %v4001, %v4010
        %v4038 = vmul.f32 %v4001, %v4014
        %v4039 = vmul.f32 %v4001, %v4018
        %v4040 = vmul.f32 %v4001, %v4022
        %v4041 = vmul.f32 %v4001, %v4026
        %v4042 = vmul.f32 %v4001, %v4030
        %v4043 = vmul.f32 %v4001, %v4034
        %4053 = vrot.lane.b32.xlu0 %v4035, 127
        %v4054 = vpop.permute.xlu0 %4053
        %4055 = vrot.lane.b32.xlu0 %v4036, 127
        %v4056 = vpop.permute.xlu0 %4055
        %4057 = vrot.lane.b32.xlu0 %v4037, 127
        %v4058 = vpop.permute.xlu0 %4057
        %4059 = vrot.lane.b32.xlu0 %v4038, 127
        %v4060 = vpop.permute.xlu0 %4059
        %4061 = vrot.lane.b32.xlu0 %v4039, 127
        %v4062 = vpop.permute.xlu0 %4061
        %4063 = vrot.lane.b32.xlu0 %v4040, 127
        %v4064 = vpop.permute.xlu0 %4063
        %4065 = vrot.lane.b32.xlu0 %v4041, 127
        %v4066 = vpop.permute.xlu0 %4065
        %4067 = vrot.lane.b32.xlu0 %v4042, 127
        %v4068 = vpop.permute.xlu0 %4067
        %4069 = vrot.lane.b32.xlu0 %v4043, 127
        %v4070 = vpop.permute.xlu0 %4069
        %v4071 = vsel %vm742, %v4054, %v4056
        %v4072 = vsel %vm742, %v4056, %v4058
        %v4073 = vsel %vm742, %v4058, %v4060
        %v4074 = vsel %vm742, %v4060, %v4062
        %v4075 = vsel %vm742, %v4062, %v4064
        %v4076 = vsel %vm742, %v4064, %v4066
        %v4077 = vsel %vm742, %v4066, %v4068
        %v4078 = vsel %vm742, %v4068, %v4070
        %v4088 = vadd.f32 %v3990, %v4071
        %v4089 = vadd.f32 %v3991, %v4072
        %v4090 = vadd.f32 %v3992, %v4073
        %v4091 = vadd.f32 %v3993, %v4074
        %v4092 = vadd.f32 %v3994, %v4075
        %v4093 = vadd.f32 %v3995, %v4076
        %v4094 = vadd.f32 %v3996, %v4077
        %v4095 = vadd.f32 %v3997, %v4078
        %v4096 = vadd.f32 %v3998, %v4070
        %4097 = vset.pattern.permute.xlu0 3
        %4098 = vperm.xlu0 %4097, %v3437
        %v4099 = vpop.permute.xlu0 %4098
        %v4101 = vlaneseq
        %v4102 = vshrl.u32 %v4101, 7
        %v4103 = vsub.s32 3, %v4102
        %v4104 = vrot.slane %v3219, %v4103
        %v4105 = vlaneseq
        %v4106 = vshrl.u32 %v4105, 7
        %v4107 = vsub.s32 3, %v4106
        %v4108 = vrot.slane %v3221, %v4107
        %v4109 = vlaneseq
        %v4110 = vshrl.u32 %v4109, 7
        %v4111 = vsub.s32 3, %v4110
        %v4112 = vrot.slane %v3290, %v4111
        %v4113 = vlaneseq
        %v4114 = vshrl.u32 %v4113, 7
        %v4115 = vsub.s32 3, %v4114
        %v4116 = vrot.slane %v3292, %v4115
        %v4117 = vlaneseq
        %v4118 = vshrl.u32 %v4117, 7
        %v4119 = vsub.s32 3, %v4118
        %v4120 = vrot.slane %v3361, %v4119
        %v4121 = vlaneseq
        %v4122 = vshrl.u32 %v4121, 7
        %v4123 = vsub.s32 3, %v4122
        %v4124 = vrot.slane %v3363, %v4123
        %v4125 = vlaneseq
        %v4126 = vshrl.u32 %v4125, 7
        %v4127 = vsub.s32 3, %v4126
        %v4128 = vrot.slane %v3432, %v4127
        %v4129 = vlaneseq
        %v4130 = vshrl.u32 %v4129, 7
        %v4131 = vsub.s32 3, %v4130
        %v4132 = vrot.slane %v3434, %v4131
        %v4133 = vmul.f32 %v4099, 0.0
        %v4134 = vmul.f32 %v4099, %v4104
        %v4135 = vmul.f32 %v4099, %v4108
        %v4136 = vmul.f32 %v4099, %v4112
        %v4137 = vmul.f32 %v4099, %v4116
        %v4138 = vmul.f32 %v4099, %v4120
        %v4139 = vmul.f32 %v4099, %v4124
        %v4140 = vmul.f32 %v4099, %v4128
        %v4141 = vmul.f32 %v4099, %v4132
        %4151 = vrot.lane.b32.xlu0 %v4133, 127
        %v4152 = vpop.permute.xlu0 %4151
        %4153 = vrot.lane.b32.xlu0 %v4134, 127
        %v4154 = vpop.permute.xlu0 %4153
        %4155 = vrot.lane.b32.xlu0 %v4135, 127
        %v4156 = vpop.permute.xlu0 %4155
        %4157 = vrot.lane.b32.xlu0 %v4136, 127
        %v4158 = vpop.permute.xlu0 %4157
        %4159 = vrot.lane.b32.xlu0 %v4137, 127
        %v4160 = vpop.permute.xlu0 %4159
        %4161 = vrot.lane.b32.xlu0 %v4138, 127
        %v4162 = vpop.permute.xlu0 %4161
        %4163 = vrot.lane.b32.xlu0 %v4139, 127
        %v4164 = vpop.permute.xlu0 %4163
        %4165 = vrot.lane.b32.xlu0 %v4140, 127
        %v4166 = vpop.permute.xlu0 %4165
        %4167 = vrot.lane.b32.xlu0 %v4141, 127
        %v4168 = vpop.permute.xlu0 %4167
        %v4169 = vsel %vm742, %v4152, %v4154
        %v4170 = vsel %vm742, %v4154, %v4156
        %v4171 = vsel %vm742, %v4156, %v4158
        %v4172 = vsel %vm742, %v4158, %v4160
        %v4173 = vsel %vm742, %v4160, %v4162
        %v4174 = vsel %vm742, %v4162, %v4164
        %v4175 = vsel %vm742, %v4164, %v4166
        %v4176 = vsel %vm742, %v4166, %v4168
        %v4186 = vadd.f32 %v4088, %v4169
        %v4187 = vadd.f32 %v4089, %v4170
        %v4188 = vadd.f32 %v4090, %v4171
        %v4189 = vadd.f32 %v4091, %v4172
        %v4190 = vadd.f32 %v4092, %v4173
        %v4191 = vadd.f32 %v4093, %v4174
        %v4192 = vadd.f32 %v4094, %v4175
        %v4193 = vadd.f32 %v4095, %v4176
        %v4194 = vadd.f32 %v4096, %v4168
        %v4195 = vlaneseq
        %v4196 = vshrl.u32 %v4195, 7
        %v4197 = vsub.s32 1, %v4196
        %v4198 = vrot.slane %v401, %v4197
        %v4199 = vlaneseq
        %v4200 = vshrl.u32 %v4199, 7
        %v4201 = vsub.s32 3, %v4200
        %v4202 = vrot.slane %v401, %v4201
        %v4203 = vlaneseq
        %v4204 = vshrl.u32 %v4203, 7
        %v4205 = vsub.s32 5, %v4204
        %v4206 = vrot.slane %v401, %v4205
        %v4207 = vlaneseq
        %v4208 = vshrl.u32 %v4207, 7
        %v4209 = vsub.s32 7, %v4208
        %v4210 = vrot.slane %v401, %v4209
        %v4211 = vlaneseq
        %v4212 = vshrl.u32 %v4211, 7
        %v4213 = vsub.s32 1, %v4212
        %v4214 = vrot.slane %v402, %v4213
        %v4215 = vlaneseq
        %v4216 = vshrl.u32 %v4215, 7
        %v4217 = vsub.s32 3, %v4216
        %v4218 = vrot.slane %v402, %v4217
        %v4219 = vlaneseq
        %v4220 = vshrl.u32 %v4219, 7
        %v4221 = vsub.s32 5, %v4220
        %v4222 = vrot.slane %v402, %v4221
        %v4223 = vlaneseq
        %v4224 = vshrl.u32 %v4223, 7
        %v4225 = vsub.s32 7, %v4224
        %v4226 = vrot.slane %v402, %v4225
        %v4235 = vlaneseq
        %v4236 = vshrl.u32 %v4235, 7
        %v4237 = vsub.s32 1, %v4236
        %v4238 = vrot.slane %v4198, %v4237
        %v4239 = vlaneseq
        %v4240 = vshrl.u32 %v4239, 7
        %v4241 = vsub.s32 1, %v4240
        %v4242 = vrot.slane %v4202, %v4241
        %v4243 = vlaneseq
        %v4244 = vshrl.u32 %v4243, 7
        %v4245 = vsub.s32 1, %v4244
        %v4246 = vrot.slane %v4206, %v4245
        %v4247 = vlaneseq
        %v4248 = vshrl.u32 %v4247, 7
        %v4249 = vsub.s32 1, %v4248
        %v4250 = vrot.slane %v4210, %v4249
        %v4251 = vlaneseq
        %v4252 = vshrl.u32 %v4251, 7
        %v4253 = vsub.s32 1, %v4252
        %v4254 = vrot.slane %v4214, %v4253
        %v4255 = vlaneseq
        %v4256 = vshrl.u32 %v4255, 7
        %v4257 = vsub.s32 1, %v4256
        %v4258 = vrot.slane %v4218, %v4257
        %v4259 = vlaneseq
        %v4260 = vshrl.u32 %v4259, 7
        %v4261 = vsub.s32 1, %v4260
        %v4262 = vrot.slane %v4222, %v4261
        %v4263 = vlaneseq
        %v4264 = vshrl.u32 %v4263, 7
        %v4265 = vsub.s32 1, %v4264
        %v4266 = vrot.slane %v4226, %v4265
        %4275 = vrot.lane.b32.xlu0 %v4238, 97
        %v4276 = vpop.permute.xlu0 %4275
        %4277 = vrot.lane.b32.xlu0 %v4242, 97
        %v4278 = vpop.permute.xlu0 %4277
        %4279 = vrot.lane.b32.xlu0 %v4246, 97
        %v4280 = vpop.permute.xlu0 %4279
        %4281 = vrot.lane.b32.xlu0 %v4250, 97
        %v4282 = vpop.permute.xlu0 %4281
        %4283 = vrot.lane.b32.xlu0 %v4254, 97
        %v4284 = vpop.permute.xlu0 %4283
        %4285 = vrot.lane.b32.xlu0 %v4258, 97
        %v4286 = vpop.permute.xlu0 %4285
        %4287 = vrot.lane.b32.xlu0 %v4262, 97
        %v4288 = vpop.permute.xlu0 %4287
        %4289 = vrot.lane.b32.xlu0 %v4266, 97
        %v4290 = vpop.permute.xlu0 %4289
        %vm4291 = vcmask 793600
        %v4292 = vsel %vm4291, %v4276, %v4278
        %v4293 = vsel %vm4291, %v4278, %v4280
        %v4294 = vsel %vm4291, %v4280, %v4282
        %v4295 = vsel %vm4291, %v4282, %v4284
        %v4296 = vsel %vm4291, %v4284, %v4286
        %v4297 = vsel %vm4291, %v4286, %v4288
        %v4298 = vsel %vm4291, %v4288, %v4290
        %v4308 = vmul.f32 %v4276, 0.0
        %v4309 = vmul.f32 %v3219, %v4292
        %v4310 = vmul.f32 %v3221, %v4293
        %v4311 = vmul.f32 %v3290, %v4294
        %v4312 = vmul.f32 %v3292, %v4295
        %v4313 = vmul.f32 %v3361, %v4296
        %v4314 = vmul.f32 %v3363, %v4297
        %v4315 = vmul.f32 %v3432, %v4298
        %v4316 = vmul.f32 %v3434, %v4290
        %4318 = vset.pattern.permute.xlu0 0
        %4319 = vperm.xlu0 %4318, %v3438
        %v4320 = vpop.permute.xlu0 %4319
        %v4322 = vlaneseq
        %v4323 = vshrl.u32 %v4322, 7
        %v4324 = vsub.s32 0, %v4323
        %v4325 = vrot.slane %v4308, %v4324
        %v4326 = vlaneseq
        %v4327 = vshrl.u32 %v4326, 7
        %v4328 = vsub.s32 0, %v4327
        %v4329 = vrot.slane %v4309, %v4328
        %v4330 = vlaneseq
        %v4331 = vshrl.u32 %v4330, 7
        %v4332 = vsub.s32 0, %v4331
        %v4333 = vrot.slane %v4310, %v4332
        %v4334 = vlaneseq
        %v4335 = vshrl.u32 %v4334, 7
        %v4336 = vsub.s32 0, %v4335
        %v4337 = vrot.slane %v4311, %v4336
        %v4338 = vlaneseq
        %v4339 = vshrl.u32 %v4338, 7
        %v4340 = vsub.s32 0, %v4339
        %v4341 = vrot.slane %v4312, %v4340
        %v4342 = vlaneseq
        %v4343 = vshrl.u32 %v4342, 7
        %v4344 = vsub.s32 0, %v4343
        %v4345 = vrot.slane %v4313, %v4344
        %v4346 = vlaneseq
        %v4347 = vshrl.u32 %v4346, 7
        %v4348 = vsub.s32 0, %v4347
        %v4349 = vrot.slane %v4314, %v4348
        %v4350 = vlaneseq
        %v4351 = vshrl.u32 %v4350, 7
        %v4352 = vsub.s32 0, %v4351
        %v4353 = vrot.slane %v4315, %v4352
        %v4354 = vlaneseq
        %v4355 = vshrl.u32 %v4354, 7
        %v4356 = vsub.s32 0, %v4355
        %v4357 = vrot.slane %v4316, %v4356
        %v4358 = vmul.f32 %v4320, %v4325
        %v4359 = vmul.f32 %v4320, %v4329
        %v4360 = vmul.f32 %v4320, %v4333
        %v4361 = vmul.f32 %v4320, %v4337
        %v4362 = vmul.f32 %v4320, %v4341
        %v4363 = vmul.f32 %v4320, %v4345
        %v4364 = vmul.f32 %v4320, %v4349
        %v4365 = vmul.f32 %v4320, %v4353
        %v4366 = vmul.f32 %v4320, %v4357
        %4376 = vrot.lane.b32.xlu0 %v4358, 126
        %v4377 = vpop.permute.xlu0 %4376
        %4378 = vrot.lane.b32.xlu0 %v4359, 126
        %v4379 = vpop.permute.xlu0 %4378
        %4380 = vrot.lane.b32.xlu0 %v4360, 126
        %v4381 = vpop.permute.xlu0 %4380
        %4382 = vrot.lane.b32.xlu0 %v4361, 126
        %v4383 = vpop.permute.xlu0 %4382
        %4384 = vrot.lane.b32.xlu0 %v4362, 126
        %v4385 = vpop.permute.xlu0 %4384
        %4386 = vrot.lane.b32.xlu0 %v4363, 126
        %v4387 = vpop.permute.xlu0 %4386
        %4388 = vrot.lane.b32.xlu0 %v4364, 126
        %v4389 = vpop.permute.xlu0 %4388
        %4390 = vrot.lane.b32.xlu0 %v4365, 126
        %v4391 = vpop.permute.xlu0 %4390
        %4392 = vrot.lane.b32.xlu0 %v4366, 126
        %v4393 = vpop.permute.xlu0 %4392
        %v4394 = vsel %vm1057, %v4377, %v4379
        %v4395 = vsel %vm1057, %v4379, %v4381
        %v4396 = vsel %vm1057, %v4381, %v4383
        %v4397 = vsel %vm1057, %v4383, %v4385
        %v4398 = vsel %vm1057, %v4385, %v4387
        %v4399 = vsel %vm1057, %v4387, %v4389
        %v4400 = vsel %vm1057, %v4389, %v4391
        %v4401 = vsel %vm1057, %v4391, %v4393
        %v4411 = vadd.f32 %v4186, %v4394
        %v4412 = vadd.f32 %v4187, %v4395
        %v4413 = vadd.f32 %v4188, %v4396
        %v4414 = vadd.f32 %v4189, %v4397
        %v4415 = vadd.f32 %v4190, %v4398
        %v4416 = vadd.f32 %v4191, %v4399
        %v4417 = vadd.f32 %v4192, %v4400
        %v4418 = vadd.f32 %v4193, %v4401
        %v4419 = vadd.f32 %v4194, %v4393
        %4420 = vset.pattern.permute.xlu0 1
        %4421 = vperm.xlu0 %4420, %v3438
        %v4422 = vpop.permute.xlu0 %4421
        %v4424 = vlaneseq
        %v4425 = vshrl.u32 %v4424, 7
        %v4426 = vsub.s32 1, %v4425
        %v4427 = vrot.slane %v4308, %v4426
        %v4428 = vlaneseq
        %v4429 = vshrl.u32 %v4428, 7
        %v4430 = vsub.s32 1, %v4429
        %v4431 = vrot.slane %v4309, %v4430
        %v4432 = vlaneseq
        %v4433 = vshrl.u32 %v4432, 7
        %v4434 = vsub.s32 1, %v4433
        %v4435 = vrot.slane %v4310, %v4434
        %v4436 = vlaneseq
        %v4437 = vshrl.u32 %v4436, 7
        %v4438 = vsub.s32 1, %v4437
        %v4439 = vrot.slane %v4311, %v4438
        %v4440 = vlaneseq
        %v4441 = vshrl.u32 %v4440, 7
        %v4442 = vsub.s32 1, %v4441
        %v4443 = vrot.slane %v4312, %v4442
        %v4444 = vlaneseq
        %v4445 = vshrl.u32 %v4444, 7
        %v4446 = vsub.s32 1, %v4445
        %v4447 = vrot.slane %v4313, %v4446
        %v4448 = vlaneseq
        %v4449 = vshrl.u32 %v4448, 7
        %v4450 = vsub.s32 1, %v4449
        %v4451 = vrot.slane %v4314, %v4450
        %v4452 = vlaneseq
        %v4453 = vshrl.u32 %v4452, 7
        %v4454 = vsub.s32 1, %v4453
        %v4455 = vrot.slane %v4315, %v4454
        %v4456 = vlaneseq
        %v4457 = vshrl.u32 %v4456, 7
        %v4458 = vsub.s32 1, %v4457
        %v4459 = vrot.slane %v4316, %v4458
        %v4460 = vmul.f32 %v4422, %v4427
        %v4461 = vmul.f32 %v4422, %v4431
        %v4462 = vmul.f32 %v4422, %v4435
        %v4463 = vmul.f32 %v4422, %v4439
        %v4464 = vmul.f32 %v4422, %v4443
        %v4465 = vmul.f32 %v4422, %v4447
        %v4466 = vmul.f32 %v4422, %v4451
        %v4467 = vmul.f32 %v4422, %v4455
        %v4468 = vmul.f32 %v4422, %v4459
        %4478 = vrot.lane.b32.xlu0 %v4460, 126
        %v4479 = vpop.permute.xlu0 %4478
        %4480 = vrot.lane.b32.xlu0 %v4461, 126
        %v4481 = vpop.permute.xlu0 %4480
        %4482 = vrot.lane.b32.xlu0 %v4462, 126
        %v4483 = vpop.permute.xlu0 %4482
        %4484 = vrot.lane.b32.xlu0 %v4463, 126
        %v4485 = vpop.permute.xlu0 %4484
        %4486 = vrot.lane.b32.xlu0 %v4464, 126
        %v4487 = vpop.permute.xlu0 %4486
        %4488 = vrot.lane.b32.xlu0 %v4465, 126
        %v4489 = vpop.permute.xlu0 %4488
        %4490 = vrot.lane.b32.xlu0 %v4466, 126
        %v4491 = vpop.permute.xlu0 %4490
        %4492 = vrot.lane.b32.xlu0 %v4467, 126
        %v4493 = vpop.permute.xlu0 %4492
        %4494 = vrot.lane.b32.xlu0 %v4468, 126
        %v4495 = vpop.permute.xlu0 %4494
        %v4496 = vsel %vm1057, %v4479, %v4481
        %v4497 = vsel %vm1057, %v4481, %v4483
        %v4498 = vsel %vm1057, %v4483, %v4485
        %v4499 = vsel %vm1057, %v4485, %v4487
        %v4500 = vsel %vm1057, %v4487, %v4489
        %v4501 = vsel %vm1057, %v4489, %v4491
        %v4502 = vsel %vm1057, %v4491, %v4493
        %v4503 = vsel %vm1057, %v4493, %v4495
        %v4513 = vadd.f32 %v4411, %v4496
        %v4514 = vadd.f32 %v4412, %v4497
        %v4515 = vadd.f32 %v4413, %v4498
        %v4516 = vadd.f32 %v4414, %v4499
        %v4517 = vadd.f32 %v4415, %v4500
        %v4518 = vadd.f32 %v4416, %v4501
        %v4519 = vadd.f32 %v4417, %v4502
        %v4520 = vadd.f32 %v4418, %v4503
        %v4521 = vadd.f32 %v4419, %v4495
        %4522 = vset.pattern.permute.xlu0 2
        %4523 = vperm.xlu0 %4522, %v3438
        %v4524 = vpop.permute.xlu0 %4523
        %v4526 = vlaneseq
        %v4527 = vshrl.u32 %v4526, 7
        %v4528 = vsub.s32 2, %v4527
        %v4529 = vrot.slane %v4308, %v4528
        %v4530 = vlaneseq
        %v4531 = vshrl.u32 %v4530, 7
        %v4532 = vsub.s32 2, %v4531
        %v4533 = vrot.slane %v4309, %v4532
        %v4534 = vlaneseq
        %v4535 = vshrl.u32 %v4534, 7
        %v4536 = vsub.s32 2, %v4535
        %v4537 = vrot.slane %v4310, %v4536
        %v4538 = vlaneseq
        %v4539 = vshrl.u32 %v4538, 7
        %v4540 = vsub.s32 2, %v4539
        %v4541 = vrot.slane %v4311, %v4540
        %v4542 = vlaneseq
        %v4543 = vshrl.u32 %v4542, 7
        %v4544 = vsub.s32 2, %v4543
        %v4545 = vrot.slane %v4312, %v4544
        %v4546 = vlaneseq
        %v4547 = vshrl.u32 %v4546, 7
        %v4548 = vsub.s32 2, %v4547
        %v4549 = vrot.slane %v4313, %v4548
        %v4550 = vlaneseq
        %v4551 = vshrl.u32 %v4550, 7
        %v4552 = vsub.s32 2, %v4551
        %v4553 = vrot.slane %v4314, %v4552
        %v4554 = vlaneseq
        %v4555 = vshrl.u32 %v4554, 7
        %v4556 = vsub.s32 2, %v4555
        %v4557 = vrot.slane %v4315, %v4556
        %v4558 = vlaneseq
        %v4559 = vshrl.u32 %v4558, 7
        %v4560 = vsub.s32 2, %v4559
        %v4561 = vrot.slane %v4316, %v4560
        %v4562 = vmul.f32 %v4524, %v4529
        %v4563 = vmul.f32 %v4524, %v4533
        %v4564 = vmul.f32 %v4524, %v4537
        %v4565 = vmul.f32 %v4524, %v4541
        %v4566 = vmul.f32 %v4524, %v4545
        %v4567 = vmul.f32 %v4524, %v4549
        %v4568 = vmul.f32 %v4524, %v4553
        %v4569 = vmul.f32 %v4524, %v4557
        %v4570 = vmul.f32 %v4524, %v4561
        %4580 = vrot.lane.b32.xlu0 %v4562, 126
        %v4581 = vpop.permute.xlu0 %4580
        %4582 = vrot.lane.b32.xlu0 %v4563, 126
        %v4583 = vpop.permute.xlu0 %4582
        %4584 = vrot.lane.b32.xlu0 %v4564, 126
        %v4585 = vpop.permute.xlu0 %4584
        %4586 = vrot.lane.b32.xlu0 %v4565, 126
        %v4587 = vpop.permute.xlu0 %4586
        %4588 = vrot.lane.b32.xlu0 %v4566, 126
        %v4589 = vpop.permute.xlu0 %4588
        %4590 = vrot.lane.b32.xlu0 %v4567, 126
        %v4591 = vpop.permute.xlu0 %4590
        %4592 = vrot.lane.b32.xlu0 %v4568, 126
        %v4593 = vpop.permute.xlu0 %4592
        %4594 = vrot.lane.b32.xlu0 %v4569, 126
        %v4595 = vpop.permute.xlu0 %4594
        %4596 = vrot.lane.b32.xlu0 %v4570, 126
        %v4597 = vpop.permute.xlu0 %4596
        %v4598 = vsel %vm1057, %v4581, %v4583
        %v4599 = vsel %vm1057, %v4583, %v4585
        %v4600 = vsel %vm1057, %v4585, %v4587
        %v4601 = vsel %vm1057, %v4587, %v4589
        %v4602 = vsel %vm1057, %v4589, %v4591
        %v4603 = vsel %vm1057, %v4591, %v4593
        %v4604 = vsel %vm1057, %v4593, %v4595
        %v4605 = vsel %vm1057, %v4595, %v4597
        %v4615 = vadd.f32 %v4513, %v4598
        %v4616 = vadd.f32 %v4514, %v4599
        %v4617 = vadd.f32 %v4515, %v4600
        %v4618 = vadd.f32 %v4516, %v4601
        %v4619 = vadd.f32 %v4517, %v4602
        %v4620 = vadd.f32 %v4518, %v4603
        %v4621 = vadd.f32 %v4519, %v4604
        %v4622 = vadd.f32 %v4520, %v4605
        %v4623 = vadd.f32 %v4521, %v4597
        %4624 = vset.pattern.permute.xlu0 3
        %4625 = vperm.xlu0 %4624, %v3438
        %v4626 = vpop.permute.xlu0 %4625
        %v4628 = vlaneseq
        %v4629 = vshrl.u32 %v4628, 7
        %v4630 = vsub.s32 3, %v4629
        %v4631 = vrot.slane %v4308, %v4630
        %v4632 = vlaneseq
        %v4633 = vshrl.u32 %v4632, 7
        %v4634 = vsub.s32 3, %v4633
        %v4635 = vrot.slane %v4309, %v4634
        %v4636 = vlaneseq
        %v4637 = vshrl.u32 %v4636, 7
        %v4638 = vsub.s32 3, %v4637
        %v4639 = vrot.slane %v4310, %v4638
        %v4640 = vlaneseq
        %v4641 = vshrl.u32 %v4640, 7
        %v4642 = vsub.s32 3, %v4641
        %v4643 = vrot.slane %v4311, %v4642
        %v4644 = vlaneseq
        %v4645 = vshrl.u32 %v4644, 7
        %v4646 = vsub.s32 3, %v4645
        %v4647 = vrot.slane %v4312, %v4646
        %v4648 = vlaneseq
        %v4649 = vshrl.u32 %v4648, 7
        %v4650 = vsub.s32 3, %v4649
        %v4651 = vrot.slane %v4313, %v4650
        %v4652 = vlaneseq
        %v4653 = vshrl.u32 %v4652, 7
        %v4654 = vsub.s32 3, %v4653
        %v4655 = vrot.slane %v4314, %v4654
        %v4656 = vlaneseq
        %v4657 = vshrl.u32 %v4656, 7
        %v4658 = vsub.s32 3, %v4657
        %v4659 = vrot.slane %v4315, %v4658
        %v4660 = vlaneseq
        %v4661 = vshrl.u32 %v4660, 7
        %v4662 = vsub.s32 3, %v4661
        %v4663 = vrot.slane %v4316, %v4662
        %v4664 = vmul.f32 %v4626, %v4631
        %v4665 = vmul.f32 %v4626, %v4635
        %v4666 = vmul.f32 %v4626, %v4639
        %v4667 = vmul.f32 %v4626, %v4643
        %v4668 = vmul.f32 %v4626, %v4647
        %v4669 = vmul.f32 %v4626, %v4651
        %v4670 = vmul.f32 %v4626, %v4655
        %v4671 = vmul.f32 %v4626, %v4659
        %v4672 = vmul.f32 %v4626, %v4663
        %4682 = vrot.lane.b32.xlu0 %v4664, 126
        %v4683 = vpop.permute.xlu0 %4682
        %4684 = vrot.lane.b32.xlu0 %v4665, 126
        %v4685 = vpop.permute.xlu0 %4684
        %4686 = vrot.lane.b32.xlu0 %v4666, 126
        %v4687 = vpop.permute.xlu0 %4686
        %4688 = vrot.lane.b32.xlu0 %v4667, 126
        %v4689 = vpop.permute.xlu0 %4688
        %4690 = vrot.lane.b32.xlu0 %v4668, 126
        %v4691 = vpop.permute.xlu0 %4690
        %4692 = vrot.lane.b32.xlu0 %v4669, 126
        %v4693 = vpop.permute.xlu0 %4692
        %4694 = vrot.lane.b32.xlu0 %v4670, 126
        %v4695 = vpop.permute.xlu0 %4694
        %4696 = vrot.lane.b32.xlu0 %v4671, 126
        %v4697 = vpop.permute.xlu0 %4696
        %4698 = vrot.lane.b32.xlu0 %v4672, 126
        %v4699 = vpop.permute.xlu0 %4698
        %v4700 = vsel %vm1057, %v4683, %v4685
        %v4701 = vsel %vm1057, %v4685, %v4687
        %v4702 = vsel %vm1057, %v4687, %v4689
        %v4703 = vsel %vm1057, %v4689, %v4691
        %v4704 = vsel %vm1057, %v4691, %v4693
        %v4705 = vsel %vm1057, %v4693, %v4695
        %v4706 = vsel %vm1057, %v4695, %v4697
        %v4707 = vsel %vm1057, %v4697, %v4699
        %v4717 = vadd.f32 %v4615, %v4700
        %v4718 = vadd.f32 %v4616, %v4701
        %v4719 = vadd.f32 %v4617, %v4702
        %v4720 = vadd.f32 %v4618, %v4703
        %v4721 = vadd.f32 %v4619, %v4704
        %v4722 = vadd.f32 %v4620, %v4705
        %v4723 = vadd.f32 %v4621, %v4706
        %v4724 = vadd.f32 %v4622, %v4707
        %v4725 = vadd.f32 %v4623, %v4699
        %4726 = vrot.lane.b32.xlu0 %v3491, 127
        %v4727 = vpop.permute.xlu0 %4726
        %4728 = vrot.lane.b32.xlu0 %v3495, 127
        %v4729 = vpop.permute.xlu0 %4728
        %4730 = vrot.lane.b32.xlu0 %v3499, 127
        %v4731 = vpop.permute.xlu0 %4730
        %4732 = vrot.lane.b32.xlu0 %v3503, 127
        %v4733 = vpop.permute.xlu0 %4732
        %4734 = vrot.lane.b32.xlu0 %v3507, 127
        %v4735 = vpop.permute.xlu0 %4734
        %4736 = vrot.lane.b32.xlu0 %v3511, 127
        %v4737 = vpop.permute.xlu0 %4736
        %4738 = vrot.lane.b32.xlu0 %v3515, 127
        %v4739 = vpop.permute.xlu0 %4738
        %4740 = vrot.lane.b32.xlu0 %v3519, 127
        %v4741 = vpop.permute.xlu0 %4740
        %v4742 = vsel %vm742, %v4727, %v4729
        %v4743 = vsel %vm742, %v4729, %v4731
        %v4744 = vsel %vm742, %v4731, %v4733
        %v4745 = vsel %vm742, %v4733, %v4735
        %v4746 = vsel %vm742, %v4735, %v4737
        %v4747 = vsel %vm742, %v4737, %v4739
        %v4748 = vsel %vm742, %v4739, %v4741
        %v4758 = vmul.f32 %v4727, 0.0
        %v4759 = vmul.f32 %v3219, %v4742
        %v4760 = vmul.f32 %v3221, %v4743
        %v4761 = vmul.f32 %v3290, %v4744
        %v4762 = vmul.f32 %v3292, %v4745
        %v4763 = vmul.f32 %v3361, %v4746
        %v4764 = vmul.f32 %v3363, %v4747
        %v4765 = vmul.f32 %v3432, %v4748
        %v4766 = vmul.f32 %v3434, %v4741
        %4768 = vset.pattern.permute.xlu0 0
        %4769 = vperm.xlu0 %4768, %v3439
        %v4770 = vpop.permute.xlu0 %4769
        %v4772 = vlaneseq
        %v4773 = vshrl.u32 %v4772, 7
        %v4774 = vsub.s32 0, %v4773
        %v4775 = vrot.slane %v4758, %v4774
        %v4776 = vlaneseq
        %v4777 = vshrl.u32 %v4776, 7
        %v4778 = vsub.s32 0, %v4777
        %v4779 = vrot.slane %v4759, %v4778
        %v4780 = vlaneseq
        %v4781 = vshrl.u32 %v4780, 7
        %v4782 = vsub.s32 0, %v4781
        %v4783 = vrot.slane %v4760, %v4782
        %v4784 = vlaneseq
        %v4785 = vshrl.u32 %v4784, 7
        %v4786 = vsub.s32 0, %v4785
        %v4787 = vrot.slane %v4761, %v4786
        %v4788 = vlaneseq
        %v4789 = vshrl.u32 %v4788, 7
        %v4790 = vsub.s32 0, %v4789
        %v4791 = vrot.slane %v4762, %v4790
        %v4792 = vlaneseq
        %v4793 = vshrl.u32 %v4792, 7
        %v4794 = vsub.s32 0, %v4793
        %v4795 = vrot.slane %v4763, %v4794
        %v4796 = vlaneseq
        %v4797 = vshrl.u32 %v4796, 7
        %v4798 = vsub.s32 0, %v4797
        %v4799 = vrot.slane %v4764, %v4798
        %v4800 = vlaneseq
        %v4801 = vshrl.u32 %v4800, 7
        %v4802 = vsub.s32 0, %v4801
        %v4803 = vrot.slane %v4765, %v4802
        %v4804 = vlaneseq
        %v4805 = vshrl.u32 %v4804, 7
        %v4806 = vsub.s32 0, %v4805
        %v4807 = vrot.slane %v4766, %v4806
        %v4808 = vmul.f32 %v4770, %v4775
        %v4809 = vmul.f32 %v4770, %v4779
        %v4810 = vmul.f32 %v4770, %v4783
        %v4811 = vmul.f32 %v4770, %v4787
        %v4812 = vmul.f32 %v4770, %v4791
        %v4813 = vmul.f32 %v4770, %v4795
        %v4814 = vmul.f32 %v4770, %v4799
        %v4815 = vmul.f32 %v4770, %v4803
        %v4816 = vmul.f32 %v4770, %v4807
        %4826 = vrot.lane.b32.xlu0 %v4808, 96
        %v4827 = vpop.permute.xlu0 %4826
        %4828 = vrot.lane.b32.xlu0 %v4809, 96
        %v4829 = vpop.permute.xlu0 %4828
        %4830 = vrot.lane.b32.xlu0 %v4810, 96
        %v4831 = vpop.permute.xlu0 %4830
        %4832 = vrot.lane.b32.xlu0 %v4811, 96
        %v4833 = vpop.permute.xlu0 %4832
        %4834 = vrot.lane.b32.xlu0 %v4812, 96
        %v4835 = vpop.permute.xlu0 %4834
        %4836 = vrot.lane.b32.xlu0 %v4813, 96
        %v4837 = vpop.permute.xlu0 %4836
        %4838 = vrot.lane.b32.xlu0 %v4814, 96
        %v4839 = vpop.permute.xlu0 %4838
        %4840 = vrot.lane.b32.xlu0 %v4815, 96
        %v4841 = vpop.permute.xlu0 %4840
        %4842 = vrot.lane.b32.xlu0 %v4816, 96
        %v4843 = vpop.permute.xlu0 %4842
        %v4844 = vsel %vm2115, %v4827, %v4829
        %v4845 = vsel %vm2115, %v4829, %v4831
        %v4846 = vsel %vm2115, %v4831, %v4833
        %v4847 = vsel %vm2115, %v4833, %v4835
        %v4848 = vsel %vm2115, %v4835, %v4837
        %v4849 = vsel %vm2115, %v4837, %v4839
        %v4850 = vsel %vm2115, %v4839, %v4841
        %v4851 = vsel %vm2115, %v4841, %v4843
        %v4861 = vadd.f32 %v4717, %v4844
        %v4862 = vadd.f32 %v4718, %v4845
        %v4863 = vadd.f32 %v4719, %v4846
        %v4864 = vadd.f32 %v4720, %v4847
        %v4865 = vadd.f32 %v4721, %v4848
        %v4866 = vadd.f32 %v4722, %v4849
        %v4867 = vadd.f32 %v4723, %v4850
        %v4868 = vadd.f32 %v4724, %v4851
        %v4869 = vadd.f32 %v4725, %v4843
        %4870 = vset.pattern.permute.xlu0 1
        %4871 = vperm.xlu0 %4870, %v3439
        %v4872 = vpop.permute.xlu0 %4871
        %v4874 = vlaneseq
        %v4875 = vshrl.u32 %v4874, 7
        %v4876 = vsub.s32 1, %v4875
        %v4877 = vrot.slane %v4758, %v4876
        %v4878 = vlaneseq
        %v4879 = vshrl.u32 %v4878, 7
        %v4880 = vsub.s32 1, %v4879
        %v4881 = vrot.slane %v4759, %v4880
        %v4882 = vlaneseq
        %v4883 = vshrl.u32 %v4882, 7
        %v4884 = vsub.s32 1, %v4883
        %v4885 = vrot.slane %v4760, %v4884
        %v4886 = vlaneseq
        %v4887 = vshrl.u32 %v4886, 7
        %v4888 = vsub.s32 1, %v4887
        %v4889 = vrot.slane %v4761, %v4888
        %v4890 = vlaneseq
        %v4891 = vshrl.u32 %v4890, 7
        %v4892 = vsub.s32 1, %v4891
        %v4893 = vrot.slane %v4762, %v4892
        %v4894 = vlaneseq
        %v4895 = vshrl.u32 %v4894, 7
        %v4896 = vsub.s32 1, %v4895
        %v4897 = vrot.slane %v4763, %v4896
        %v4898 = vlaneseq
        %v4899 = vshrl.u32 %v4898, 7
        %v4900 = vsub.s32 1, %v4899
        %v4901 = vrot.slane %v4764, %v4900
        %v4902 = vlaneseq
        %v4903 = vshrl.u32 %v4902, 7
        %v4904 = vsub.s32 1, %v4903
        %v4905 = vrot.slane %v4765, %v4904
        %v4906 = vlaneseq
        %v4907 = vshrl.u32 %v4906, 7
        %v4908 = vsub.s32 1, %v4907
        %v4909 = vrot.slane %v4766, %v4908
        %v4910 = vmul.f32 %v4872, %v4877
        %v4911 = vmul.f32 %v4872, %v4881
        %v4912 = vmul.f32 %v4872, %v4885
        %v4913 = vmul.f32 %v4872, %v4889
        %v4914 = vmul.f32 %v4872, %v4893
        %v4915 = vmul.f32 %v4872, %v4897
        %v4916 = vmul.f32 %v4872, %v4901
        %v4917 = vmul.f32 %v4872, %v4905
        %v4918 = vmul.f32 %v4872, %v4909
        %4928 = vrot.lane.b32.xlu0 %v4910, 96
        %v4929 = vpop.permute.xlu0 %4928
        %4930 = vrot.lane.b32.xlu0 %v4911, 96
        %v4931 = vpop.permute.xlu0 %4930
        %4932 = vrot.lane.b32.xlu0 %v4912, 96
        %v4933 = vpop.permute.xlu0 %4932
        %4934 = vrot.lane.b32.xlu0 %v4913, 96
        %v4935 = vpop.permute.xlu0 %4934
        %4936 = vrot.lane.b32.xlu0 %v4914, 96
        %v4937 = vpop.permute.xlu0 %4936
        %4938 = vrot.lane.b32.xlu0 %v4915, 96
        %v4939 = vpop.permute.xlu0 %4938
        %4940 = vrot.lane.b32.xlu0 %v4916, 96
        %v4941 = vpop.permute.xlu0 %4940
        %4942 = vrot.lane.b32.xlu0 %v4917, 96
        %v4943 = vpop.permute.xlu0 %4942
        %4944 = vrot.lane.b32.xlu0 %v4918, 96
        %v4945 = vpop.permute.xlu0 %4944
        %v4946 = vsel %vm2115, %v4929, %v4931
        %v4947 = vsel %vm2115, %v4931, %v4933
        %v4948 = vsel %vm2115, %v4933, %v4935
        %v4949 = vsel %vm2115, %v4935, %v4937
        %v4950 = vsel %vm2115, %v4937, %v4939
        %v4951 = vsel %vm2115, %v4939, %v4941
        %v4952 = vsel %vm2115, %v4941, %v4943
        %v4953 = vsel %vm2115, %v4943, %v4945
        %v4963 = vadd.f32 %v4861, %v4946
        %v4964 = vadd.f32 %v4862, %v4947
        %v4965 = vadd.f32 %v4863, %v4948
        %v4966 = vadd.f32 %v4864, %v4949
        %v4967 = vadd.f32 %v4865, %v4950
        %v4968 = vadd.f32 %v4866, %v4951
        %v4969 = vadd.f32 %v4867, %v4952
        %v4970 = vadd.f32 %v4868, %v4953
        %v4971 = vadd.f32 %v4869, %v4945
        %4972 = vset.pattern.permute.xlu0 2
        %4973 = vperm.xlu0 %4972, %v3439
        %v4974 = vpop.permute.xlu0 %4973
        %v4976 = vlaneseq
        %v4977 = vshrl.u32 %v4976, 7
        %v4978 = vsub.s32 2, %v4977
        %v4979 = vrot.slane %v4758, %v4978
        %v4980 = vlaneseq
        %v4981 = vshrl.u32 %v4980, 7
        %v4982 = vsub.s32 2, %v4981
        %v4983 = vrot.slane %v4759, %v4982
        %v4984 = vlaneseq
        %v4985 = vshrl.u32 %v4984, 7
        %v4986 = vsub.s32 2, %v4985
        %v4987 = vrot.slane %v4760, %v4986
        %v4988 = vlaneseq
        %v4989 = vshrl.u32 %v4988, 7
        %v4990 = vsub.s32 2, %v4989
        %v4991 = vrot.slane %v4761, %v4990
        %v4992 = vlaneseq
        %v4993 = vshrl.u32 %v4992, 7
        %v4994 = vsub.s32 2, %v4993
        %v4995 = vrot.slane %v4762, %v4994
        %v4996 = vlaneseq
        %v4997 = vshrl.u32 %v4996, 7
        %v4998 = vsub.s32 2, %v4997
        %v4999 = vrot.slane %v4763, %v4998
        %v5000 = vlaneseq
        %v5001 = vshrl.u32 %v5000, 7
        %v5002 = vsub.s32 2, %v5001
        %v5003 = vrot.slane %v4764, %v5002
        %v5004 = vlaneseq
        %v5005 = vshrl.u32 %v5004, 7
        %v5006 = vsub.s32 2, %v5005
        %v5007 = vrot.slane %v4765, %v5006
        %v5008 = vlaneseq
        %v5009 = vshrl.u32 %v5008, 7
        %v5010 = vsub.s32 2, %v5009
        %v5011 = vrot.slane %v4766, %v5010
        %v5012 = vmul.f32 %v4974, %v4979
        %v5013 = vmul.f32 %v4974, %v4983
        %v5014 = vmul.f32 %v4974, %v4987
        %v5015 = vmul.f32 %v4974, %v4991
        %v5016 = vmul.f32 %v4974, %v4995
        %v5017 = vmul.f32 %v4974, %v4999
        %v5018 = vmul.f32 %v4974, %v5003
        %v5019 = vmul.f32 %v4974, %v5007
        %v5020 = vmul.f32 %v4974, %v5011
        %5030 = vrot.lane.b32.xlu0 %v5012, 96
        %v5031 = vpop.permute.xlu0 %5030
        %5032 = vrot.lane.b32.xlu0 %v5013, 96
        %v5033 = vpop.permute.xlu0 %5032
        %5034 = vrot.lane.b32.xlu0 %v5014, 96
        %v5035 = vpop.permute.xlu0 %5034
        %5036 = vrot.lane.b32.xlu0 %v5015, 96
        %v5037 = vpop.permute.xlu0 %5036
        %5038 = vrot.lane.b32.xlu0 %v5016, 96
        %v5039 = vpop.permute.xlu0 %5038
        %5040 = vrot.lane.b32.xlu0 %v5017, 96
        %v5041 = vpop.permute.xlu0 %5040
        %5042 = vrot.lane.b32.xlu0 %v5018, 96
        %v5043 = vpop.permute.xlu0 %5042
        %5044 = vrot.lane.b32.xlu0 %v5019, 96
        %v5045 = vpop.permute.xlu0 %5044
        %5046 = vrot.lane.b32.xlu0 %v5020, 96
        %v5047 = vpop.permute.xlu0 %5046
        %v5048 = vsel %vm2115, %v5031, %v5033
        %v5049 = vsel %vm2115, %v5033, %v5035
        %v5050 = vsel %vm2115, %v5035, %v5037
        %v5051 = vsel %vm2115, %v5037, %v5039
        %v5052 = vsel %vm2115, %v5039, %v5041
        %v5053 = vsel %vm2115, %v5041, %v5043
        %v5054 = vsel %vm2115, %v5043, %v5045
        %v5055 = vsel %vm2115, %v5045, %v5047
        %v5065 = vadd.f32 %v4963, %v5048
        %v5066 = vadd.f32 %v4964, %v5049
        %v5067 = vadd.f32 %v4965, %v5050
        %v5068 = vadd.f32 %v4966, %v5051
        %v5069 = vadd.f32 %v4967, %v5052
        %v5070 = vadd.f32 %v4968, %v5053
        %v5071 = vadd.f32 %v4969, %v5054
        %v5072 = vadd.f32 %v4970, %v5055
        %v5073 = vadd.f32 %v4971, %v5047
        %5074 = vset.pattern.permute.xlu0 3
        %5075 = vperm.xlu0 %5074, %v3439
        %v5076 = vpop.permute.xlu0 %5075
        %v5078 = vlaneseq
        %v5079 = vshrl.u32 %v5078, 7
        %v5080 = vsub.s32 3, %v5079
        %v5081 = vrot.slane %v4758, %v5080
        %v5082 = vlaneseq
        %v5083 = vshrl.u32 %v5082, 7
        %v5084 = vsub.s32 3, %v5083
        %v5085 = vrot.slane %v4759, %v5084
        %v5086 = vlaneseq
        %v5087 = vshrl.u32 %v5086, 7
        %v5088 = vsub.s32 3, %v5087
        %v5089 = vrot.slane %v4760, %v5088
        %v5090 = vlaneseq
        %v5091 = vshrl.u32 %v5090, 7
        %v5092 = vsub.s32 3, %v5091
        %v5093 = vrot.slane %v4761, %v5092
        %v5094 = vlaneseq
        %v5095 = vshrl.u32 %v5094, 7
        %v5096 = vsub.s32 3, %v5095
        %v5097 = vrot.slane %v4762, %v5096
        %v5098 = vlaneseq
        %v5099 = vshrl.u32 %v5098, 7
        %v5100 = vsub.s32 3, %v5099
        %v5101 = vrot.slane %v4763, %v5100
        %v5102 = vlaneseq
        %v5103 = vshrl.u32 %v5102, 7
        %v5104 = vsub.s32 3, %v5103
        %v5105 = vrot.slane %v4764, %v5104
        %v5106 = vlaneseq
        %v5107 = vshrl.u32 %v5106, 7
        %v5108 = vsub.s32 3, %v5107
        %v5109 = vrot.slane %v4765, %v5108
        %v5110 = vlaneseq
        %v5111 = vshrl.u32 %v5110, 7
        %v5112 = vsub.s32 3, %v5111
        %v5113 = vrot.slane %v4766, %v5112
        %v5114 = vmul.f32 %v5076, %v5081
        %v5115 = vmul.f32 %v5076, %v5085
        %v5116 = vmul.f32 %v5076, %v5089
        %v5117 = vmul.f32 %v5076, %v5093
        %v5118 = vmul.f32 %v5076, %v5097
        %v5119 = vmul.f32 %v5076, %v5101
        %v5120 = vmul.f32 %v5076, %v5105
        %v5121 = vmul.f32 %v5076, %v5109
        %v5122 = vmul.f32 %v5076, %v5113
        %5132 = vrot.lane.b32.xlu0 %v5114, 96
        %v5133 = vpop.permute.xlu0 %5132
        %5134 = vrot.lane.b32.xlu0 %v5115, 96
        %v5135 = vpop.permute.xlu0 %5134
        %5136 = vrot.lane.b32.xlu0 %v5116, 96
        %v5137 = vpop.permute.xlu0 %5136
        %5138 = vrot.lane.b32.xlu0 %v5117, 96
        %v5139 = vpop.permute.xlu0 %5138
        %5140 = vrot.lane.b32.xlu0 %v5118, 96
        %v5141 = vpop.permute.xlu0 %5140
        %5142 = vrot.lane.b32.xlu0 %v5119, 96
        %v5143 = vpop.permute.xlu0 %5142
        %5144 = vrot.lane.b32.xlu0 %v5120, 96
        %v5145 = vpop.permute.xlu0 %5144
        %5146 = vrot.lane.b32.xlu0 %v5121, 96
        %v5147 = vpop.permute.xlu0 %5146
        %5148 = vrot.lane.b32.xlu0 %v5122, 96
        %v5149 = vpop.permute.xlu0 %5148
        %v5150 = vsel %vm2115, %v5133, %v5135
        %v5151 = vsel %vm2115, %v5135, %v5137
        %v5152 = vsel %vm2115, %v5137, %v5139
        %v5153 = vsel %vm2115, %v5139, %v5141
        %v5154 = vsel %vm2115, %v5141, %v5143
        %v5155 = vsel %vm2115, %v5143, %v5145
        %v5156 = vsel %vm2115, %v5145, %v5147
        %v5157 = vsel %vm2115, %v5147, %v5149
        %v5167 = vadd.f32 %v5065, %v5150
        %v5168 = vadd.f32 %v5066, %v5151
        %v5169 = vadd.f32 %v5067, %v5152
        %v5170 = vadd.f32 %v5068, %v5153
        %v5171 = vadd.f32 %v5069, %v5154
        %v5172 = vadd.f32 %v5070, %v5155
        %v5173 = vadd.f32 %v5071, %v5156
        %v5174 = vadd.f32 %v5072, %v5157
        %v5175 = vadd.f32 %v5073, %v5149
        %5177 = vset.pattern.permute.xlu0 0
        %5178 = vperm.xlu0 %5177, %v3440
        %v5179 = vpop.permute.xlu0 %5178
        %v5181 = vmul.f32 %v5179, %v3810
        %v5182 = vmul.f32 %v5179, %v3814
        %v5183 = vmul.f32 %v5179, %v3818
        %v5184 = vmul.f32 %v5179, %v3822
        %v5185 = vmul.f32 %v5179, %v3826
        %v5186 = vmul.f32 %v5179, %v3830
        %v5187 = vmul.f32 %v5179, %v3834
        %v5188 = vmul.f32 %v5179, %v3838
        %5197 = vrot.lane.b32.xlu0 %v5181, 95
        %v5198 = vpop.permute.xlu0 %5197
        %5199 = vrot.lane.b32.xlu0 %v5182, 95
        %v5200 = vpop.permute.xlu0 %5199
        %5201 = vrot.lane.b32.xlu0 %v5183, 95
        %v5202 = vpop.permute.xlu0 %5201
        %5203 = vrot.lane.b32.xlu0 %v5184, 95
        %v5204 = vpop.permute.xlu0 %5203
        %5205 = vrot.lane.b32.xlu0 %v5185, 95
        %v5206 = vpop.permute.xlu0 %5205
        %5207 = vrot.lane.b32.xlu0 %v5186, 95
        %v5208 = vpop.permute.xlu0 %5207
        %5209 = vrot.lane.b32.xlu0 %v5187, 95
        %v5210 = vpop.permute.xlu0 %5209
        %5211 = vrot.lane.b32.xlu0 %v5188, 95
        %v5212 = vpop.permute.xlu0 %5211
        %v5213 = vsel %vm2393, %v5198, %v5200
        %v5214 = vsel %vm2393, %v5200, %v5202
        %v5215 = vsel %vm2393, %v5202, %v5204
        %v5216 = vsel %vm2393, %v5204, %v5206
        %v5217 = vsel %vm2393, %v5206, %v5208
        %v5218 = vsel %vm2393, %v5208, %v5210
        %v5219 = vsel %vm2393, %v5210, %v5212
        %v5229 = vadd.f32 %v5167, %v5198
        %v5230 = vadd.f32 %v5168, %v5213
        %v5231 = vadd.f32 %v5169, %v5214
        %v5232 = vadd.f32 %v5170, %v5215
        %v5233 = vadd.f32 %v5171, %v5216
        %v5234 = vadd.f32 %v5172, %v5217
        %v5235 = vadd.f32 %v5173, %v5218
        %v5236 = vadd.f32 %v5174, %v5219
        %v5237 = vadd.f32 %v5175, %v5212
        %5238 = vset.pattern.permute.xlu0 1
        %5239 = vperm.xlu0 %5238, %v3440
        %v5240 = vpop.permute.xlu0 %5239
        %v5242 = vmul.f32 %v5240, %v3908
        %v5243 = vmul.f32 %v5240, %v3912
        %v5244 = vmul.f32 %v5240, %v3916
        %v5245 = vmul.f32 %v5240, %v3920
        %v5246 = vmul.f32 %v5240, %v3924
        %v5247 = vmul.f32 %v5240, %v3928
        %v5248 = vmul.f32 %v5240, %v3932
        %v5249 = vmul.f32 %v5240, %v3936
        %5258 = vrot.lane.b32.xlu0 %v5242, 95
        %v5259 = vpop.permute.xlu0 %5258
        %5260 = vrot.lane.b32.xlu0 %v5243, 95
        %v5261 = vpop.permute.xlu0 %5260
        %5262 = vrot.lane.b32.xlu0 %v5244, 95
        %v5263 = vpop.permute.xlu0 %5262
        %5264 = vrot.lane.b32.xlu0 %v5245, 95
        %v5265 = vpop.permute.xlu0 %5264
        %5266 = vrot.lane.b32.xlu0 %v5246, 95
        %v5267 = vpop.permute.xlu0 %5266
        %5268 = vrot.lane.b32.xlu0 %v5247, 95
        %v5269 = vpop.permute.xlu0 %5268
        %5270 = vrot.lane.b32.xlu0 %v5248, 95
        %v5271 = vpop.permute.xlu0 %5270
        %5272 = vrot.lane.b32.xlu0 %v5249, 95
        %v5273 = vpop.permute.xlu0 %5272
        %v5274 = vsel %vm2393, %v5259, %v5261
        %v5275 = vsel %vm2393, %v5261, %v5263
        %v5276 = vsel %vm2393, %v5263, %v5265
        %v5277 = vsel %vm2393, %v5265, %v5267
        %v5278 = vsel %vm2393, %v5267, %v5269
        %v5279 = vsel %vm2393, %v5269, %v5271
        %v5280 = vsel %vm2393, %v5271, %v5273
        %v5290 = vadd.f32 %v5229, %v5259
        %v5291 = vadd.f32 %v5230, %v5274
        %v5292 = vadd.f32 %v5231, %v5275
        %v5293 = vadd.f32 %v5232, %v5276
        %v5294 = vadd.f32 %v5233, %v5277
        %v5295 = vadd.f32 %v5234, %v5278
        %v5296 = vadd.f32 %v5235, %v5279
        %v5297 = vadd.f32 %v5236, %v5280
        %v5298 = vadd.f32 %v5237, %v5273
        %5299 = vset.pattern.permute.xlu0 2
        %5300 = vperm.xlu0 %5299, %v3440
        %v5301 = vpop.permute.xlu0 %5300
        %v5303 = vmul.f32 %v5301, %v4006
        %v5304 = vmul.f32 %v5301, %v4010
        %v5305 = vmul.f32 %v5301, %v4014
        %v5306 = vmul.f32 %v5301, %v4018
        %v5307 = vmul.f32 %v5301, %v4022
        %v5308 = vmul.f32 %v5301, %v4026
        %v5309 = vmul.f32 %v5301, %v4030
        %v5310 = vmul.f32 %v5301, %v4034
        %5319 = vrot.lane.b32.xlu0 %v5303, 95
        %v5320 = vpop.permute.xlu0 %5319
        %5321 = vrot.lane.b32.xlu0 %v5304, 95
        %v5322 = vpop.permute.xlu0 %5321
        %5323 = vrot.lane.b32.xlu0 %v5305, 95
        %v5324 = vpop.permute.xlu0 %5323
        %5325 = vrot.lane.b32.xlu0 %v5306, 95
        %v5326 = vpop.permute.xlu0 %5325
        %5327 = vrot.lane.b32.xlu0 %v5307, 95
        %v5328 = vpop.permute.xlu0 %5327
        %5329 = vrot.lane.b32.xlu0 %v5308, 95
        %v5330 = vpop.permute.xlu0 %5329
        %5331 = vrot.lane.b32.xlu0 %v5309, 95
        %v5332 = vpop.permute.xlu0 %5331
        %5333 = vrot.lane.b32.xlu0 %v5310, 95
        %v5334 = vpop.permute.xlu0 %5333
        %v5335 = vsel %vm2393, %v5320, %v5322
        %v5336 = vsel %vm2393, %v5322, %v5324
        %v5337 = vsel %vm2393, %v5324, %v5326
        %v5338 = vsel %vm2393, %v5326, %v5328
        %v5339 = vsel %vm2393, %v5328, %v5330
        %v5340 = vsel %vm2393, %v5330, %v5332
        %v5341 = vsel %vm2393, %v5332, %v5334
        %v5351 = vadd.f32 %v5290, %v5320
        %v5352 = vadd.f32 %v5291, %v5335
        %v5353 = vadd.f32 %v5292, %v5336
        %v5354 = vadd.f32 %v5293, %v5337
        %v5355 = vadd.f32 %v5294, %v5338
        %v5356 = vadd.f32 %v5295, %v5339
        %v5357 = vadd.f32 %v5296, %v5340
        %v5358 = vadd.f32 %v5297, %v5341
        %v5359 = vadd.f32 %v5298, %v5334
        %5360 = vset.pattern.permute.xlu0 3
        %5361 = vperm.xlu0 %5360, %v3440
        %v5362 = vpop.permute.xlu0 %5361
        %v5364 = vmul.f32 %v5362, %v4104
        %v5365 = vmul.f32 %v5362, %v4108
        %v5366 = vmul.f32 %v5362, %v4112
        %v5367 = vmul.f32 %v5362, %v4116
        %v5368 = vmul.f32 %v5362, %v4120
        %v5369 = vmul.f32 %v5362, %v4124
        %v5370 = vmul.f32 %v5362, %v4128
        %v5371 = vmul.f32 %v5362, %v4132
        %5380 = vrot.lane.b32.xlu0 %v5364, 95
        %v5381 = vpop.permute.xlu0 %5380
        %5382 = vrot.lane.b32.xlu0 %v5365, 95
        %v5383 = vpop.permute.xlu0 %5382
        %5384 = vrot.lane.b32.xlu0 %v5366, 95
        %v5385 = vpop.permute.xlu0 %5384
        %5386 = vrot.lane.b32.xlu0 %v5367, 95
        %v5387 = vpop.permute.xlu0 %5386
        %5388 = vrot.lane.b32.xlu0 %v5368, 95
        %v5389 = vpop.permute.xlu0 %5388
        %5390 = vrot.lane.b32.xlu0 %v5369, 95
        %v5391 = vpop.permute.xlu0 %5390
        %5392 = vrot.lane.b32.xlu0 %v5370, 95
        %v5393 = vpop.permute.xlu0 %5392
        %5394 = vrot.lane.b32.xlu0 %v5371, 95
        %v5395 = vpop.permute.xlu0 %5394
        %v5396 = vsel %vm2393, %v5381, %v5383
        %v5397 = vsel %vm2393, %v5383, %v5385
        %v5398 = vsel %vm2393, %v5385, %v5387
        %v5399 = vsel %vm2393, %v5387, %v5389
        %v5400 = vsel %vm2393, %v5389, %v5391
        %v5401 = vsel %vm2393, %v5391, %v5393
        %v5402 = vsel %vm2393, %v5393, %v5395
        %v5412 = vadd.f32 %v5351, %v5381
        %v5413 = vadd.f32 %v5352, %v5396
        %v5414 = vadd.f32 %v5353, %v5397
        %v5415 = vadd.f32 %v5354, %v5398
        %v5416 = vadd.f32 %v5355, %v5399
        %v5417 = vadd.f32 %v5356, %v5400
        %v5418 = vadd.f32 %v5357, %v5401
        %v5419 = vadd.f32 %v5358, %v5402
        %v5420 = vadd.f32 %v5359, %v5395
        %5421 = vrot.lane.b32.xlu0 %v4238, 1
        %v5422 = vpop.permute.xlu0 %5421
        %5423 = vrot.lane.b32.xlu0 %v4242, 1
        %v5424 = vpop.permute.xlu0 %5423
        %5425 = vrot.lane.b32.xlu0 %v4246, 1
        %v5426 = vpop.permute.xlu0 %5425
        %5427 = vrot.lane.b32.xlu0 %v4250, 1
        %v5428 = vpop.permute.xlu0 %5427
        %5429 = vrot.lane.b32.xlu0 %v4254, 1
        %v5430 = vpop.permute.xlu0 %5429
        %5431 = vrot.lane.b32.xlu0 %v4258, 1
        %v5432 = vpop.permute.xlu0 %5431
        %5433 = vrot.lane.b32.xlu0 %v4262, 1
        %v5434 = vpop.permute.xlu0 %5433
        %5435 = vrot.lane.b32.xlu0 %v4266, 1
        %v5436 = vpop.permute.xlu0 %5435
        %v5437 = vsel %vm1776, %v5422, %v5424
        %v5438 = vsel %vm1776, %v5424, %v5426
        %v5439 = vsel %vm1776, %v5426, %v5428
        %v5440 = vsel %vm1776, %v5428, %v5430
        %v5441 = vsel %vm1776, %v5430, %v5432
        %v5442 = vsel %vm1776, %v5432, %v5434
        %v5443 = vsel %vm1776, %v5434, %v5436
        %v5453 = vmul.f32 %v3219, %v5422
        %v5454 = vmul.f32 %v3221, %v5437
        %v5455 = vmul.f32 %v3290, %v5438
        %v5456 = vmul.f32 %v3292, %v5439
        %v5457 = vmul.f32 %v3361, %v5440
        %v5458 = vmul.f32 %v3363, %v5441
        %v5459 = vmul.f32 %v3432, %v5442
        %v5460 = vmul.f32 %v3434, %v5443
        %v5461 = vmul.f32 %v5436, 0.0
        %5463 = vset.pattern.permute.xlu0 0
        %5464 = vperm.xlu0 %5463, %v3441
        %v5465 = vpop.permute.xlu0 %5464
        %v5467 = vlaneseq
        %v5468 = vshrl.u32 %v5467, 7
        %v5469 = vsub.s32 0, %v5468
        %v5470 = vrot.slane %v5453, %v5469
        %v5471 = vlaneseq
        %v5472 = vshrl.u32 %v5471, 7
        %v5473 = vsub.s32 0, %v5472
        %v5474 = vrot.slane %v5454, %v5473
        %v5475 = vlaneseq
        %v5476 = vshrl.u32 %v5475, 7
        %v5477 = vsub.s32 0, %v5476
        %v5478 = vrot.slane %v5455, %v5477
        %v5479 = vlaneseq
        %v5480 = vshrl.u32 %v5479, 7
        %v5481 = vsub.s32 0, %v5480
        %v5482 = vrot.slane %v5456, %v5481
        %v5483 = vlaneseq
        %v5484 = vshrl.u32 %v5483, 7
        %v5485 = vsub.s32 0, %v5484
        %v5486 = vrot.slane %v5457, %v5485
        %v5487 = vlaneseq
        %v5488 = vshrl.u32 %v5487, 7
        %v5489 = vsub.s32 0, %v5488
        %v5490 = vrot.slane %v5458, %v5489
        %v5491 = vlaneseq
        %v5492 = vshrl.u32 %v5491, 7
        %v5493 = vsub.s32 0, %v5492
        %v5494 = vrot.slane %v5459, %v5493
        %v5495 = vlaneseq
        %v5496 = vshrl.u32 %v5495, 7
        %v5497 = vsub.s32 0, %v5496
        %v5498 = vrot.slane %v5460, %v5497
        %v5499 = vlaneseq
        %v5500 = vshrl.u32 %v5499, 7
        %v5501 = vsub.s32 0, %v5500
        %v5502 = vrot.slane %v5461, %v5501
        %v5503 = vmul.f32 %v5465, %v5470
        %v5504 = vmul.f32 %v5465, %v5474
        %v5505 = vmul.f32 %v5465, %v5478
        %v5506 = vmul.f32 %v5465, %v5482
        %v5507 = vmul.f32 %v5465, %v5486
        %v5508 = vmul.f32 %v5465, %v5490
        %v5509 = vmul.f32 %v5465, %v5494
        %v5510 = vmul.f32 %v5465, %v5498
        %v5511 = vmul.f32 %v5465, %v5502
        %5521 = vrot.lane.b32.xlu0 %v5503, 94
        %v5522 = vpop.permute.xlu0 %5521
        %5523 = vrot.lane.b32.xlu0 %v5504, 94
        %v5524 = vpop.permute.xlu0 %5523
        %5525 = vrot.lane.b32.xlu0 %v5505, 94
        %v5526 = vpop.permute.xlu0 %5525
        %5527 = vrot.lane.b32.xlu0 %v5506, 94
        %v5528 = vpop.permute.xlu0 %5527
        %5529 = vrot.lane.b32.xlu0 %v5507, 94
        %v5530 = vpop.permute.xlu0 %5529
        %5531 = vrot.lane.b32.xlu0 %v5508, 94
        %v5532 = vpop.permute.xlu0 %5531
        %5533 = vrot.lane.b32.xlu0 %v5509, 94
        %v5534 = vpop.permute.xlu0 %5533
        %5535 = vrot.lane.b32.xlu0 %v5510, 94
        %v5536 = vpop.permute.xlu0 %5535
        %5537 = vrot.lane.b32.xlu0 %v5511, 94
        %v5538 = vpop.permute.xlu0 %5537
        %v5539 = vsel %vm2611, %v5522, %v5524
        %v5540 = vsel %vm2611, %v5524, %v5526
        %v5541 = vsel %vm2611, %v5526, %v5528
        %v5542 = vsel %vm2611, %v5528, %v5530
        %v5543 = vsel %vm2611, %v5530, %v5532
        %v5544 = vsel %vm2611, %v5532, %v5534
        %v5545 = vsel %vm2611, %v5534, %v5536
        %v5546 = vsel %vm2611, %v5536, %v5538
        %v5556 = vadd.f32 %v5412, %v5522
        %v5557 = vadd.f32 %v5413, %v5539
        %v5558 = vadd.f32 %v5414, %v5540
        %v5559 = vadd.f32 %v5415, %v5541
        %v5560 = vadd.f32 %v5416, %v5542
        %v5561 = vadd.f32 %v5417, %v5543
        %v5562 = vadd.f32 %v5418, %v5544
        %v5563 = vadd.f32 %v5419, %v5545
        %v5564 = vadd.f32 %v5420, %v5546
        %5565 = vset.pattern.permute.xlu0 1
        %5566 = vperm.xlu0 %5565, %v3441
        %v5567 = vpop.permute.xlu0 %5566
        %v5569 = vlaneseq
        %v5570 = vshrl.u32 %v5569, 7
        %v5571 = vsub.s32 1, %v5570
        %v5572 = vrot.slane %v5453, %v5571
        %v5573 = vlaneseq
        %v5574 = vshrl.u32 %v5573, 7
        %v5575 = vsub.s32 1, %v5574
        %v5576 = vrot.slane %v5454, %v5575
        %v5577 = vlaneseq
        %v5578 = vshrl.u32 %v5577, 7
        %v5579 = vsub.s32 1, %v5578
        %v5580 = vrot.slane %v5455, %v5579
        %v5581 = vlaneseq
        %v5582 = vshrl.u32 %v5581, 7
        %v5583 = vsub.s32 1, %v5582
        %v5584 = vrot.slane %v5456, %v5583
        %v5585 = vlaneseq
        %v5586 = vshrl.u32 %v5585, 7
        %v5587 = vsub.s32 1, %v5586
        %v5588 = vrot.slane %v5457, %v5587
        %v5589 = vlaneseq
        %v5590 = vshrl.u32 %v5589, 7
        %v5591 = vsub.s32 1, %v5590
        %v5592 = vrot.slane %v5458, %v5591
        %v5593 = vlaneseq
        %v5594 = vshrl.u32 %v5593, 7
        %v5595 = vsub.s32 1, %v5594
        %v5596 = vrot.slane %v5459, %v5595
        %v5597 = vlaneseq
        %v5598 = vshrl.u32 %v5597, 7
        %v5599 = vsub.s32 1, %v5598
        %v5600 = vrot.slane %v5460, %v5599
        %v5601 = vlaneseq
        %v5602 = vshrl.u32 %v5601, 7
        %v5603 = vsub.s32 1, %v5602
        %v5604 = vrot.slane %v5461, %v5603
        %v5605 = vmul.f32 %v5567, %v5572
        %v5606 = vmul.f32 %v5567, %v5576
        %v5607 = vmul.f32 %v5567, %v5580
        %v5608 = vmul.f32 %v5567, %v5584
        %v5609 = vmul.f32 %v5567, %v5588
        %v5610 = vmul.f32 %v5567, %v5592
        %v5611 = vmul.f32 %v5567, %v5596
        %v5612 = vmul.f32 %v5567, %v5600
        %v5613 = vmul.f32 %v5567, %v5604
        %5623 = vrot.lane.b32.xlu0 %v5605, 94
        %v5624 = vpop.permute.xlu0 %5623
        %5625 = vrot.lane.b32.xlu0 %v5606, 94
        %v5626 = vpop.permute.xlu0 %5625
        %5627 = vrot.lane.b32.xlu0 %v5607, 94
        %v5628 = vpop.permute.xlu0 %5627
        %5629 = vrot.lane.b32.xlu0 %v5608, 94
        %v5630 = vpop.permute.xlu0 %5629
        %5631 = vrot.lane.b32.xlu0 %v5609, 94
        %v5632 = vpop.permute.xlu0 %5631
        %5633 = vrot.lane.b32.xlu0 %v5610, 94
        %v5634 = vpop.permute.xlu0 %5633
        %5635 = vrot.lane.b32.xlu0 %v5611, 94
        %v5636 = vpop.permute.xlu0 %5635
        %5637 = vrot.lane.b32.xlu0 %v5612, 94
        %v5638 = vpop.permute.xlu0 %5637
        %5639 = vrot.lane.b32.xlu0 %v5613, 94
        %v5640 = vpop.permute.xlu0 %5639
        %v5641 = vsel %vm2611, %v5624, %v5626
        %v5642 = vsel %vm2611, %v5626, %v5628
        %v5643 = vsel %vm2611, %v5628, %v5630
        %v5644 = vsel %vm2611, %v5630, %v5632
        %v5645 = vsel %vm2611, %v5632, %v5634
        %v5646 = vsel %vm2611, %v5634, %v5636
        %v5647 = vsel %vm2611, %v5636, %v5638
        %v5648 = vsel %vm2611, %v5638, %v5640
        %v5658 = vadd.f32 %v5556, %v5624
        %v5659 = vadd.f32 %v5557, %v5641
        %v5660 = vadd.f32 %v5558, %v5642
        %v5661 = vadd.f32 %v5559, %v5643
        %v5662 = vadd.f32 %v5560, %v5644
        %v5663 = vadd.f32 %v5561, %v5645
        %v5664 = vadd.f32 %v5562, %v5646
        %v5665 = vadd.f32 %v5563, %v5647
        %v5666 = vadd.f32 %v5564, %v5648
        %5667 = vset.pattern.permute.xlu0 2
        %5668 = vperm.xlu0 %5667, %v3441
        %v5669 = vpop.permute.xlu0 %5668
        %v5671 = vlaneseq
        %v5672 = vshrl.u32 %v5671, 7
        %v5673 = vsub.s32 2, %v5672
        %v5674 = vrot.slane %v5453, %v5673
        %v5675 = vlaneseq
        %v5676 = vshrl.u32 %v5675, 7
        %v5677 = vsub.s32 2, %v5676
        %v5678 = vrot.slane %v5454, %v5677
        %v5679 = vlaneseq
        %v5680 = vshrl.u32 %v5679, 7
        %v5681 = vsub.s32 2, %v5680
        %v5682 = vrot.slane %v5455, %v5681
        %v5683 = vlaneseq
        %v5684 = vshrl.u32 %v5683, 7
        %v5685 = vsub.s32 2, %v5684
        %v5686 = vrot.slane %v5456, %v5685
        %v5687 = vlaneseq
        %v5688 = vshrl.u32 %v5687, 7
        %v5689 = vsub.s32 2, %v5688
        %v5690 = vrot.slane %v5457, %v5689
        %v5691 = vlaneseq
        %v5692 = vshrl.u32 %v5691, 7
        %v5693 = vsub.s32 2, %v5692
        %v5694 = vrot.slane %v5458, %v5693
        %v5695 = vlaneseq
        %v5696 = vshrl.u32 %v5695, 7
        %v5697 = vsub.s32 2, %v5696
        %v5698 = vrot.slane %v5459, %v5697
        %v5699 = vlaneseq
        %v5700 = vshrl.u32 %v5699, 7
        %v5701 = vsub.s32 2, %v5700
        %v5702 = vrot.slane %v5460, %v5701
        %v5703 = vlaneseq
        %v5704 = vshrl.u32 %v5703, 7
        %v5705 = vsub.s32 2, %v5704
        %v5706 = vrot.slane %v5461, %v5705
        %v5707 = vmul.f32 %v5669, %v5674
        %v5708 = vmul.f32 %v5669, %v5678
        %v5709 = vmul.f32 %v5669, %v5682
        %v5710 = vmul.f32 %v5669, %v5686
        %v5711 = vmul.f32 %v5669, %v5690
        %v5712 = vmul.f32 %v5669, %v5694
        %v5713 = vmul.f32 %v5669, %v5698
        %v5714 = vmul.f32 %v5669, %v5702
        %v5715 = vmul.f32 %v5669, %v5706
        %5725 = vrot.lane.b32.xlu0 %v5707, 94
        %v5726 = vpop.permute.xlu0 %5725
        %5727 = vrot.lane.b32.xlu0 %v5708, 94
        %v5728 = vpop.permute.xlu0 %5727
        %5729 = vrot.lane.b32.xlu0 %v5709, 94
        %v5730 = vpop.permute.xlu0 %5729
        %5731 = vrot.lane.b32.xlu0 %v5710, 94
        %v5732 = vpop.permute.xlu0 %5731
        %5733 = vrot.lane.b32.xlu0 %v5711, 94
        %v5734 = vpop.permute.xlu0 %5733
        %5735 = vrot.lane.b32.xlu0 %v5712, 94
        %v5736 = vpop.permute.xlu0 %5735
        %5737 = vrot.lane.b32.xlu0 %v5713, 94
        %v5738 = vpop.permute.xlu0 %5737
        %5739 = vrot.lane.b32.xlu0 %v5714, 94
        %v5740 = vpop.permute.xlu0 %5739
        %5741 = vrot.lane.b32.xlu0 %v5715, 94
        %v5742 = vpop.permute.xlu0 %5741
        %v5743 = vsel %vm2611, %v5726, %v5728
        %v5744 = vsel %vm2611, %v5728, %v5730
        %v5745 = vsel %vm2611, %v5730, %v5732
        %v5746 = vsel %vm2611, %v5732, %v5734
        %v5747 = vsel %vm2611, %v5734, %v5736
        %v5748 = vsel %vm2611, %v5736, %v5738
        %v5749 = vsel %vm2611, %v5738, %v5740
        %v5750 = vsel %vm2611, %v5740, %v5742
        %v5760 = vadd.f32 %v5658, %v5726
        %v5761 = vadd.f32 %v5659, %v5743
        %v5762 = vadd.f32 %v5660, %v5744
        %v5763 = vadd.f32 %v5661, %v5745
        %v5764 = vadd.f32 %v5662, %v5746
        %v5765 = vadd.f32 %v5663, %v5747
        %v5766 = vadd.f32 %v5664, %v5748
        %v5767 = vadd.f32 %v5665, %v5749
        %v5768 = vadd.f32 %v5666, %v5750
        %5769 = vset.pattern.permute.xlu0 3
        %5770 = vperm.xlu0 %5769, %v3441
        %v5771 = vpop.permute.xlu0 %5770
        %v5773 = vlaneseq
        %v5774 = vshrl.u32 %v5773, 7
        %v5775 = vsub.s32 3, %v5774
        %v5776 = vrot.slane %v5453, %v5775
        %v5777 = vlaneseq
        %v5778 = vshrl.u32 %v5777, 7
        %v5779 = vsub.s32 3, %v5778
        %v5780 = vrot.slane %v5454, %v5779
        %v5781 = vlaneseq
        %v5782 = vshrl.u32 %v5781, 7
        %v5783 = vsub.s32 3, %v5782
        %v5784 = vrot.slane %v5455, %v5783
        %v5785 = vlaneseq
        %v5786 = vshrl.u32 %v5785, 7
        %v5787 = vsub.s32 3, %v5786
        %v5788 = vrot.slane %v5456, %v5787
        %v5789 = vlaneseq
        %v5790 = vshrl.u32 %v5789, 7
        %v5791 = vsub.s32 3, %v5790
        %v5792 = vrot.slane %v5457, %v5791
        %v5793 = vlaneseq
        %v5794 = vshrl.u32 %v5793, 7
        %v5795 = vsub.s32 3, %v5794
        %v5796 = vrot.slane %v5458, %v5795
        %v5797 = vlaneseq
        %v5798 = vshrl.u32 %v5797, 7
        %v5799 = vsub.s32 3, %v5798
        %v5800 = vrot.slane %v5459, %v5799
        %v5801 = vlaneseq
        %v5802 = vshrl.u32 %v5801, 7
        %v5803 = vsub.s32 3, %v5802
        %v5804 = vrot.slane %v5460, %v5803
        %v5805 = vlaneseq
        %v5806 = vshrl.u32 %v5805, 7
        %v5807 = vsub.s32 3, %v5806
        %v5808 = vrot.slane %v5461, %v5807
        %v5809 = vmul.f32 %v5771, %v5776
        %v5810 = vmul.f32 %v5771, %v5780
        %v5811 = vmul.f32 %v5771, %v5784
        %v5812 = vmul.f32 %v5771, %v5788
        %v5813 = vmul.f32 %v5771, %v5792
        %v5814 = vmul.f32 %v5771, %v5796
        %v5815 = vmul.f32 %v5771, %v5800
        %v5816 = vmul.f32 %v5771, %v5804
        %v5817 = vmul.f32 %v5771, %v5808
        %5827 = vrot.lane.b32.xlu0 %v5809, 94
        %v5828 = vpop.permute.xlu0 %5827
        %5829 = vrot.lane.b32.xlu0 %v5810, 94
        %v5830 = vpop.permute.xlu0 %5829
        %5831 = vrot.lane.b32.xlu0 %v5811, 94
        %v5832 = vpop.permute.xlu0 %5831
        %5833 = vrot.lane.b32.xlu0 %v5812, 94
        %v5834 = vpop.permute.xlu0 %5833
        %5835 = vrot.lane.b32.xlu0 %v5813, 94
        %v5836 = vpop.permute.xlu0 %5835
        %5837 = vrot.lane.b32.xlu0 %v5814, 94
        %v5838 = vpop.permute.xlu0 %5837
        %5839 = vrot.lane.b32.xlu0 %v5815, 94
        %v5840 = vpop.permute.xlu0 %5839
        %5841 = vrot.lane.b32.xlu0 %v5816, 94
        %v5842 = vpop.permute.xlu0 %5841
        %5843 = vrot.lane.b32.xlu0 %v5817, 94
        %v5844 = vpop.permute.xlu0 %5843
        %v5845 = vsel %vm2611, %v5828, %v5830
        %v5846 = vsel %vm2611, %v5830, %v5832
        %v5847 = vsel %vm2611, %v5832, %v5834
        %v5848 = vsel %vm2611, %v5834, %v5836
        %v5849 = vsel %vm2611, %v5836, %v5838
        %v5850 = vsel %vm2611, %v5838, %v5840
        %v5851 = vsel %vm2611, %v5840, %v5842
        %v5852 = vsel %vm2611, %v5842, %v5844
        %v5862 = vadd.f32 %v5760, %v5828
        %v5863 = vadd.f32 %v5761, %v5845
        %v5864 = vadd.f32 %v5762, %v5846
        %v5865 = vadd.f32 %v5763, %v5847
        %v5866 = vadd.f32 %v5764, %v5848
        %v5867 = vadd.f32 %v5765, %v5849
        %v5868 = vadd.f32 %v5766, %v5850
        %v5869 = vadd.f32 %v5767, %v5851
        %v5870 = vadd.f32 %v5768, %v5852
        %5871 = vrot.lane.b32.xlu0 %v3491, 31
        %v5872 = vpop.permute.xlu0 %5871
        %5873 = vrot.lane.b32.xlu0 %v3495, 31
        %v5874 = vpop.permute.xlu0 %5873
        %5875 = vrot.lane.b32.xlu0 %v3499, 31
        %v5876 = vpop.permute.xlu0 %5875
        %5877 = vrot.lane.b32.xlu0 %v3503, 31
        %v5878 = vpop.permute.xlu0 %5877
        %5879 = vrot.lane.b32.xlu0 %v3507, 31
        %v5880 = vpop.permute.xlu0 %5879
        %5881 = vrot.lane.b32.xlu0 %v3511, 31
        %v5882 = vpop.permute.xlu0 %5881
        %5883 = vrot.lane.b32.xlu0 %v3515, 31
        %v5884 = vpop.permute.xlu0 %5883
        %5885 = vrot.lane.b32.xlu0 %v3519, 31
        %v5886 = vpop.permute.xlu0 %5885
        %vm5887 = vcmask 252928
        %v5888 = vsel %vm5887, %v5872, %v5874
        %v5889 = vsel %vm5887, %v5874, %v5876
        %v5890 = vsel %vm5887, %v5876, %v5878
        %v5891 = vsel %vm5887, %v5878, %v5880
        %v5892 = vsel %vm5887, %v5880, %v5882
        %v5893 = vsel %vm5887, %v5882, %v5884
        %v5894 = vsel %vm5887, %v5884, %v5886
        %v5904 = vmul.f32 %v3219, %v5872
        %v5905 = vmul.f32 %v3221, %v5888
        %v5906 = vmul.f32 %v3290, %v5889
        %v5907 = vmul.f32 %v3292, %v5890
        %v5908 = vmul.f32 %v3361, %v5891
        %v5909 = vmul.f32 %v3363, %v5892
        %v5910 = vmul.f32 %v3432, %v5893
        %v5911 = vmul.f32 %v3434, %v5894
        %v5912 = vmul.f32 %v5886, 0.0
        %5914 = vset.pattern.permute.xlu0 0
        %5915 = vperm.xlu0 %5914, %v3442
        %v5916 = vpop.permute.xlu0 %5915
        %v5918 = vlaneseq
        %v5919 = vshrl.u32 %v5918, 7
        %v5920 = vsub.s32 0, %v5919
        %v5921 = vrot.slane %v5904, %v5920
        %v5922 = vlaneseq
        %v5923 = vshrl.u32 %v5922, 7
        %v5924 = vsub.s32 0, %v5923
        %v5925 = vrot.slane %v5905, %v5924
        %v5926 = vlaneseq
        %v5927 = vshrl.u32 %v5926, 7
        %v5928 = vsub.s32 0, %v5927
        %v5929 = vrot.slane %v5906, %v5928
        %v5930 = vlaneseq
        %v5931 = vshrl.u32 %v5930, 7
        %v5932 = vsub.s32 0, %v5931
        %v5933 = vrot.slane %v5907, %v5932
        %v5934 = vlaneseq
        %v5935 = vshrl.u32 %v5934, 7
        %v5936 = vsub.s32 0, %v5935
        %v5937 = vrot.slane %v5908, %v5936
        %v5938 = vlaneseq
        %v5939 = vshrl.u32 %v5938, 7
        %v5940 = vsub.s32 0, %v5939
        %v5941 = vrot.slane %v5909, %v5940
        %v5942 = vlaneseq
        %v5943 = vshrl.u32 %v5942, 7
        %v5944 = vsub.s32 0, %v5943
        %v5945 = vrot.slane %v5910, %v5944
        %v5946 = vlaneseq
        %v5947 = vshrl.u32 %v5946, 7
        %v5948 = vsub.s32 0, %v5947
        %v5949 = vrot.slane %v5911, %v5948
        %v5950 = vlaneseq
        %v5951 = vshrl.u32 %v5950, 7
        %v5952 = vsub.s32 0, %v5951
        %v5953 = vrot.slane %v5912, %v5952
        %v5954 = vmul.f32 %v5916, %v5921
        %v5955 = vmul.f32 %v5916, %v5925
        %v5956 = vmul.f32 %v5916, %v5929
        %v5957 = vmul.f32 %v5916, %v5933
        %v5958 = vmul.f32 %v5916, %v5937
        %v5959 = vmul.f32 %v5916, %v5941
        %v5960 = vmul.f32 %v5916, %v5945
        %v5961 = vmul.f32 %v5916, %v5949
        %v5962 = vmul.f32 %v5916, %v5953
        %5972 = vrot.lane.b32.xlu0 %v5954, 64
        %v5973 = vpop.permute.xlu0 %5972
        %5974 = vrot.lane.b32.xlu0 %v5955, 64
        %v5975 = vpop.permute.xlu0 %5974
        %5976 = vrot.lane.b32.xlu0 %v5956, 64
        %v5977 = vpop.permute.xlu0 %5976
        %5978 = vrot.lane.b32.xlu0 %v5957, 64
        %v5979 = vpop.permute.xlu0 %5978
        %5980 = vrot.lane.b32.xlu0 %v5958, 64
        %v5981 = vpop.permute.xlu0 %5980
        %5982 = vrot.lane.b32.xlu0 %v5959, 64
        %v5983 = vpop.permute.xlu0 %5982
        %5984 = vrot.lane.b32.xlu0 %v5960, 64
        %v5985 = vpop.permute.xlu0 %5984
        %5986 = vrot.lane.b32.xlu0 %v5961, 64
        %v5987 = vpop.permute.xlu0 %5986
        %5988 = vrot.lane.b32.xlu0 %v5962, 64
        %v5989 = vpop.permute.xlu0 %5988
        %v5990 = vsel %vm419, %v5973, %v5975
        %v5991 = vsel %vm419, %v5975, %v5977
        %v5992 = vsel %vm419, %v5977, %v5979
        %v5993 = vsel %vm419, %v5979, %v5981
        %v5994 = vsel %vm419, %v5981, %v5983
        %v5995 = vsel %vm419, %v5983, %v5985
        %v5996 = vsel %vm419, %v5985, %v5987
        %v5997 = vsel %vm419, %v5987, %v5989
        %v6007 = vadd.f32 %v5862, %v5973
        %v6008 = vadd.f32 %v5863, %v5990
        %v6009 = vadd.f32 %v5864, %v5991
        %v6010 = vadd.f32 %v5865, %v5992
        %v6011 = vadd.f32 %v5866, %v5993
        %v6012 = vadd.f32 %v5867, %v5994
        %v6013 = vadd.f32 %v5868, %v5995
        %v6014 = vadd.f32 %v5869, %v5996
        %v6015 = vadd.f32 %v5870, %v5997
        %6016 = vset.pattern.permute.xlu0 1
        %6017 = vperm.xlu0 %6016, %v3442
        %v6018 = vpop.permute.xlu0 %6017
        %v6020 = vlaneseq
        %v6021 = vshrl.u32 %v6020, 7
        %v6022 = vsub.s32 1, %v6021
        %v6023 = vrot.slane %v5904, %v6022
        %v6024 = vlaneseq
        %v6025 = vshrl.u32 %v6024, 7
        %v6026 = vsub.s32 1, %v6025
        %v6027 = vrot.slane %v5905, %v6026
        %v6028 = vlaneseq
        %v6029 = vshrl.u32 %v6028, 7
        %v6030 = vsub.s32 1, %v6029
        %v6031 = vrot.slane %v5906, %v6030
        %v6032 = vlaneseq
        %v6033 = vshrl.u32 %v6032, 7
        %v6034 = vsub.s32 1, %v6033
        %v6035 = vrot.slane %v5907, %v6034
        %v6036 = vlaneseq
        %v6037 = vshrl.u32 %v6036, 7
        %v6038 = vsub.s32 1, %v6037
        %v6039 = vrot.slane %v5908, %v6038
        %v6040 = vlaneseq
        %v6041 = vshrl.u32 %v6040, 7
        %v6042 = vsub.s32 1, %v6041
        %v6043 = vrot.slane %v5909, %v6042
        %v6044 = vlaneseq
        %v6045 = vshrl.u32 %v6044, 7
        %v6046 = vsub.s32 1, %v6045
        %v6047 = vrot.slane %v5910, %v6046
        %v6048 = vlaneseq
        %v6049 = vshrl.u32 %v6048, 7
        %v6050 = vsub.s32 1, %v6049
        %v6051 = vrot.slane %v5911, %v6050
        %v6052 = vlaneseq
        %v6053 = vshrl.u32 %v6052, 7
        %v6054 = vsub.s32 1, %v6053
        %v6055 = vrot.slane %v5912, %v6054
        %v6056 = vmul.f32 %v6018, %v6023
        %v6057 = vmul.f32 %v6018, %v6027
        %v6058 = vmul.f32 %v6018, %v6031
        %v6059 = vmul.f32 %v6018, %v6035
        %v6060 = vmul.f32 %v6018, %v6039
        %v6061 = vmul.f32 %v6018, %v6043
        %v6062 = vmul.f32 %v6018, %v6047
        %v6063 = vmul.f32 %v6018, %v6051
        %v6064 = vmul.f32 %v6018, %v6055
        %6074 = vrot.lane.b32.xlu0 %v6056, 64
        %v6075 = vpop.permute.xlu0 %6074
        %6076 = vrot.lane.b32.xlu0 %v6057, 64
        %v6077 = vpop.permute.xlu0 %6076
        %6078 = vrot.lane.b32.xlu0 %v6058, 64
        %v6079 = vpop.permute.xlu0 %6078
        %6080 = vrot.lane.b32.xlu0 %v6059, 64
        %v6081 = vpop.permute.xlu0 %6080
        %6082 = vrot.lane.b32.xlu0 %v6060, 64
        %v6083 = vpop.permute.xlu0 %6082
        %6084 = vrot.lane.b32.xlu0 %v6061, 64
        %v6085 = vpop.permute.xlu0 %6084
        %6086 = vrot.lane.b32.xlu0 %v6062, 64
        %v6087 = vpop.permute.xlu0 %6086
        %6088 = vrot.lane.b32.xlu0 %v6063, 64
        %v6089 = vpop.permute.xlu0 %6088
        %6090 = vrot.lane.b32.xlu0 %v6064, 64
        %v6091 = vpop.permute.xlu0 %6090
        %v6092 = vsel %vm419, %v6075, %v6077
        %v6093 = vsel %vm419, %v6077, %v6079
        %v6094 = vsel %vm419, %v6079, %v6081
        %v6095 = vsel %vm419, %v6081, %v6083
        %v6096 = vsel %vm419, %v6083, %v6085
        %v6097 = vsel %vm419, %v6085, %v6087
        %v6098 = vsel %vm419, %v6087, %v6089
        %v6099 = vsel %vm419, %v6089, %v6091
        %v6109 = vadd.f32 %v6007, %v6075
        %v6110 = vadd.f32 %v6008, %v6092
        %v6111 = vadd.f32 %v6009, %v6093
        %v6112 = vadd.f32 %v6010, %v6094
        %v6113 = vadd.f32 %v6011, %v6095
        %v6114 = vadd.f32 %v6012, %v6096
        %v6115 = vadd.f32 %v6013, %v6097
        %v6116 = vadd.f32 %v6014, %v6098
        %v6117 = vadd.f32 %v6015, %v6099
        %6118 = vset.pattern.permute.xlu0 2
        %6119 = vperm.xlu0 %6118, %v3442
        %v6120 = vpop.permute.xlu0 %6119
        %v6122 = vlaneseq
        %v6123 = vshrl.u32 %v6122, 7
        %v6124 = vsub.s32 2, %v6123
        %v6125 = vrot.slane %v5904, %v6124
        %v6126 = vlaneseq
        %v6127 = vshrl.u32 %v6126, 7
        %v6128 = vsub.s32 2, %v6127
        %v6129 = vrot.slane %v5905, %v6128
        %v6130 = vlaneseq
        %v6131 = vshrl.u32 %v6130, 7
        %v6132 = vsub.s32 2, %v6131
        %v6133 = vrot.slane %v5906, %v6132
        %v6134 = vlaneseq
        %v6135 = vshrl.u32 %v6134, 7
        %v6136 = vsub.s32 2, %v6135
        %v6137 = vrot.slane %v5907, %v6136
        %v6138 = vlaneseq
        %v6139 = vshrl.u32 %v6138, 7
        %v6140 = vsub.s32 2, %v6139
        %v6141 = vrot.slane %v5908, %v6140
        %v6142 = vlaneseq
        %v6143 = vshrl.u32 %v6142, 7
        %v6144 = vsub.s32 2, %v6143
        %v6145 = vrot.slane %v5909, %v6144
        %v6146 = vlaneseq
        %v6147 = vshrl.u32 %v6146, 7
        %v6148 = vsub.s32 2, %v6147
        %v6149 = vrot.slane %v5910, %v6148
        %v6150 = vlaneseq
        %v6151 = vshrl.u32 %v6150, 7
        %v6152 = vsub.s32 2, %v6151
        %v6153 = vrot.slane %v5911, %v6152
        %v6154 = vlaneseq
        %v6155 = vshrl.u32 %v6154, 7
        %v6156 = vsub.s32 2, %v6155
        %v6157 = vrot.slane %v5912, %v6156
        %v6158 = vmul.f32 %v6120, %v6125
        %v6159 = vmul.f32 %v6120, %v6129
        %v6160 = vmul.f32 %v6120, %v6133
        %v6161 = vmul.f32 %v6120, %v6137
        %v6162 = vmul.f32 %v6120, %v6141
        %v6163 = vmul.f32 %v6120, %v6145
        %v6164 = vmul.f32 %v6120, %v6149
        %v6165 = vmul.f32 %v6120, %v6153
        %v6166 = vmul.f32 %v6120, %v6157
        %6176 = vrot.lane.b32.xlu0 %v6158, 64
        %v6177 = vpop.permute.xlu0 %6176
        %6178 = vrot.lane.b32.xlu0 %v6159, 64
        %v6179 = vpop.permute.xlu0 %6178
        %6180 = vrot.lane.b32.xlu0 %v6160, 64
        %v6181 = vpop.permute.xlu0 %6180
        %6182 = vrot.lane.b32.xlu0 %v6161, 64
        %v6183 = vpop.permute.xlu0 %6182
        %6184 = vrot.lane.b32.xlu0 %v6162, 64
        %v6185 = vpop.permute.xlu0 %6184
        %6186 = vrot.lane.b32.xlu0 %v6163, 64
        %v6187 = vpop.permute.xlu0 %6186
        %6188 = vrot.lane.b32.xlu0 %v6164, 64
        %v6189 = vpop.permute.xlu0 %6188
        %6190 = vrot.lane.b32.xlu0 %v6165, 64
        %v6191 = vpop.permute.xlu0 %6190
        %6192 = vrot.lane.b32.xlu0 %v6166, 64
        %v6193 = vpop.permute.xlu0 %6192
        %v6194 = vsel %vm419, %v6177, %v6179
        %v6195 = vsel %vm419, %v6179, %v6181
        %v6196 = vsel %vm419, %v6181, %v6183
        %v6197 = vsel %vm419, %v6183, %v6185
        %v6198 = vsel %vm419, %v6185, %v6187
        %v6199 = vsel %vm419, %v6187, %v6189
        %v6200 = vsel %vm419, %v6189, %v6191
        %v6201 = vsel %vm419, %v6191, %v6193
        %v6211 = vadd.f32 %v6109, %v6177
        %v6212 = vadd.f32 %v6110, %v6194
        %v6213 = vadd.f32 %v6111, %v6195
        %v6214 = vadd.f32 %v6112, %v6196
        %v6215 = vadd.f32 %v6113, %v6197
        %v6216 = vadd.f32 %v6114, %v6198
        %v6217 = vadd.f32 %v6115, %v6199
        %v6218 = vadd.f32 %v6116, %v6200
        %v6219 = vadd.f32 %v6117, %v6201
        %6220 = vset.pattern.permute.xlu0 3
        %6221 = vperm.xlu0 %6220, %v3442
        %v6222 = vpop.permute.xlu0 %6221
        %v6224 = vlaneseq
        %v6225 = vshrl.u32 %v6224, 7
        %v6226 = vsub.s32 3, %v6225
        %v6227 = vrot.slane %v5904, %v6226
        %v6228 = vlaneseq
        %v6229 = vshrl.u32 %v6228, 7
        %v6230 = vsub.s32 3, %v6229
        %v6231 = vrot.slane %v5905, %v6230
        %v6232 = vlaneseq
        %v6233 = vshrl.u32 %v6232, 7
        %v6234 = vsub.s32 3, %v6233
        %v6235 = vrot.slane %v5906, %v6234
        %v6236 = vlaneseq
        %v6237 = vshrl.u32 %v6236, 7
        %v6238 = vsub.s32 3, %v6237
        %v6239 = vrot.slane %v5907, %v6238
        %v6240 = vlaneseq
        %v6241 = vshrl.u32 %v6240, 7
        %v6242 = vsub.s32 3, %v6241
        %v6243 = vrot.slane %v5908, %v6242
        %v6244 = vlaneseq
        %v6245 = vshrl.u32 %v6244, 7
        %v6246 = vsub.s32 3, %v6245
        %v6247 = vrot.slane %v5909, %v6246
        %v6248 = vlaneseq
        %v6249 = vshrl.u32 %v6248, 7
        %v6250 = vsub.s32 3, %v6249
        %v6251 = vrot.slane %v5910, %v6250
        %v6252 = vlaneseq
        %v6253 = vshrl.u32 %v6252, 7
        %v6254 = vsub.s32 3, %v6253
        %v6255 = vrot.slane %v5911, %v6254
        %v6256 = vlaneseq
        %v6257 = vshrl.u32 %v6256, 7
        %v6258 = vsub.s32 3, %v6257
        %v6259 = vrot.slane %v5912, %v6258
        %v6260 = vmul.f32 %v6222, %v6227
        %v6261 = vmul.f32 %v6222, %v6231
        %v6262 = vmul.f32 %v6222, %v6235
        %v6263 = vmul.f32 %v6222, %v6239
        %v6264 = vmul.f32 %v6222, %v6243
        %v6265 = vmul.f32 %v6222, %v6247
        %v6266 = vmul.f32 %v6222, %v6251
        %v6267 = vmul.f32 %v6222, %v6255
        %v6268 = vmul.f32 %v6222, %v6259
        %6278 = vrot.lane.b32.xlu0 %v6260, 64
        %v6279 = vpop.permute.xlu0 %6278
        %6280 = vrot.lane.b32.xlu0 %v6261, 64
        %v6281 = vpop.permute.xlu0 %6280
        %6282 = vrot.lane.b32.xlu0 %v6262, 64
        %v6283 = vpop.permute.xlu0 %6282
        %6284 = vrot.lane.b32.xlu0 %v6263, 64
        %v6285 = vpop.permute.xlu0 %6284
        %6286 = vrot.lane.b32.xlu0 %v6264, 64
        %v6287 = vpop.permute.xlu0 %6286
        %6288 = vrot.lane.b32.xlu0 %v6265, 64
        %v6289 = vpop.permute.xlu0 %6288
        %6290 = vrot.lane.b32.xlu0 %v6266, 64
        %v6291 = vpop.permute.xlu0 %6290
        %6292 = vrot.lane.b32.xlu0 %v6267, 64
        %v6293 = vpop.permute.xlu0 %6292
        %6294 = vrot.lane.b32.xlu0 %v6268, 64
        %v6295 = vpop.permute.xlu0 %6294
        %v6296 = vsel %vm419, %v6279, %v6281
        %v6297 = vsel %vm419, %v6281, %v6283
        %v6298 = vsel %vm419, %v6283, %v6285
        %v6299 = vsel %vm419, %v6285, %v6287
        %v6300 = vsel %vm419, %v6287, %v6289
        %v6301 = vsel %vm419, %v6289, %v6291
        %v6302 = vsel %vm419, %v6291, %v6293
        %v6303 = vsel %vm419, %v6293, %v6295
        %v6313 = vadd.f32 %v6211, %v6279
        %v6314 = vadd.f32 %v6212, %v6296
        %v6315 = vadd.f32 %v6213, %v6297
        %v6316 = vadd.f32 %v6214, %v6298
        %v6317 = vadd.f32 %v6215, %v6299
        %v6318 = vadd.f32 %v6216, %v6300
        %v6319 = vadd.f32 %v6217, %v6301
        %v6320 = vadd.f32 %v6218, %v6302
        %v6321 = vadd.f32 %v6219, %v6303
        %6323 = vset.pattern.permute.xlu0 0
        %6324 = vperm.xlu0 %6323, %v3443
        %v6325 = vpop.permute.xlu0 %6324
        %v6327 = vmul.f32 %v6325, %v3810
        %v6328 = vmul.f32 %v6325, %v3814
        %v6329 = vmul.f32 %v6325, %v3818
        %v6330 = vmul.f32 %v6325, %v3822
        %v6331 = vmul.f32 %v6325, %v3826
        %v6332 = vmul.f32 %v6325, %v3830
        %v6333 = vmul.f32 %v6325, %v3834
        %v6334 = vmul.f32 %v6325, %v3838
        %v6335 = vmul.f32 %v6325, 0.0
        %6345 = vrot.lane.b32.xlu0 %v6327, 63
        %v6346 = vpop.permute.xlu0 %6345
        %6347 = vrot.lane.b32.xlu0 %v6328, 63
        %v6348 = vpop.permute.xlu0 %6347
        %6349 = vrot.lane.b32.xlu0 %v6329, 63
        %v6350 = vpop.permute.xlu0 %6349
        %6351 = vrot.lane.b32.xlu0 %v6330, 63
        %v6352 = vpop.permute.xlu0 %6351
        %6353 = vrot.lane.b32.xlu0 %v6331, 63
        %v6354 = vpop.permute.xlu0 %6353
        %6355 = vrot.lane.b32.xlu0 %v6332, 63
        %v6356 = vpop.permute.xlu0 %6355
        %6357 = vrot.lane.b32.xlu0 %v6333, 63
        %v6358 = vpop.permute.xlu0 %6357
        %6359 = vrot.lane.b32.xlu0 %v6334, 63
        %v6360 = vpop.permute.xlu0 %6359
        %6361 = vrot.lane.b32.xlu0 %v6335, 63
        %v6362 = vpop.permute.xlu0 %6361
        %vm6363 = vcmask 515072
        %v6364 = vsel %vm6363, %v6346, %v6348
        %v6365 = vsel %vm6363, %v6348, %v6350
        %v6366 = vsel %vm6363, %v6350, %v6352
        %v6367 = vsel %vm6363, %v6352, %v6354
        %v6368 = vsel %vm6363, %v6354, %v6356
        %v6369 = vsel %vm6363, %v6356, %v6358
        %v6370 = vsel %vm6363, %v6358, %v6360
        %v6371 = vsel %vm6363, %v6360, %v6362
        %v6381 = vadd.f32 %v6313, %v6346
        %v6382 = vadd.f32 %v6314, %v6364
        %v6383 = vadd.f32 %v6315, %v6365
        %v6384 = vadd.f32 %v6316, %v6366
        %v6385 = vadd.f32 %v6317, %v6367
        %v6386 = vadd.f32 %v6318, %v6368
        %v6387 = vadd.f32 %v6319, %v6369
        %v6388 = vadd.f32 %v6320, %v6370
        %v6389 = vadd.f32 %v6321, %v6371
        %6390 = vset.pattern.permute.xlu0 1
        %6391 = vperm.xlu0 %6390, %v3443
        %v6392 = vpop.permute.xlu0 %6391
        %v6394 = vmul.f32 %v6392, %v3908
        %v6395 = vmul.f32 %v6392, %v3912
        %v6396 = vmul.f32 %v6392, %v3916
        %v6397 = vmul.f32 %v6392, %v3920
        %v6398 = vmul.f32 %v6392, %v3924
        %v6399 = vmul.f32 %v6392, %v3928
        %v6400 = vmul.f32 %v6392, %v3932
        %v6401 = vmul.f32 %v6392, %v3936
        %v6402 = vmul.f32 %v6392, 0.0
        %6412 = vrot.lane.b32.xlu0 %v6394, 63
        %v6413 = vpop.permute.xlu0 %6412
        %6414 = vrot.lane.b32.xlu0 %v6395, 63
        %v6415 = vpop.permute.xlu0 %6414
        %6416 = vrot.lane.b32.xlu0 %v6396, 63
        %v6417 = vpop.permute.xlu0 %6416
        %6418 = vrot.lane.b32.xlu0 %v6397, 63
        %v6419 = vpop.permute.xlu0 %6418
        %6420 = vrot.lane.b32.xlu0 %v6398, 63
        %v6421 = vpop.permute.xlu0 %6420
        %6422 = vrot.lane.b32.xlu0 %v6399, 63
        %v6423 = vpop.permute.xlu0 %6422
        %6424 = vrot.lane.b32.xlu0 %v6400, 63
        %v6425 = vpop.permute.xlu0 %6424
        %6426 = vrot.lane.b32.xlu0 %v6401, 63
        %v6427 = vpop.permute.xlu0 %6426
        %6428 = vrot.lane.b32.xlu0 %v6402, 63
        %v6429 = vpop.permute.xlu0 %6428
        %v6430 = vsel %vm6363, %v6413, %v6415
        %v6431 = vsel %vm6363, %v6415, %v6417
        %v6432 = vsel %vm6363, %v6417, %v6419
        %v6433 = vsel %vm6363, %v6419, %v6421
        %v6434 = vsel %vm6363, %v6421, %v6423
        %v6435 = vsel %vm6363, %v6423, %v6425
        %v6436 = vsel %vm6363, %v6425, %v6427
        %v6437 = vsel %vm6363, %v6427, %v6429
        %v6447 = vadd.f32 %v6381, %v6413
        %v6448 = vadd.f32 %v6382, %v6430
        %v6449 = vadd.f32 %v6383, %v6431
        %v6450 = vadd.f32 %v6384, %v6432
        %v6451 = vadd.f32 %v6385, %v6433
        %v6452 = vadd.f32 %v6386, %v6434
        %v6453 = vadd.f32 %v6387, %v6435
        %v6454 = vadd.f32 %v6388, %v6436
        %v6455 = vadd.f32 %v6389, %v6437
        %6456 = vset.pattern.permute.xlu0 2
        %6457 = vperm.xlu0 %6456, %v3443
        %v6458 = vpop.permute.xlu0 %6457
        %v6460 = vmul.f32 %v6458, %v4006
        %v6461 = vmul.f32 %v6458, %v4010
        %v6462 = vmul.f32 %v6458, %v4014
        %v6463 = vmul.f32 %v6458, %v4018
        %v6464 = vmul.f32 %v6458, %v4022
        %v6465 = vmul.f32 %v6458, %v4026
        %v6466 = vmul.f32 %v6458, %v4030
        %v6467 = vmul.f32 %v6458, %v4034
        %v6468 = vmul.f32 %v6458, 0.0
        %6478 = vrot.lane.b32.xlu0 %v6460, 63
        %v6479 = vpop.permute.xlu0 %6478
        %6480 = vrot.lane.b32.xlu0 %v6461, 63
        %v6481 = vpop.permute.xlu0 %6480
        %6482 = vrot.lane.b32.xlu0 %v6462, 63
        %v6483 = vpop.permute.xlu0 %6482
        %6484 = vrot.lane.b32.xlu0 %v6463, 63
        %v6485 = vpop.permute.xlu0 %6484
        %6486 = vrot.lane.b32.xlu0 %v6464, 63
        %v6487 = vpop.permute.xlu0 %6486
        %6488 = vrot.lane.b32.xlu0 %v6465, 63
        %v6489 = vpop.permute.xlu0 %6488
        %6490 = vrot.lane.b32.xlu0 %v6466, 63
        %v6491 = vpop.permute.xlu0 %6490
        %6492 = vrot.lane.b32.xlu0 %v6467, 63
        %v6493 = vpop.permute.xlu0 %6492
        %6494 = vrot.lane.b32.xlu0 %v6468, 63
        %v6495 = vpop.permute.xlu0 %6494
        %v6496 = vsel %vm6363, %v6479, %v6481
        %v6497 = vsel %vm6363, %v6481, %v6483
        %v6498 = vsel %vm6363, %v6483, %v6485
        %v6499 = vsel %vm6363, %v6485, %v6487
        %v6500 = vsel %vm6363, %v6487, %v6489
        %v6501 = vsel %vm6363, %v6489, %v6491
        %v6502 = vsel %vm6363, %v6491, %v6493
        %v6503 = vsel %vm6363, %v6493, %v6495
        %v6513 = vadd.f32 %v6447, %v6479
        %v6514 = vadd.f32 %v6448, %v6496
        %v6515 = vadd.f32 %v6449, %v6497
        %v6516 = vadd.f32 %v6450, %v6498
        %v6517 = vadd.f32 %v6451, %v6499
        %v6518 = vadd.f32 %v6452, %v6500
        %v6519 = vadd.f32 %v6453, %v6501
        %v6520 = vadd.f32 %v6454, %v6502
        %v6521 = vadd.f32 %v6455, %v6503
        %6522 = vset.pattern.permute.xlu0 3
        %6523 = vperm.xlu0 %6522, %v3443
        %v6524 = vpop.permute.xlu0 %6523
        %v6526 = vmul.f32 %v6524, %v4104
        %v6527 = vmul.f32 %v6524, %v4108
        %v6528 = vmul.f32 %v6524, %v4112
        %v6529 = vmul.f32 %v6524, %v4116
        %v6530 = vmul.f32 %v6524, %v4120
        %v6531 = vmul.f32 %v6524, %v4124
        %v6532 = vmul.f32 %v6524, %v4128
        %v6533 = vmul.f32 %v6524, %v4132
        %v6534 = vmul.f32 %v6524, 0.0
        %6544 = vrot.lane.b32.xlu0 %v6526, 63
        %v6545 = vpop.permute.xlu0 %6544
        %6546 = vrot.lane.b32.xlu0 %v6527, 63
        %v6547 = vpop.permute.xlu0 %6546
        %6548 = vrot.lane.b32.xlu0 %v6528, 63
        %v6549 = vpop.permute.xlu0 %6548
        %6550 = vrot.lane.b32.xlu0 %v6529, 63
        %v6551 = vpop.permute.xlu0 %6550
        %6552 = vrot.lane.b32.xlu0 %v6530, 63
        %v6553 = vpop.permute.xlu0 %6552
        %6554 = vrot.lane.b32.xlu0 %v6531, 63
        %v6555 = vpop.permute.xlu0 %6554
        %6556 = vrot.lane.b32.xlu0 %v6532, 63
        %v6557 = vpop.permute.xlu0 %6556
        %6558 = vrot.lane.b32.xlu0 %v6533, 63
        %v6559 = vpop.permute.xlu0 %6558
        %6560 = vrot.lane.b32.xlu0 %v6534, 63
        %v6561 = vpop.permute.xlu0 %6560
        %v6562 = vsel %vm6363, %v6545, %v6547
        %v6563 = vsel %vm6363, %v6547, %v6549
        %v6564 = vsel %vm6363, %v6549, %v6551
        %v6565 = vsel %vm6363, %v6551, %v6553
        %v6566 = vsel %vm6363, %v6553, %v6555
        %v6567 = vsel %vm6363, %v6555, %v6557
        %v6568 = vsel %vm6363, %v6557, %v6559
        %v6569 = vsel %vm6363, %v6559, %v6561
        %v6579 = vadd.f32 %v6513, %v6545
        %v6580 = vadd.f32 %v6514, %v6562
        %v6581 = vadd.f32 %v6515, %v6563
        %v6582 = vadd.f32 %v6516, %v6564
        %v6583 = vadd.f32 %v6517, %v6565
        %v6584 = vadd.f32 %v6518, %v6566
        %v6585 = vadd.f32 %v6519, %v6567
        %v6586 = vadd.f32 %v6520, %v6568
        %v6587 = vadd.f32 %v6521, %v6569
        %6588 = vrot.lane.b32.xlu0 %v4238, 33
        %v6589 = vpop.permute.xlu0 %6588
        %6590 = vrot.lane.b32.xlu0 %v4242, 33
        %v6591 = vpop.permute.xlu0 %6590
        %6592 = vrot.lane.b32.xlu0 %v4246, 33
        %v6593 = vpop.permute.xlu0 %6592
        %6594 = vrot.lane.b32.xlu0 %v4250, 33
        %v6595 = vpop.permute.xlu0 %6594
        %6596 = vrot.lane.b32.xlu0 %v4254, 33
        %v6597 = vpop.permute.xlu0 %6596
        %6598 = vrot.lane.b32.xlu0 %v4258, 33
        %v6599 = vpop.permute.xlu0 %6598
        %6600 = vrot.lane.b32.xlu0 %v4262, 33
        %v6601 = vpop.permute.xlu0 %6600
        %6602 = vrot.lane.b32.xlu0 %v4266, 33
        %v6603 = vpop.permute.xlu0 %6602
        %vm6604 = vcmask 269312
        %v6605 = vsel %vm6604, %v6589, %v6591
        %v6606 = vsel %vm6604, %v6591, %v6593
        %v6607 = vsel %vm6604, %v6593, %v6595
        %v6608 = vsel %vm6604, %v6595, %v6597
        %v6609 = vsel %vm6604, %v6597, %v6599
        %v6610 = vsel %vm6604, %v6599, %v6601
        %v6611 = vsel %vm6604, %v6601, %v6603
        %v6621 = vmul.f32 %v3219, %v6589
        %v6622 = vmul.f32 %v3221, %v6605
        %v6623 = vmul.f32 %v3290, %v6606
        %v6624 = vmul.f32 %v3292, %v6607
        %v6625 = vmul.f32 %v3361, %v6608
        %v6626 = vmul.f32 %v3363, %v6609
        %v6627 = vmul.f32 %v3432, %v6610
        %v6628 = vmul.f32 %v3434, %v6611
        %v6629 = vmul.f32 %v6603, 0.0
        %6631 = vset.pattern.permute.xlu0 0
        %6632 = vperm.xlu0 %6631, %v3444
        %v6633 = vpop.permute.xlu0 %6632
        %v6635 = vlaneseq
        %v6636 = vshrl.u32 %v6635, 7
        %v6637 = vsub.s32 0, %v6636
        %v6638 = vrot.slane %v6621, %v6637
        %v6639 = vlaneseq
        %v6640 = vshrl.u32 %v6639, 7
        %v6641 = vsub.s32 0, %v6640
        %v6642 = vrot.slane %v6622, %v6641
        %v6643 = vlaneseq
        %v6644 = vshrl.u32 %v6643, 7
        %v6645 = vsub.s32 0, %v6644
        %v6646 = vrot.slane %v6623, %v6645
        %v6647 = vlaneseq
        %v6648 = vshrl.u32 %v6647, 7
        %v6649 = vsub.s32 0, %v6648
        %v6650 = vrot.slane %v6624, %v6649
        %v6651 = vlaneseq
        %v6652 = vshrl.u32 %v6651, 7
        %v6653 = vsub.s32 0, %v6652
        %v6654 = vrot.slane %v6625, %v6653
        %v6655 = vlaneseq
        %v6656 = vshrl.u32 %v6655, 7
        %v6657 = vsub.s32 0, %v6656
        %v6658 = vrot.slane %v6626, %v6657
        %v6659 = vlaneseq
        %v6660 = vshrl.u32 %v6659, 7
        %v6661 = vsub.s32 0, %v6660
        %v6662 = vrot.slane %v6627, %v6661
        %v6663 = vlaneseq
        %v6664 = vshrl.u32 %v6663, 7
        %v6665 = vsub.s32 0, %v6664
        %v6666 = vrot.slane %v6628, %v6665
        %v6667 = vlaneseq
        %v6668 = vshrl.u32 %v6667, 7
        %v6669 = vsub.s32 0, %v6668
        %v6670 = vrot.slane %v6629, %v6669
        %v6671 = vmul.f32 %v6633, %v6638
        %v6672 = vmul.f32 %v6633, %v6642
        %v6673 = vmul.f32 %v6633, %v6646
        %v6674 = vmul.f32 %v6633, %v6650
        %v6675 = vmul.f32 %v6633, %v6654
        %v6676 = vmul.f32 %v6633, %v6658
        %v6677 = vmul.f32 %v6633, %v6662
        %v6678 = vmul.f32 %v6633, %v6666
        %v6679 = vmul.f32 %v6633, %v6670
        %6689 = vrot.lane.b32.xlu0 %v6671, 62
        %v6690 = vpop.permute.xlu0 %6689
        %6691 = vrot.lane.b32.xlu0 %v6672, 62
        %v6692 = vpop.permute.xlu0 %6691
        %6693 = vrot.lane.b32.xlu0 %v6673, 62
        %v6694 = vpop.permute.xlu0 %6693
        %6695 = vrot.lane.b32.xlu0 %v6674, 62
        %v6696 = vpop.permute.xlu0 %6695
        %6697 = vrot.lane.b32.xlu0 %v6675, 62
        %v6698 = vpop.permute.xlu0 %6697
        %6699 = vrot.lane.b32.xlu0 %v6676, 62
        %v6700 = vpop.permute.xlu0 %6699
        %6701 = vrot.lane.b32.xlu0 %v6677, 62
        %v6702 = vpop.permute.xlu0 %6701
        %6703 = vrot.lane.b32.xlu0 %v6678, 62
        %v6704 = vpop.permute.xlu0 %6703
        %6705 = vrot.lane.b32.xlu0 %v6679, 62
        %v6706 = vpop.permute.xlu0 %6705
        %vm6707 = vcmask 506880
        %v6708 = vsel %vm6707, %v6690, %v6692
        %v6709 = vsel %vm6707, %v6692, %v6694
        %v6710 = vsel %vm6707, %v6694, %v6696
        %v6711 = vsel %vm6707, %v6696, %v6698
        %v6712 = vsel %vm6707, %v6698, %v6700
        %v6713 = vsel %vm6707, %v6700, %v6702
        %v6714 = vsel %vm6707, %v6702, %v6704
        %v6715 = vsel %vm6707, %v6704, %v6706
        %v6725 = vadd.f32 %v6579, %v6690
        %v6726 = vadd.f32 %v6580, %v6708
        %v6727 = vadd.f32 %v6581, %v6709
        %v6728 = vadd.f32 %v6582, %v6710
        %v6729 = vadd.f32 %v6583, %v6711
        %v6730 = vadd.f32 %v6584, %v6712
        %v6731 = vadd.f32 %v6585, %v6713
        %v6732 = vadd.f32 %v6586, %v6714
        %v6733 = vadd.f32 %v6587, %v6715
        %6734 = vset.pattern.permute.xlu0 1
        %6735 = vperm.xlu0 %6734, %v3444
        %v6736 = vpop.permute.xlu0 %6735
        %v6738 = vlaneseq
        %v6739 = vshrl.u32 %v6738, 7
        %v6740 = vsub.s32 1, %v6739
        %v6741 = vrot.slane %v6621, %v6740
        %v6742 = vlaneseq
        %v6743 = vshrl.u32 %v6742, 7
        %v6744 = vsub.s32 1, %v6743
        %v6745 = vrot.slane %v6622, %v6744
        %v6746 = vlaneseq
        %v6747 = vshrl.u32 %v6746, 7
        %v6748 = vsub.s32 1, %v6747
        %v6749 = vrot.slane %v6623, %v6748
        %v6750 = vlaneseq
        %v6751 = vshrl.u32 %v6750, 7
        %v6752 = vsub.s32 1, %v6751
        %v6753 = vrot.slane %v6624, %v6752
        %v6754 = vlaneseq
        %v6755 = vshrl.u32 %v6754, 7
        %v6756 = vsub.s32 1, %v6755
        %v6757 = vrot.slane %v6625, %v6756
        %v6758 = vlaneseq
        %v6759 = vshrl.u32 %v6758, 7
        %v6760 = vsub.s32 1, %v6759
        %v6761 = vrot.slane %v6626, %v6760
        %v6762 = vlaneseq
        %v6763 = vshrl.u32 %v6762, 7
        %v6764 = vsub.s32 1, %v6763
        %v6765 = vrot.slane %v6627, %v6764
        %v6766 = vlaneseq
        %v6767 = vshrl.u32 %v6766, 7
        %v6768 = vsub.s32 1, %v6767
        %v6769 = vrot.slane %v6628, %v6768
        %v6770 = vlaneseq
        %v6771 = vshrl.u32 %v6770, 7
        %v6772 = vsub.s32 1, %v6771
        %v6773 = vrot.slane %v6629, %v6772
        %v6774 = vmul.f32 %v6736, %v6741
        %v6775 = vmul.f32 %v6736, %v6745
        %v6776 = vmul.f32 %v6736, %v6749
        %v6777 = vmul.f32 %v6736, %v6753
        %v6778 = vmul.f32 %v6736, %v6757
        %v6779 = vmul.f32 %v6736, %v6761
        %v6780 = vmul.f32 %v6736, %v6765
        %v6781 = vmul.f32 %v6736, %v6769
        %v6782 = vmul.f32 %v6736, %v6773
        %6792 = vrot.lane.b32.xlu0 %v6774, 62
        %v6793 = vpop.permute.xlu0 %6792
        %6794 = vrot.lane.b32.xlu0 %v6775, 62
        %v6795 = vpop.permute.xlu0 %6794
        %6796 = vrot.lane.b32.xlu0 %v6776, 62
        %v6797 = vpop.permute.xlu0 %6796
        %6798 = vrot.lane.b32.xlu0 %v6777, 62
        %v6799 = vpop.permute.xlu0 %6798
        %6800 = vrot.lane.b32.xlu0 %v6778, 62
        %v6801 = vpop.permute.xlu0 %6800
        %6802 = vrot.lane.b32.xlu0 %v6779, 62
        %v6803 = vpop.permute.xlu0 %6802
        %6804 = vrot.lane.b32.xlu0 %v6780, 62
        %v6805 = vpop.permute.xlu0 %6804
        %6806 = vrot.lane.b32.xlu0 %v6781, 62
        %v6807 = vpop.permute.xlu0 %6806
        %6808 = vrot.lane.b32.xlu0 %v6782, 62
        %v6809 = vpop.permute.xlu0 %6808
        %v6810 = vsel %vm6707, %v6793, %v6795
        %v6811 = vsel %vm6707, %v6795, %v6797
        %v6812 = vsel %vm6707, %v6797, %v6799
        %v6813 = vsel %vm6707, %v6799, %v6801
        %v6814 = vsel %vm6707, %v6801, %v6803
        %v6815 = vsel %vm6707, %v6803, %v6805
        %v6816 = vsel %vm6707, %v6805, %v6807
        %v6817 = vsel %vm6707, %v6807, %v6809
        %v6827 = vadd.f32 %v6725, %v6793
        %v6828 = vadd.f32 %v6726, %v6810
        %v6829 = vadd.f32 %v6727, %v6811
        %v6830 = vadd.f32 %v6728, %v6812
        %v6831 = vadd.f32 %v6729, %v6813
        %v6832 = vadd.f32 %v6730, %v6814
        %v6833 = vadd.f32 %v6731, %v6815
        %v6834 = vadd.f32 %v6732, %v6816
        %v6835 = vadd.f32 %v6733, %v6817
        %6836 = vset.pattern.permute.xlu0 2
        %6837 = vperm.xlu0 %6836, %v3444
        %v6838 = vpop.permute.xlu0 %6837
        %v6840 = vlaneseq
        %v6841 = vshrl.u32 %v6840, 7
        %v6842 = vsub.s32 2, %v6841
        %v6843 = vrot.slane %v6621, %v6842
        %v6844 = vlaneseq
        %v6845 = vshrl.u32 %v6844, 7
        %v6846 = vsub.s32 2, %v6845
        %v6847 = vrot.slane %v6622, %v6846
        %v6848 = vlaneseq
        %v6849 = vshrl.u32 %v6848, 7
        %v6850 = vsub.s32 2, %v6849
        %v6851 = vrot.slane %v6623, %v6850
        %v6852 = vlaneseq
        %v6853 = vshrl.u32 %v6852, 7
        %v6854 = vsub.s32 2, %v6853
        %v6855 = vrot.slane %v6624, %v6854
        %v6856 = vlaneseq
        %v6857 = vshrl.u32 %v6856, 7
        %v6858 = vsub.s32 2, %v6857
        %v6859 = vrot.slane %v6625, %v6858
        %v6860 = vlaneseq
        %v6861 = vshrl.u32 %v6860, 7
        %v6862 = vsub.s32 2, %v6861
        %v6863 = vrot.slane %v6626, %v6862
        %v6864 = vlaneseq
        %v6865 = vshrl.u32 %v6864, 7
        %v6866 = vsub.s32 2, %v6865
        %v6867 = vrot.slane %v6627, %v6866
        %v6868 = vlaneseq
        %v6869 = vshrl.u32 %v6868, 7
        %v6870 = vsub.s32 2, %v6869
        %v6871 = vrot.slane %v6628, %v6870
        %v6872 = vlaneseq
        %v6873 = vshrl.u32 %v6872, 7
        %v6874 = vsub.s32 2, %v6873
        %v6875 = vrot.slane %v6629, %v6874
        %v6876 = vmul.f32 %v6838, %v6843
        %v6877 = vmul.f32 %v6838, %v6847
        %v6878 = vmul.f32 %v6838, %v6851
        %v6879 = vmul.f32 %v6838, %v6855
        %v6880 = vmul.f32 %v6838, %v6859
        %v6881 = vmul.f32 %v6838, %v6863
        %v6882 = vmul.f32 %v6838, %v6867
        %v6883 = vmul.f32 %v6838, %v6871
        %v6884 = vmul.f32 %v6838, %v6875
        %6894 = vrot.lane.b32.xlu0 %v6876, 62
        %v6895 = vpop.permute.xlu0 %6894
        %6896 = vrot.lane.b32.xlu0 %v6877, 62
        %v6897 = vpop.permute.xlu0 %6896
        %6898 = vrot.lane.b32.xlu0 %v6878, 62
        %v6899 = vpop.permute.xlu0 %6898
        %6900 = vrot.lane.b32.xlu0 %v6879, 62
        %v6901 = vpop.permute.xlu0 %6900
        %6902 = vrot.lane.b32.xlu0 %v6880, 62
        %v6903 = vpop.permute.xlu0 %6902
        %6904 = vrot.lane.b32.xlu0 %v6881, 62
        %v6905 = vpop.permute.xlu0 %6904
        %6906 = vrot.lane.b32.xlu0 %v6882, 62
        %v6907 = vpop.permute.xlu0 %6906
        %6908 = vrot.lane.b32.xlu0 %v6883, 62
        %v6909 = vpop.permute.xlu0 %6908
        %6910 = vrot.lane.b32.xlu0 %v6884, 62
        %v6911 = vpop.permute.xlu0 %6910
        %v6912 = vsel %vm6707, %v6895, %v6897
        %v6913 = vsel %vm6707, %v6897, %v6899
        %v6914 = vsel %vm6707, %v6899, %v6901
        %v6915 = vsel %vm6707, %v6901, %v6903
        %v6916 = vsel %vm6707, %v6903, %v6905
        %v6917 = vsel %vm6707, %v6905, %v6907
        %v6918 = vsel %vm6707, %v6907, %v6909
        %v6919 = vsel %vm6707, %v6909, %v6911
        %v6929 = vadd.f32 %v6827, %v6895
        %v6930 = vadd.f32 %v6828, %v6912
        %v6931 = vadd.f32 %v6829, %v6913
        %v6932 = vadd.f32 %v6830, %v6914
        %v6933 = vadd.f32 %v6831, %v6915
        %v6934 = vadd.f32 %v6832, %v6916
        %v6935 = vadd.f32 %v6833, %v6917
        %v6936 = vadd.f32 %v6834, %v6918
        %v6937 = vadd.f32 %v6835, %v6919
        %6938 = vset.pattern.permute.xlu0 3
        %6939 = vperm.xlu0 %6938, %v3444
        %v6940 = vpop.permute.xlu0 %6939
        %v6942 = vlaneseq
        %v6943 = vshrl.u32 %v6942, 7
        %v6944 = vsub.s32 3, %v6943
        %v6945 = vrot.slane %v6621, %v6944
        %v6946 = vlaneseq
        %v6947 = vshrl.u32 %v6946, 7
        %v6948 = vsub.s32 3, %v6947
        %v6949 = vrot.slane %v6622, %v6948
        %v6950 = vlaneseq
        %v6951 = vshrl.u32 %v6950, 7
        %v6952 = vsub.s32 3, %v6951
        %v6953 = vrot.slane %v6623, %v6952
        %v6954 = vlaneseq
        %v6955 = vshrl.u32 %v6954, 7
        %v6956 = vsub.s32 3, %v6955
        %v6957 = vrot.slane %v6624, %v6956
        %v6958 = vlaneseq
        %v6959 = vshrl.u32 %v6958, 7
        %v6960 = vsub.s32 3, %v6959
        %v6961 = vrot.slane %v6625, %v6960
        %v6962 = vlaneseq
        %v6963 = vshrl.u32 %v6962, 7
        %v6964 = vsub.s32 3, %v6963
        %v6965 = vrot.slane %v6626, %v6964
        %v6966 = vlaneseq
        %v6967 = vshrl.u32 %v6966, 7
        %v6968 = vsub.s32 3, %v6967
        %v6969 = vrot.slane %v6627, %v6968
        %v6970 = vlaneseq
        %v6971 = vshrl.u32 %v6970, 7
        %v6972 = vsub.s32 3, %v6971
        %v6973 = vrot.slane %v6628, %v6972
        %v6974 = vlaneseq
        %v6975 = vshrl.u32 %v6974, 7
        %v6976 = vsub.s32 3, %v6975
        %v6977 = vrot.slane %v6629, %v6976
        %v6978 = vmul.f32 %v6940, %v6945
        %v6979 = vmul.f32 %v6940, %v6949
        %v6980 = vmul.f32 %v6940, %v6953
        %v6981 = vmul.f32 %v6940, %v6957
        %v6982 = vmul.f32 %v6940, %v6961
        %v6983 = vmul.f32 %v6940, %v6965
        %v6984 = vmul.f32 %v6940, %v6969
        %v6985 = vmul.f32 %v6940, %v6973
        %v6986 = vmul.f32 %v6940, %v6977
        %6996 = vrot.lane.b32.xlu0 %v6978, 62
        %v6997 = vpop.permute.xlu0 %6996
        %6998 = vrot.lane.b32.xlu0 %v6979, 62
        %v6999 = vpop.permute.xlu0 %6998
        %7000 = vrot.lane.b32.xlu0 %v6980, 62
        %v7001 = vpop.permute.xlu0 %7000
        %7002 = vrot.lane.b32.xlu0 %v6981, 62
        %v7003 = vpop.permute.xlu0 %7002
        %7004 = vrot.lane.b32.xlu0 %v6982, 62
        %v7005 = vpop.permute.xlu0 %7004
        %7006 = vrot.lane.b32.xlu0 %v6983, 62
        %v7007 = vpop.permute.xlu0 %7006
        %7008 = vrot.lane.b32.xlu0 %v6984, 62
        %v7009 = vpop.permute.xlu0 %7008
        %7010 = vrot.lane.b32.xlu0 %v6985, 62
        %v7011 = vpop.permute.xlu0 %7010
        %7012 = vrot.lane.b32.xlu0 %v6986, 62
        %v7013 = vpop.permute.xlu0 %7012
        %v7014 = vsel %vm6707, %v6997, %v6999
        %v7015 = vsel %vm6707, %v6999, %v7001
        %v7016 = vsel %vm6707, %v7001, %v7003
        %v7017 = vsel %vm6707, %v7003, %v7005
        %v7018 = vsel %vm6707, %v7005, %v7007
        %v7019 = vsel %vm6707, %v7007, %v7009
        %v7020 = vsel %vm6707, %v7009, %v7011
        %v7021 = vsel %vm6707, %v7011, %v7013
        %v7031 = vadd.f32 %v6929, %v6997
        %v7032 = vadd.f32 %v6930, %v7014
        %v7033 = vadd.f32 %v6931, %v7015
        %v7034 = vadd.f32 %v6932, %v7016
        %v7035 = vadd.f32 %v6933, %v7017
        %v7036 = vadd.f32 %v6934, %v7018
        %v7037 = vadd.f32 %v6935, %v7019
        %v7038 = vadd.f32 %v6936, %v7020
        %v7039 = vadd.f32 %v6937, %v7021
        %7041 = vset.pattern.permute.xlu0 0
        %7042 = vperm.xlu0 %7041, %v3445
        %v7043 = vpop.permute.xlu0 %7042
        %v7045 = vadd.f32 %v7031, %v7043
        %v7046 = vadd.f32 %v7032, %v7043
        %v7047 = vadd.f32 %v7033, %v7043
        %v7048 = vadd.f32 %v7034, %v7043
        %v7049 = vadd.f32 %v7035, %v7043
        %v7050 = vadd.f32 %v7036, %v7043
        %v7051 = vadd.f32 %v7037, %v7043
        %v7052 = vadd.f32 %v7038, %v7043
        %v7053 = vadd.f32 %v7039, %v7043
        %v7054 = vmax.f32 %v7045, 0.0
        %v7055 = vmax.f32 %v7046, 0.0
        %v7056 = vmax.f32 %v7047, 0.0
        %v7057 = vmax.f32 %v7048, 0.0
        %v7058 = vmax.f32 %v7049, 0.0
        %v7059 = vmax.f32 %v7050, 0.0
        %v7060 = vmax.f32 %v7051, 0.0
        %v7061 = vmax.f32 %v7052, 0.0
        %v7062 = vmax.f32 %v7053, 0.0
        %v7063 = vld [vmem:[%s9] sm:$0x1]
        %v7064 = vld [vmem:[%s9 + $0x1] sm:$0x1]
        %v7065 = vld [vmem:[%s9 + $0x2] sm:$0x1]
        %v7066 = vld [vmem:[%s9 + $0x3] sm:$0x1]
        %v7067 = vld [vmem:[%s9 + $0x4] sm:$0x1]
        %v7068 = vld [vmem:[%s9 + $0x5] sm:$0x1]
        %v7069 = vld [vmem:[%s9 + $0x6] sm:$0x1]
        %v7070 = vld [vmem:[%s9 + $0x7] sm:$0x1]
        %v7071 = vld [vmem:[%s9 + $0x8] sm:$0x1]
        %v7072 = vld [vmem:[#allocation2] sm:$0x1]
        %7082 = vrot.lane.b32.xlu0 %v7054, 33
        %v7083 = vpop.permute.xlu0 %7082
        %7084 = vrot.lane.b32.xlu0 %v7055, 33
        %v7085 = vpop.permute.xlu0 %7084
        %7086 = vrot.lane.b32.xlu0 %v7056, 33
        %v7087 = vpop.permute.xlu0 %7086
        %7088 = vrot.lane.b32.xlu0 %v7057, 33
        %v7089 = vpop.permute.xlu0 %7088
        %7090 = vrot.lane.b32.xlu0 %v7058, 33
        %v7091 = vpop.permute.xlu0 %7090
        %7092 = vrot.lane.b32.xlu0 %v7059, 33
        %v7093 = vpop.permute.xlu0 %7092
        %7094 = vrot.lane.b32.xlu0 %v7060, 33
        %v7095 = vpop.permute.xlu0 %7094
        %7096 = vrot.lane.b32.xlu0 %v7061, 33
        %v7097 = vpop.permute.xlu0 %7096
        %7098 = vrot.lane.b32.xlu0 %v7062, 33
        %v7099 = vpop.permute.xlu0 %7098
        %v7100 = vsel %vm6604, %v7083, %v7085
        %v7101 = vsel %vm6604, %v7085, %v7087
        %v7102 = vsel %vm6604, %v7087, %v7089
        %v7103 = vsel %vm6604, %v7089, %v7091
        %v7104 = vsel %vm6604, %v7091, %v7093
        %v7105 = vsel %vm6604, %v7093, %v7095
        %v7106 = vsel %vm6604, %v7095, %v7097
        %v7107 = vsel %vm6604, %v7097, %v7099
        %v7116 = vmul.f32 %v7100, %v3544
        %v7117 = vmul.f32 %v7101, %v3545
        %v7118 = vmul.f32 %v7102, %v3546
        %v7119 = vmul.f32 %v7103, %v3547
        %v7120 = vmul.f32 %v7104, %v3548
        %v7121 = vmul.f32 %v7105, %v3549
        %v7122 = vmul.f32 %v7106, %v3550
        %v7123 = vmul.f32 %v7107, %v3543
        %7125 = vset.pattern.permute.xlu0 0
        %7126 = vperm.xlu0 %7125, %v7063
        %v7127 = vpop.permute.xlu0 %7126
        %v7129 = vlaneseq
        %v7130 = vshrl.u32 %v7129, 7
        %v7131 = vsub.s32 0, %v7130
        %v7132 = vrot.slane %v7127, %v7131
        %v7133 = vmul.f32 %v7132, %v3560
        %v7134 = vmul.f32 %v7132, %v7116
        %v7135 = vmul.f32 %v7132, %v7117
        %v7136 = vmul.f32 %v7132, %v7118
        %v7137 = vmul.f32 %v7132, %v7119
        %v7138 = vmul.f32 %v7132, %v7120
        %v7139 = vmul.f32 %v7132, %v7121
        %v7140 = vmul.f32 %v7132, %v7122
        %v7141 = vmul.f32 %v7132, %v7123
        %v7142 = vadd.f32 %v7133, 0.0
        %v7143 = vadd.f32 %v7134, 0.0
        %v7144 = vadd.f32 %v7135, 0.0
        %v7145 = vadd.f32 %v7136, 0.0
        %v7146 = vadd.f32 %v7137, 0.0
        %v7147 = vadd.f32 %v7138, 0.0
        %v7148 = vadd.f32 %v7139, 0.0
        %v7149 = vadd.f32 %v7140, 0.0
        %v7150 = vadd.f32 %v7141, 0.0
        %7151 = vset.pattern.permute.xlu0 1
        %7152 = vperm.xlu0 %7151, %v7063
        %v7153 = vpop.permute.xlu0 %7152
        %v7155 = vlaneseq
        %v7156 = vshrl.u32 %v7155, 7
        %v7157 = vsub.s32 0, %v7156
        %v7158 = vrot.slane %v7153, %v7157
        %v7159 = vmul.f32 %v7158, %v3560
        %v7160 = vmul.f32 %v7158, %v7116
        %v7161 = vmul.f32 %v7158, %v7117
        %v7162 = vmul.f32 %v7158, %v7118
        %v7163 = vmul.f32 %v7158, %v7119
        %v7164 = vmul.f32 %v7158, %v7120
        %v7165 = vmul.f32 %v7158, %v7121
        %v7166 = vmul.f32 %v7158, %v7122
        %v7167 = vmul.f32 %v7158, %v7123
        %v7177 = vrot.slane %v7159, 1
        %v7178 = vrot.slane %v7160, 1
        %v7179 = vrot.slane %v7161, 1
        %v7180 = vrot.slane %v7162, 1
        %v7181 = vrot.slane %v7163, 1
        %v7182 = vrot.slane %v7164, 1
        %v7183 = vrot.slane %v7165, 1
        %v7184 = vrot.slane %v7166, 1
        %v7185 = vrot.slane %v7167, 1
        %v7195 = vadd.f32 %v7142, %v7177
        %v7196 = vadd.f32 %v7143, %v7178
        %v7197 = vadd.f32 %v7144, %v7179
        %v7198 = vadd.f32 %v7145, %v7180
        %v7199 = vadd.f32 %v7146, %v7181
        %v7200 = vadd.f32 %v7147, %v7182
        %v7201 = vadd.f32 %v7148, %v7183
        %v7202 = vadd.f32 %v7149, %v7184
        %v7203 = vadd.f32 %v7150, %v7185
        %7205 = vset.pattern.permute.xlu0 0
        %7206 = vperm.xlu0 %7205, %v7064
        %v7207 = vpop.permute.xlu0 %7206
        %v7209 = vlaneseq
        %v7210 = vshrl.u32 %v7209, 7
        %v7211 = vsub.s32 0, %v7210
        %v7212 = vrot.slane %v7207, %v7211
        %v7213 = vmul.f32 %v7212, 0.0
        %v7214 = vmul.f32 %v7212, %v7100
        %v7215 = vmul.f32 %v7212, %v7101
        %v7216 = vmul.f32 %v7212, %v7102
        %v7217 = vmul.f32 %v7212, %v7103
        %v7218 = vmul.f32 %v7212, %v7104
        %v7219 = vmul.f32 %v7212, %v7105
        %v7220 = vmul.f32 %v7212, %v7106
        %v7221 = vmul.f32 %v7212, %v7107
        %7231 = vrot.lane.b32.xlu0 %v7213, 127
        %v7232 = vpop.permute.xlu0 %7231
        %7233 = vrot.lane.b32.xlu0 %v7214, 127
        %v7234 = vpop.permute.xlu0 %7233
        %7235 = vrot.lane.b32.xlu0 %v7215, 127
        %v7236 = vpop.permute.xlu0 %7235
        %7237 = vrot.lane.b32.xlu0 %v7216, 127
        %v7238 = vpop.permute.xlu0 %7237
        %7239 = vrot.lane.b32.xlu0 %v7217, 127
        %v7240 = vpop.permute.xlu0 %7239
        %7241 = vrot.lane.b32.xlu0 %v7218, 127
        %v7242 = vpop.permute.xlu0 %7241
        %7243 = vrot.lane.b32.xlu0 %v7219, 127
        %v7244 = vpop.permute.xlu0 %7243
        %7245 = vrot.lane.b32.xlu0 %v7220, 127
        %v7246 = vpop.permute.xlu0 %7245
        %7247 = vrot.lane.b32.xlu0 %v7221, 127
        %v7248 = vpop.permute.xlu0 %7247
        %v7249 = vsel %vm742, %v7232, %v7234
        %v7250 = vsel %vm742, %v7234, %v7236
        %v7251 = vsel %vm742, %v7236, %v7238
        %v7252 = vsel %vm742, %v7238, %v7240
        %v7253 = vsel %vm742, %v7240, %v7242
        %v7254 = vsel %vm742, %v7242, %v7244
        %v7255 = vsel %vm742, %v7244, %v7246
        %v7256 = vsel %vm742, %v7246, %v7248
        %v7266 = vadd.f32 %v7195, %v7249
        %v7267 = vadd.f32 %v7196, %v7250
        %v7268 = vadd.f32 %v7197, %v7251
        %v7269 = vadd.f32 %v7198, %v7252
        %v7270 = vadd.f32 %v7199, %v7253
        %v7271 = vadd.f32 %v7200, %v7254
        %v7272 = vadd.f32 %v7201, %v7255
        %v7273 = vadd.f32 %v7202, %v7256
        %v7274 = vadd.f32 %v7203, %v7248
        %7275 = vset.pattern.permute.xlu0 1
        %7276 = vperm.xlu0 %7275, %v7064
        %v7277 = vpop.permute.xlu0 %7276
        %v7279 = vlaneseq
        %v7280 = vshrl.u32 %v7279, 7
        %v7281 = vsub.s32 0, %v7280
        %v7282 = vrot.slane %v7277, %v7281
        %v7283 = vmul.f32 %v7282, 0.0
        %v7284 = vmul.f32 %v7282, %v7100
        %v7285 = vmul.f32 %v7282, %v7101
        %v7286 = vmul.f32 %v7282, %v7102
        %v7287 = vmul.f32 %v7282, %v7103
        %v7288 = vmul.f32 %v7282, %v7104
        %v7289 = vmul.f32 %v7282, %v7105
        %v7290 = vmul.f32 %v7282, %v7106
        %v7291 = vmul.f32 %v7282, %v7107
        %v7301 = vrot.slane %v7283, 1
        %v7302 = vrot.slane %v7284, 1
        %v7303 = vrot.slane %v7285, 1
        %v7304 = vrot.slane %v7286, 1
        %v7305 = vrot.slane %v7287, 1
        %v7306 = vrot.slane %v7288, 1
        %v7307 = vrot.slane %v7289, 1
        %v7308 = vrot.slane %v7290, 1
        %v7309 = vrot.slane %v7291, 1
        %7310 = vrot.lane.b32.xlu0 %v7301, 127
        %v7311 = vpop.permute.xlu0 %7310
        %7312 = vrot.lane.b32.xlu0 %v7302, 127
        %v7313 = vpop.permute.xlu0 %7312
        %7314 = vrot.lane.b32.xlu0 %v7303, 127
        %v7315 = vpop.permute.xlu0 %7314
        %7316 = vrot.lane.b32.xlu0 %v7304, 127
        %v7317 = vpop.permute.xlu0 %7316
        %7318 = vrot.lane.b32.xlu0 %v7305, 127
        %v7319 = vpop.permute.xlu0 %7318
        %7320 = vrot.lane.b32.xlu0 %v7306, 127
        %v7321 = vpop.permute.xlu0 %7320
        %7322 = vrot.lane.b32.xlu0 %v7307, 127
        %v7323 = vpop.permute.xlu0 %7322
        %7324 = vrot.lane.b32.xlu0 %v7308, 127
        %v7325 = vpop.permute.xlu0 %7324
        %7326 = vrot.lane.b32.xlu0 %v7309, 127
        %v7327 = vpop.permute.xlu0 %7326
        %v7328 = vsel %vm742, %v7311, %v7313
        %v7329 = vsel %vm742, %v7313, %v7315
        %v7330 = vsel %vm742, %v7315, %v7317
        %v7331 = vsel %vm742, %v7317, %v7319
        %v7332 = vsel %vm742, %v7319, %v7321
        %v7333 = vsel %vm742, %v7321, %v7323
        %v7334 = vsel %vm742, %v7323, %v7325
        %v7335 = vsel %vm742, %v7325, %v7327
        %v7345 = vadd.f32 %v7266, %v7328
        %v7346 = vadd.f32 %v7267, %v7329
        %v7347 = vadd.f32 %v7268, %v7330
        %v7348 = vadd.f32 %v7269, %v7331
        %v7349 = vadd.f32 %v7270, %v7332
        %v7350 = vadd.f32 %v7271, %v7333
        %v7351 = vadd.f32 %v7272, %v7334
        %v7352 = vadd.f32 %v7273, %v7335
        %v7353 = vadd.f32 %v7274, %v7327
        %v7354 = vmul.f32 %v7100, %v4292
        %v7355 = vmul.f32 %v7101, %v4293
        %v7356 = vmul.f32 %v7102, %v4294
        %v7357 = vmul.f32 %v7103, %v4295
        %v7358 = vmul.f32 %v7104, %v4296
        %v7359 = vmul.f32 %v7105, %v4297
        %v7360 = vmul.f32 %v7106, %v4298
        %v7361 = vmul.f32 %v7107, %v4290
        %7363 = vset.pattern.permute.xlu0 0
        %7364 = vperm.xlu0 %7363, %v7065
        %v7365 = vpop.permute.xlu0 %7364
        %v7367 = vlaneseq
        %v7368 = vshrl.u32 %v7367, 7
        %v7369 = vsub.s32 0, %v7368
        %v7370 = vrot.slane %v7365, %v7369
        %v7371 = vmul.f32 %v7370, %v4308
        %v7372 = vmul.f32 %v7370, %v7354
        %v7373 = vmul.f32 %v7370, %v7355
        %v7374 = vmul.f32 %v7370, %v7356
        %v7375 = vmul.f32 %v7370, %v7357
        %v7376 = vmul.f32 %v7370, %v7358
        %v7377 = vmul.f32 %v7370, %v7359
        %v7378 = vmul.f32 %v7370, %v7360
        %v7379 = vmul.f32 %v7370, %v7361
        %7389 = vrot.lane.b32.xlu0 %v7371, 126
        %v7390 = vpop.permute.xlu0 %7389
        %7391 = vrot.lane.b32.xlu0 %v7372, 126
        %v7392 = vpop.permute.xlu0 %7391
        %7393 = vrot.lane.b32.xlu0 %v7373, 126
        %v7394 = vpop.permute.xlu0 %7393
        %7395 = vrot.lane.b32.xlu0 %v7374, 126
        %v7396 = vpop.permute.xlu0 %7395
        %7397 = vrot.lane.b32.xlu0 %v7375, 126
        %v7398 = vpop.permute.xlu0 %7397
        %7399 = vrot.lane.b32.xlu0 %v7376, 126
        %v7400 = vpop.permute.xlu0 %7399
        %7401 = vrot.lane.b32.xlu0 %v7377, 126
        %v7402 = vpop.permute.xlu0 %7401
        %7403 = vrot.lane.b32.xlu0 %v7378, 126
        %v7404 = vpop.permute.xlu0 %7403
        %7405 = vrot.lane.b32.xlu0 %v7379, 126
        %v7406 = vpop.permute.xlu0 %7405
        %v7407 = vsel %vm1057, %v7390, %v7392
        %v7408 = vsel %vm1057, %v7392, %v7394
        %v7409 = vsel %vm1057, %v7394, %v7396
        %v7410 = vsel %vm1057, %v7396, %v7398
        %v7411 = vsel %vm1057, %v7398, %v7400
        %v7412 = vsel %vm1057, %v7400, %v7402
        %v7413 = vsel %vm1057, %v7402, %v7404
        %v7414 = vsel %vm1057, %v7404, %v7406
        %v7424 = vadd.f32 %v7345, %v7407
        %v7425 = vadd.f32 %v7346, %v7408
        %v7426 = vadd.f32 %v7347, %v7409
        %v7427 = vadd.f32 %v7348, %v7410
        %v7428 = vadd.f32 %v7349, %v7411
        %v7429 = vadd.f32 %v7350, %v7412
        %v7430 = vadd.f32 %v7351, %v7413
        %v7431 = vadd.f32 %v7352, %v7414
        %v7432 = vadd.f32 %v7353, %v7406
        %7433 = vset.pattern.permute.xlu0 1
        %7434 = vperm.xlu0 %7433, %v7065
        %v7435 = vpop.permute.xlu0 %7434
        %v7437 = vlaneseq
        %v7438 = vshrl.u32 %v7437, 7
        %v7439 = vsub.s32 0, %v7438
        %v7440 = vrot.slane %v7435, %v7439
        %v7441 = vmul.f32 %v7440, %v4308
        %v7442 = vmul.f32 %v7440, %v7354
        %v7443 = vmul.f32 %v7440, %v7355
        %v7444 = vmul.f32 %v7440, %v7356
        %v7445 = vmul.f32 %v7440, %v7357
        %v7446 = vmul.f32 %v7440, %v7358
        %v7447 = vmul.f32 %v7440, %v7359
        %v7448 = vmul.f32 %v7440, %v7360
        %v7449 = vmul.f32 %v7440, %v7361
        %v7459 = vrot.slane %v7441, 1
        %v7460 = vrot.slane %v7442, 1
        %v7461 = vrot.slane %v7443, 1
        %v7462 = vrot.slane %v7444, 1
        %v7463 = vrot.slane %v7445, 1
        %v7464 = vrot.slane %v7446, 1
        %v7465 = vrot.slane %v7447, 1
        %v7466 = vrot.slane %v7448, 1
        %v7467 = vrot.slane %v7449, 1
        %7468 = vrot.lane.b32.xlu0 %v7459, 126
        %v7469 = vpop.permute.xlu0 %7468
        %7470 = vrot.lane.b32.xlu0 %v7460, 126
        %v7471 = vpop.permute.xlu0 %7470
        %7472 = vrot.lane.b32.xlu0 %v7461, 126
        %v7473 = vpop.permute.xlu0 %7472
        %7474 = vrot.lane.b32.xlu0 %v7462, 126
        %v7475 = vpop.permute.xlu0 %7474
        %7476 = vrot.lane.b32.xlu0 %v7463, 126
        %v7477 = vpop.permute.xlu0 %7476
        %7478 = vrot.lane.b32.xlu0 %v7464, 126
        %v7479 = vpop.permute.xlu0 %7478
        %7480 = vrot.lane.b32.xlu0 %v7465, 126
        %v7481 = vpop.permute.xlu0 %7480
        %7482 = vrot.lane.b32.xlu0 %v7466, 126
        %v7483 = vpop.permute.xlu0 %7482
        %7484 = vrot.lane.b32.xlu0 %v7467, 126
        %v7485 = vpop.permute.xlu0 %7484
        %v7486 = vsel %vm1057, %v7469, %v7471
        %v7487 = vsel %vm1057, %v7471, %v7473
        %v7488 = vsel %vm1057, %v7473, %v7475
        %v7489 = vsel %vm1057, %v7475, %v7477
        %v7490 = vsel %vm1057, %v7477, %v7479
        %v7491 = vsel %vm1057, %v7479, %v7481
        %v7492 = vsel %vm1057, %v7481, %v7483
        %v7493 = vsel %vm1057, %v7483, %v7485
        %v7503 = vadd.f32 %v7424, %v7486
        %v7504 = vadd.f32 %v7425, %v7487
        %v7505 = vadd.f32 %v7426, %v7488
        %v7506 = vadd.f32 %v7427, %v7489
        %v7507 = vadd.f32 %v7428, %v7490
        %v7508 = vadd.f32 %v7429, %v7491
        %v7509 = vadd.f32 %v7430, %v7492
        %v7510 = vadd.f32 %v7431, %v7493
        %v7511 = vadd.f32 %v7432, %v7485
        %v7512 = vmul.f32 %v7100, %v4742
        %v7513 = vmul.f32 %v7101, %v4743
        %v7514 = vmul.f32 %v7102, %v4744
        %v7515 = vmul.f32 %v7103, %v4745
        %v7516 = vmul.f32 %v7104, %v4746
        %v7517 = vmul.f32 %v7105, %v4747
        %v7518 = vmul.f32 %v7106, %v4748
        %v7519 = vmul.f32 %v7107, %v4741
        %7521 = vset.pattern.permute.xlu0 0
        %7522 = vperm.xlu0 %7521, %v7066
        %v7523 = vpop.permute.xlu0 %7522
        %v7525 = vlaneseq
        %v7526 = vshrl.u32 %v7525, 7
        %v7527 = vsub.s32 0, %v7526
        %v7528 = vrot.slane %v7523, %v7527
        %v7529 = vmul.f32 %v7528, %v4758
        %v7530 = vmul.f32 %v7528, %v7512
        %v7531 = vmul.f32 %v7528, %v7513
        %v7532 = vmul.f32 %v7528, %v7514
        %v7533 = vmul.f32 %v7528, %v7515
        %v7534 = vmul.f32 %v7528, %v7516
        %v7535 = vmul.f32 %v7528, %v7517
        %v7536 = vmul.f32 %v7528, %v7518
        %v7537 = vmul.f32 %v7528, %v7519
        %7547 = vrot.lane.b32.xlu0 %v7529, 96
        %v7548 = vpop.permute.xlu0 %7547
        %7549 = vrot.lane.b32.xlu0 %v7530, 96
        %v7550 = vpop.permute.xlu0 %7549
        %7551 = vrot.lane.b32.xlu0 %v7531, 96
        %v7552 = vpop.permute.xlu0 %7551
        %7553 = vrot.lane.b32.xlu0 %v7532, 96
        %v7554 = vpop.permute.xlu0 %7553
        %7555 = vrot.lane.b32.xlu0 %v7533, 96
        %v7556 = vpop.permute.xlu0 %7555
        %7557 = vrot.lane.b32.xlu0 %v7534, 96
        %v7558 = vpop.permute.xlu0 %7557
        %7559 = vrot.lane.b32.xlu0 %v7535, 96
        %v7560 = vpop.permute.xlu0 %7559
        %7561 = vrot.lane.b32.xlu0 %v7536, 96
        %v7562 = vpop.permute.xlu0 %7561
        %7563 = vrot.lane.b32.xlu0 %v7537, 96
        %v7564 = vpop.permute.xlu0 %7563
        %v7565 = vsel %vm2115, %v7548, %v7550
        %v7566 = vsel %vm2115, %v7550, %v7552
        %v7567 = vsel %vm2115, %v7552, %v7554
        %v7568 = vsel %vm2115, %v7554, %v7556
        %v7569 = vsel %vm2115, %v7556, %v7558
        %v7570 = vsel %vm2115, %v7558, %v7560
        %v7571 = vsel %vm2115, %v7560, %v7562
        %v7572 = vsel %vm2115, %v7562, %v7564
        %v7582 = vadd.f32 %v7503, %v7565
        %v7583 = vadd.f32 %v7504, %v7566
        %v7584 = vadd.f32 %v7505, %v7567
        %v7585 = vadd.f32 %v7506, %v7568
        %v7586 = vadd.f32 %v7507, %v7569
        %v7587 = vadd.f32 %v7508, %v7570
        %v7588 = vadd.f32 %v7509, %v7571
        %v7589 = vadd.f32 %v7510, %v7572
        %v7590 = vadd.f32 %v7511, %v7564
        %7591 = vset.pattern.permute.xlu0 1
        %7592 = vperm.xlu0 %7591, %v7066
        %v7593 = vpop.permute.xlu0 %7592
        %v7595 = vlaneseq
        %v7596 = vshrl.u32 %v7595, 7
        %v7597 = vsub.s32 0, %v7596
        %v7598 = vrot.slane %v7593, %v7597
        %v7599 = vmul.f32 %v7598, %v4758
        %v7600 = vmul.f32 %v7598, %v7512
        %v7601 = vmul.f32 %v7598, %v7513
        %v7602 = vmul.f32 %v7598, %v7514
        %v7603 = vmul.f32 %v7598, %v7515
        %v7604 = vmul.f32 %v7598, %v7516
        %v7605 = vmul.f32 %v7598, %v7517
        %v7606 = vmul.f32 %v7598, %v7518
        %v7607 = vmul.f32 %v7598, %v7519
        %v7617 = vrot.slane %v7599, 1
        %v7618 = vrot.slane %v7600, 1
        %v7619 = vrot.slane %v7601, 1
        %v7620 = vrot.slane %v7602, 1
        %v7621 = vrot.slane %v7603, 1
        %v7622 = vrot.slane %v7604, 1
        %v7623 = vrot.slane %v7605, 1
        %v7624 = vrot.slane %v7606, 1
        %v7625 = vrot.slane %v7607, 1
        %7626 = vrot.lane.b32.xlu0 %v7617, 96
        %v7627 = vpop.permute.xlu0 %7626
        %7628 = vrot.lane.b32.xlu0 %v7618, 96
        %v7629 = vpop.permute.xlu0 %7628
        %7630 = vrot.lane.b32.xlu0 %v7619, 96
        %v7631 = vpop.permute.xlu0 %7630
        %7632 = vrot.lane.b32.xlu0 %v7620, 96
        %v7633 = vpop.permute.xlu0 %7632
        %7634 = vrot.lane.b32.xlu0 %v7621, 96
        %v7635 = vpop.permute.xlu0 %7634
        %7636 = vrot.lane.b32.xlu0 %v7622, 96
        %v7637 = vpop.permute.xlu0 %7636
        %7638 = vrot.lane.b32.xlu0 %v7623, 96
        %v7639 = vpop.permute.xlu0 %7638
        %7640 = vrot.lane.b32.xlu0 %v7624, 96
        %v7641 = vpop.permute.xlu0 %7640
        %7642 = vrot.lane.b32.xlu0 %v7625, 96
        %v7643 = vpop.permute.xlu0 %7642
        %v7644 = vsel %vm2115, %v7627, %v7629
        %v7645 = vsel %vm2115, %v7629, %v7631
        %v7646 = vsel %vm2115, %v7631, %v7633
        %v7647 = vsel %vm2115, %v7633, %v7635
        %v7648 = vsel %vm2115, %v7635, %v7637
        %v7649 = vsel %vm2115, %v7637, %v7639
        %v7650 = vsel %vm2115, %v7639, %v7641
        %v7651 = vsel %vm2115, %v7641, %v7643
        %v7661 = vadd.f32 %v7582, %v7644
        %v7662 = vadd.f32 %v7583, %v7645
        %v7663 = vadd.f32 %v7584, %v7646
        %v7664 = vadd.f32 %v7585, %v7647
        %v7665 = vadd.f32 %v7586, %v7648
        %v7666 = vadd.f32 %v7587, %v7649
        %v7667 = vadd.f32 %v7588, %v7650
        %v7668 = vadd.f32 %v7589, %v7651
        %v7669 = vadd.f32 %v7590, %v7643
        %7671 = vset.pattern.permute.xlu0 0
        %7672 = vperm.xlu0 %7671, %v7067
        %v7673 = vpop.permute.xlu0 %7672
        %v7675 = vlaneseq
        %v7676 = vshrl.u32 %v7675, 7
        %v7677 = vsub.s32 0, %v7676
        %v7678 = vrot.slane %v7673, %v7677
        %v7679 = vmul.f32 %v7678, %v7100
        %v7680 = vmul.f32 %v7678, %v7101
        %v7681 = vmul.f32 %v7678, %v7102
        %v7682 = vmul.f32 %v7678, %v7103
        %v7683 = vmul.f32 %v7678, %v7104
        %v7684 = vmul.f32 %v7678, %v7105
        %v7685 = vmul.f32 %v7678, %v7106
        %v7686 = vmul.f32 %v7678, %v7107
        %7695 = vrot.lane.b32.xlu0 %v7679, 95
        %v7696 = vpop.permute.xlu0 %7695
        %7697 = vrot.lane.b32.xlu0 %v7680, 95
        %v7698 = vpop.permute.xlu0 %7697
        %7699 = vrot.lane.b32.xlu0 %v7681, 95
        %v7700 = vpop.permute.xlu0 %7699
        %7701 = vrot.lane.b32.xlu0 %v7682, 95
        %v7702 = vpop.permute.xlu0 %7701
        %7703 = vrot.lane.b32.xlu0 %v7683, 95
        %v7704 = vpop.permute.xlu0 %7703
        %7705 = vrot.lane.b32.xlu0 %v7684, 95
        %v7706 = vpop.permute.xlu0 %7705
        %7707 = vrot.lane.b32.xlu0 %v7685, 95
        %v7708 = vpop.permute.xlu0 %7707
        %7709 = vrot.lane.b32.xlu0 %v7686, 95
        %v7710 = vpop.permute.xlu0 %7709
        %v7711 = vsel %vm2393, %v7696, %v7698
        %v7712 = vsel %vm2393, %v7698, %v7700
        %v7713 = vsel %vm2393, %v7700, %v7702
        %v7714 = vsel %vm2393, %v7702, %v7704
        %v7715 = vsel %vm2393, %v7704, %v7706
        %v7716 = vsel %vm2393, %v7706, %v7708
        %v7717 = vsel %vm2393, %v7708, %v7710
        %v7727 = vadd.f32 %v7661, %v7696
        %v7728 = vadd.f32 %v7662, %v7711
        %v7729 = vadd.f32 %v7663, %v7712
        %v7730 = vadd.f32 %v7664, %v7713
        %v7731 = vadd.f32 %v7665, %v7714
        %v7732 = vadd.f32 %v7666, %v7715
        %v7733 = vadd.f32 %v7667, %v7716
        %v7734 = vadd.f32 %v7668, %v7717
        %v7735 = vadd.f32 %v7669, %v7710
        %7736 = vset.pattern.permute.xlu0 1
        %7737 = vperm.xlu0 %7736, %v7067
        %v7738 = vpop.permute.xlu0 %7737
        %v7740 = vlaneseq
        %v7741 = vshrl.u32 %v7740, 7
        %v7742 = vsub.s32 0, %v7741
        %v7743 = vrot.slane %v7738, %v7742
        %v7744 = vmul.f32 %v7743, %v7100
        %v7745 = vmul.f32 %v7743, %v7101
        %v7746 = vmul.f32 %v7743, %v7102
        %v7747 = vmul.f32 %v7743, %v7103
        %v7748 = vmul.f32 %v7743, %v7104
        %v7749 = vmul.f32 %v7743, %v7105
        %v7750 = vmul.f32 %v7743, %v7106
        %v7751 = vmul.f32 %v7743, %v7107
        %v7760 = vrot.slane %v7744, 1
        %v7761 = vrot.slane %v7745, 1
        %v7762 = vrot.slane %v7746, 1
        %v7763 = vrot.slane %v7747, 1
        %v7764 = vrot.slane %v7748, 1
        %v7765 = vrot.slane %v7749, 1
        %v7766 = vrot.slane %v7750, 1
        %v7767 = vrot.slane %v7751, 1
        %7768 = vrot.lane.b32.xlu0 %v7760, 95
        %v7769 = vpop.permute.xlu0 %7768
        %7770 = vrot.lane.b32.xlu0 %v7761, 95
        %v7771 = vpop.permute.xlu0 %7770
        %7772 = vrot.lane.b32.xlu0 %v7762, 95
        %v7773 = vpop.permute.xlu0 %7772
        %7774 = vrot.lane.b32.xlu0 %v7763, 95
        %v7775 = vpop.permute.xlu0 %7774
        %7776 = vrot.lane.b32.xlu0 %v7764, 95
        %v7777 = vpop.permute.xlu0 %7776
        %7778 = vrot.lane.b32.xlu0 %v7765, 95
        %v7779 = vpop.permute.xlu0 %7778
        %7780 = vrot.lane.b32.xlu0 %v7766, 95
        %v7781 = vpop.permute.xlu0 %7780
        %7782 = vrot.lane.b32.xlu0 %v7767, 95
        %v7783 = vpop.permute.xlu0 %7782
        %v7784 = vsel %vm2393, %v7769, %v7771
        %v7785 = vsel %vm2393, %v7771, %v7773
        %v7786 = vsel %vm2393, %v7773, %v7775
        %v7787 = vsel %vm2393, %v7775, %v7777
        %v7788 = vsel %vm2393, %v7777, %v7779
        %v7789 = vsel %vm2393, %v7779, %v7781
        %v7790 = vsel %vm2393, %v7781, %v7783
        %v7800 = vadd.f32 %v7727, %v7769
        %v7801 = vadd.f32 %v7728, %v7784
        %v7802 = vadd.f32 %v7729, %v7785
        %v7803 = vadd.f32 %v7730, %v7786
        %v7804 = vadd.f32 %v7731, %v7787
        %v7805 = vadd.f32 %v7732, %v7788
        %v7806 = vadd.f32 %v7733, %v7789
        %v7807 = vadd.f32 %v7734, %v7790
        %v7808 = vadd.f32 %v7735, %v7783
        %v7809 = vmul.f32 %v7100, %v5422
        %v7810 = vmul.f32 %v7101, %v5437
        %v7811 = vmul.f32 %v7102, %v5438
        %v7812 = vmul.f32 %v7103, %v5439
        %v7813 = vmul.f32 %v7104, %v5440
        %v7814 = vmul.f32 %v7105, %v5441
        %v7815 = vmul.f32 %v7106, %v5442
        %v7816 = vmul.f32 %v7107, %v5443
        %7818 = vset.pattern.permute.xlu0 0
        %7819 = vperm.xlu0 %7818, %v7068
        %v7820 = vpop.permute.xlu0 %7819
        %v7822 = vlaneseq
        %v7823 = vshrl.u32 %v7822, 7
        %v7824 = vsub.s32 0, %v7823
        %v7825 = vrot.slane %v7820, %v7824
        %v7826 = vmul.f32 %v7825, %v7809
        %v7827 = vmul.f32 %v7825, %v7810
        %v7828 = vmul.f32 %v7825, %v7811
        %v7829 = vmul.f32 %v7825, %v7812
        %v7830 = vmul.f32 %v7825, %v7813
        %v7831 = vmul.f32 %v7825, %v7814
        %v7832 = vmul.f32 %v7825, %v7815
        %v7833 = vmul.f32 %v7825, %v7816
        %v7834 = vmul.f32 %v7825, %v5461
        %7844 = vrot.lane.b32.xlu0 %v7826, 94
        %v7845 = vpop.permute.xlu0 %7844
        %7846 = vrot.lane.b32.xlu0 %v7827, 94
        %v7847 = vpop.permute.xlu0 %7846
        %7848 = vrot.lane.b32.xlu0 %v7828, 94
        %v7849 = vpop.permute.xlu0 %7848
        %7850 = vrot.lane.b32.xlu0 %v7829, 94
        %v7851 = vpop.permute.xlu0 %7850
        %7852 = vrot.lane.b32.xlu0 %v7830, 94
        %v7853 = vpop.permute.xlu0 %7852
        %7854 = vrot.lane.b32.xlu0 %v7831, 94
        %v7855 = vpop.permute.xlu0 %7854
        %7856 = vrot.lane.b32.xlu0 %v7832, 94
        %v7857 = vpop.permute.xlu0 %7856
        %7858 = vrot.lane.b32.xlu0 %v7833, 94
        %v7859 = vpop.permute.xlu0 %7858
        %7860 = vrot.lane.b32.xlu0 %v7834, 94
        %v7861 = vpop.permute.xlu0 %7860
        %v7862 = vsel %vm2611, %v7845, %v7847
        %v7863 = vsel %vm2611, %v7847, %v7849
        %v7864 = vsel %vm2611, %v7849, %v7851
        %v7865 = vsel %vm2611, %v7851, %v7853
        %v7866 = vsel %vm2611, %v7853, %v7855
        %v7867 = vsel %vm2611, %v7855, %v7857
        %v7868 = vsel %vm2611, %v7857, %v7859
        %v7869 = vsel %vm2611, %v7859, %v7861
        %v7879 = vadd.f32 %v7800, %v7845
        %v7880 = vadd.f32 %v7801, %v7862
        %v7881 = vadd.f32 %v7802, %v7863
        %v7882 = vadd.f32 %v7803, %v7864
        %v7883 = vadd.f32 %v7804, %v7865
        %v7884 = vadd.f32 %v7805, %v7866
        %v7885 = vadd.f32 %v7806, %v7867
        %v7886 = vadd.f32 %v7807, %v7868
        %v7887 = vadd.f32 %v7808, %v7869
        %7888 = vset.pattern.permute.xlu0 1
        %7889 = vperm.xlu0 %7888, %v7068
        %v7890 = vpop.permute.xlu0 %7889
        %v7892 = vlaneseq
        %v7893 = vshrl.u32 %v7892, 7
        %v7894 = vsub.s32 0, %v7893
        %v7895 = vrot.slane %v7890, %v7894
        %v7896 = vmul.f32 %v7895, %v7809
        %v7897 = vmul.f32 %v7895, %v7810
        %v7898 = vmul.f32 %v7895, %v7811
        %v7899 = vmul.f32 %v7895, %v7812
        %v7900 = vmul.f32 %v7895, %v7813
        %v7901 = vmul.f32 %v7895, %v7814
        %v7902 = vmul.f32 %v7895, %v7815
        %v7903 = vmul.f32 %v7895, %v7816
        %v7904 = vmul.f32 %v7895, %v5461
        %v7914 = vrot.slane %v7896, 1
        %v7915 = vrot.slane %v7897, 1
        %v7916 = vrot.slane %v7898, 1
        %v7917 = vrot.slane %v7899, 1
        %v7918 = vrot.slane %v7900, 1
        %v7919 = vrot.slane %v7901, 1
        %v7920 = vrot.slane %v7902, 1
        %v7921 = vrot.slane %v7903, 1
        %v7922 = vrot.slane %v7904, 1
        %7923 = vrot.lane.b32.xlu0 %v7914, 94
        %v7924 = vpop.permute.xlu0 %7923
        %7925 = vrot.lane.b32.xlu0 %v7915, 94
        %v7926 = vpop.permute.xlu0 %7925
        %7927 = vrot.lane.b32.xlu0 %v7916, 94
        %v7928 = vpop.permute.xlu0 %7927
        %7929 = vrot.lane.b32.xlu0 %v7917, 94
        %v7930 = vpop.permute.xlu0 %7929
        %7931 = vrot.lane.b32.xlu0 %v7918, 94
        %v7932 = vpop.permute.xlu0 %7931
        %7933 = vrot.lane.b32.xlu0 %v7919, 94
        %v7934 = vpop.permute.xlu0 %7933
        %7935 = vrot.lane.b32.xlu0 %v7920, 94
        %v7936 = vpop.permute.xlu0 %7935
        %7937 = vrot.lane.b32.xlu0 %v7921, 94
        %v7938 = vpop.permute.xlu0 %7937
        %7939 = vrot.lane.b32.xlu0 %v7922, 94
        %v7940 = vpop.permute.xlu0 %7939
        %v7941 = vsel %vm2611, %v7924, %v7926
        %v7942 = vsel %vm2611, %v7926, %v7928
        %v7943 = vsel %vm2611, %v7928, %v7930
        %v7944 = vsel %vm2611, %v7930, %v7932
        %v7945 = vsel %vm2611, %v7932, %v7934
        %v7946 = vsel %vm2611, %v7934, %v7936
        %v7947 = vsel %vm2611, %v7936, %v7938
        %v7948 = vsel %vm2611, %v7938, %v7940
        %v7958 = vadd.f32 %v7879, %v7924
        %v7959 = vadd.f32 %v7880, %v7941
        %v7960 = vadd.f32 %v7881, %v7942
        %v7961 = vadd.f32 %v7882, %v7943
        %v7962 = vadd.f32 %v7883, %v7944
        %v7963 = vadd.f32 %v7884, %v7945
        %v7964 = vadd.f32 %v7885, %v7946
        %v7965 = vadd.f32 %v7886, %v7947
        %v7966 = vadd.f32 %v7887, %v7948
        %v7967 = vmul.f32 %v7100, %v5872
        %v7968 = vmul.f32 %v7101, %v5888
        %v7969 = vmul.f32 %v7102, %v5889
        %v7970 = vmul.f32 %v7103, %v5890
        %v7971 = vmul.f32 %v7104, %v5891
        %v7972 = vmul.f32 %v7105, %v5892
        %v7973 = vmul.f32 %v7106, %v5893
        %v7974 = vmul.f32 %v7107, %v5894
        %7976 = vset.pattern.permute.xlu0 0
        %7977 = vperm.xlu0 %7976, %v7069
        %v7978 = vpop.permute.xlu0 %7977
        %v7980 = vlaneseq
        %v7981 = vshrl.u32 %v7980, 7
        %v7982 = vsub.s32 0, %v7981
        %v7983 = vrot.slane %v7978, %v7982
        %v7984 = vmul.f32 %v7983, %v7967
        %v7985 = vmul.f32 %v7983, %v7968
        %v7986 = vmul.f32 %v7983, %v7969
        %v7987 = vmul.f32 %v7983, %v7970
        %v7988 = vmul.f32 %v7983, %v7971
        %v7989 = vmul.f32 %v7983, %v7972
        %v7990 = vmul.f32 %v7983, %v7973
        %v7991 = vmul.f32 %v7983, %v7974
        %v7992 = vmul.f32 %v7983, %v5912
        %8002 = vrot.lane.b32.xlu0 %v7984, 64
        %v8003 = vpop.permute.xlu0 %8002
        %8004 = vrot.lane.b32.xlu0 %v7985, 64
        %v8005 = vpop.permute.xlu0 %8004
        %8006 = vrot.lane.b32.xlu0 %v7986, 64
        %v8007 = vpop.permute.xlu0 %8006
        %8008 = vrot.lane.b32.xlu0 %v7987, 64
        %v8009 = vpop.permute.xlu0 %8008
        %8010 = vrot.lane.b32.xlu0 %v7988, 64
        %v8011 = vpop.permute.xlu0 %8010
        %8012 = vrot.lane.b32.xlu0 %v7989, 64
        %v8013 = vpop.permute.xlu0 %8012
        %8014 = vrot.lane.b32.xlu0 %v7990, 64
        %v8015 = vpop.permute.xlu0 %8014
        %8016 = vrot.lane.b32.xlu0 %v7991, 64
        %v8017 = vpop.permute.xlu0 %8016
        %8018 = vrot.lane.b32.xlu0 %v7992, 64
        %v8019 = vpop.permute.xlu0 %8018
        %v8020 = vsel %vm419, %v8003, %v8005
        %v8021 = vsel %vm419, %v8005, %v8007
        %v8022 = vsel %vm419, %v8007, %v8009
        %v8023 = vsel %vm419, %v8009, %v8011
        %v8024 = vsel %vm419, %v8011, %v8013
        %v8025 = vsel %vm419, %v8013, %v8015
        %v8026 = vsel %vm419, %v8015, %v8017
        %v8027 = vsel %vm419, %v8017, %v8019
        %v8037 = vadd.f32 %v7958, %v8003
        %v8038 = vadd.f32 %v7959, %v8020
        %v8039 = vadd.f32 %v7960, %v8021
        %v8040 = vadd.f32 %v7961, %v8022
        %v8041 = vadd.f32 %v7962, %v8023
        %v8042 = vadd.f32 %v7963, %v8024
        %v8043 = vadd.f32 %v7964, %v8025
        %v8044 = vadd.f32 %v7965, %v8026
        %v8045 = vadd.f32 %v7966, %v8027
        %8046 = vset.pattern.permute.xlu0 1
        %8047 = vperm.xlu0 %8046, %v7069
        %v8048 = vpop.permute.xlu0 %8047
        %v8050 = vlaneseq
        %v8051 = vshrl.u32 %v8050, 7
        %v8052 = vsub.s32 0, %v8051
        %v8053 = vrot.slane %v8048, %v8052
        %v8054 = vmul.f32 %v8053, %v7967
        %v8055 = vmul.f32 %v8053, %v7968
        %v8056 = vmul.f32 %v8053, %v7969
        %v8057 = vmul.f32 %v8053, %v7970
        %v8058 = vmul.f32 %v8053, %v7971
        %v8059 = vmul.f32 %v8053, %v7972
        %v8060 = vmul.f32 %v8053, %v7973
        %v8061 = vmul.f32 %v8053, %v7974
        %v8062 = vmul.f32 %v8053, %v5912
        %v8072 = vrot.slane %v8054, 1
        %v8073 = vrot.slane %v8055, 1
        %v8074 = vrot.slane %v8056, 1
        %v8075 = vrot.slane %v8057, 1
        %v8076 = vrot.slane %v8058, 1
        %v8077 = vrot.slane %v8059, 1
        %v8078 = vrot.slane %v8060, 1
        %v8079 = vrot.slane %v8061, 1
        %v8080 = vrot.slane %v8062, 1
        %8081 = vrot.lane.b32.xlu0 %v8072, 64
        %v8082 = vpop.permute.xlu0 %8081
        %8083 = vrot.lane.b32.xlu0 %v8073, 64
        %v8084 = vpop.permute.xlu0 %8083
        %8085 = vrot.lane.b32.xlu0 %v8074, 64
        %v8086 = vpop.permute.xlu0 %8085
        %8087 = vrot.lane.b32.xlu0 %v8075, 64
        %v8088 = vpop.permute.xlu0 %8087
        %8089 = vrot.lane.b32.xlu0 %v8076, 64
        %v8090 = vpop.permute.xlu0 %8089
        %8091 = vrot.lane.b32.xlu0 %v8077, 64
        %v8092 = vpop.permute.xlu0 %8091
        %8093 = vrot.lane.b32.xlu0 %v8078, 64
        %v8094 = vpop.permute.xlu0 %8093
        %8095 = vrot.lane.b32.xlu0 %v8079, 64
        %v8096 = vpop.permute.xlu0 %8095
        %8097 = vrot.lane.b32.xlu0 %v8080, 64
        %v8098 = vpop.permute.xlu0 %8097
        %v8099 = vsel %vm419, %v8082, %v8084
        %v8100 = vsel %vm419, %v8084, %v8086
        %v8101 = vsel %vm419, %v8086, %v8088
        %v8102 = vsel %vm419, %v8088, %v8090
        %v8103 = vsel %vm419, %v8090, %v8092
        %v8104 = vsel %vm419, %v8092, %v8094
        %v8105 = vsel %vm419, %v8094, %v8096
        %v8106 = vsel %vm419, %v8096, %v8098
        %v8116 = vadd.f32 %v8037, %v8082
        %v8117 = vadd.f32 %v8038, %v8099
        %v8118 = vadd.f32 %v8039, %v8100
        %v8119 = vadd.f32 %v8040, %v8101
        %v8120 = vadd.f32 %v8041, %v8102
        %v8121 = vadd.f32 %v8042, %v8103
        %v8122 = vadd.f32 %v8043, %v8104
        %v8123 = vadd.f32 %v8044, %v8105
        %v8124 = vadd.f32 %v8045, %v8106
        %8126 = vset.pattern.permute.xlu0 0
        %8127 = vperm.xlu0 %8126, %v7070
        %v8128 = vpop.permute.xlu0 %8127
        %v8130 = vlaneseq
        %v8131 = vshrl.u32 %v8130, 7
        %v8132 = vsub.s32 0, %v8131
        %v8133 = vrot.slane %v8128, %v8132
        %v8134 = vmul.f32 %v8133, %v7100
        %v8135 = vmul.f32 %v8133, %v7101
        %v8136 = vmul.f32 %v8133, %v7102
        %v8137 = vmul.f32 %v8133, %v7103
        %v8138 = vmul.f32 %v8133, %v7104
        %v8139 = vmul.f32 %v8133, %v7105
        %v8140 = vmul.f32 %v8133, %v7106
        %v8141 = vmul.f32 %v8133, %v7107
        %v8142 = vmul.f32 %v8133, 0.0
        %8152 = vrot.lane.b32.xlu0 %v8134, 63
        %v8153 = vpop.permute.xlu0 %8152
        %8154 = vrot.lane.b32.xlu0 %v8135, 63
        %v8155 = vpop.permute.xlu0 %8154
        %8156 = vrot.lane.b32.xlu0 %v8136, 63
        %v8157 = vpop.permute.xlu0 %8156
        %8158 = vrot.lane.b32.xlu0 %v8137, 63
        %v8159 = vpop.permute.xlu0 %8158
        %8160 = vrot.lane.b32.xlu0 %v8138, 63
        %v8161 = vpop.permute.xlu0 %8160
        %8162 = vrot.lane.b32.xlu0 %v8139, 63
        %v8163 = vpop.permute.xlu0 %8162
        %8164 = vrot.lane.b32.xlu0 %v8140, 63
        %v8165 = vpop.permute.xlu0 %8164
        %8166 = vrot.lane.b32.xlu0 %v8141, 63
        %v8167 = vpop.permute.xlu0 %8166
        %8168 = vrot.lane.b32.xlu0 %v8142, 63
        %v8169 = vpop.permute.xlu0 %8168
        %v8170 = vsel %vm6363, %v8153, %v8155
        %v8171 = vsel %vm6363, %v8155, %v8157
        %v8172 = vsel %vm6363, %v8157, %v8159
        %v8173 = vsel %vm6363, %v8159, %v8161
        %v8174 = vsel %vm6363, %v8161, %v8163
        %v8175 = vsel %vm6363, %v8163, %v8165
        %v8176 = vsel %vm6363, %v8165, %v8167
        %v8177 = vsel %vm6363, %v8167, %v8169
        %v8187 = vadd.f32 %v8116, %v8153
        %v8188 = vadd.f32 %v8117, %v8170
        %v8189 = vadd.f32 %v8118, %v8171
        %v8190 = vadd.f32 %v8119, %v8172
        %v8191 = vadd.f32 %v8120, %v8173
        %v8192 = vadd.f32 %v8121, %v8174
        %v8193 = vadd.f32 %v8122, %v8175
        %v8194 = vadd.f32 %v8123, %v8176
        %v8195 = vadd.f32 %v8124, %v8177
        %8196 = vset.pattern.permute.xlu0 1
        %8197 = vperm.xlu0 %8196, %v7070
        %v8198 = vpop.permute.xlu0 %8197
        %v8200 = vlaneseq
        %v8201 = vshrl.u32 %v8200, 7
        %v8202 = vsub.s32 0, %v8201
        %v8203 = vrot.slane %v8198, %v8202
        %v8204 = vmul.f32 %v8203, %v7100
        %v8205 = vmul.f32 %v8203, %v7101
        %v8206 = vmul.f32 %v8203, %v7102
        %v8207 = vmul.f32 %v8203, %v7103
        %v8208 = vmul.f32 %v8203, %v7104
        %v8209 = vmul.f32 %v8203, %v7105
        %v8210 = vmul.f32 %v8203, %v7106
        %v8211 = vmul.f32 %v8203, %v7107
        %v8212 = vmul.f32 %v8203, 0.0
        %v8222 = vrot.slane %v8204, 1
        %v8223 = vrot.slane %v8205, 1
        %v8224 = vrot.slane %v8206, 1
        %v8225 = vrot.slane %v8207, 1
        %v8226 = vrot.slane %v8208, 1
        %v8227 = vrot.slane %v8209, 1
        %v8228 = vrot.slane %v8210, 1
        %v8229 = vrot.slane %v8211, 1
        %v8230 = vrot.slane %v8212, 1
        %8231 = vrot.lane.b32.xlu0 %v8222, 63
        %v8232 = vpop.permute.xlu0 %8231
        %8233 = vrot.lane.b32.xlu0 %v8223, 63
        %v8234 = vpop.permute.xlu0 %8233
        %8235 = vrot.lane.b32.xlu0 %v8224, 63
        %v8236 = vpop.permute.xlu0 %8235
        %8237 = vrot.lane.b32.xlu0 %v8225, 63
        %v8238 = vpop.permute.xlu0 %8237
        %8239 = vrot.lane.b32.xlu0 %v8226, 63
        %v8240 = vpop.permute.xlu0 %8239
        %8241 = vrot.lane.b32.xlu0 %v8227, 63
        %v8242 = vpop.permute.xlu0 %8241
        %8243 = vrot.lane.b32.xlu0 %v8228, 63
        %v8244 = vpop.permute.xlu0 %8243
        %8245 = vrot.lane.b32.xlu0 %v8229, 63
        %v8246 = vpop.permute.xlu0 %8245
        %8247 = vrot.lane.b32.xlu0 %v8230, 63
        %v8248 = vpop.permute.xlu0 %8247
        %v8249 = vsel %vm6363, %v8232, %v8234
        %v8250 = vsel %vm6363, %v8234, %v8236
        %v8251 = vsel %vm6363, %v8236, %v8238
        %v8252 = vsel %vm6363, %v8238, %v8240
        %v8253 = vsel %vm6363, %v8240, %v8242
        %v8254 = vsel %vm6363, %v8242, %v8244
        %v8255 = vsel %vm6363, %v8244, %v8246
        %v8256 = vsel %vm6363, %v8246, %v8248
        %v8266 = vadd.f32 %v8187, %v8232
        %v8267 = vadd.f32 %v8188, %v8249
        %v8268 = vadd.f32 %v8189, %v8250
        %v8269 = vadd.f32 %v8190, %v8251
        %v8270 = vadd.f32 %v8191, %v8252
        %v8271 = vadd.f32 %v8192, %v8253
        %v8272 = vadd.f32 %v8193, %v8254
        %v8273 = vadd.f32 %v8194, %v8255
        %v8274 = vadd.f32 %v8195, %v8256
        %v8275 = vmul.f32 %v7100, %v6589
        %v8276 = vmul.f32 %v7101, %v6605
        %v8277 = vmul.f32 %v7102, %v6606
        %v8278 = vmul.f32 %v7103, %v6607
        %v8279 = vmul.f32 %v7104, %v6608
        %v8280 = vmul.f32 %v7105, %v6609
        %v8281 = vmul.f32 %v7106, %v6610
        %v8282 = vmul.f32 %v7107, %v6611
        %8284 = vset.pattern.permute.xlu0 0
        %8285 = vperm.xlu0 %8284, %v7071
        %v8286 = vpop.permute.xlu0 %8285
        %v8288 = vlaneseq
        %v8289 = vshrl.u32 %v8288, 7
        %v8290 = vsub.s32 0, %v8289
        %v8291 = vrot.slane %v8286, %v8290
        %v8292 = vmul.f32 %v8291, %v8275
        %v8293 = vmul.f32 %v8291, %v8276
        %v8294 = vmul.f32 %v8291, %v8277
        %v8295 = vmul.f32 %v8291, %v8278
        %v8296 = vmul.f32 %v8291, %v8279
        %v8297 = vmul.f32 %v8291, %v8280
        %v8298 = vmul.f32 %v8291, %v8281
        %v8299 = vmul.f32 %v8291, %v8282
        %v8300 = vmul.f32 %v8291, %v6629
        %8310 = vrot.lane.b32.xlu0 %v8292, 62
        %v8311 = vpop.permute.xlu0 %8310
        %8312 = vrot.lane.b32.xlu0 %v8293, 62
        %v8313 = vpop.permute.xlu0 %8312
        %8314 = vrot.lane.b32.xlu0 %v8294, 62
        %v8315 = vpop.permute.xlu0 %8314
        %8316 = vrot.lane.b32.xlu0 %v8295, 62
        %v8317 = vpop.permute.xlu0 %8316
        %8318 = vrot.lane.b32.xlu0 %v8296, 62
        %v8319 = vpop.permute.xlu0 %8318
        %8320 = vrot.lane.b32.xlu0 %v8297, 62
        %v8321 = vpop.permute.xlu0 %8320
        %8322 = vrot.lane.b32.xlu0 %v8298, 62
        %v8323 = vpop.permute.xlu0 %8322
        %8324 = vrot.lane.b32.xlu0 %v8299, 62
        %v8325 = vpop.permute.xlu0 %8324
        %8326 = vrot.lane.b32.xlu0 %v8300, 62
        %v8327 = vpop.permute.xlu0 %8326
        %v8328 = vsel %vm6707, %v8311, %v8313
        %v8329 = vsel %vm6707, %v8313, %v8315
        %v8330 = vsel %vm6707, %v8315, %v8317
        %v8331 = vsel %vm6707, %v8317, %v8319
        %v8332 = vsel %vm6707, %v8319, %v8321
        %v8333 = vsel %vm6707, %v8321, %v8323
        %v8334 = vsel %vm6707, %v8323, %v8325
        %v8335 = vsel %vm6707, %v8325, %v8327
        %v8345 = vadd.f32 %v8266, %v8311
        %v8346 = vadd.f32 %v8267, %v8328
        %v8347 = vadd.f32 %v8268, %v8329
        %v8348 = vadd.f32 %v8269, %v8330
        %v8349 = vadd.f32 %v8270, %v8331
        %v8350 = vadd.f32 %v8271, %v8332
        %v8351 = vadd.f32 %v8272, %v8333
        %v8352 = vadd.f32 %v8273, %v8334
        %v8353 = vadd.f32 %v8274, %v8335
        %8354 = vset.pattern.permute.xlu0 1
        %8355 = vperm.xlu0 %8354, %v7071
        %v8356 = vpop.permute.xlu0 %8355
        %v8358 = vlaneseq
        %v8359 = vshrl.u32 %v8358, 7
        %v8360 = vsub.s32 0, %v8359
        %v8361 = vrot.slane %v8356, %v8360
        %v8362 = vmul.f32 %v8361, %v8275
        %v8363 = vmul.f32 %v8361, %v8276
        %v8364 = vmul.f32 %v8361, %v8277
        %v8365 = vmul.f32 %v8361, %v8278
        %v8366 = vmul.f32 %v8361, %v8279
        %v8367 = vmul.f32 %v8361, %v8280
        %v8368 = vmul.f32 %v8361, %v8281
        %v8369 = vmul.f32 %v8361, %v8282
        %v8370 = vmul.f32 %v8361, %v6629
        %v8380 = vrot.slane %v8362, 1
        %v8381 = vrot.slane %v8363, 1
        %v8382 = vrot.slane %v8364, 1
        %v8383 = vrot.slane %v8365, 1
        %v8384 = vrot.slane %v8366, 1
        %v8385 = vrot.slane %v8367, 1
        %v8386 = vrot.slane %v8368, 1
        %v8387 = vrot.slane %v8369, 1
        %v8388 = vrot.slane %v8370, 1
        %8389 = vrot.lane.b32.xlu0 %v8380, 62
        %v8390 = vpop.permute.xlu0 %8389
        %8391 = vrot.lane.b32.xlu0 %v8381, 62
        %v8392 = vpop.permute.xlu0 %8391
        %8393 = vrot.lane.b32.xlu0 %v8382, 62
        %v8394 = vpop.permute.xlu0 %8393
        %8395 = vrot.lane.b32.xlu0 %v8383, 62
        %v8396 = vpop.permute.xlu0 %8395
        %8397 = vrot.lane.b32.xlu0 %v8384, 62
        %v8398 = vpop.permute.xlu0 %8397
        %8399 = vrot.lane.b32.xlu0 %v8385, 62
        %v8400 = vpop.permute.xlu0 %8399
        %8401 = vrot.lane.b32.xlu0 %v8386, 62
        %v8402 = vpop.permute.xlu0 %8401
        %8403 = vrot.lane.b32.xlu0 %v8387, 62
        %v8404 = vpop.permute.xlu0 %8403
        %8405 = vrot.lane.b32.xlu0 %v8388, 62
        %v8406 = vpop.permute.xlu0 %8405
        %v8407 = vsel %vm6707, %v8390, %v8392
        %v8408 = vsel %vm6707, %v8392, %v8394
        %v8409 = vsel %vm6707, %v8394, %v8396
        %v8410 = vsel %vm6707, %v8396, %v8398
        %v8411 = vsel %vm6707, %v8398, %v8400
        %v8412 = vsel %vm6707, %v8400, %v8402
        %v8413 = vsel %vm6707, %v8402, %v8404
        %v8414 = vsel %vm6707, %v8404, %v8406
        %v8424 = vadd.f32 %v8345, %v8390
        %v8425 = vadd.f32 %v8346, %v8407
        %v8426 = vadd.f32 %v8347, %v8408
        %v8427 = vadd.f32 %v8348, %v8409
        %v8428 = vadd.f32 %v8349, %v8410
        %v8429 = vadd.f32 %v8350, %v8411
        %v8430 = vadd.f32 %v8351, %v8412
        %v8431 = vadd.f32 %v8352, %v8413
        %v8432 = vadd.f32 %v8353, %v8414
        %8434 = vset.pattern.permute.xlu0 0
        %8435 = vperm.xlu0 %8434, %v7072
        %v8436 = vpop.permute.xlu0 %8435
        %v8438 = vlaneseq
        %v8439 = vshrl.u32 %v8438, 7
        %v8440 = vsub.s32 0, %v8439
        %v8441 = vrot.slane %v8436, %v8440
        %v8442 = vadd.f32 %v8424, %v8441
        %v8443 = vadd.f32 %v8425, %v8441
        %v8444 = vadd.f32 %v8426, %v8441
        %v8445 = vadd.f32 %v8427, %v8441
        %v8446 = vadd.f32 %v8428, %v8441
        %v8447 = vadd.f32 %v8429, %v8441
        %v8448 = vadd.f32 %v8430, %v8441
        %v8449 = vadd.f32 %v8431, %v8441
        %v8450 = vadd.f32 %v8432, %v8441
        %v8460 = vcombine.low %v8442, %v8443
        %v8461 = vcombine.low %v8444, %v8445
        %v8462 = vcombine.low %v8446, %v8447
        %v8463 = vcombine.low %v8448, %v8449
        %v8465 = vunpack.c.l.s4 1966171168
        %v8466 = vunpack.c.0.s8 %v8465
        %v8467 = vlaneseq
        %v8468 = vshrl.u32 %v8467, 7
        %v8469 = vsub.s32 %v8466, %v8468
        %v8470 = vrot.slane %v8460, %v8469
        %v8472 = vunpack.c.l.s4 1966171168
        %v8473 = vunpack.c.0.s8 %v8472
        %v8474 = vlaneseq
        %v8475 = vshrl.u32 %v8474, 7
        %v8476 = vsub.s32 %v8473, %v8475
        %v8477 = vrot.slane %v8461, %v8476
        %v8479 = vunpack.c.l.s4 1966171168
        %v8480 = vunpack.c.0.s8 %v8479
        %v8481 = vlaneseq
        %v8482 = vshrl.u32 %v8481, 7
        %v8483 = vsub.s32 %v8480, %v8482
        %v8484 = vrot.slane %v8462, %v8483
        %v8486 = vunpack.c.l.s4 1966171168
        %v8487 = vunpack.c.0.s8 %v8486
        %v8488 = vlaneseq
        %v8489 = vshrl.u32 %v8488, 7
        %v8490 = vsub.s32 %v8487, %v8489
        %v8491 = vrot.slane %v8463, %v8490
        %v8492 = vcombine.low %v8470, %v8477
        %v8493 = vcombine.low %v8484, %v8491
        %v8495 = vunpack.c.l.s4 1966171168
        %v8496 = vunpack.c.0.s8 %v8495
        %v8497 = vlaneseq
        %v8498 = vshrl.u32 %v8497, 7
        %v8499 = vsub.s32 %v8496, %v8498
        %v8500 = vrot.slane %v8492, %v8499
        %v8502 = vunpack.c.l.s4 1966171168
        %v8503 = vunpack.c.0.s8 %v8502
        %v8504 = vlaneseq
        %v8505 = vshrl.u32 %v8504, 7
        %v8506 = vsub.s32 %v8503, %v8505
        %v8507 = vrot.slane %v8493, %v8506
        %v8508 = vcombine.low %v8500, %v8507
        %v8510 = vunpack.c.l.s4 1966171168
        %v8511 = vunpack.c.0.s8 %v8510
        %v8512 = vlaneseq
        %v8513 = vshrl.u32 %v8512, 7
        %v8514 = vsub.s32 %v8511, %v8513
        %v8515 = vrot.slane %v8450, %v8514
        %v8517 = vunpack.c.l.s4 1966171168
        %v8518 = vunpack.c.0.s8 %v8517
        %v8519 = vlaneseq
        %v8520 = vshrl.u32 %v8519, 7
        %v8521 = vsub.s32 %v8518, %v8520
        %v8522 = vrot.slane %v8515, %v8521
        %8523 = vrot.lane.b32.xlu0 %v8508, 33
        %v8524 = vpop.permute.xlu0 %8523
        %8525 = vrot.lane.b32.xlu0 %v8522, 33
        %v8526 = vpop.permute.xlu0 %8525
        %v8527 = vrot.slane %v8524, 1
        %v8528 = vrot.slane %v8526, 1
        %vm8529 = vcmask 1046528
        %v8530 = vsel %vm8529, %v8527, %v8528
        %v8531 = vsel %vm6604, %v8524, %v8530
        %8533 = vst [vmem:[%s398] sm:$0xff] %v8531
        %p8534 = scmp.lt.s32.totalorder %s25, 1
        %s8535 = scalar_select %p8534, %s25, 1
        %s8536 = smul.addr %s8535, 8
        %s8537 = scalar_lea.vmem %s11, %s8536
        // Predicated region
        $region69: #{decoder_block.1} parent=63 // pred_check
          %p8538 = pneg %p279
        $region70: #{decoder_block.1} parent=63 // pred_check_branch
          %8540 = sbr.rel (%p8538) target = $region72
        $region71: #{decoder_block.1} parent=63 // pred_region
          _
        $region72: #{decoder_block.1} parent=63 // pred_fallthru
          _
      $region64: #{decoder_block.1} parent=5 // pred_fallthru
        _
      %p8541 = scmp.le.s32.totalorder 2, %s20
      // Predicated region
      $region73: #{decoder_block.1} parent=5 // pred_check
        %p8542 = pneg %p8541
      $region74: #{decoder_block.1} parent=5 // pred_check_branch
        %8544 = sbr.rel (%p8542) target = $region76
      $region75: #{decoder_block.1} parent=5 // pred_region
        %s8545 = ssub.s32 %s20, 2
        // Predicated region
        $region77: #{decoder_block.1} parent=75 // pred_check
          %p8546 = pneg %p285
        $region78: #{decoder_block.1} parent=75 // pred_check_branch
          %8548 = sbr.rel (%p8546) target = $region80
        $region79: #{decoder_block.1} parent=75 // pred_region
          %p8549 = scmp.lt.s32.totalorder %s26, 1
          %s8550 = scalar_select %p8549, %s26, 1
          %s8551 = smul.addr %s8550, 8
          %s8552 = scalar_lea.vmem %s11, %s8551
        $region80: #{decoder_block.1} parent=75 // pred_fallthru
          _
      $region76: #{decoder_block.1} parent=5 // pred_fallthru
        _
    $region6: #{decoder_block.1} parent=1 // loop_footer
      %s24 = sadd.s32 1, %s20
    $region7: #{decoder_block.1} parent=1 // loop_footer_branch
      %19 = sbr.rel target = $region3
    $region8: #{decoder_block.1} parent=1 // loop_exit
      _
    %8553 = vsyncpa [#allocation4], 1
    %s8554 = scalar_lea.sflag [#allocation4], 1
    %8555 = vsyncpa %s8554, 1

</llo_original>
